<compile_context>
chip_gen: v7x
topology: tpu7x:2x2x1
jax: 0.10.0
libtpu: 0.0.40
codegen_flags: <defaults>
</compile_context>

<pallas_src>
import jax
import jax.numpy as jnp
from jax.experimental import pallas as pl
from jax.experimental.pallas import tpu as pltpu

EPS = 1e-5
LEAK = 0.1

NODE_F = 16
EDGE_F = 19
LAYER = 64
SECOND = NODE_F + LAYER  # 80
N_META = 3               # only metalayers 1..3 are exercised by the forward


# ---------------------------------------------------------------------------
# In-kernel math helpers
# ---------------------------------------------------------------------------
def _bn_train(x, gamma, beta):
    """BatchNorm1d, training mode: batch mean / biased variance, affine."""
    mean = jnp.mean(x, axis=0, keepdims=True)
    var = jnp.mean((x - mean) ** 2, axis=0, keepdims=True)
    return (x - mean) * jax.lax.rsqrt(var + EPS) * gamma + beta


def _leaky(x):
    return jnp.where(x >= 0, x, LEAK * x)


def _mlp3(chunks, p):
    """BN -> Linear -> LeakyReLU -> BN -> Linear -> LeakyReLU -> BN -> Linear.

    `chunks` are the (un-concatenated) input pieces; the first Linear's weight
    is pre-split per chunk so the concat never has to be materialized.
    """
    acc = None
    for x_c, (g, be, w) in zip(chunks, p["in"]):
        t = _bn_train(x_c, g, be)
        d = jnp.dot(t, w, preferred_element_type=jnp.float32)
        acc = d if acc is None else acc + d
    h = _leaky(acc + p["b1"])
    h = _bn_train(h, p["g2"], p["be2"])
    h = _leaky(jnp.dot(h, p["w2"], preferred_element_type=jnp.float32) + p["b2"])
    h = _bn_train(h, p["g3"], p["be3"])
    return jnp.dot(h, p["w3"], preferred_element_type=jnp.float32) + p["b3"]


def _slice_mlp(p_refs, i):
    """Load metalayer `i`'s slice of a stacked-MLP ref tree into plain arrays."""
    return {
        "in": tuple((g[i], be[i], w[i]) for (g, be, w) in p_refs["in"]),
        "b1": p_refs["b1"][i],
        "g2": p_refs["g2"][i], "be2": p_refs["be2"][i],
        "w2": p_refs["w2"][i], "b2": p_refs["b2"][i],
        "g3": p_refs["g3"][i], "be3": p_refs["be3"][i],
        "w3": p_refs["w3"][i], "b3": p_refs["b3"][i],
    }


# ---------------------------------------------------------------------------
# Fused forward kernel
# ---------------------------------------------------------------------------
def _make_kernel(treedef, n_leaves, n_meta):
    def kernel(*refs):
        x_ref, ea_ref, row_e1_ref, col_e1_ref, col_1e_ref = refs[:5]
        p_refs = refs[5:5 + n_leaves]
        y_ref, el_ref = refs[5 + n_leaves], refs[5 + n_leaves + 1]

        params = jax.tree_util.tree_unflatten(treedef, list(p_refs))
        ml_refs = params["ml"]
        head = params["head"]

        x = x_ref[...]                                # [N, 16]
        ea = ea_ref[...]                              # [E, 19]
        n, e = x.shape[0], ea.shape[0]

        row_e1 = row_e1_ref[...]                      # [E, 1] int32
        col_e1 = col_e1_ref[...]                      # [E, 1] int32
        col_1e = col_1e_ref[...]                      # [1, E] int32

        # One-hot gather / scatter matrices (MXU-friendly, built once).
        iota_en = jax.lax.broadcasted_iota(jnp.int32, (e, n), 1)
        oh_row_en = (iota_en == row_e1).astype(jnp.float32)   # x[row] gather [E, N]
        oh_col_en = (iota_en == col_e1).astype(jnp.float32)   # x[col] gather [E, N]
        iota_ne = jax.lax.broadcasted_iota(jnp.int32, (n, e), 0)
        oh_col_ne = (iota_ne == col_1e).astype(jnp.float32)   # scatter-sum  [N, E]

        for i in range(n_meta):
            edge_p = _slice_mlp(ml_refs["edge"], i)
            node1_p = _slice_mlp(ml_refs["node1"], i)
            node2_p = _slice_mlp(ml_refs["node2"], i)

            src = jnp.dot(oh_row_en, x, preferred_element_type=jnp.float32)  # x[row]
            dst = jnp.dot(oh_col_en, x, preferred_element_type=jnp.float32)  # x[col]

            # EdgeModel: mlp(cat([src, dst, edge_attr]))
            ea = _mlp3([src, dst, ea], edge_p)                 # [E, 19]
            # NodeModel: mlp1(cat([x[row], edge_attr])) -> scatter-sum -> mlp2
            msgs = _mlp3([src, ea], node1_p)                   # [E, 64]
            agg = jnp.dot(oh_col_ne, msgs,
                          preferred_element_type=jnp.float32)  # [N, 64]
            x = _mlp3([x, agg], node2_p)                       # [N, 16]
            # GlobalModel returns u unchanged (u is None throughout)

        y = jnp.dot(x, head["xw"][...],
                    preferred_element_type=jnp.float32) + head["xb"][...]
        el = jnp.dot(ea, head["ew"][...],
                     preferred_element_type=jnp.float32) + head["eb"][...]
        y_ref[...] = jax.nn.sigmoid(y)
        el_ref[...] = jax.nn.sigmoid(el)

    return kernel


# ---------------------------------------------------------------------------
# Parameter initialization (deterministic, PyTorch-default-style)
# ---------------------------------------------------------------------------
def _init_linear_split(key, in_dims, fan_out):
    total_in = sum(in_dims)
    bound = 1.0 / float(total_in) ** 0.5
    kw, kb = jax.random.split(key)
    w_full = jax.random.uniform(kw, (total_in, fan_out), jnp.float32, -bound, bound)
    b = jax.random.uniform(kb, (1, fan_out), jnp.float32, -bound, bound)
    ws, off = [], 0
    for d in in_dims:
        ws.append(w_full[off:off + d])
        off += d
    return ws, b


def _init_linear(key, fan_in, fan_out):
    (w,), b = _init_linear_split(key, [fan_in], fan_out)
    return w, b


def _init_bn(dim):
    return jnp.ones((1, dim), jnp.float32), jnp.zeros((1, dim), jnp.float32)


def init_mlp3(key, in_dims, d_hidden, d_out):
    k1, k2, k3 = jax.random.split(key, 3)
    w1s, b1 = _init_linear_split(k1, in_dims, d_hidden)
    in_chunks = []
    for d, w in zip(in_dims, w1s):
        g, be = _init_bn(d)
        in_chunks.append((g, be, w))
    g2, be2 = _init_bn(d_hidden)
    w2, b2 = _init_linear(k2, d_hidden, d_hidden)
    g3, be3 = _init_bn(d_hidden)
    w3, b3 = _init_linear(k3, d_hidden, d_out)
    return {
        "in": tuple(in_chunks), "b1": b1,
        "g2": g2, "be2": be2, "w2": w2, "b2": b2,
        "g3": g3, "be3": be3, "w3": w3, "b3": b3,
    }


def init_metalayer(key):
    ke, kn1, kn2 = jax.random.split(key, 3)
    return {
        # EdgeModel: cat([src, dst, edge_attr]) -> 51 -> 64 -> 64 -> 19
        "edge": init_mlp3(ke, [NODE_F, NODE_F, EDGE_F], LAYER, EDGE_F),
        # NodeModel mlp1: cat([x[row], edge_attr]) -> 35 -> 64 -> 64 -> 64
        "node1": init_mlp3(kn1, [NODE_F, EDGE_F], LAYER, LAYER),
        # NodeModel mlp2: cat([x, agg]) -> 80 -> 80 -> 80 -> 16
        "node2": init_mlp3(kn2, [NODE_F, LAYER], SECOND, NODE_F),
    }


def init_params(key):
    mkeys = jax.random.split(key, N_META + 2)
    layers = [init_metalayer(mkeys[i]) for i in range(N_META)]
    # Stack identical-shape per-metalayer params along a leading dim.
    stacked = jax.tree_util.tree_map(lambda *xs: jnp.stack(xs, axis=0), *layers)
    xw, xb = _init_linear(mkeys[N_META], NODE_F, 1)
    ew, eb = _init_linear(mkeys[N_META + 1], EDGE_F, 1)
    return {"ml": stacked, "head": {"xw": xw, "xb": xb, "ew": ew, "eb": eb}}


# ---------------------------------------------------------------------------
# Forward wrapper: one fused pallas_call for the whole model
# ---------------------------------------------------------------------------
def build_forward(params, num_nodes, num_edges):
    leaves, treedef = jax.tree_util.tree_flatten(params)
    kernel = _make_kernel(treedef, len(leaves), N_META)
    vspec = pl.BlockSpec(memory_space=pltpu.MemorySpace.VMEM)

    call = pl.pallas_call(
        kernel,
        out_shape=(jax.ShapeDtypeStruct((num_nodes, 1), jnp.float32),
                   jax.ShapeDtypeStruct((num_edges, 1), jnp.float32)),
        in_specs=[vspec] * (5 + len(leaves)),
        out_specs=(vspec, vspec),
    )

    def forward(x, edge_index, edge_attr, u, batch):
        del u, batch  # forward discards u; batch is unused by the used sub-modules
        row = edge_index[0].astype(jnp.int32)
        col = edge_index[1].astype(jnp.int32)
        return call(x, edge_attr,
                    row.reshape(num_edges, 1),
                    col.reshape(num_edges, 1),
                    col.reshape(1, num_edges),
                    *leaves)

    return forward


# ---------------------------------------------------------------------------
if __name__ == "__main__":
    root = jax.random.PRNGKey(0)
    k_params, k_x, k_e, k_ei = jax.random.split(root, 4)

    params = init_params(k_params)

    # Small synthetic graph: 8 nodes, 16 directed edges.
    N, E = 8, 16
    x = jax.random.normal(k_x, (N, NODE_F), jnp.float32)
    edge_attr = jax.random.normal(k_e, (E, EDGE_F), jnp.float32)
    edge_index = jax.random.randint(k_ei, (2, E), 0, N, jnp.int32)
    batch = jnp.zeros((N,), jnp.int32)
    u = None

    fwd = jax.jit(build_forward(params, N, E))
    y_pred, edge_label_pred = fwd(x, edge_index, edge_attr, u, batch)
    jax.block_until_ready((y_pred, edge_label_pred))

    assert y_pred.shape == (N, 1) and edge_label_pred.shape == (E, 1)
    assert bool(jnp.all(jnp.isfinite(y_pred))) and bool(jnp.all(jnp.isfinite(edge_label_pred)))
    print("KERNEL_OK")
</pallas_src>

<mosaic_0001>
module attributes {stable_mosaic.version = 11 : i64} {
  func.func @kernel(%arg0: memref<8x16xf32, #tpu.memory_space<vmem>>, %arg1: memref<16x19xf32, #tpu.memory_space<vmem>>, %arg2: memref<16x1xi32, #tpu.memory_space<vmem>>, %arg3: memref<16x1xi32, #tpu.memory_space<vmem>>, %arg4: memref<1x16xi32, #tpu.memory_space<vmem>>, %arg5: memref<1x1xf32, #tpu.memory_space<vmem>>, %arg6: memref<19x1xf32, #tpu.memory_space<vmem>>, %arg7: memref<1x1xf32, #tpu.memory_space<vmem>>, %arg8: memref<16x1xf32, #tpu.memory_space<vmem>>, %arg9: memref<3x1x64xf32, #tpu.memory_space<vmem>>, %arg10: memref<3x1x64xf32, #tpu.memory_space<vmem>>, %arg11: memref<3x1x19xf32, #tpu.memory_space<vmem>>, %arg12: memref<3x1x64xf32, #tpu.memory_space<vmem>>, %arg13: memref<3x1x64xf32, #tpu.memory_space<vmem>>, %arg14: memref<3x1x64xf32, #tpu.memory_space<vmem>>, %arg15: memref<3x1x64xf32, #tpu.memory_space<vmem>>, %arg16: memref<3x1x16xf32, #tpu.memory_space<vmem>>, %arg17: memref<3x1x16xf32, #tpu.memory_space<vmem>>, %arg18: memref<3x16x64xf32, #tpu.memory_space<vmem>>, %arg19: memref<3x1x16xf32, #tpu.memory_space<vmem>>, %arg20: memref<3x1x16xf32, #tpu.memory_space<vmem>>, %arg21: memref<3x16x64xf32, #tpu.memory_space<vmem>>, %arg22: memref<3x1x19xf32, #tpu.memory_space<vmem>>, %arg23: memref<3x1x19xf32, #tpu.memory_space<vmem>>, %arg24: memref<3x19x64xf32, #tpu.memory_space<vmem>>, %arg25: memref<3x64x64xf32, #tpu.memory_space<vmem>>, %arg26: memref<3x64x19xf32, #tpu.memory_space<vmem>>, %arg27: memref<3x1x64xf32, #tpu.memory_space<vmem>>, %arg28: memref<3x1x64xf32, #tpu.memory_space<vmem>>, %arg29: memref<3x1x64xf32, #tpu.memory_space<vmem>>, %arg30: memref<3x1x64xf32, #tpu.memory_space<vmem>>, %arg31: memref<3x1x64xf32, #tpu.memory_space<vmem>>, %arg32: memref<3x1x64xf32, #tpu.memory_space<vmem>>, %arg33: memref<3x1x64xf32, #tpu.memory_space<vmem>>, %arg34: memref<3x1x16xf32, #tpu.memory_space<vmem>>, %arg35: memref<3x1x16xf32, #tpu.memory_space<vmem>>, %arg36: memref<3x16x64xf32, #tpu.memory_space<vmem>>, %arg37: memref<3x1x19xf32, #tpu.memory_space<vmem>>, %arg38: memref<3x1x19xf32, #tpu.memory_space<vmem>>, %arg39: memref<3x19x64xf32, #tpu.memory_space<vmem>>, %arg40: memref<3x64x64xf32, #tpu.memory_space<vmem>>, %arg41: memref<3x64x64xf32, #tpu.memory_space<vmem>>, %arg42: memref<3x1x80xf32, #tpu.memory_space<vmem>>, %arg43: memref<3x1x80xf32, #tpu.memory_space<vmem>>, %arg44: memref<3x1x16xf32, #tpu.memory_space<vmem>>, %arg45: memref<3x1x80xf32, #tpu.memory_space<vmem>>, %arg46: memref<3x1x80xf32, #tpu.memory_space<vmem>>, %arg47: memref<3x1x80xf32, #tpu.memory_space<vmem>>, %arg48: memref<3x1x80xf32, #tpu.memory_space<vmem>>, %arg49: memref<3x1x16xf32, #tpu.memory_space<vmem>>, %arg50: memref<3x1x16xf32, #tpu.memory_space<vmem>>, %arg51: memref<3x16x80xf32, #tpu.memory_space<vmem>>, %arg52: memref<3x1x64xf32, #tpu.memory_space<vmem>>, %arg53: memref<3x1x64xf32, #tpu.memory_space<vmem>>, %arg54: memref<3x64x80xf32, #tpu.memory_space<vmem>>, %arg55: memref<3x80x80xf32, #tpu.memory_space<vmem>>, %arg56: memref<3x80x16xf32, #tpu.memory_space<vmem>>, %arg57: memref<8x1xf32, #tpu.memory_space<vmem>>, %arg58: memref<16x1xf32, #tpu.memory_space<vmem>>) attributes {dimension_semantics = [], scalar_prefetch = 0 : i64, scratch_operands = 0 : i64, tpu.core_type = #tpu.core_type<tc>} {
    %c0 = arith.constant 0 : index
    %c0_0 = arith.constant 0 : index
    %0 = vector.load %arg0[%c0, %c0_0] : memref<8x16xf32, #tpu.memory_space<vmem>>, vector<8x16xf32>
    %c0_1 = arith.constant 0 : index
    %c0_2 = arith.constant 0 : index
    %1 = vector.load %arg1[%c0_1, %c0_2] : memref<16x19xf32, #tpu.memory_space<vmem>>, vector<16x19xf32>
    %c0_3 = arith.constant 0 : index
    %c0_4 = arith.constant 0 : index
    %2 = vector.load %arg2[%c0_3, %c0_4] : memref<16x1xi32, #tpu.memory_space<vmem>>, vector<16x1xi32>
    %c0_5 = arith.constant 0 : index
    %c0_6 = arith.constant 0 : index
    %3 = vector.load %arg3[%c0_5, %c0_6] : memref<16x1xi32, #tpu.memory_space<vmem>>, vector<16x1xi32>
    %c0_7 = arith.constant 0 : index
    %c0_8 = arith.constant 0 : index
    %4 = vector.load %arg4[%c0_7, %c0_8] : memref<1x16xi32, #tpu.memory_space<vmem>>, vector<1x16xi32>
    %5 = tpu.iota {dimensions = array<i32: 1>} : vector<16x8xi32>
    %6 = vector.broadcast %2 : vector<16x1xi32> to vector<16x8xi32>
    %7 = arith.cmpi eq, %5, %6 : vector<16x8xi32>
    %8 = arith.extui %7 : vector<16x8xi1> to vector<16x8xi32>
    %9 = arith.sitofp %8 : vector<16x8xi32> to vector<16x8xf32>
    %10 = vector.broadcast %3 : vector<16x1xi32> to vector<16x8xi32>
    %11 = arith.cmpi eq, %5, %10 : vector<16x8xi32>
    %12 = arith.extui %11 : vector<16x8xi1> to vector<16x8xi32>
    %13 = arith.sitofp %12 : vector<16x8xi32> to vector<16x8xf32>
    %14 = tpu.iota {dimensions = array<i32: 0>} : vector<8x16xi32>
    %15 = vector.broadcast %4 : vector<1x16xi32> to vector<8x16xi32>
    %16 = arith.cmpi eq, %14, %15 : vector<8x16xi32>
    %17 = arith.extui %16 : vector<8x16xi1> to vector<8x16xi32>
    %18 = arith.sitofp %17 : vector<8x16xi32> to vector<8x16xf32>
    %c0_9 = arith.constant 0 : index
    %c0_10 = arith.constant 0 : index
    %c0_11 = arith.constant 0 : index
    %19 = vector.load %arg16[%c0_9, %c0_10, %c0_11] : memref<3x1x16xf32, #tpu.memory_space<vmem>>, vector<1x1x16xf32>
    %20 = vector.shape_cast %19 : vector<1x1x16xf32> to vector<1x16xf32>
    %c0_12 = arith.constant 0 : index
    %c0_13 = arith.constant 0 : index
    %c0_14 = arith.constant 0 : index
    %21 = vector.load %arg17[%c0_12, %c0_13, %c0_14] : memref<3x1x16xf32, #tpu.memory_space<vmem>>, vector<1x1x16xf32>
    %22 = vector.shape_cast %21 : vector<1x1x16xf32> to vector<1x16xf32>
    %c0_15 = arith.constant 0 : index
    %c0_16 = arith.constant 0 : index
    %c0_17 = arith.constant 0 : index
    %23 = vector.load %arg18[%c0_15, %c0_16, %c0_17] : memref<3x16x64xf32, #tpu.memory_space<vmem>>, vector<1x16x64xf32>
    %24 = vector.shape_cast %23 : vector<1x16x64xf32> to vector<16x64xf32>
    %c0_18 = arith.constant 0 : index
    %c0_19 = arith.constant 0 : index
    %c0_20 = arith.constant 0 : index
    %25 = vector.load %arg19[%c0_18, %c0_19, %c0_20] : memref<3x1x16xf32, #tpu.memory_space<vmem>>, vector<1x1x16xf32>
    %26 = vector.shape_cast %25 : vector<1x1x16xf32> to vector<1x16xf32>
    %c0_21 = arith.constant 0 : index
    %c0_22 = arith.constant 0 : index
    %c0_23 = arith.constant 0 : index
    %27 = vector.load %arg20[%c0_21, %c0_22, %c0_23] : memref<3x1x16xf32, #tpu.memory_space<vmem>>, vector<1x1x16xf32>
    %28 = vector.shape_cast %27 : vector<1x1x16xf32> to vector<1x16xf32>
    %c0_24 = arith.constant 0 : index
    %c0_25 = arith.constant 0 : index
    %c0_26 = arith.constant 0 : index
    %29 = vector.load %arg21[%c0_24, %c0_25, %c0_26] : memref<3x16x64xf32, #tpu.memory_space<vmem>>, vector<1x16x64xf32>
    %30 = vector.shape_cast %29 : vector<1x16x64xf32> to vector<16x64xf32>
    %c0_27 = arith.constant 0 : index
    %c0_28 = arith.constant 0 : index
    %c0_29 = arith.constant 0 : index
    %31 = vector.load %arg22[%c0_27, %c0_28, %c0_29] : memref<3x1x19xf32, #tpu.memory_space<vmem>>, vector<1x1x19xf32>
    %32 = vector.shape_cast %31 : vector<1x1x19xf32> to vector<1x19xf32>
    %c0_30 = arith.constant 0 : index
    %c0_31 = arith.constant 0 : index
    %c0_32 = arith.constant 0 : index
    %33 = vector.load %arg23[%c0_30, %c0_31, %c0_32] : memref<3x1x19xf32, #tpu.memory_space<vmem>>, vector<1x1x19xf32>
    %34 = vector.shape_cast %33 : vector<1x1x19xf32> to vector<1x19xf32>
    %c0_33 = arith.constant 0 : index
    %c0_34 = arith.constant 0 : index
    %c0_35 = arith.constant 0 : index
    %35 = vector.load %arg24[%c0_33, %c0_34, %c0_35] : memref<3x19x64xf32, #tpu.memory_space<vmem>>, vector<1x19x64xf32>
    %36 = vector.shape_cast %35 : vector<1x19x64xf32> to vector<19x64xf32>
    %c0_36 = arith.constant 0 : index
    %c0_37 = arith.constant 0 : index
    %c0_38 = arith.constant 0 : index
    %37 = vector.load %arg9[%c0_36, %c0_37, %c0_38] : memref<3x1x64xf32, #tpu.memory_space<vmem>>, vector<1x1x64xf32>
    %38 = vector.shape_cast %37 : vector<1x1x64xf32> to vector<1x64xf32>
    %c0_39 = arith.constant 0 : index
    %c0_40 = arith.constant 0 : index
    %c0_41 = arith.constant 0 : index
    %39 = vector.load %arg14[%c0_39, %c0_40, %c0_41] : memref<3x1x64xf32, #tpu.memory_space<vmem>>, vector<1x1x64xf32>
    %40 = vector.shape_cast %39 : vector<1x1x64xf32> to vector<1x64xf32>
    %c0_42 = arith.constant 0 : index
    %c0_43 = arith.constant 0 : index
    %c0_44 = arith.constant 0 : index
    %41 = vector.load %arg12[%c0_42, %c0_43, %c0_44] : memref<3x1x64xf32, #tpu.memory_space<vmem>>, vector<1x1x64xf32>
    %42 = vector.shape_cast %41 : vector<1x1x64xf32> to vector<1x64xf32>
    %c0_45 = arith.constant 0 : index
    %c0_46 = arith.constant 0 : index
    %c0_47 = arith.constant 0 : index
    %43 = vector.load %arg25[%c0_45, %c0_46, %c0_47] : memref<3x64x64xf32, #tpu.memory_space<vmem>>, vector<1x64x64xf32>
    %44 = vector.shape_cast %43 : vector<1x64x64xf32> to vector<64x64xf32>
    %c0_48 = arith.constant 0 : index
    %c0_49 = arith.constant 0 : index
    %c0_50 = arith.constant 0 : index
    %45 = vector.load %arg10[%c0_48, %c0_49, %c0_50] : memref<3x1x64xf32, #tpu.memory_space<vmem>>, vector<1x1x64xf32>
    %46 = vector.shape_cast %45 : vector<1x1x64xf32> to vector<1x64xf32>
    %c0_51 = arith.constant 0 : index
    %c0_52 = arith.constant 0 : index
    %c0_53 = arith.constant 0 : index
    %47 = vector.load %arg15[%c0_51, %c0_52, %c0_53] : memref<3x1x64xf32, #tpu.memory_space<vmem>>, vector<1x1x64xf32>
    %48 = vector.shape_cast %47 : vector<1x1x64xf32> to vector<1x64xf32>
    %c0_54 = arith.constant 0 : index
    %c0_55 = arith.constant 0 : index
    %c0_56 = arith.constant 0 : index
    %49 = vector.load %arg13[%c0_54, %c0_55, %c0_56] : memref<3x1x64xf32, #tpu.memory_space<vmem>>, vector<1x1x64xf32>
    %50 = vector.shape_cast %49 : vector<1x1x64xf32> to vector<1x64xf32>
    %c0_57 = arith.constant 0 : index
    %c0_58 = arith.constant 0 : index
    %c0_59 = arith.constant 0 : index
    %51 = vector.load %arg26[%c0_57, %c0_58, %c0_59] : memref<3x64x19xf32, #tpu.memory_space<vmem>>, vector<1x64x19xf32>
    %52 = vector.shape_cast %51 : vector<1x64x19xf32> to vector<64x19xf32>
    %c0_60 = arith.constant 0 : index
    %c0_61 = arith.constant 0 : index
    %c0_62 = arith.constant 0 : index
    %53 = vector.load %arg11[%c0_60, %c0_61, %c0_62] : memref<3x1x19xf32, #tpu.memory_space<vmem>>, vector<1x1x19xf32>
    %54 = vector.shape_cast %53 : vector<1x1x19xf32> to vector<1x19xf32>
    %c0_63 = arith.constant 0 : index
    %c0_64 = arith.constant 0 : index
    %c0_65 = arith.constant 0 : index
    %55 = vector.load %arg34[%c0_63, %c0_64, %c0_65] : memref<3x1x16xf32, #tpu.memory_space<vmem>>, vector<1x1x16xf32>
    %56 = vector.shape_cast %55 : vector<1x1x16xf32> to vector<1x16xf32>
    %c0_66 = arith.constant 0 : index
    %c0_67 = arith.constant 0 : index
    %c0_68 = arith.constant 0 : index
    %57 = vector.load %arg35[%c0_66, %c0_67, %c0_68] : memref<3x1x16xf32, #tpu.memory_space<vmem>>, vector<1x1x16xf32>
    %58 = vector.shape_cast %57 : vector<1x1x16xf32> to vector<1x16xf32>
    %c0_69 = arith.constant 0 : index
    %c0_70 = arith.constant 0 : index
    %c0_71 = arith.constant 0 : index
    %59 = vector.load %arg36[%c0_69, %c0_70, %c0_71] : memref<3x16x64xf32, #tpu.memory_space<vmem>>, vector<1x16x64xf32>
    %60 = vector.shape_cast %59 : vector<1x16x64xf32> to vector<16x64xf32>
    %c0_72 = arith.constant 0 : index
    %c0_73 = arith.constant 0 : index
    %c0_74 = arith.constant 0 : index
    %61 = vector.load %arg37[%c0_72, %c0_73, %c0_74] : memref<3x1x19xf32, #tpu.memory_space<vmem>>, vector<1x1x19xf32>
    %62 = vector.shape_cast %61 : vector<1x1x19xf32> to vector<1x19xf32>
    %c0_75 = arith.constant 0 : index
    %c0_76 = arith.constant 0 : index
    %c0_77 = arith.constant 0 : index
    %63 = vector.load %arg38[%c0_75, %c0_76, %c0_77] : memref<3x1x19xf32, #tpu.memory_space<vmem>>, vector<1x1x19xf32>
    %64 = vector.shape_cast %63 : vector<1x1x19xf32> to vector<1x19xf32>
    %c0_78 = arith.constant 0 : index
    %c0_79 = arith.constant 0 : index
    %c0_80 = arith.constant 0 : index
    %65 = vector.load %arg39[%c0_78, %c0_79, %c0_80] : memref<3x19x64xf32, #tpu.memory_space<vmem>>, vector<1x19x64xf32>
    %66 = vector.shape_cast %65 : vector<1x19x64xf32> to vector<19x64xf32>
    %c0_81 = arith.constant 0 : index
    %c0_82 = arith.constant 0 : index
    %c0_83 = arith.constant 0 : index
    %67 = vector.load %arg27[%c0_81, %c0_82, %c0_83] : memref<3x1x64xf32, #tpu.memory_space<vmem>>, vector<1x1x64xf32>
    %68 = vector.shape_cast %67 : vector<1x1x64xf32> to vector<1x64xf32>
    %c0_84 = arith.constant 0 : index
    %c0_85 = arith.constant 0 : index
    %c0_86 = arith.constant 0 : index
    %69 = vector.load %arg32[%c0_84, %c0_85, %c0_86] : memref<3x1x64xf32, #tpu.memory_space<vmem>>, vector<1x1x64xf32>
    %70 = vector.shape_cast %69 : vector<1x1x64xf32> to vector<1x64xf32>
    %c0_87 = arith.constant 0 : index
    %c0_88 = arith.constant 0 : index
    %c0_89 = arith.constant 0 : index
    %71 = vector.load %arg30[%c0_87, %c0_88, %c0_89] : memref<3x1x64xf32, #tpu.memory_space<vmem>>, vector<1x1x64xf32>
    %72 = vector.shape_cast %71 : vector<1x1x64xf32> to vector<1x64xf32>
    %c0_90 = arith.constant 0 : index
    %c0_91 = arith.constant 0 : index
    %c0_92 = arith.constant 0 : index
    %73 = vector.load %arg40[%c0_90, %c0_91, %c0_92] : memref<3x64x64xf32, #tpu.memory_space<vmem>>, vector<1x64x64xf32>
    %74 = vector.shape_cast %73 : vector<1x64x64xf32> to vector<64x64xf32>
    %c0_93 = arith.constant 0 : index
    %c0_94 = arith.constant 0 : index
    %c0_95 = arith.constant 0 : index
    %75 = vector.load %arg28[%c0_93, %c0_94, %c0_95] : memref<3x1x64xf32, #tpu.memory_space<vmem>>, vector<1x1x64xf32>
    %76 = vector.shape_cast %75 : vector<1x1x64xf32> to vector<1x64xf32>
    %c0_96 = arith.constant 0 : index
    %c0_97 = arith.constant 0 : index
    %c0_98 = arith.constant 0 : index
    %77 = vector.load %arg33[%c0_96, %c0_97, %c0_98] : memref<3x1x64xf32, #tpu.memory_space<vmem>>, vector<1x1x64xf32>
    %78 = vector.shape_cast %77 : vector<1x1x64xf32> to vector<1x64xf32>
    %c0_99 = arith.constant 0 : index
    %c0_100 = arith.constant 0 : index
    %c0_101 = arith.constant 0 : index
    %79 = vector.load %arg31[%c0_99, %c0_100, %c0_101] : memref<3x1x64xf32, #tpu.memory_space<vmem>>, vector<1x1x64xf32>
    %80 = vector.shape_cast %79 : vector<1x1x64xf32> to vector<1x64xf32>
    %c0_102 = arith.constant 0 : index
    %c0_103 = arith.constant 0 : index
    %c0_104 = arith.constant 0 : index
    %81 = vector.load %arg41[%c0_102, %c0_103, %c0_104] : memref<3x64x64xf32, #tpu.memory_space<vmem>>, vector<1x64x64xf32>
    %82 = vector.shape_cast %81 : vector<1x64x64xf32> to vector<64x64xf32>
    %c0_105 = arith.constant 0 : index
    %c0_106 = arith.constant 0 : index
    %c0_107 = arith.constant 0 : index
    %83 = vector.load %arg29[%c0_105, %c0_106, %c0_107] : memref<3x1x64xf32, #tpu.memory_space<vmem>>, vector<1x1x64xf32>
    %84 = vector.shape_cast %83 : vector<1x1x64xf32> to vector<1x64xf32>
    %c0_108 = arith.constant 0 : index
    %c0_109 = arith.constant 0 : index
    %c0_110 = arith.constant 0 : index
    %85 = vector.load %arg49[%c0_108, %c0_109, %c0_110] : memref<3x1x16xf32, #tpu.memory_space<vmem>>, vector<1x1x16xf32>
    %86 = vector.shape_cast %85 : vector<1x1x16xf32> to vector<1x16xf32>
    %c0_111 = arith.constant 0 : index
    %c0_112 = arith.constant 0 : index
    %c0_113 = arith.constant 0 : index
    %87 = vector.load %arg50[%c0_111, %c0_112, %c0_113] : memref<3x1x16xf32, #tpu.memory_space<vmem>>, vector<1x1x16xf32>
    %88 = vector.shape_cast %87 : vector<1x1x16xf32> to vector<1x16xf32>
    %c0_114 = arith.constant 0 : index
    %c0_115 = arith.constant 0 : index
    %c0_116 = arith.constant 0 : index
    %89 = vector.load %arg51[%c0_114, %c0_115, %c0_116] : memref<3x16x80xf32, #tpu.memory_space<vmem>>, vector<1x16x80xf32>
    %90 = vector.shape_cast %89 : vector<1x16x80xf32> to vector<16x80xf32>
    %c0_117 = arith.constant 0 : index
    %c0_118 = arith.constant 0 : index
    %c0_119 = arith.constant 0 : index
    %91 = vector.load %arg52[%c0_117, %c0_118, %c0_119] : memref<3x1x64xf32, #tpu.memory_space<vmem>>, vector<1x1x64xf32>
    %92 = vector.shape_cast %91 : vector<1x1x64xf32> to vector<1x64xf32>
    %c0_120 = arith.constant 0 : index
    %c0_121 = arith.constant 0 : index
    %c0_122 = arith.constant 0 : index
    %93 = vector.load %arg53[%c0_120, %c0_121, %c0_122] : memref<3x1x64xf32, #tpu.memory_space<vmem>>, vector<1x1x64xf32>
    %94 = vector.shape_cast %93 : vector<1x1x64xf32> to vector<1x64xf32>
    %c0_123 = arith.constant 0 : index
    %c0_124 = arith.constant 0 : index
    %c0_125 = arith.constant 0 : index
    %95 = vector.load %arg54[%c0_123, %c0_124, %c0_125] : memref<3x64x80xf32, #tpu.memory_space<vmem>>, vector<1x64x80xf32>
    %96 = vector.shape_cast %95 : vector<1x64x80xf32> to vector<64x80xf32>
    %c0_126 = arith.constant 0 : index
    %c0_127 = arith.constant 0 : index
    %c0_128 = arith.constant 0 : index
    %97 = vector.load %arg42[%c0_126, %c0_127, %c0_128] : memref<3x1x80xf32, #tpu.memory_space<vmem>>, vector<1x1x80xf32>
    %98 = vector.shape_cast %97 : vector<1x1x80xf32> to vector<1x80xf32>
    %c0_129 = arith.constant 0 : index
    %c0_130 = arith.constant 0 : index
    %c0_131 = arith.constant 0 : index
    %99 = vector.load %arg47[%c0_129, %c0_130, %c0_131] : memref<3x1x80xf32, #tpu.memory_space<vmem>>, vector<1x1x80xf32>
    %100 = vector.shape_cast %99 : vector<1x1x80xf32> to vector<1x80xf32>
    %c0_132 = arith.constant 0 : index
    %c0_133 = arith.constant 0 : index
    %c0_134 = arith.constant 0 : index
    %101 = vector.load %arg45[%c0_132, %c0_133, %c0_134] : memref<3x1x80xf32, #tpu.memory_space<vmem>>, vector<1x1x80xf32>
    %102 = vector.shape_cast %101 : vector<1x1x80xf32> to vector<1x80xf32>
    %c0_135 = arith.constant 0 : index
    %c0_136 = arith.constant 0 : index
    %c0_137 = arith.constant 0 : index
    %103 = vector.load %arg55[%c0_135, %c0_136, %c0_137] : memref<3x80x80xf32, #tpu.memory_space<vmem>>, vector<1x80x80xf32>
    %104 = vector.shape_cast %103 : vector<1x80x80xf32> to vector<80x80xf32>
    %c0_138 = arith.constant 0 : index
    %c0_139 = arith.constant 0 : index
    %c0_140 = arith.constant 0 : index
    %105 = vector.load %arg43[%c0_138, %c0_139, %c0_140] : memref<3x1x80xf32, #tpu.memory_space<vmem>>, vector<1x1x80xf32>
    %106 = vector.shape_cast %105 : vector<1x1x80xf32> to vector<1x80xf32>
    %c0_141 = arith.constant 0 : index
    %c0_142 = arith.constant 0 : index
    %c0_143 = arith.constant 0 : index
    %107 = vector.load %arg48[%c0_141, %c0_142, %c0_143] : memref<3x1x80xf32, #tpu.memory_space<vmem>>, vector<1x1x80xf32>
    %108 = vector.shape_cast %107 : vector<1x1x80xf32> to vector<1x80xf32>
    %c0_144 = arith.constant 0 : index
    %c0_145 = arith.constant 0 : index
    %c0_146 = arith.constant 0 : index
    %109 = vector.load %arg46[%c0_144, %c0_145, %c0_146] : memref<3x1x80xf32, #tpu.memory_space<vmem>>, vector<1x1x80xf32>
    %110 = vector.shape_cast %109 : vector<1x1x80xf32> to vector<1x80xf32>
    %c0_147 = arith.constant 0 : index
    %c0_148 = arith.constant 0 : index
    %c0_149 = arith.constant 0 : index
    %111 = vector.load %arg56[%c0_147, %c0_148, %c0_149] : memref<3x80x16xf32, #tpu.memory_space<vmem>>, vector<1x80x16xf32>
    %112 = vector.shape_cast %111 : vector<1x80x16xf32> to vector<80x16xf32>
    %c0_150 = arith.constant 0 : index
    %c0_151 = arith.constant 0 : index
    %c0_152 = arith.constant 0 : index
    %113 = vector.load %arg44[%c0_150, %c0_151, %c0_152] : memref<3x1x16xf32, #tpu.memory_space<vmem>>, vector<1x1x16xf32>
    %114 = vector.shape_cast %113 : vector<1x1x16xf32> to vector<1x16xf32>
    %cst = arith.constant dense<0.000000e+00> : vector<16x16xf32>
    %115 = tpu.matmul %9, %0, %cst {dimension_numbers = #tpu.dot_dimension_numbers<[1], [0], [0], [1], [0, 0, 1, 1], [], []>} : vector<16x8xf32>, vector<8x16xf32>, vector<16x16xf32> -> vector<16x16xf32>
    %cst_153 = arith.constant dense<0.000000e+00> : vector<16x16xf32>
    %116 = tpu.matmul %13, %0, %cst_153 {dimension_numbers = #tpu.dot_dimension_numbers<[1], [0], [0], [1], [0, 0, 1, 1], [], []>} : vector<16x8xf32>, vector<8x16xf32>, vector<16x16xf32> -> vector<16x16xf32>
    %cst_154 = arith.constant dense<0.000000e+00> : vector<16xf32>
    %117 = vector.multi_reduction <add>, %115, %cst_154 [0] : vector<16x16xf32> to vector<16xf32>
    %118 = vector.shape_cast %117 : vector<16xf32> to vector<1x16xf32>
    %cst_155 = arith.constant 1.600000e+01 : f32
    %119 = vector.broadcast %cst_155 : f32 to vector<1x16xf32>
    %120 = arith.divf %118, %119 : vector<1x16xf32>
    %121 = vector.broadcast %120 : vector<1x16xf32> to vector<16x16xf32>
    %122 = arith.subf %115, %121 : vector<16x16xf32>
    %123 = arith.mulf %122, %122 : vector<16x16xf32>
    %cst_156 = arith.constant dense<0.000000e+00> : vector<16xf32>
    %124 = vector.multi_reduction <add>, %123, %cst_156 [0] : vector<16x16xf32> to vector<16xf32>
    %125 = vector.shape_cast %124 : vector<16xf32> to vector<1x16xf32>
    %cst_157 = arith.constant 1.600000e+01 : f32
    %126 = vector.broadcast %cst_157 : f32 to vector<1x16xf32>
    %127 = arith.divf %125, %126 : vector<1x16xf32>
    %128 = vector.broadcast %120 : vector<1x16xf32> to vector<16x16xf32>
    %129 = arith.subf %115, %128 : vector<16x16xf32>
    %cst_158 = arith.constant 9.99999974E-6 : f32
    %130 = vector.broadcast %cst_158 : f32 to vector<1x16xf32>
    %131 = arith.addf %127, %130 : vector<1x16xf32>
    %132 = math.rsqrt %131 : vector<1x16xf32>
    %133 = vector.broadcast %132 : vector<1x16xf32> to vector<16x16xf32>
    %134 = arith.mulf %129, %133 : vector<16x16xf32>
    %135 = vector.broadcast %20 : vector<1x16xf32> to vector<16x16xf32>
    %136 = arith.mulf %134, %135 : vector<16x16xf32>
    %137 = vector.broadcast %22 : vector<1x16xf32> to vector<16x16xf32>
    %138 = arith.addf %136, %137 : vector<16x16xf32>
    %cst_159 = arith.constant dense<0.000000e+00> : vector<16x64xf32>
    %139 = tpu.matmul %138, %24, %cst_159 {dimension_numbers = #tpu.dot_dimension_numbers<[1], [0], [0], [1], [0, 0, 1, 1], [], []>} : vector<16x16xf32>, vector<16x64xf32>, vector<16x64xf32> -> vector<16x64xf32>
    %cst_160 = arith.constant dense<0.000000e+00> : vector<16xf32>
    %140 = vector.multi_reduction <add>, %116, %cst_160 [0] : vector<16x16xf32> to vector<16xf32>
    %141 = vector.shape_cast %140 : vector<16xf32> to vector<1x16xf32>
    %cst_161 = arith.constant 1.600000e+01 : f32
    %142 = vector.broadcast %cst_161 : f32 to vector<1x16xf32>
    %143 = arith.divf %141, %142 : vector<1x16xf32>
    %144 = vector.broadcast %143 : vector<1x16xf32> to vector<16x16xf32>
    %145 = arith.subf %116, %144 : vector<16x16xf32>
    %146 = arith.mulf %145, %145 : vector<16x16xf32>
    %cst_162 = arith.constant dense<0.000000e+00> : vector<16xf32>
    %147 = vector.multi_reduction <add>, %146, %cst_162 [0] : vector<16x16xf32> to vector<16xf32>
    %148 = vector.shape_cast %147 : vector<16xf32> to vector<1x16xf32>
    %cst_163 = arith.constant 1.600000e+01 : f32
    %149 = vector.broadcast %cst_163 : f32 to vector<1x16xf32>
    %150 = arith.divf %148, %149 : vector<1x16xf32>
    %151 = vector.broadcast %143 : vector<1x16xf32> to vector<16x16xf32>
    %152 = arith.subf %116, %151 : vector<16x16xf32>
    %cst_164 = arith.constant 9.99999974E-6 : f32
    %153 = vector.broadcast %cst_164 : f32 to vector<1x16xf32>
    %154 = arith.addf %150, %153 : vector<1x16xf32>
    %155 = math.rsqrt %154 : vector<1x16xf32>
    %156 = vector.broadcast %155 : vector<1x16xf32> to vector<16x16xf32>
    %157 = arith.mulf %152, %156 : vector<16x16xf32>
    %158 = vector.broadcast %26 : vector<1x16xf32> to vector<16x16xf32>
    %159 = arith.mulf %157, %158 : vector<16x16xf32>
    %160 = vector.broadcast %28 : vector<1x16xf32> to vector<16x16xf32>
    %161 = arith.addf %159, %160 : vector<16x16xf32>
    %cst_165 = arith.constant dense<0.000000e+00> : vector<16x64xf32>
    %162 = tpu.matmul %161, %30, %cst_165 {dimension_numbers = #tpu.dot_dimension_numbers<[1], [0], [0], [1], [0, 0, 1, 1], [], []>} : vector<16x16xf32>, vector<16x64xf32>, vector<16x64xf32> -> vector<16x64xf32>
    %163 = arith.addf %139, %162 : vector<16x64xf32>
    %cst_166 = arith.constant dense<0.000000e+00> : vector<19xf32>
    %164 = vector.multi_reduction <add>, %1, %cst_166 [0] : vector<16x19xf32> to vector<19xf32>
    %165 = vector.shape_cast %164 : vector<19xf32> to vector<1x19xf32>
    %cst_167 = arith.constant 1.600000e+01 : f32
    %166 = vector.broadcast %cst_167 : f32 to vector<1x19xf32>
    %167 = arith.divf %165, %166 : vector<1x19xf32>
    %168 = vector.broadcast %167 : vector<1x19xf32> to vector<16x19xf32>
    %169 = arith.subf %1, %168 : vector<16x19xf32>
    %170 = arith.mulf %169, %169 : vector<16x19xf32>
    %cst_168 = arith.constant dense<0.000000e+00> : vector<19xf32>
    %171 = vector.multi_reduction <add>, %170, %cst_168 [0] : vector<16x19xf32> to vector<19xf32>
    %172 = vector.shape_cast %171 : vector<19xf32> to vector<1x19xf32>
    %cst_169 = arith.constant 1.600000e+01 : f32
    %173 = vector.broadcast %cst_169 : f32 to vector<1x19xf32>
    %174 = arith.divf %172, %173 : vector<1x19xf32>
    %175 = vector.broadcast %167 : vector<1x19xf32> to vector<16x19xf32>
    %176 = arith.subf %1, %175 : vector<16x19xf32>
    %cst_170 = arith.constant 9.99999974E-6 : f32
    %177 = vector.broadcast %cst_170 : f32 to vector<1x19xf32>
    %178 = arith.addf %174, %177 : vector<1x19xf32>
    %179 = math.rsqrt %178 : vector<1x19xf32>
    %180 = vector.broadcast %179 : vector<1x19xf32> to vector<16x19xf32>
    %181 = arith.mulf %176, %180 : vector<16x19xf32>
    %182 = vector.broadcast %32 : vector<1x19xf32> to vector<16x19xf32>
    %183 = arith.mulf %181, %182 : vector<16x19xf32>
    %184 = vector.broadcast %34 : vector<1x19xf32> to vector<16x19xf32>
    %185 = arith.addf %183, %184 : vector<16x19xf32>
    %cst_171 = arith.constant dense<0.000000e+00> : vector<16x64xf32>
    %186 = tpu.matmul %185, %36, %cst_171 {dimension_numbers = #tpu.dot_dimension_numbers<[1], [0], [0], [1], [0, 0, 1, 1], [], []>} : vector<16x19xf32>, vector<19x64xf32>, vector<16x64xf32> -> vector<16x64xf32>
    %187 = arith.addf %163, %186 : vector<16x64xf32>
    %188 = vector.broadcast %38 : vector<1x64xf32> to vector<16x64xf32>
    %189 = arith.addf %187, %188 : vector<16x64xf32>
    %cst_172 = arith.constant 0.000000e+00 : f32
    %190 = vector.broadcast %cst_172 : f32 to vector<16x64xf32>
    %191 = arith.cmpf oge, %189, %190 : vector<16x64xf32>
    %cst_173 = arith.constant 1.000000e-01 : f32
    %192 = vector.broadcast %cst_173 : f32 to vector<16x64xf32>
    %193 = arith.mulf %192, %189 : vector<16x64xf32>
    %194 = arith.select %191, %189, %193 : vector<16x64xi1>, vector<16x64xf32>
    %cst_174 = arith.constant dense<0.000000e+00> : vector<64xf32>
    %195 = vector.multi_reduction <add>, %194, %cst_174 [0] : vector<16x64xf32> to vector<64xf32>
    %196 = vector.shape_cast %195 : vector<64xf32> to vector<1x64xf32>
    %cst_175 = arith.constant 1.600000e+01 : f32
    %197 = vector.broadcast %cst_175 : f32 to vector<1x64xf32>
    %198 = arith.divf %196, %197 : vector<1x64xf32>
    %199 = vector.broadcast %198 : vector<1x64xf32> to vector<16x64xf32>
    %200 = arith.subf %194, %199 : vector<16x64xf32>
    %201 = arith.mulf %200, %200 : vector<16x64xf32>
    %cst_176 = arith.constant dense<0.000000e+00> : vector<64xf32>
    %202 = vector.multi_reduction <add>, %201, %cst_176 [0] : vector<16x64xf32> to vector<64xf32>
    %203 = vector.shape_cast %202 : vector<64xf32> to vector<1x64xf32>
    %cst_177 = arith.constant 1.600000e+01 : f32
    %204 = vector.broadcast %cst_177 : f32 to vector<1x64xf32>
    %205 = arith.divf %203, %204 : vector<1x64xf32>
    %206 = vector.broadcast %198 : vector<1x64xf32> to vector<16x64xf32>
    %207 = arith.subf %194, %206 : vector<16x64xf32>
    %cst_178 = arith.constant 9.99999974E-6 : f32
    %208 = vector.broadcast %cst_178 : f32 to vector<1x64xf32>
    %209 = arith.addf %205, %208 : vector<1x64xf32>
    %210 = math.rsqrt %209 : vector<1x64xf32>
    %211 = vector.broadcast %210 : vector<1x64xf32> to vector<16x64xf32>
    %212 = arith.mulf %207, %211 : vector<16x64xf32>
    %213 = vector.broadcast %40 : vector<1x64xf32> to vector<16x64xf32>
    %214 = arith.mulf %212, %213 : vector<16x64xf32>
    %215 = vector.broadcast %42 : vector<1x64xf32> to vector<16x64xf32>
    %216 = arith.addf %214, %215 : vector<16x64xf32>
    %cst_179 = arith.constant dense<0.000000e+00> : vector<16x64xf32>
    %217 = tpu.matmul %216, %44, %cst_179 {dimension_numbers = #tpu.dot_dimension_numbers<[1], [0], [0], [1], [0, 0, 1, 1], [], []>} : vector<16x64xf32>, vector<64x64xf32>, vector<16x64xf32> -> vector<16x64xf32>
    %218 = vector.broadcast %46 : vector<1x64xf32> to vector<16x64xf32>
    %219 = arith.addf %217, %218 : vector<16x64xf32>
    %cst_180 = arith.constant 0.000000e+00 : f32
    %220 = vector.broadcast %cst_180 : f32 to vector<16x64xf32>
    %221 = arith.cmpf oge, %219, %220 : vector<16x64xf32>
    %cst_181 = arith.constant 1.000000e-01 : f32
    %222 = vector.broadcast %cst_181 : f32 to vector<16x64xf32>
    %223 = arith.mulf %222, %219 : vector<16x64xf32>
    %224 = arith.select %221, %219, %223 : vector<16x64xi1>, vector<16x64xf32>
    %cst_182 = arith.constant dense<0.000000e+00> : vector<64xf32>
    %225 = vector.multi_reduction <add>, %224, %cst_182 [0] : vector<16x64xf32> to vector<64xf32>
    %226 = vector.shape_cast %225 : vector<64xf32> to vector<1x64xf32>
    %cst_183 = arith.constant 1.600000e+01 : f32
    %227 = vector.broadcast %cst_183 : f32 to vector<1x64xf32>
    %228 = arith.divf %226, %227 : vector<1x64xf32>
    %229 = vector.broadcast %228 : vector<1x64xf32> to vector<16x64xf32>
    %230 = arith.subf %224, %229 : vector<16x64xf32>
    %231 = arith.mulf %230, %230 : vector<16x64xf32>
    %cst_184 = arith.constant dense<0.000000e+00> : vector<64xf32>
    %232 = vector.multi_reduction <add>, %231, %cst_184 [0] : vector<16x64xf32> to vector<64xf32>
    %233 = vector.shape_cast %232 : vector<64xf32> to vector<1x64xf32>
    %cst_185 = arith.constant 1.600000e+01 : f32
    %234 = vector.broadcast %cst_185 : f32 to vector<1x64xf32>
    %235 = arith.divf %233, %234 : vector<1x64xf32>
    %236 = vector.broadcast %228 : vector<1x64xf32> to vector<16x64xf32>
    %237 = arith.subf %224, %236 : vector<16x64xf32>
    %cst_186 = arith.constant 9.99999974E-6 : f32
    %238 = vector.broadcast %cst_186 : f32 to vector<1x64xf32>
    %239 = arith.addf %235, %238 : vector<1x64xf32>
    %240 = math.rsqrt %239 : vector<1x64xf32>
    %241 = vector.broadcast %240 : vector<1x64xf32> to vector<16x64xf32>
    %242 = arith.mulf %237, %241 : vector<16x64xf32>
    %243 = vector.broadcast %48 : vector<1x64xf32> to vector<16x64xf32>
    %244 = arith.mulf %242, %243 : vector<16x64xf32>
    %245 = vector.broadcast %50 : vector<1x64xf32> to vector<16x64xf32>
    %246 = arith.addf %244, %245 : vector<16x64xf32>
    %cst_187 = arith.constant dense<0.000000e+00> : vector<16x19xf32>
    %247 = tpu.matmul %246, %52, %cst_187 {dimension_numbers = #tpu.dot_dimension_numbers<[1], [0], [0], [1], [0, 0, 1, 1], [], []>} : vector<16x64xf32>, vector<64x19xf32>, vector<16x19xf32> -> vector<16x19xf32>
    %248 = vector.broadcast %54 : vector<1x19xf32> to vector<16x19xf32>
    %249 = arith.addf %247, %248 : vector<16x19xf32>
    %cst_188 = arith.constant dense<0.000000e+00> : vector<16xf32>
    %250 = vector.multi_reduction <add>, %115, %cst_188 [0] : vector<16x16xf32> to vector<16xf32>
    %251 = vector.shape_cast %250 : vector<16xf32> to vector<1x16xf32>
    %cst_189 = arith.constant 1.600000e+01 : f32
    %252 = vector.broadcast %cst_189 : f32 to vector<1x16xf32>
    %253 = arith.divf %251, %252 : vector<1x16xf32>
    %254 = vector.broadcast %253 : vector<1x16xf32> to vector<16x16xf32>
    %255 = arith.subf %115, %254 : vector<16x16xf32>
    %256 = arith.mulf %255, %255 : vector<16x16xf32>
    %cst_190 = arith.constant dense<0.000000e+00> : vector<16xf32>
    %257 = vector.multi_reduction <add>, %256, %cst_190 [0] : vector<16x16xf32> to vector<16xf32>
    %258 = vector.shape_cast %257 : vector<16xf32> to vector<1x16xf32>
    %cst_191 = arith.constant 1.600000e+01 : f32
    %259 = vector.broadcast %cst_191 : f32 to vector<1x16xf32>
    %260 = arith.divf %258, %259 : vector<1x16xf32>
    %261 = vector.broadcast %253 : vector<1x16xf32> to vector<16x16xf32>
    %262 = arith.subf %115, %261 : vector<16x16xf32>
    %cst_192 = arith.constant 9.99999974E-6 : f32
    %263 = vector.broadcast %cst_192 : f32 to vector<1x16xf32>
    %264 = arith.addf %260, %263 : vector<1x16xf32>
    %265 = math.rsqrt %264 : vector<1x16xf32>
    %266 = vector.broadcast %265 : vector<1x16xf32> to vector<16x16xf32>
    %267 = arith.mulf %262, %266 : vector<16x16xf32>
    %268 = vector.broadcast %56 : vector<1x16xf32> to vector<16x16xf32>
    %269 = arith.mulf %267, %268 : vector<16x16xf32>
    %270 = vector.broadcast %58 : vector<1x16xf32> to vector<16x16xf32>
    %271 = arith.addf %269, %270 : vector<16x16xf32>
    %cst_193 = arith.constant dense<0.000000e+00> : vector<16x64xf32>
    %272 = tpu.matmul %271, %60, %cst_193 {dimension_numbers = #tpu.dot_dimension_numbers<[1], [0], [0], [1], [0, 0, 1, 1], [], []>} : vector<16x16xf32>, vector<16x64xf32>, vector<16x64xf32> -> vector<16x64xf32>
    %cst_194 = arith.constant dense<0.000000e+00> : vector<19xf32>
    %273 = vector.multi_reduction <add>, %249, %cst_194 [0] : vector<16x19xf32> to vector<19xf32>
    %274 = vector.shape_cast %273 : vector<19xf32> to vector<1x19xf32>
    %cst_195 = arith.constant 1.600000e+01 : f32
    %275 = vector.broadcast %cst_195 : f32 to vector<1x19xf32>
    %276 = arith.divf %274, %275 : vector<1x19xf32>
    %277 = vector.broadcast %276 : vector<1x19xf32> to vector<16x19xf32>
    %278 = arith.subf %249, %277 : vector<16x19xf32>
    %279 = arith.mulf %278, %278 : vector<16x19xf32>
    %cst_196 = arith.constant dense<0.000000e+00> : vector<19xf32>
    %280 = vector.multi_reduction <add>, %279, %cst_196 [0] : vector<16x19xf32> to vector<19xf32>
    %281 = vector.shape_cast %280 : vector<19xf32> to vector<1x19xf32>
    %cst_197 = arith.constant 1.600000e+01 : f32
    %282 = vector.broadcast %cst_197 : f32 to vector<1x19xf32>
    %283 = arith.divf %281, %282 : vector<1x19xf32>
    %284 = vector.broadcast %276 : vector<1x19xf32> to vector<16x19xf32>
    %285 = arith.subf %249, %284 : vector<16x19xf32>
    %cst_198 = arith.constant 9.99999974E-6 : f32
    %286 = vector.broadcast %cst_198 : f32 to vector<1x19xf32>
    %287 = arith.addf %283, %286 : vector<1x19xf32>
    %288 = math.rsqrt %287 : vector<1x19xf32>
    %289 = vector.broadcast %288 : vector<1x19xf32> to vector<16x19xf32>
    %290 = arith.mulf %285, %289 : vector<16x19xf32>
    %291 = vector.broadcast %62 : vector<1x19xf32> to vector<16x19xf32>
    %292 = arith.mulf %290, %291 : vector<16x19xf32>
    %293 = vector.broadcast %64 : vector<1x19xf32> to vector<16x19xf32>
    %294 = arith.addf %292, %293 : vector<16x19xf32>
    %cst_199 = arith.constant dense<0.000000e+00> : vector<16x64xf32>
    %295 = tpu.matmul %294, %66, %cst_199 {dimension_numbers = #tpu.dot_dimension_numbers<[1], [0], [0], [1], [0, 0, 1, 1], [], []>} : vector<16x19xf32>, vector<19x64xf32>, vector<16x64xf32> -> vector<16x64xf32>
    %296 = arith.addf %272, %295 : vector<16x64xf32>
    %297 = vector.broadcast %68 : vector<1x64xf32> to vector<16x64xf32>
    %298 = arith.addf %296, %297 : vector<16x64xf32>
    %cst_200 = arith.constant 0.000000e+00 : f32
    %299 = vector.broadcast %cst_200 : f32 to vector<16x64xf32>
    %300 = arith.cmpf oge, %298, %299 : vector<16x64xf32>
    %cst_201 = arith.constant 1.000000e-01 : f32
    %301 = vector.broadcast %cst_201 : f32 to vector<16x64xf32>
    %302 = arith.mulf %301, %298 : vector<16x64xf32>
    %303 = arith.select %300, %298, %302 : vector<16x64xi1>, vector<16x64xf32>
    %cst_202 = arith.constant dense<0.000000e+00> : vector<64xf32>
    %304 = vector.multi_reduction <add>, %303, %cst_202 [0] : vector<16x64xf32> to vector<64xf32>
    %305 = vector.shape_cast %304 : vector<64xf32> to vector<1x64xf32>
    %cst_203 = arith.constant 1.600000e+01 : f32
    %306 = vector.broadcast %cst_203 : f32 to vector<1x64xf32>
    %307 = arith.divf %305, %306 : vector<1x64xf32>
    %308 = vector.broadcast %307 : vector<1x64xf32> to vector<16x64xf32>
    %309 = arith.subf %303, %308 : vector<16x64xf32>
    %310 = arith.mulf %309, %309 : vector<16x64xf32>
    %cst_204 = arith.constant dense<0.000000e+00> : vector<64xf32>
    %311 = vector.multi_reduction <add>, %310, %cst_204 [0] : vector<16x64xf32> to vector<64xf32>
    %312 = vector.shape_cast %311 : vector<64xf32> to vector<1x64xf32>
    %cst_205 = arith.constant 1.600000e+01 : f32
    %313 = vector.broadcast %cst_205 : f32 to vector<1x64xf32>
    %314 = arith.divf %312, %313 : vector<1x64xf32>
    %315 = vector.broadcast %307 : vector<1x64xf32> to vector<16x64xf32>
    %316 = arith.subf %303, %315 : vector<16x64xf32>
    %cst_206 = arith.constant 9.99999974E-6 : f32
    %317 = vector.broadcast %cst_206 : f32 to vector<1x64xf32>
    %318 = arith.addf %314, %317 : vector<1x64xf32>
    %319 = math.rsqrt %318 : vector<1x64xf32>
    %320 = vector.broadcast %319 : vector<1x64xf32> to vector<16x64xf32>
    %321 = arith.mulf %316, %320 : vector<16x64xf32>
    %322 = vector.broadcast %70 : vector<1x64xf32> to vector<16x64xf32>
    %323 = arith.mulf %321, %322 : vector<16x64xf32>
    %324 = vector.broadcast %72 : vector<1x64xf32> to vector<16x64xf32>
    %325 = arith.addf %323, %324 : vector<16x64xf32>
    %cst_207 = arith.constant dense<0.000000e+00> : vector<16x64xf32>
    %326 = tpu.matmul %325, %74, %cst_207 {dimension_numbers = #tpu.dot_dimension_numbers<[1], [0], [0], [1], [0, 0, 1, 1], [], []>} : vector<16x64xf32>, vector<64x64xf32>, vector<16x64xf32> -> vector<16x64xf32>
    %327 = vector.broadcast %76 : vector<1x64xf32> to vector<16x64xf32>
    %328 = arith.addf %326, %327 : vector<16x64xf32>
    %cst_208 = arith.constant 0.000000e+00 : f32
    %329 = vector.broadcast %cst_208 : f32 to vector<16x64xf32>
    %330 = arith.cmpf oge, %328, %329 : vector<16x64xf32>
    %cst_209 = arith.constant 1.000000e-01 : f32
    %331 = vector.broadcast %cst_209 : f32 to vector<16x64xf32>
    %332 = arith.mulf %331, %328 : vector<16x64xf32>
    %333 = arith.select %330, %328, %332 : vector<16x64xi1>, vector<16x64xf32>
    %cst_210 = arith.constant dense<0.000000e+00> : vector<64xf32>
    %334 = vector.multi_reduction <add>, %333, %cst_210 [0] : vector<16x64xf32> to vector<64xf32>
    %335 = vector.shape_cast %334 : vector<64xf32> to vector<1x64xf32>
    %cst_211 = arith.constant 1.600000e+01 : f32
    %336 = vector.broadcast %cst_211 : f32 to vector<1x64xf32>
    %337 = arith.divf %335, %336 : vector<1x64xf32>
    %338 = vector.broadcast %337 : vector<1x64xf32> to vector<16x64xf32>
    %339 = arith.subf %333, %338 : vector<16x64xf32>
    %340 = arith.mulf %339, %339 : vector<16x64xf32>
    %cst_212 = arith.constant dense<0.000000e+00> : vector<64xf32>
    %341 = vector.multi_reduction <add>, %340, %cst_212 [0] : vector<16x64xf32> to vector<64xf32>
    %342 = vector.shape_cast %341 : vector<64xf32> to vector<1x64xf32>
    %cst_213 = arith.constant 1.600000e+01 : f32
    %343 = vector.broadcast %cst_213 : f32 to vector<1x64xf32>
    %344 = arith.divf %342, %343 : vector<1x64xf32>
    %345 = vector.broadcast %337 : vector<1x64xf32> to vector<16x64xf32>
    %346 = arith.subf %333, %345 : vector<16x64xf32>
    %cst_214 = arith.constant 9.99999974E-6 : f32
    %347 = vector.broadcast %cst_214 : f32 to vector<1x64xf32>
    %348 = arith.addf %344, %347 : vector<1x64xf32>
    %349 = math.rsqrt %348 : vector<1x64xf32>
    %350 = vector.broadcast %349 : vector<1x64xf32> to vector<16x64xf32>
    %351 = arith.mulf %346, %350 : vector<16x64xf32>
    %352 = vector.broadcast %78 : vector<1x64xf32> to vector<16x64xf32>
    %353 = arith.mulf %351, %352 : vector<16x64xf32>
    %354 = vector.broadcast %80 : vector<1x64xf32> to vector<16x64xf32>
    %355 = arith.addf %353, %354 : vector<16x64xf32>
    %cst_215 = arith.constant dense<0.000000e+00> : vector<16x64xf32>
    %356 = tpu.matmul %355, %82, %cst_215 {dimension_numbers = #tpu.dot_dimension_numbers<[1], [0], [0], [1], [0, 0, 1, 1], [], []>} : vector<16x64xf32>, vector<64x64xf32>, vector<16x64xf32> -> vector<16x64xf32>
    %357 = vector.broadcast %84 : vector<1x64xf32> to vector<16x64xf32>
    %358 = arith.addf %356, %357 : vector<16x64xf32>
    %cst_216 = arith.constant dense<0.000000e+00> : vector<8x64xf32>
    %359 = tpu.matmul %18, %358, %cst_216 {dimension_numbers = #tpu.dot_dimension_numbers<[1], [0], [0], [1], [0, 0, 1, 1], [], []>} : vector<8x16xf32>, vector<16x64xf32>, vector<8x64xf32> -> vector<8x64xf32>
    %cst_217 = arith.constant dense<0.000000e+00> : vector<16xf32>
    %360 = vector.multi_reduction <add>, %0, %cst_217 [0] : vector<8x16xf32> to vector<16xf32>
    %361 = vector.shape_cast %360 : vector<16xf32> to vector<1x16xf32>
    %cst_218 = arith.constant 8.000000e+00 : f32
    %362 = vector.broadcast %cst_218 : f32 to vector<1x16xf32>
    %363 = arith.divf %361, %362 : vector<1x16xf32>
    %364 = vector.broadcast %363 : vector<1x16xf32> to vector<8x16xf32>
    %365 = arith.subf %0, %364 : vector<8x16xf32>
    %366 = arith.mulf %365, %365 : vector<8x16xf32>
    %cst_219 = arith.constant dense<0.000000e+00> : vector<16xf32>
    %367 = vector.multi_reduction <add>, %366, %cst_219 [0] : vector<8x16xf32> to vector<16xf32>
    %368 = vector.shape_cast %367 : vector<16xf32> to vector<1x16xf32>
    %cst_220 = arith.constant 8.000000e+00 : f32
    %369 = vector.broadcast %cst_220 : f32 to vector<1x16xf32>
    %370 = arith.divf %368, %369 : vector<1x16xf32>
    %371 = vector.broadcast %363 : vector<1x16xf32> to vector<8x16xf32>
    %372 = arith.subf %0, %371 : vector<8x16xf32>
    %cst_221 = arith.constant 9.99999974E-6 : f32
    %373 = vector.broadcast %cst_221 : f32 to vector<1x16xf32>
    %374 = arith.addf %370, %373 : vector<1x16xf32>
    %375 = math.rsqrt %374 : vector<1x16xf32>
    %376 = vector.broadcast %375 : vector<1x16xf32> to vector<8x16xf32>
    %377 = arith.mulf %372, %376 : vector<8x16xf32>
    %378 = vector.broadcast %86 : vector<1x16xf32> to vector<8x16xf32>
    %379 = arith.mulf %377, %378 : vector<8x16xf32>
    %380 = vector.broadcast %88 : vector<1x16xf32> to vector<8x16xf32>
    %381 = arith.addf %379, %380 : vector<8x16xf32>
    %cst_222 = arith.constant dense<0.000000e+00> : vector<8x80xf32>
    %382 = tpu.matmul %381, %90, %cst_222 {dimension_numbers = #tpu.dot_dimension_numbers<[1], [0], [0], [1], [0, 0, 1, 1], [], []>} : vector<8x16xf32>, vector<16x80xf32>, vector<8x80xf32> -> vector<8x80xf32>
    %cst_223 = arith.constant dense<0.000000e+00> : vector<64xf32>
    %383 = vector.multi_reduction <add>, %359, %cst_223 [0] : vector<8x64xf32> to vector<64xf32>
    %384 = vector.shape_cast %383 : vector<64xf32> to vector<1x64xf32>
    %cst_224 = arith.constant 8.000000e+00 : f32
    %385 = vector.broadcast %cst_224 : f32 to vector<1x64xf32>
    %386 = arith.divf %384, %385 : vector<1x64xf32>
    %387 = vector.broadcast %386 : vector<1x64xf32> to vector<8x64xf32>
    %388 = arith.subf %359, %387 : vector<8x64xf32>
    %389 = arith.mulf %388, %388 : vector<8x64xf32>
    %cst_225 = arith.constant dense<0.000000e+00> : vector<64xf32>
    %390 = vector.multi_reduction <add>, %389, %cst_225 [0] : vector<8x64xf32> to vector<64xf32>
    %391 = vector.shape_cast %390 : vector<64xf32> to vector<1x64xf32>
    %cst_226 = arith.constant 8.000000e+00 : f32
    %392 = vector.broadcast %cst_226 : f32 to vector<1x64xf32>
    %393 = arith.divf %391, %392 : vector<1x64xf32>
    %394 = vector.broadcast %386 : vector<1x64xf32> to vector<8x64xf32>
    %395 = arith.subf %359, %394 : vector<8x64xf32>
    %cst_227 = arith.constant 9.99999974E-6 : f32
    %396 = vector.broadcast %cst_227 : f32 to vector<1x64xf32>
    %397 = arith.addf %393, %396 : vector<1x64xf32>
    %398 = math.rsqrt %397 : vector<1x64xf32>
    %399 = vector.broadcast %398 : vector<1x64xf32> to vector<8x64xf32>
    %400 = arith.mulf %395, %399 : vector<8x64xf32>
    %401 = vector.broadcast %92 : vector<1x64xf32> to vector<8x64xf32>
    %402 = arith.mulf %400, %401 : vector<8x64xf32>
    %403 = vector.broadcast %94 : vector<1x64xf32> to vector<8x64xf32>
    %404 = arith.addf %402, %403 : vector<8x64xf32>
    %cst_228 = arith.constant dense<0.000000e+00> : vector<8x80xf32>
    %405 = tpu.matmul %404, %96, %cst_228 {dimension_numbers = #tpu.dot_dimension_numbers<[1], [0], [0], [1], [0, 0, 1, 1], [], []>} : vector<8x64xf32>, vector<64x80xf32>, vector<8x80xf32> -> vector<8x80xf32>
    %406 = arith.addf %382, %405 : vector<8x80xf32>
    %407 = vector.broadcast %98 : vector<1x80xf32> to vector<8x80xf32>
    %408 = arith.addf %406, %407 : vector<8x80xf32>
    %cst_229 = arith.constant 0.000000e+00 : f32
    %409 = vector.broadcast %cst_229 : f32 to vector<8x80xf32>
    %410 = arith.cmpf oge, %408, %409 : vector<8x80xf32>
    %cst_230 = arith.constant 1.000000e-01 : f32
    %411 = vector.broadcast %cst_230 : f32 to vector<8x80xf32>
    %412 = arith.mulf %411, %408 : vector<8x80xf32>
    %413 = arith.select %410, %408, %412 : vector<8x80xi1>, vector<8x80xf32>
    %cst_231 = arith.constant dense<0.000000e+00> : vector<80xf32>
    %414 = vector.multi_reduction <add>, %413, %cst_231 [0] : vector<8x80xf32> to vector<80xf32>
    %415 = vector.shape_cast %414 : vector<80xf32> to vector<1x80xf32>
    %cst_232 = arith.constant 8.000000e+00 : f32
    %416 = vector.broadcast %cst_232 : f32 to vector<1x80xf32>
    %417 = arith.divf %415, %416 : vector<1x80xf32>
    %418 = vector.broadcast %417 : vector<1x80xf32> to vector<8x80xf32>
    %419 = arith.subf %413, %418 : vector<8x80xf32>
    %420 = arith.mulf %419, %419 : vector<8x80xf32>
    %cst_233 = arith.constant dense<0.000000e+00> : vector<80xf32>
    %421 = vector.multi_reduction <add>, %420, %cst_233 [0] : vector<8x80xf32> to vector<80xf32>
    %422 = vector.shape_cast %421 : vector<80xf32> to vector<1x80xf32>
    %cst_234 = arith.constant 8.000000e+00 : f32
    %423 = vector.broadcast %cst_234 : f32 to vector<1x80xf32>
    %424 = arith.divf %422, %423 : vector<1x80xf32>
    %425 = vector.broadcast %417 : vector<1x80xf32> to vector<8x80xf32>
    %426 = arith.subf %413, %425 : vector<8x80xf32>
    %cst_235 = arith.constant 9.99999974E-6 : f32
    %427 = vector.broadcast %cst_235 : f32 to vector<1x80xf32>
    %428 = arith.addf %424, %427 : vector<1x80xf32>
    %429 = math.rsqrt %428 : vector<1x80xf32>
    %430 = vector.broadcast %429 : vector<1x80xf32> to vector<8x80xf32>
    %431 = arith.mulf %426, %430 : vector<8x80xf32>
    %432 = vector.broadcast %100 : vector<1x80xf32> to vector<8x80xf32>
    %433 = arith.mulf %431, %432 : vector<8x80xf32>
    %434 = vector.broadcast %102 : vector<1x80xf32> to vector<8x80xf32>
    %435 = arith.addf %433, %434 : vector<8x80xf32>
    %cst_236 = arith.constant dense<0.000000e+00> : vector<8x80xf32>
    %436 = tpu.matmul %435, %104, %cst_236 {dimension_numbers = #tpu.dot_dimension_numbers<[1], [0], [0], [1], [0, 0, 1, 1], [], []>} : vector<8x80xf32>, vector<80x80xf32>, vector<8x80xf32> -> vector<8x80xf32>
    %437 = vector.broadcast %106 : vector<1x80xf32> to vector<8x80xf32>
    %438 = arith.addf %436, %437 : vector<8x80xf32>
    %cst_237 = arith.constant 0.000000e+00 : f32
    %439 = vector.broadcast %cst_237 : f32 to vector<8x80xf32>
    %440 = arith.cmpf oge, %438, %439 : vector<8x80xf32>
    %cst_238 = arith.constant 1.000000e-01 : f32
    %441 = vector.broadcast %cst_238 : f32 to vector<8x80xf32>
    %442 = arith.mulf %441, %438 : vector<8x80xf32>
    %443 = arith.select %440, %438, %442 : vector<8x80xi1>, vector<8x80xf32>
    %cst_239 = arith.constant dense<0.000000e+00> : vector<80xf32>
    %444 = vector.multi_reduction <add>, %443, %cst_239 [0] : vector<8x80xf32> to vector<80xf32>
    %445 = vector.shape_cast %444 : vector<80xf32> to vector<1x80xf32>
    %cst_240 = arith.constant 8.000000e+00 : f32
    %446 = vector.broadcast %cst_240 : f32 to vector<1x80xf32>
    %447 = arith.divf %445, %446 : vector<1x80xf32>
    %448 = vector.broadcast %447 : vector<1x80xf32> to vector<8x80xf32>
    %449 = arith.subf %443, %448 : vector<8x80xf32>
    %450 = arith.mulf %449, %449 : vector<8x80xf32>
    %cst_241 = arith.constant dense<0.000000e+00> : vector<80xf32>
    %451 = vector.multi_reduction <add>, %450, %cst_241 [0] : vector<8x80xf32> to vector<80xf32>
    %452 = vector.shape_cast %451 : vector<80xf32> to vector<1x80xf32>
    %cst_242 = arith.constant 8.000000e+00 : f32
    %453 = vector.broadcast %cst_242 : f32 to vector<1x80xf32>
    %454 = arith.divf %452, %453 : vector<1x80xf32>
    %455 = vector.broadcast %447 : vector<1x80xf32> to vector<8x80xf32>
    %456 = arith.subf %443, %455 : vector<8x80xf32>
    %cst_243 = arith.constant 9.99999974E-6 : f32
    %457 = vector.broadcast %cst_243 : f32 to vector<1x80xf32>
    %458 = arith.addf %454, %457 : vector<1x80xf32>
    %459 = math.rsqrt %458 : vector<1x80xf32>
    %460 = vector.broadcast %459 : vector<1x80xf32> to vector<8x80xf32>
    %461 = arith.mulf %456, %460 : vector<8x80xf32>
    %462 = vector.broadcast %108 : vector<1x80xf32> to vector<8x80xf32>
    %463 = arith.mulf %461, %462 : vector<8x80xf32>
    %464 = vector.broadcast %110 : vector<1x80xf32> to vector<8x80xf32>
    %465 = arith.addf %463, %464 : vector<8x80xf32>
    %cst_244 = arith.constant dense<0.000000e+00> : vector<8x16xf32>
    %466 = tpu.matmul %465, %112, %cst_244 {dimension_numbers = #tpu.dot_dimension_numbers<[1], [0], [0], [1], [0, 0, 1, 1], [], []>} : vector<8x80xf32>, vector<80x16xf32>, vector<8x16xf32> -> vector<8x16xf32>
    %467 = vector.broadcast %114 : vector<1x16xf32> to vector<8x16xf32>
    %468 = arith.addf %466, %467 : vector<8x16xf32>
    %c1 = arith.constant 1 : index
    %c0_245 = arith.constant 0 : index
    %c0_246 = arith.constant 0 : index
    %469 = vector.load %arg16[%c1, %c0_245, %c0_246] : memref<3x1x16xf32, #tpu.memory_space<vmem>>, vector<1x1x16xf32>
    %470 = vector.shape_cast %469 : vector<1x1x16xf32> to vector<1x16xf32>
    %c1_247 = arith.constant 1 : index
    %c0_248 = arith.constant 0 : index
    %c0_249 = arith.constant 0 : index
    %471 = vector.load %arg17[%c1_247, %c0_248, %c0_249] : memref<3x1x16xf32, #tpu.memory_space<vmem>>, vector<1x1x16xf32>
    %472 = vector.shape_cast %471 : vector<1x1x16xf32> to vector<1x16xf32>
    %c1_250 = arith.constant 1 : index
    %c0_251 = arith.constant 0 : index
    %c0_252 = arith.constant 0 : index
    %473 = vector.load %arg18[%c1_250, %c0_251, %c0_252] : memref<3x16x64xf32, #tpu.memory_space<vmem>>, vector<1x16x64xf32>
    %474 = vector.shape_cast %473 : vector<1x16x64xf32> to vector<16x64xf32>
    %c1_253 = arith.constant 1 : index
    %c0_254 = arith.constant 0 : index
    %c0_255 = arith.constant 0 : index
    %475 = vector.load %arg19[%c1_253, %c0_254, %c0_255] : memref<3x1x16xf32, #tpu.memory_space<vmem>>, vector<1x1x16xf32>
    %476 = vector.shape_cast %475 : vector<1x1x16xf32> to vector<1x16xf32>
    %c1_256 = arith.constant 1 : index
    %c0_257 = arith.constant 0 : index
    %c0_258 = arith.constant 0 : index
    %477 = vector.load %arg20[%c1_256, %c0_257, %c0_258] : memref<3x1x16xf32, #tpu.memory_space<vmem>>, vector<1x1x16xf32>
    %478 = vector.shape_cast %477 : vector<1x1x16xf32> to vector<1x16xf32>
    %c1_259 = arith.constant 1 : index
    %c0_260 = arith.constant 0 : index
    %c0_261 = arith.constant 0 : index
    %479 = vector.load %arg21[%c1_259, %c0_260, %c0_261] : memref<3x16x64xf32, #tpu.memory_space<vmem>>, vector<1x16x64xf32>
    %480 = vector.shape_cast %479 : vector<1x16x64xf32> to vector<16x64xf32>
    %c1_262 = arith.constant 1 : index
    %c0_263 = arith.constant 0 : index
    %c0_264 = arith.constant 0 : index
    %481 = vector.load %arg22[%c1_262, %c0_263, %c0_264] : memref<3x1x19xf32, #tpu.memory_space<vmem>>, vector<1x1x19xf32>
    %482 = vector.shape_cast %481 : vector<1x1x19xf32> to vector<1x19xf32>
    %c1_265 = arith.constant 1 : index
    %c0_266 = arith.constant 0 : index
    %c0_267 = arith.constant 0 : index
    %483 = vector.load %arg23[%c1_265, %c0_266, %c0_267] : memref<3x1x19xf32, #tpu.memory_space<vmem>>, vector<1x1x19xf32>
    %484 = vector.shape_cast %483 : vector<1x1x19xf32> to vector<1x19xf32>
    %c1_268 = arith.constant 1 : index
    %c0_269 = arith.constant 0 : index
    %c0_270 = arith.constant 0 : index
    %485 = vector.load %arg24[%c1_268, %c0_269, %c0_270] : memref<3x19x64xf32, #tpu.memory_space<vmem>>, vector<1x19x64xf32>
    %486 = vector.shape_cast %485 : vector<1x19x64xf32> to vector<19x64xf32>
    %c1_271 = arith.constant 1 : index
    %c0_272 = arith.constant 0 : index
    %c0_273 = arith.constant 0 : index
    %487 = vector.load %arg9[%c1_271, %c0_272, %c0_273] : memref<3x1x64xf32, #tpu.memory_space<vmem>>, vector<1x1x64xf32>
    %488 = vector.shape_cast %487 : vector<1x1x64xf32> to vector<1x64xf32>
    %c1_274 = arith.constant 1 : index
    %c0_275 = arith.constant 0 : index
    %c0_276 = arith.constant 0 : index
    %489 = vector.load %arg14[%c1_274, %c0_275, %c0_276] : memref<3x1x64xf32, #tpu.memory_space<vmem>>, vector<1x1x64xf32>
    %490 = vector.shape_cast %489 : vector<1x1x64xf32> to vector<1x64xf32>
    %c1_277 = arith.constant 1 : index
    %c0_278 = arith.constant 0 : index
    %c0_279 = arith.constant 0 : index
    %491 = vector.load %arg12[%c1_277, %c0_278, %c0_279] : memref<3x1x64xf32, #tpu.memory_space<vmem>>, vector<1x1x64xf32>
    %492 = vector.shape_cast %491 : vector<1x1x64xf32> to vector<1x64xf32>
    %c1_280 = arith.constant 1 : index
    %c0_281 = arith.constant 0 : index
    %c0_282 = arith.constant 0 : index
    %493 = vector.load %arg25[%c1_280, %c0_281, %c0_282] : memref<3x64x64xf32, #tpu.memory_space<vmem>>, vector<1x64x64xf32>
    %494 = vector.shape_cast %493 : vector<1x64x64xf32> to vector<64x64xf32>
    %c1_283 = arith.constant 1 : index
    %c0_284 = arith.constant 0 : index
    %c0_285 = arith.constant 0 : index
    %495 = vector.load %arg10[%c1_283, %c0_284, %c0_285] : memref<3x1x64xf32, #tpu.memory_space<vmem>>, vector<1x1x64xf32>
    %496 = vector.shape_cast %495 : vector<1x1x64xf32> to vector<1x64xf32>
    %c1_286 = arith.constant 1 : index
    %c0_287 = arith.constant 0 : index
    %c0_288 = arith.constant 0 : index
    %497 = vector.load %arg15[%c1_286, %c0_287, %c0_288] : memref<3x1x64xf32, #tpu.memory_space<vmem>>, vector<1x1x64xf32>
    %498 = vector.shape_cast %497 : vector<1x1x64xf32> to vector<1x64xf32>
    %c1_289 = arith.constant 1 : index
    %c0_290 = arith.constant 0 : index
    %c0_291 = arith.constant 0 : index
    %499 = vector.load %arg13[%c1_289, %c0_290, %c0_291] : memref<3x1x64xf32, #tpu.memory_space<vmem>>, vector<1x1x64xf32>
    %500 = vector.shape_cast %499 : vector<1x1x64xf32> to vector<1x64xf32>
    %c1_292 = arith.constant 1 : index
    %c0_293 = arith.constant 0 : index
    %c0_294 = arith.constant 0 : index
    %501 = vector.load %arg26[%c1_292, %c0_293, %c0_294] : memref<3x64x19xf32, #tpu.memory_space<vmem>>, vector<1x64x19xf32>
    %502 = vector.shape_cast %501 : vector<1x64x19xf32> to vector<64x19xf32>
    %c1_295 = arith.constant 1 : index
    %c0_296 = arith.constant 0 : index
    %c0_297 = arith.constant 0 : index
    %503 = vector.load %arg11[%c1_295, %c0_296, %c0_297] : memref<3x1x19xf32, #tpu.memory_space<vmem>>, vector<1x1x19xf32>
    %504 = vector.shape_cast %503 : vector<1x1x19xf32> to vector<1x19xf32>
    %c1_298 = arith.constant 1 : index
    %c0_299 = arith.constant 0 : index
    %c0_300 = arith.constant 0 : index
    %505 = vector.load %arg34[%c1_298, %c0_299, %c0_300] : memref<3x1x16xf32, #tpu.memory_space<vmem>>, vector<1x1x16xf32>
    %506 = vector.shape_cast %505 : vector<1x1x16xf32> to vector<1x16xf32>
    %c1_301 = arith.constant 1 : index
    %c0_302 = arith.constant 0 : index
    %c0_303 = arith.constant 0 : index
    %507 = vector.load %arg35[%c1_301, %c0_302, %c0_303] : memref<3x1x16xf32, #tpu.memory_space<vmem>>, vector<1x1x16xf32>
    %508 = vector.shape_cast %507 : vector<1x1x16xf32> to vector<1x16xf32>
    %c1_304 = arith.constant 1 : index
    %c0_305 = arith.constant 0 : index
    %c0_306 = arith.constant 0 : index
    %509 = vector.load %arg36[%c1_304, %c0_305, %c0_306] : memref<3x16x64xf32, #tpu.memory_space<vmem>>, vector<1x16x64xf32>
    %510 = vector.shape_cast %509 : vector<1x16x64xf32> to vector<16x64xf32>
    %c1_307 = arith.constant 1 : index
    %c0_308 = arith.constant 0 : index
    %c0_309 = arith.constant 0 : index
    %511 = vector.load %arg37[%c1_307, %c0_308, %c0_309] : memref<3x1x19xf32, #tpu.memory_space<vmem>>, vector<1x1x19xf32>
    %512 = vector.shape_cast %511 : vector<1x1x19xf32> to vector<1x19xf32>
    %c1_310 = arith.constant 1 : index
    %c0_311 = arith.constant 0 : index
    %c0_312 = arith.constant 0 : index
    %513 = vector.load %arg38[%c1_310, %c0_311, %c0_312] : memref<3x1x19xf32, #tpu.memory_space<vmem>>, vector<1x1x19xf32>
    %514 = vector.shape_cast %513 : vector<1x1x19xf32> to vector<1x19xf32>
    %c1_313 = arith.constant 1 : index
    %c0_314 = arith.constant 0 : index
    %c0_315 = arith.constant 0 : index
    %515 = vector.load %arg39[%c1_313, %c0_314, %c0_315] : memref<3x19x64xf32, #tpu.memory_space<vmem>>, vector<1x19x64xf32>
    %516 = vector.shape_cast %515 : vector<1x19x64xf32> to vector<19x64xf32>
    %c1_316 = arith.constant 1 : index
    %c0_317 = arith.constant 0 : index
    %c0_318 = arith.constant 0 : index
    %517 = vector.load %arg27[%c1_316, %c0_317, %c0_318] : memref<3x1x64xf32, #tpu.memory_space<vmem>>, vector<1x1x64xf32>
    %518 = vector.shape_cast %517 : vector<1x1x64xf32> to vector<1x64xf32>
    %c1_319 = arith.constant 1 : index
    %c0_320 = arith.constant 0 : index
    %c0_321 = arith.constant 0 : index
    %519 = vector.load %arg32[%c1_319, %c0_320, %c0_321] : memref<3x1x64xf32, #tpu.memory_space<vmem>>, vector<1x1x64xf32>
    %520 = vector.shape_cast %519 : vector<1x1x64xf32> to vector<1x64xf32>
    %c1_322 = arith.constant 1 : index
    %c0_323 = arith.constant 0 : index
    %c0_324 = arith.constant 0 : index
    %521 = vector.load %arg30[%c1_322, %c0_323, %c0_324] : memref<3x1x64xf32, #tpu.memory_space<vmem>>, vector<1x1x64xf32>
    %522 = vector.shape_cast %521 : vector<1x1x64xf32> to vector<1x64xf32>
    %c1_325 = arith.constant 1 : index
    %c0_326 = arith.constant 0 : index
    %c0_327 = arith.constant 0 : index
    %523 = vector.load %arg40[%c1_325, %c0_326, %c0_327] : memref<3x64x64xf32, #tpu.memory_space<vmem>>, vector<1x64x64xf32>
    %524 = vector.shape_cast %523 : vector<1x64x64xf32> to vector<64x64xf32>
    %c1_328 = arith.constant 1 : index
    %c0_329 = arith.constant 0 : index
    %c0_330 = arith.constant 0 : index
    %525 = vector.load %arg28[%c1_328, %c0_329, %c0_330] : memref<3x1x64xf32, #tpu.memory_space<vmem>>, vector<1x1x64xf32>
    %526 = vector.shape_cast %525 : vector<1x1x64xf32> to vector<1x64xf32>
    %c1_331 = arith.constant 1 : index
    %c0_332 = arith.constant 0 : index
    %c0_333 = arith.constant 0 : index
    %527 = vector.load %arg33[%c1_331, %c0_332, %c0_333] : memref<3x1x64xf32, #tpu.memory_space<vmem>>, vector<1x1x64xf32>
    %528 = vector.shape_cast %527 : vector<1x1x64xf32> to vector<1x64xf32>
    %c1_334 = arith.constant 1 : index
    %c0_335 = arith.constant 0 : index
    %c0_336 = arith.constant 0 : index
    %529 = vector.load %arg31[%c1_334, %c0_335, %c0_336] : memref<3x1x64xf32, #tpu.memory_space<vmem>>, vector<1x1x64xf32>
    %530 = vector.shape_cast %529 : vector<1x1x64xf32> to vector<1x64xf32>
    %c1_337 = arith.constant 1 : index
    %c0_338 = arith.constant 0 : index
    %c0_339 = arith.constant 0 : index
    %531 = vector.load %arg41[%c1_337, %c0_338, %c0_339] : memref<3x64x64xf32, #tpu.memory_space<vmem>>, vector<1x64x64xf32>
    %532 = vector.shape_cast %531 : vector<1x64x64xf32> to vector<64x64xf32>
    %c1_340 = arith.constant 1 : index
    %c0_341 = arith.constant 0 : index
    %c0_342 = arith.constant 0 : index
    %533 = vector.load %arg29[%c1_340, %c0_341, %c0_342] : memref<3x1x64xf32, #tpu.memory_space<vmem>>, vector<1x1x64xf32>
    %534 = vector.shape_cast %533 : vector<1x1x64xf32> to vector<1x64xf32>
    %c1_343 = arith.constant 1 : index
    %c0_344 = arith.constant 0 : index
    %c0_345 = arith.constant 0 : index
    %535 = vector.load %arg49[%c1_343, %c0_344, %c0_345] : memref<3x1x16xf32, #tpu.memory_space<vmem>>, vector<1x1x16xf32>
    %536 = vector.shape_cast %535 : vector<1x1x16xf32> to vector<1x16xf32>
    %c1_346 = arith.constant 1 : index
    %c0_347 = arith.constant 0 : index
    %c0_348 = arith.constant 0 : index
    %537 = vector.load %arg50[%c1_346, %c0_347, %c0_348] : memref<3x1x16xf32, #tpu.memory_space<vmem>>, vector<1x1x16xf32>
    %538 = vector.shape_cast %537 : vector<1x1x16xf32> to vector<1x16xf32>
    %c1_349 = arith.constant 1 : index
    %c0_350 = arith.constant 0 : index
    %c0_351 = arith.constant 0 : index
    %539 = vector.load %arg51[%c1_349, %c0_350, %c0_351] : memref<3x16x80xf32, #tpu.memory_space<vmem>>, vector<1x16x80xf32>
    %540 = vector.shape_cast %539 : vector<1x16x80xf32> to vector<16x80xf32>
    %c1_352 = arith.constant 1 : index
    %c0_353 = arith.constant 0 : index
    %c0_354 = arith.constant 0 : index
    %541 = vector.load %arg52[%c1_352, %c0_353, %c0_354] : memref<3x1x64xf32, #tpu.memory_space<vmem>>, vector<1x1x64xf32>
    %542 = vector.shape_cast %541 : vector<1x1x64xf32> to vector<1x64xf32>
    %c1_355 = arith.constant 1 : index
    %c0_356 = arith.constant 0 : index
    %c0_357 = arith.constant 0 : index
    %543 = vector.load %arg53[%c1_355, %c0_356, %c0_357] : memref<3x1x64xf32, #tpu.memory_space<vmem>>, vector<1x1x64xf32>
    %544 = vector.shape_cast %543 : vector<1x1x64xf32> to vector<1x64xf32>
    %c1_358 = arith.constant 1 : index
    %c0_359 = arith.constant 0 : index
    %c0_360 = arith.constant 0 : index
    %545 = vector.load %arg54[%c1_358, %c0_359, %c0_360] : memref<3x64x80xf32, #tpu.memory_space<vmem>>, vector<1x64x80xf32>
    %546 = vector.shape_cast %545 : vector<1x64x80xf32> to vector<64x80xf32>
    %c1_361 = arith.constant 1 : index
    %c0_362 = arith.constant 0 : index
    %c0_363 = arith.constant 0 : index
    %547 = vector.load %arg42[%c1_361, %c0_362, %c0_363] : memref<3x1x80xf32, #tpu.memory_space<vmem>>, vector<1x1x80xf32>
    %548 = vector.shape_cast %547 : vector<1x1x80xf32> to vector<1x80xf32>
    %c1_364 = arith.constant 1 : index
    %c0_365 = arith.constant 0 : index
    %c0_366 = arith.constant 0 : index
    %549 = vector.load %arg47[%c1_364, %c0_365, %c0_366] : memref<3x1x80xf32, #tpu.memory_space<vmem>>, vector<1x1x80xf32>
    %550 = vector.shape_cast %549 : vector<1x1x80xf32> to vector<1x80xf32>
    %c1_367 = arith.constant 1 : index
    %c0_368 = arith.constant 0 : index
    %c0_369 = arith.constant 0 : index
    %551 = vector.load %arg45[%c1_367, %c0_368, %c0_369] : memref<3x1x80xf32, #tpu.memory_space<vmem>>, vector<1x1x80xf32>
    %552 = vector.shape_cast %551 : vector<1x1x80xf32> to vector<1x80xf32>
    %c1_370 = arith.constant 1 : index
    %c0_371 = arith.constant 0 : index
    %c0_372 = arith.constant 0 : index
    %553 = vector.load %arg55[%c1_370, %c0_371, %c0_372] : memref<3x80x80xf32, #tpu.memory_space<vmem>>, vector<1x80x80xf32>
    %554 = vector.shape_cast %553 : vector<1x80x80xf32> to vector<80x80xf32>
    %c1_373 = arith.constant 1 : index
    %c0_374 = arith.constant 0 : index
    %c0_375 = arith.constant 0 : index
    %555 = vector.load %arg43[%c1_373, %c0_374, %c0_375] : memref<3x1x80xf32, #tpu.memory_space<vmem>>, vector<1x1x80xf32>
    %556 = vector.shape_cast %555 : vector<1x1x80xf32> to vector<1x80xf32>
    %c1_376 = arith.constant 1 : index
    %c0_377 = arith.constant 0 : index
    %c0_378 = arith.constant 0 : index
    %557 = vector.load %arg48[%c1_376, %c0_377, %c0_378] : memref<3x1x80xf32, #tpu.memory_space<vmem>>, vector<1x1x80xf32>
    %558 = vector.shape_cast %557 : vector<1x1x80xf32> to vector<1x80xf32>
    %c1_379 = arith.constant 1 : index
    %c0_380 = arith.constant 0 : index
    %c0_381 = arith.constant 0 : index
    %559 = vector.load %arg46[%c1_379, %c0_380, %c0_381] : memref<3x1x80xf32, #tpu.memory_space<vmem>>, vector<1x1x80xf32>
    %560 = vector.shape_cast %559 : vector<1x1x80xf32> to vector<1x80xf32>
    %c1_382 = arith.constant 1 : index
    %c0_383 = arith.constant 0 : index
    %c0_384 = arith.constant 0 : index
    %561 = vector.load %arg56[%c1_382, %c0_383, %c0_384] : memref<3x80x16xf32, #tpu.memory_space<vmem>>, vector<1x80x16xf32>
    %562 = vector.shape_cast %561 : vector<1x80x16xf32> to vector<80x16xf32>
    %c1_385 = arith.constant 1 : index
    %c0_386 = arith.constant 0 : index
    %c0_387 = arith.constant 0 : index
    %563 = vector.load %arg44[%c1_385, %c0_386, %c0_387] : memref<3x1x16xf32, #tpu.memory_space<vmem>>, vector<1x1x16xf32>
    %564 = vector.shape_cast %563 : vector<1x1x16xf32> to vector<1x16xf32>
    %cst_388 = arith.constant dense<0.000000e+00> : vector<16x16xf32>
    %565 = tpu.matmul %9, %468, %cst_388 {dimension_numbers = #tpu.dot_dimension_numbers<[1], [0], [0], [1], [0, 0, 1, 1], [], []>} : vector<16x8xf32>, vector<8x16xf32>, vector<16x16xf32> -> vector<16x16xf32>
    %cst_389 = arith.constant dense<0.000000e+00> : vector<16x16xf32>
    %566 = tpu.matmul %13, %468, %cst_389 {dimension_numbers = #tpu.dot_dimension_numbers<[1], [0], [0], [1], [0, 0, 1, 1], [], []>} : vector<16x8xf32>, vector<8x16xf32>, vector<16x16xf32> -> vector<16x16xf32>
    %cst_390 = arith.constant dense<0.000000e+00> : vector<16xf32>
    %567 = vector.multi_reduction <add>, %565, %cst_390 [0] : vector<16x16xf32> to vector<16xf32>
    %568 = vector.shape_cast %567 : vector<16xf32> to vector<1x16xf32>
    %cst_391 = arith.constant 1.600000e+01 : f32
    %569 = vector.broadcast %cst_391 : f32 to vector<1x16xf32>
    %570 = arith.divf %568, %569 : vector<1x16xf32>
    %571 = vector.broadcast %570 : vector<1x16xf32> to vector<16x16xf32>
    %572 = arith.subf %565, %571 : vector<16x16xf32>
    %573 = arith.mulf %572, %572 : vector<16x16xf32>
    %cst_392 = arith.constant dense<0.000000e+00> : vector<16xf32>
    %574 = vector.multi_reduction <add>, %573, %cst_392 [0] : vector<16x16xf32> to vector<16xf32>
    %575 = vector.shape_cast %574 : vector<16xf32> to vector<1x16xf32>
    %cst_393 = arith.constant 1.600000e+01 : f32
    %576 = vector.broadcast %cst_393 : f32 to vector<1x16xf32>
    %577 = arith.divf %575, %576 : vector<1x16xf32>
    %578 = vector.broadcast %570 : vector<1x16xf32> to vector<16x16xf32>
    %579 = arith.subf %565, %578 : vector<16x16xf32>
    %cst_394 = arith.constant 9.99999974E-6 : f32
    %580 = vector.broadcast %cst_394 : f32 to vector<1x16xf32>
    %581 = arith.addf %577, %580 : vector<1x16xf32>
    %582 = math.rsqrt %581 : vector<1x16xf32>
    %583 = vector.broadcast %582 : vector<1x16xf32> to vector<16x16xf32>
    %584 = arith.mulf %579, %583 : vector<16x16xf32>
    %585 = vector.broadcast %470 : vector<1x16xf32> to vector<16x16xf32>
    %586 = arith.mulf %584, %585 : vector<16x16xf32>
    %587 = vector.broadcast %472 : vector<1x16xf32> to vector<16x16xf32>
    %588 = arith.addf %586, %587 : vector<16x16xf32>
    %cst_395 = arith.constant dense<0.000000e+00> : vector<16x64xf32>
    %589 = tpu.matmul %588, %474, %cst_395 {dimension_numbers = #tpu.dot_dimension_numbers<[1], [0], [0], [1], [0, 0, 1, 1], [], []>} : vector<16x16xf32>, vector<16x64xf32>, vector<16x64xf32> -> vector<16x64xf32>
    %cst_396 = arith.constant dense<0.000000e+00> : vector<16xf32>
    %590 = vector.multi_reduction <add>, %566, %cst_396 [0] : vector<16x16xf32> to vector<16xf32>
    %591 = vector.shape_cast %590 : vector<16xf32> to vector<1x16xf32>
    %cst_397 = arith.constant 1.600000e+01 : f32
    %592 = vector.broadcast %cst_397 : f32 to vector<1x16xf32>
    %593 = arith.divf %591, %592 : vector<1x16xf32>
    %594 = vector.broadcast %593 : vector<1x16xf32> to vector<16x16xf32>
    %595 = arith.subf %566, %594 : vector<16x16xf32>
    %596 = arith.mulf %595, %595 : vector<16x16xf32>
    %cst_398 = arith.constant dense<0.000000e+00> : vector<16xf32>
    %597 = vector.multi_reduction <add>, %596, %cst_398 [0] : vector<16x16xf32> to vector<16xf32>
    %598 = vector.shape_cast %597 : vector<16xf32> to vector<1x16xf32>
    %cst_399 = arith.constant 1.600000e+01 : f32
    %599 = vector.broadcast %cst_399 : f32 to vector<1x16xf32>
    %600 = arith.divf %598, %599 : vector<1x16xf32>
    %601 = vector.broadcast %593 : vector<1x16xf32> to vector<16x16xf32>
    %602 = arith.subf %566, %601 : vector<16x16xf32>
    %cst_400 = arith.constant 9.99999974E-6 : f32
    %603 = vector.broadcast %cst_400 : f32 to vector<1x16xf32>
    %604 = arith.addf %600, %603 : vector<1x16xf32>
    %605 = math.rsqrt %604 : vector<1x16xf32>
    %606 = vector.broadcast %605 : vector<1x16xf32> to vector<16x16xf32>
    %607 = arith.mulf %602, %606 : vector<16x16xf32>
    %608 = vector.broadcast %476 : vector<1x16xf32> to vector<16x16xf32>
    %609 = arith.mulf %607, %608 : vector<16x16xf32>
    %610 = vector.broadcast %478 : vector<1x16xf32> to vector<16x16xf32>
    %611 = arith.addf %609, %610 : vector<16x16xf32>
    %cst_401 = arith.constant dense<0.000000e+00> : vector<16x64xf32>
    %612 = tpu.matmul %611, %480, %cst_401 {dimension_numbers = #tpu.dot_dimension_numbers<[1], [0], [0], [1], [0, 0, 1, 1], [], []>} : vector<16x16xf32>, vector<16x64xf32>, vector<16x64xf32> -> vector<16x64xf32>
    %613 = arith.addf %589, %612 : vector<16x64xf32>
    %cst_402 = arith.constant dense<0.000000e+00> : vector<19xf32>
    %614 = vector.multi_reduction <add>, %249, %cst_402 [0] : vector<16x19xf32> to vector<19xf32>
    %615 = vector.shape_cast %614 : vector<19xf32> to vector<1x19xf32>
    %cst_403 = arith.constant 1.600000e+01 : f32
    %616 = vector.broadcast %cst_403 : f32 to vector<1x19xf32>
    %617 = arith.divf %615, %616 : vector<1x19xf32>
    %618 = vector.broadcast %617 : vector<1x19xf32> to vector<16x19xf32>
    %619 = arith.subf %249, %618 : vector<16x19xf32>
    %620 = arith.mulf %619, %619 : vector<16x19xf32>
    %cst_404 = arith.constant dense<0.000000e+00> : vector<19xf32>
    %621 = vector.multi_reduction <add>, %620, %cst_404 [0] : vector<16x19xf32> to vector<19xf32>
    %622 = vector.shape_cast %621 : vector<19xf32> to vector<1x19xf32>
    %cst_405 = arith.constant 1.600000e+01 : f32
    %623 = vector.broadcast %cst_405 : f32 to vector<1x19xf32>
    %624 = arith.divf %622, %623 : vector<1x19xf32>
    %625 = vector.broadcast %617 : vector<1x19xf32> to vector<16x19xf32>
    %626 = arith.subf %249, %625 : vector<16x19xf32>
    %cst_406 = arith.constant 9.99999974E-6 : f32
    %627 = vector.broadcast %cst_406 : f32 to vector<1x19xf32>
    %628 = arith.addf %624, %627 : vector<1x19xf32>
    %629 = math.rsqrt %628 : vector<1x19xf32>
    %630 = vector.broadcast %629 : vector<1x19xf32> to vector<16x19xf32>
    %631 = arith.mulf %626, %630 : vector<16x19xf32>
    %632 = vector.broadcast %482 : vector<1x19xf32> to vector<16x19xf32>
    %633 = arith.mulf %631, %632 : vector<16x19xf32>
    %634 = vector.broadcast %484 : vector<1x19xf32> to vector<16x19xf32>
    %635 = arith.addf %633, %634 : vector<16x19xf32>
    %cst_407 = arith.constant dense<0.000000e+00> : vector<16x64xf32>
    %636 = tpu.matmul %635, %486, %cst_407 {dimension_numbers = #tpu.dot_dimension_numbers<[1], [0], [0], [1], [0, 0, 1, 1], [], []>} : vector<16x19xf32>, vector<19x64xf32>, vector<16x64xf32> -> vector<16x64xf32>
    %637 = arith.addf %613, %636 : vector<16x64xf32>
    %638 = vector.broadcast %488 : vector<1x64xf32> to vector<16x64xf32>
    %639 = arith.addf %637, %638 : vector<16x64xf32>
    %cst_408 = arith.constant 0.000000e+00 : f32
    %640 = vector.broadcast %cst_408 : f32 to vector<16x64xf32>
    %641 = arith.cmpf oge, %639, %640 : vector<16x64xf32>
    %cst_409 = arith.constant 1.000000e-01 : f32
    %642 = vector.broadcast %cst_409 : f32 to vector<16x64xf32>
    %643 = arith.mulf %642, %639 : vector<16x64xf32>
    %644 = arith.select %641, %639, %643 : vector<16x64xi1>, vector<16x64xf32>
    %cst_410 = arith.constant dense<0.000000e+00> : vector<64xf32>
    %645 = vector.multi_reduction <add>, %644, %cst_410 [0] : vector<16x64xf32> to vector<64xf32>
    %646 = vector.shape_cast %645 : vector<64xf32> to vector<1x64xf32>
    %cst_411 = arith.constant 1.600000e+01 : f32
    %647 = vector.broadcast %cst_411 : f32 to vector<1x64xf32>
    %648 = arith.divf %646, %647 : vector<1x64xf32>
    %649 = vector.broadcast %648 : vector<1x64xf32> to vector<16x64xf32>
    %650 = arith.subf %644, %649 : vector<16x64xf32>
    %651 = arith.mulf %650, %650 : vector<16x64xf32>
    %cst_412 = arith.constant dense<0.000000e+00> : vector<64xf32>
    %652 = vector.multi_reduction <add>, %651, %cst_412 [0] : vector<16x64xf32> to vector<64xf32>
    %653 = vector.shape_cast %652 : vector<64xf32> to vector<1x64xf32>
    %cst_413 = arith.constant 1.600000e+01 : f32
    %654 = vector.broadcast %cst_413 : f32 to vector<1x64xf32>
    %655 = arith.divf %653, %654 : vector<1x64xf32>
    %656 = vector.broadcast %648 : vector<1x64xf32> to vector<16x64xf32>
    %657 = arith.subf %644, %656 : vector<16x64xf32>
    %cst_414 = arith.constant 9.99999974E-6 : f32
    %658 = vector.broadcast %cst_414 : f32 to vector<1x64xf32>
    %659 = arith.addf %655, %658 : vector<1x64xf32>
    %660 = math.rsqrt %659 : vector<1x64xf32>
    %661 = vector.broadcast %660 : vector<1x64xf32> to vector<16x64xf32>
    %662 = arith.mulf %657, %661 : vector<16x64xf32>
    %663 = vector.broadcast %490 : vector<1x64xf32> to vector<16x64xf32>
    %664 = arith.mulf %662, %663 : vector<16x64xf32>
    %665 = vector.broadcast %492 : vector<1x64xf32> to vector<16x64xf32>
    %666 = arith.addf %664, %665 : vector<16x64xf32>
    %cst_415 = arith.constant dense<0.000000e+00> : vector<16x64xf32>
    %667 = tpu.matmul %666, %494, %cst_415 {dimension_numbers = #tpu.dot_dimension_numbers<[1], [0], [0], [1], [0, 0, 1, 1], [], []>} : vector<16x64xf32>, vector<64x64xf32>, vector<16x64xf32> -> vector<16x64xf32>
    %668 = vector.broadcast %496 : vector<1x64xf32> to vector<16x64xf32>
    %669 = arith.addf %667, %668 : vector<16x64xf32>
    %cst_416 = arith.constant 0.000000e+00 : f32
    %670 = vector.broadcast %cst_416 : f32 to vector<16x64xf32>
    %671 = arith.cmpf oge, %669, %670 : vector<16x64xf32>
    %cst_417 = arith.constant 1.000000e-01 : f32
    %672 = vector.broadcast %cst_417 : f32 to vector<16x64xf32>
    %673 = arith.mulf %672, %669 : vector<16x64xf32>
    %674 = arith.select %671, %669, %673 : vector<16x64xi1>, vector<16x64xf32>
    %cst_418 = arith.constant dense<0.000000e+00> : vector<64xf32>
    %675 = vector.multi_reduction <add>, %674, %cst_418 [0] : vector<16x64xf32> to vector<64xf32>
    %676 = vector.shape_cast %675 : vector<64xf32> to vector<1x64xf32>
    %cst_419 = arith.constant 1.600000e+01 : f32
    %677 = vector.broadcast %cst_419 : f32 to vector<1x64xf32>
    %678 = arith.divf %676, %677 : vector<1x64xf32>
    %679 = vector.broadcast %678 : vector<1x64xf32> to vector<16x64xf32>
    %680 = arith.subf %674, %679 : vector<16x64xf32>
    %681 = arith.mulf %680, %680 : vector<16x64xf32>
    %cst_420 = arith.constant dense<0.000000e+00> : vector<64xf32>
    %682 = vector.multi_reduction <add>, %681, %cst_420 [0] : vector<16x64xf32> to vector<64xf32>
    %683 = vector.shape_cast %682 : vector<64xf32> to vector<1x64xf32>
    %cst_421 = arith.constant 1.600000e+01 : f32
    %684 = vector.broadcast %cst_421 : f32 to vector<1x64xf32>
    %685 = arith.divf %683, %684 : vector<1x64xf32>
    %686 = vector.broadcast %678 : vector<1x64xf32> to vector<16x64xf32>
    %687 = arith.subf %674, %686 : vector<16x64xf32>
    %cst_422 = arith.constant 9.99999974E-6 : f32
    %688 = vector.broadcast %cst_422 : f32 to vector<1x64xf32>
    %689 = arith.addf %685, %688 : vector<1x64xf32>
    %690 = math.rsqrt %689 : vector<1x64xf32>
    %691 = vector.broadcast %690 : vector<1x64xf32> to vector<16x64xf32>
    %692 = arith.mulf %687, %691 : vector<16x64xf32>
    %693 = vector.broadcast %498 : vector<1x64xf32> to vector<16x64xf32>
    %694 = arith.mulf %692, %693 : vector<16x64xf32>
    %695 = vector.broadcast %500 : vector<1x64xf32> to vector<16x64xf32>
    %696 = arith.addf %694, %695 : vector<16x64xf32>
    %cst_423 = arith.constant dense<0.000000e+00> : vector<16x19xf32>
    %697 = tpu.matmul %696, %502, %cst_423 {dimension_numbers = #tpu.dot_dimension_numbers<[1], [0], [0], [1], [0, 0, 1, 1], [], []>} : vector<16x64xf32>, vector<64x19xf32>, vector<16x19xf32> -> vector<16x19xf32>
    %698 = vector.broadcast %504 : vector<1x19xf32> to vector<16x19xf32>
    %699 = arith.addf %697, %698 : vector<16x19xf32>
    %cst_424 = arith.constant dense<0.000000e+00> : vector<16xf32>
    %700 = vector.multi_reduction <add>, %565, %cst_424 [0] : vector<16x16xf32> to vector<16xf32>
    %701 = vector.shape_cast %700 : vector<16xf32> to vector<1x16xf32>
    %cst_425 = arith.constant 1.600000e+01 : f32
    %702 = vector.broadcast %cst_425 : f32 to vector<1x16xf32>
    %703 = arith.divf %701, %702 : vector<1x16xf32>
    %704 = vector.broadcast %703 : vector<1x16xf32> to vector<16x16xf32>
    %705 = arith.subf %565, %704 : vector<16x16xf32>
    %706 = arith.mulf %705, %705 : vector<16x16xf32>
    %cst_426 = arith.constant dense<0.000000e+00> : vector<16xf32>
    %707 = vector.multi_reduction <add>, %706, %cst_426 [0] : vector<16x16xf32> to vector<16xf32>
    %708 = vector.shape_cast %707 : vector<16xf32> to vector<1x16xf32>
    %cst_427 = arith.constant 1.600000e+01 : f32
    %709 = vector.broadcast %cst_427 : f32 to vector<1x16xf32>
    %710 = arith.divf %708, %709 : vector<1x16xf32>
    %711 = vector.broadcast %703 : vector<1x16xf32> to vector<16x16xf32>
    %712 = arith.subf %565, %711 : vector<16x16xf32>
    %cst_428 = arith.constant 9.99999974E-6 : f32
    %713 = vector.broadcast %cst_428 : f32 to vector<1x16xf32>
    %714 = arith.addf %710, %713 : vector<1x16xf32>
    %715 = math.rsqrt %714 : vector<1x16xf32>
    %716 = vector.broadcast %715 : vector<1x16xf32> to vector<16x16xf32>
    %717 = arith.mulf %712, %716 : vector<16x16xf32>
    %718 = vector.broadcast %506 : vector<1x16xf32> to vector<16x16xf32>
    %719 = arith.mulf %717, %718 : vector<16x16xf32>
    %720 = vector.broadcast %508 : vector<1x16xf32> to vector<16x16xf32>
    %721 = arith.addf %719, %720 : vector<16x16xf32>
    %cst_429 = arith.constant dense<0.000000e+00> : vector<16x64xf32>
    %722 = tpu.matmul %721, %510, %cst_429 {dimension_numbers = #tpu.dot_dimension_numbers<[1], [0], [0], [1], [0, 0, 1, 1], [], []>} : vector<16x16xf32>, vector<16x64xf32>, vector<16x64xf32> -> vector<16x64xf32>
    %cst_430 = arith.constant dense<0.000000e+00> : vector<19xf32>
    %723 = vector.multi_reduction <add>, %699, %cst_430 [0] : vector<16x19xf32> to vector<19xf32>
    %724 = vector.shape_cast %723 : vector<19xf32> to vector<1x19xf32>
    %cst_431 = arith.constant 1.600000e+01 : f32
    %725 = vector.broadcast %cst_431 : f32 to vector<1x19xf32>
    %726 = arith.divf %724, %725 : vector<1x19xf32>
    %727 = vector.broadcast %726 : vector<1x19xf32> to vector<16x19xf32>
    %728 = arith.subf %699, %727 : vector<16x19xf32>
    %729 = arith.mulf %728, %728 : vector<16x19xf32>
    %cst_432 = arith.constant dense<0.000000e+00> : vector<19xf32>
    %730 = vector.multi_reduction <add>, %729, %cst_432 [0] : vector<16x19xf32> to vector<19xf32>
    %731 = vector.shape_cast %730 : vector<19xf32> to vector<1x19xf32>
    %cst_433 = arith.constant 1.600000e+01 : f32
    %732 = vector.broadcast %cst_433 : f32 to vector<1x19xf32>
    %733 = arith.divf %731, %732 : vector<1x19xf32>
    %734 = vector.broadcast %726 : vector<1x19xf32> to vector<16x19xf32>
    %735 = arith.subf %699, %734 : vector<16x19xf32>
    %cst_434 = arith.constant 9.99999974E-6 : f32
    %736 = vector.broadcast %cst_434 : f32 to vector<1x19xf32>
    %737 = arith.addf %733, %736 : vector<1x19xf32>
    %738 = math.rsqrt %737 : vector<1x19xf32>
    %739 = vector.broadcast %738 : vector<1x19xf32> to vector<16x19xf32>
    %740 = arith.mulf %735, %739 : vector<16x19xf32>
    %741 = vector.broadcast %512 : vector<1x19xf32> to vector<16x19xf32>
    %742 = arith.mulf %740, %741 : vector<16x19xf32>
    %743 = vector.broadcast %514 : vector<1x19xf32> to vector<16x19xf32>
    %744 = arith.addf %742, %743 : vector<16x19xf32>
    %cst_435 = arith.constant dense<0.000000e+00> : vector<16x64xf32>
    %745 = tpu.matmul %744, %516, %cst_435 {dimension_numbers = #tpu.dot_dimension_numbers<[1], [0], [0], [1], [0, 0, 1, 1], [], []>} : vector<16x19xf32>, vector<19x64xf32>, vector<16x64xf32> -> vector<16x64xf32>
    %746 = arith.addf %722, %745 : vector<16x64xf32>
    %747 = vector.broadcast %518 : vector<1x64xf32> to vector<16x64xf32>
    %748 = arith.addf %746, %747 : vector<16x64xf32>
    %cst_436 = arith.constant 0.000000e+00 : f32
    %749 = vector.broadcast %cst_436 : f32 to vector<16x64xf32>
    %750 = arith.cmpf oge, %748, %749 : vector<16x64xf32>
    %cst_437 = arith.constant 1.000000e-01 : f32
    %751 = vector.broadcast %cst_437 : f32 to vector<16x64xf32>
    %752 = arith.mulf %751, %748 : vector<16x64xf32>
    %753 = arith.select %750, %748, %752 : vector<16x64xi1>, vector<16x64xf32>
    %cst_438 = arith.constant dense<0.000000e+00> : vector<64xf32>
    %754 = vector.multi_reduction <add>, %753, %cst_438 [0] : vector<16x64xf32> to vector<64xf32>
    %755 = vector.shape_cast %754 : vector<64xf32> to vector<1x64xf32>
    %cst_439 = arith.constant 1.600000e+01 : f32
    %756 = vector.broadcast %cst_439 : f32 to vector<1x64xf32>
    %757 = arith.divf %755, %756 : vector<1x64xf32>
    %758 = vector.broadcast %757 : vector<1x64xf32> to vector<16x64xf32>
    %759 = arith.subf %753, %758 : vector<16x64xf32>
    %760 = arith.mulf %759, %759 : vector<16x64xf32>
    %cst_440 = arith.constant dense<0.000000e+00> : vector<64xf32>
    %761 = vector.multi_reduction <add>, %760, %cst_440 [0] : vector<16x64xf32> to vector<64xf32>
    %762 = vector.shape_cast %761 : vector<64xf32> to vector<1x64xf32>
    %cst_441 = arith.constant 1.600000e+01 : f32
    %763 = vector.broadcast %cst_441 : f32 to vector<1x64xf32>
    %764 = arith.divf %762, %763 : vector<1x64xf32>
    %765 = vector.broadcast %757 : vector<1x64xf32> to vector<16x64xf32>
    %766 = arith.subf %753, %765 : vector<16x64xf32>
    %cst_442 = arith.constant 9.99999974E-6 : f32
    %767 = vector.broadcast %cst_442 : f32 to vector<1x64xf32>
    %768 = arith.addf %764, %767 : vector<1x64xf32>
    %769 = math.rsqrt %768 : vector<1x64xf32>
    %770 = vector.broadcast %769 : vector<1x64xf32> to vector<16x64xf32>
    %771 = arith.mulf %766, %770 : vector<16x64xf32>
    %772 = vector.broadcast %520 : vector<1x64xf32> to vector<16x64xf32>
    %773 = arith.mulf %771, %772 : vector<16x64xf32>
    %774 = vector.broadcast %522 : vector<1x64xf32> to vector<16x64xf32>
    %775 = arith.addf %773, %774 : vector<16x64xf32>
    %cst_443 = arith.constant dense<0.000000e+00> : vector<16x64xf32>
    %776 = tpu.matmul %775, %524, %cst_443 {dimension_numbers = #tpu.dot_dimension_numbers<[1], [0], [0], [1], [0, 0, 1, 1], [], []>} : vector<16x64xf32>, vector<64x64xf32>, vector<16x64xf32> -> vector<16x64xf32>
    %777 = vector.broadcast %526 : vector<1x64xf32> to vector<16x64xf32>
    %778 = arith.addf %776, %777 : vector<16x64xf32>
    %cst_444 = arith.constant 0.000000e+00 : f32
    %779 = vector.broadcast %cst_444 : f32 to vector<16x64xf32>
    %780 = arith.cmpf oge, %778, %779 : vector<16x64xf32>
    %cst_445 = arith.constant 1.000000e-01 : f32
    %781 = vector.broadcast %cst_445 : f32 to vector<16x64xf32>
    %782 = arith.mulf %781, %778 : vector<16x64xf32>
    %783 = arith.select %780, %778, %782 : vector<16x64xi1>, vector<16x64xf32>
    %cst_446 = arith.constant dense<0.000000e+00> : vector<64xf32>
    %784 = vector.multi_reduction <add>, %783, %cst_446 [0] : vector<16x64xf32> to vector<64xf32>
    %785 = vector.shape_cast %784 : vector<64xf32> to vector<1x64xf32>
    %cst_447 = arith.constant 1.600000e+01 : f32
    %786 = vector.broadcast %cst_447 : f32 to vector<1x64xf32>
    %787 = arith.divf %785, %786 : vector<1x64xf32>
    %788 = vector.broadcast %787 : vector<1x64xf32> to vector<16x64xf32>
    %789 = arith.subf %783, %788 : vector<16x64xf32>
    %790 = arith.mulf %789, %789 : vector<16x64xf32>
    %cst_448 = arith.constant dense<0.000000e+00> : vector<64xf32>
    %791 = vector.multi_reduction <add>, %790, %cst_448 [0] : vector<16x64xf32> to vector<64xf32>
    %792 = vector.shape_cast %791 : vector<64xf32> to vector<1x64xf32>
    %cst_449 = arith.constant 1.600000e+01 : f32
    %793 = vector.broadcast %cst_449 : f32 to vector<1x64xf32>
    %794 = arith.divf %792, %793 : vector<1x64xf32>
    %795 = vector.broadcast %787 : vector<1x64xf32> to vector<16x64xf32>
    %796 = arith.subf %783, %795 : vector<16x64xf32>
    %cst_450 = arith.constant 9.99999974E-6 : f32
    %797 = vector.broadcast %cst_450 : f32 to vector<1x64xf32>
    %798 = arith.addf %794, %797 : vector<1x64xf32>
    %799 = math.rsqrt %798 : vector<1x64xf32>
    %800 = vector.broadcast %799 : vector<1x64xf32> to vector<16x64xf32>
    %801 = arith.mulf %796, %800 : vector<16x64xf32>
    %802 = vector.broadcast %528 : vector<1x64xf32> to vector<16x64xf32>
    %803 = arith.mulf %801, %802 : vector<16x64xf32>
    %804 = vector.broadcast %530 : vector<1x64xf32> to vector<16x64xf32>
    %805 = arith.addf %803, %804 : vector<16x64xf32>
    %cst_451 = arith.constant dense<0.000000e+00> : vector<16x64xf32>
    %806 = tpu.matmul %805, %532, %cst_451 {dimension_numbers = #tpu.dot_dimension_numbers<[1], [0], [0], [1], [0, 0, 1, 1], [], []>} : vector<16x64xf32>, vector<64x64xf32>, vector<16x64xf32> -> vector<16x64xf32>
    %807 = vector.broadcast %534 : vector<1x64xf32> to vector<16x64xf32>
    %808 = arith.addf %806, %807 : vector<16x64xf32>
    %cst_452 = arith.constant dense<0.000000e+00> : vector<8x64xf32>
    %809 = tpu.matmul %18, %808, %cst_452 {dimension_numbers = #tpu.dot_dimension_numbers<[1], [0], [0], [1], [0, 0, 1, 1], [], []>} : vector<8x16xf32>, vector<16x64xf32>, vector<8x64xf32> -> vector<8x64xf32>
    %cst_453 = arith.constant dense<0.000000e+00> : vector<16xf32>
    %810 = vector.multi_reduction <add>, %468, %cst_453 [0] : vector<8x16xf32> to vector<16xf32>
    %811 = vector.shape_cast %810 : vector<16xf32> to vector<1x16xf32>
    %cst_454 = arith.constant 8.000000e+00 : f32
    %812 = vector.broadcast %cst_454 : f32 to vector<1x16xf32>
    %813 = arith.divf %811, %812 : vector<1x16xf32>
    %814 = vector.broadcast %813 : vector<1x16xf32> to vector<8x16xf32>
    %815 = arith.subf %468, %814 : vector<8x16xf32>
    %816 = arith.mulf %815, %815 : vector<8x16xf32>
    %cst_455 = arith.constant dense<0.000000e+00> : vector<16xf32>
    %817 = vector.multi_reduction <add>, %816, %cst_455 [0] : vector<8x16xf32> to vector<16xf32>
    %818 = vector.shape_cast %817 : vector<16xf32> to vector<1x16xf32>
    %cst_456 = arith.constant 8.000000e+00 : f32
    %819 = vector.broadcast %cst_456 : f32 to vector<1x16xf32>
    %820 = arith.divf %818, %819 : vector<1x16xf32>
    %821 = vector.broadcast %813 : vector<1x16xf32> to vector<8x16xf32>
    %822 = arith.subf %468, %821 : vector<8x16xf32>
    %cst_457 = arith.constant 9.99999974E-6 : f32
    %823 = vector.broadcast %cst_457 : f32 to vector<1x16xf32>
    %824 = arith.addf %820, %823 : vector<1x16xf32>
    %825 = math.rsqrt %824 : vector<1x16xf32>
    %826 = vector.broadcast %825 : vector<1x16xf32> to vector<8x16xf32>
    %827 = arith.mulf %822, %826 : vector<8x16xf32>
    %828 = vector.broadcast %536 : vector<1x16xf32> to vector<8x16xf32>
    %829 = arith.mulf %827, %828 : vector<8x16xf32>
    %830 = vector.broadcast %538 : vector<1x16xf32> to vector<8x16xf32>
    %831 = arith.addf %829, %830 : vector<8x16xf32>
    %cst_458 = arith.constant dense<0.000000e+00> : vector<8x80xf32>
    %832 = tpu.matmul %831, %540, %cst_458 {dimension_numbers = #tpu.dot_dimension_numbers<[1], [0], [0], [1], [0, 0, 1, 1], [], []>} : vector<8x16xf32>, vector<16x80xf32>, vector<8x80xf32> -> vector<8x80xf32>
    %cst_459 = arith.constant dense<0.000000e+00> : vector<64xf32>
    %833 = vector.multi_reduction <add>, %809, %cst_459 [0] : vector<8x64xf32> to vector<64xf32>
    %834 = vector.shape_cast %833 : vector<64xf32> to vector<1x64xf32>
    %cst_460 = arith.constant 8.000000e+00 : f32
    %835 = vector.broadcast %cst_460 : f32 to vector<1x64xf32>
    %836 = arith.divf %834, %835 : vector<1x64xf32>
    %837 = vector.broadcast %836 : vector<1x64xf32> to vector<8x64xf32>
    %838 = arith.subf %809, %837 : vector<8x64xf32>
    %839 = arith.mulf %838, %838 : vector<8x64xf32>
    %cst_461 = arith.constant dense<0.000000e+00> : vector<64xf32>
    %840 = vector.multi_reduction <add>, %839, %cst_461 [0] : vector<8x64xf32> to vector<64xf32>
    %841 = vector.shape_cast %840 : vector<64xf32> to vector<1x64xf32>
    %cst_462 = arith.constant 8.000000e+00 : f32
    %842 = vector.broadcast %cst_462 : f32 to vector<1x64xf32>
    %843 = arith.divf %841, %842 : vector<1x64xf32>
    %844 = vector.broadcast %836 : vector<1x64xf32> to vector<8x64xf32>
    %845 = arith.subf %809, %844 : vector<8x64xf32>
    %cst_463 = arith.constant 9.99999974E-6 : f32
    %846 = vector.broadcast %cst_463 : f32 to vector<1x64xf32>
    %847 = arith.addf %843, %846 : vector<1x64xf32>
    %848 = math.rsqrt %847 : vector<1x64xf32>
    %849 = vector.broadcast %848 : vector<1x64xf32> to vector<8x64xf32>
    %850 = arith.mulf %845, %849 : vector<8x64xf32>
    %851 = vector.broadcast %542 : vector<1x64xf32> to vector<8x64xf32>
    %852 = arith.mulf %850, %851 : vector<8x64xf32>
    %853 = vector.broadcast %544 : vector<1x64xf32> to vector<8x64xf32>
    %854 = arith.addf %852, %853 : vector<8x64xf32>
    %cst_464 = arith.constant dense<0.000000e+00> : vector<8x80xf32>
    %855 = tpu.matmul %854, %546, %cst_464 {dimension_numbers = #tpu.dot_dimension_numbers<[1], [0], [0], [1], [0, 0, 1, 1], [], []>} : vector<8x64xf32>, vector<64x80xf32>, vector<8x80xf32> -> vector<8x80xf32>
    %856 = arith.addf %832, %855 : vector<8x80xf32>
    %857 = vector.broadcast %548 : vector<1x80xf32> to vector<8x80xf32>
    %858 = arith.addf %856, %857 : vector<8x80xf32>
    %cst_465 = arith.constant 0.000000e+00 : f32
    %859 = vector.broadcast %cst_465 : f32 to vector<8x80xf32>
    %860 = arith.cmpf oge, %858, %859 : vector<8x80xf32>
    %cst_466 = arith.constant 1.000000e-01 : f32
    %861 = vector.broadcast %cst_466 : f32 to vector<8x80xf32>
    %862 = arith.mulf %861, %858 : vector<8x80xf32>
    %863 = arith.select %860, %858, %862 : vector<8x80xi1>, vector<8x80xf32>
    %cst_467 = arith.constant dense<0.000000e+00> : vector<80xf32>
    %864 = vector.multi_reduction <add>, %863, %cst_467 [0] : vector<8x80xf32> to vector<80xf32>
    %865 = vector.shape_cast %864 : vector<80xf32> to vector<1x80xf32>
    %cst_468 = arith.constant 8.000000e+00 : f32
    %866 = vector.broadcast %cst_468 : f32 to vector<1x80xf32>
    %867 = arith.divf %865, %866 : vector<1x80xf32>
    %868 = vector.broadcast %867 : vector<1x80xf32> to vector<8x80xf32>
    %869 = arith.subf %863, %868 : vector<8x80xf32>
    %870 = arith.mulf %869, %869 : vector<8x80xf32>
    %cst_469 = arith.constant dense<0.000000e+00> : vector<80xf32>
    %871 = vector.multi_reduction <add>, %870, %cst_469 [0] : vector<8x80xf32> to vector<80xf32>
    %872 = vector.shape_cast %871 : vector<80xf32> to vector<1x80xf32>
    %cst_470 = arith.constant 8.000000e+00 : f32
    %873 = vector.broadcast %cst_470 : f32 to vector<1x80xf32>
    %874 = arith.divf %872, %873 : vector<1x80xf32>
    %875 = vector.broadcast %867 : vector<1x80xf32> to vector<8x80xf32>
    %876 = arith.subf %863, %875 : vector<8x80xf32>
    %cst_471 = arith.constant 9.99999974E-6 : f32
    %877 = vector.broadcast %cst_471 : f32 to vector<1x80xf32>
    %878 = arith.addf %874, %877 : vector<1x80xf32>
    %879 = math.rsqrt %878 : vector<1x80xf32>
    %880 = vector.broadcast %879 : vector<1x80xf32> to vector<8x80xf32>
    %881 = arith.mulf %876, %880 : vector<8x80xf32>
    %882 = vector.broadcast %550 : vector<1x80xf32> to vector<8x80xf32>
    %883 = arith.mulf %881, %882 : vector<8x80xf32>
    %884 = vector.broadcast %552 : vector<1x80xf32> to vector<8x80xf32>
    %885 = arith.addf %883, %884 : vector<8x80xf32>
    %cst_472 = arith.constant dense<0.000000e+00> : vector<8x80xf32>
    %886 = tpu.matmul %885, %554, %cst_472 {dimension_numbers = #tpu.dot_dimension_numbers<[1], [0], [0], [1], [0, 0, 1, 1], [], []>} : vector<8x80xf32>, vector<80x80xf32>, vector<8x80xf32> -> vector<8x80xf32>
    %887 = vector.broadcast %556 : vector<1x80xf32> to vector<8x80xf32>
    %888 = arith.addf %886, %887 : vector<8x80xf32>
    %cst_473 = arith.constant 0.000000e+00 : f32
    %889 = vector.broadcast %cst_473 : f32 to vector<8x80xf32>
    %890 = arith.cmpf oge, %888, %889 : vector<8x80xf32>
    %cst_474 = arith.constant 1.000000e-01 : f32
    %891 = vector.broadcast %cst_474 : f32 to vector<8x80xf32>
    %892 = arith.mulf %891, %888 : vector<8x80xf32>
    %893 = arith.select %890, %888, %892 : vector<8x80xi1>, vector<8x80xf32>
    %cst_475 = arith.constant dense<0.000000e+00> : vector<80xf32>
    %894 = vector.multi_reduction <add>, %893, %cst_475 [0] : vector<8x80xf32> to vector<80xf32>
    %895 = vector.shape_cast %894 : vector<80xf32> to vector<1x80xf32>
    %cst_476 = arith.constant 8.000000e+00 : f32
    %896 = vector.broadcast %cst_476 : f32 to vector<1x80xf32>
    %897 = arith.divf %895, %896 : vector<1x80xf32>
    %898 = vector.broadcast %897 : vector<1x80xf32> to vector<8x80xf32>
    %899 = arith.subf %893, %898 : vector<8x80xf32>
    %900 = arith.mulf %899, %899 : vector<8x80xf32>
    %cst_477 = arith.constant dense<0.000000e+00> : vector<80xf32>
    %901 = vector.multi_reduction <add>, %900, %cst_477 [0] : vector<8x80xf32> to vector<80xf32>
    %902 = vector.shape_cast %901 : vector<80xf32> to vector<1x80xf32>
    %cst_478 = arith.constant 8.000000e+00 : f32
    %903 = vector.broadcast %cst_478 : f32 to vector<1x80xf32>
    %904 = arith.divf %902, %903 : vector<1x80xf32>
    %905 = vector.broadcast %897 : vector<1x80xf32> to vector<8x80xf32>
    %906 = arith.subf %893, %905 : vector<8x80xf32>
    %cst_479 = arith.constant 9.99999974E-6 : f32
    %907 = vector.broadcast %cst_479 : f32 to vector<1x80xf32>
    %908 = arith.addf %904, %907 : vector<1x80xf32>
    %909 = math.rsqrt %908 : vector<1x80xf32>
    %910 = vector.broadcast %909 : vector<1x80xf32> to vector<8x80xf32>
    %911 = arith.mulf %906, %910 : vector<8x80xf32>
    %912 = vector.broadcast %558 : vector<1x80xf32> to vector<8x80xf32>
    %913 = arith.mulf %911, %912 : vector<8x80xf32>
    %914 = vector.broadcast %560 : vector<1x80xf32> to vector<8x80xf32>
    %915 = arith.addf %913, %914 : vector<8x80xf32>
    %cst_480 = arith.constant dense<0.000000e+00> : vector<8x16xf32>
    %916 = tpu.matmul %915, %562, %cst_480 {dimension_numbers = #tpu.dot_dimension_numbers<[1], [0], [0], [1], [0, 0, 1, 1], [], []>} : vector<8x80xf32>, vector<80x16xf32>, vector<8x16xf32> -> vector<8x16xf32>
    %917 = vector.broadcast %564 : vector<1x16xf32> to vector<8x16xf32>
    %918 = arith.addf %916, %917 : vector<8x16xf32>
    %c2 = arith.constant 2 : index
    %c0_481 = arith.constant 0 : index
    %c0_482 = arith.constant 0 : index
    %919 = vector.load %arg16[%c2, %c0_481, %c0_482] : memref<3x1x16xf32, #tpu.memory_space<vmem>>, vector<1x1x16xf32>
    %920 = vector.shape_cast %919 : vector<1x1x16xf32> to vector<1x16xf32>
    %c2_483 = arith.constant 2 : index
    %c0_484 = arith.constant 0 : index
    %c0_485 = arith.constant 0 : index
    %921 = vector.load %arg17[%c2_483, %c0_484, %c0_485] : memref<3x1x16xf32, #tpu.memory_space<vmem>>, vector<1x1x16xf32>
    %922 = vector.shape_cast %921 : vector<1x1x16xf32> to vector<1x16xf32>
    %c2_486 = arith.constant 2 : index
    %c0_487 = arith.constant 0 : index
    %c0_488 = arith.constant 0 : index
    %923 = vector.load %arg18[%c2_486, %c0_487, %c0_488] : memref<3x16x64xf32, #tpu.memory_space<vmem>>, vector<1x16x64xf32>
    %924 = vector.shape_cast %923 : vector<1x16x64xf32> to vector<16x64xf32>
    %c2_489 = arith.constant 2 : index
    %c0_490 = arith.constant 0 : index
    %c0_491 = arith.constant 0 : index
    %925 = vector.load %arg19[%c2_489, %c0_490, %c0_491] : memref<3x1x16xf32, #tpu.memory_space<vmem>>, vector<1x1x16xf32>
    %926 = vector.shape_cast %925 : vector<1x1x16xf32> to vector<1x16xf32>
    %c2_492 = arith.constant 2 : index
    %c0_493 = arith.constant 0 : index
    %c0_494 = arith.constant 0 : index
    %927 = vector.load %arg20[%c2_492, %c0_493, %c0_494] : memref<3x1x16xf32, #tpu.memory_space<vmem>>, vector<1x1x16xf32>
    %928 = vector.shape_cast %927 : vector<1x1x16xf32> to vector<1x16xf32>
    %c2_495 = arith.constant 2 : index
    %c0_496 = arith.constant 0 : index
    %c0_497 = arith.constant 0 : index
    %929 = vector.load %arg21[%c2_495, %c0_496, %c0_497] : memref<3x16x64xf32, #tpu.memory_space<vmem>>, vector<1x16x64xf32>
    %930 = vector.shape_cast %929 : vector<1x16x64xf32> to vector<16x64xf32>
    %c2_498 = arith.constant 2 : index
    %c0_499 = arith.constant 0 : index
    %c0_500 = arith.constant 0 : index
    %931 = vector.load %arg22[%c2_498, %c0_499, %c0_500] : memref<3x1x19xf32, #tpu.memory_space<vmem>>, vector<1x1x19xf32>
    %932 = vector.shape_cast %931 : vector<1x1x19xf32> to vector<1x19xf32>
    %c2_501 = arith.constant 2 : index
    %c0_502 = arith.constant 0 : index
    %c0_503 = arith.constant 0 : index
    %933 = vector.load %arg23[%c2_501, %c0_502, %c0_503] : memref<3x1x19xf32, #tpu.memory_space<vmem>>, vector<1x1x19xf32>
    %934 = vector.shape_cast %933 : vector<1x1x19xf32> to vector<1x19xf32>
    %c2_504 = arith.constant 2 : index
    %c0_505 = arith.constant 0 : index
    %c0_506 = arith.constant 0 : index
    %935 = vector.load %arg24[%c2_504, %c0_505, %c0_506] : memref<3x19x64xf32, #tpu.memory_space<vmem>>, vector<1x19x64xf32>
    %936 = vector.shape_cast %935 : vector<1x19x64xf32> to vector<19x64xf32>
    %c2_507 = arith.constant 2 : index
    %c0_508 = arith.constant 0 : index
    %c0_509 = arith.constant 0 : index
    %937 = vector.load %arg9[%c2_507, %c0_508, %c0_509] : memref<3x1x64xf32, #tpu.memory_space<vmem>>, vector<1x1x64xf32>
    %938 = vector.shape_cast %937 : vector<1x1x64xf32> to vector<1x64xf32>
    %c2_510 = arith.constant 2 : index
    %c0_511 = arith.constant 0 : index
    %c0_512 = arith.constant 0 : index
    %939 = vector.load %arg14[%c2_510, %c0_511, %c0_512] : memref<3x1x64xf32, #tpu.memory_space<vmem>>, vector<1x1x64xf32>
    %940 = vector.shape_cast %939 : vector<1x1x64xf32> to vector<1x64xf32>
    %c2_513 = arith.constant 2 : index
    %c0_514 = arith.constant 0 : index
    %c0_515 = arith.constant 0 : index
    %941 = vector.load %arg12[%c2_513, %c0_514, %c0_515] : memref<3x1x64xf32, #tpu.memory_space<vmem>>, vector<1x1x64xf32>
    %942 = vector.shape_cast %941 : vector<1x1x64xf32> to vector<1x64xf32>
    %c2_516 = arith.constant 2 : index
    %c0_517 = arith.constant 0 : index
    %c0_518 = arith.constant 0 : index
    %943 = vector.load %arg25[%c2_516, %c0_517, %c0_518] : memref<3x64x64xf32, #tpu.memory_space<vmem>>, vector<1x64x64xf32>
    %944 = vector.shape_cast %943 : vector<1x64x64xf32> to vector<64x64xf32>
    %c2_519 = arith.constant 2 : index
    %c0_520 = arith.constant 0 : index
    %c0_521 = arith.constant 0 : index
    %945 = vector.load %arg10[%c2_519, %c0_520, %c0_521] : memref<3x1x64xf32, #tpu.memory_space<vmem>>, vector<1x1x64xf32>
    %946 = vector.shape_cast %945 : vector<1x1x64xf32> to vector<1x64xf32>
    %c2_522 = arith.constant 2 : index
    %c0_523 = arith.constant 0 : index
    %c0_524 = arith.constant 0 : index
    %947 = vector.load %arg15[%c2_522, %c0_523, %c0_524] : memref<3x1x64xf32, #tpu.memory_space<vmem>>, vector<1x1x64xf32>
    %948 = vector.shape_cast %947 : vector<1x1x64xf32> to vector<1x64xf32>
    %c2_525 = arith.constant 2 : index
    %c0_526 = arith.constant 0 : index
    %c0_527 = arith.constant 0 : index
    %949 = vector.load %arg13[%c2_525, %c0_526, %c0_527] : memref<3x1x64xf32, #tpu.memory_space<vmem>>, vector<1x1x64xf32>
    %950 = vector.shape_cast %949 : vector<1x1x64xf32> to vector<1x64xf32>
    %c2_528 = arith.constant 2 : index
    %c0_529 = arith.constant 0 : index
    %c0_530 = arith.constant 0 : index
    %951 = vector.load %arg26[%c2_528, %c0_529, %c0_530] : memref<3x64x19xf32, #tpu.memory_space<vmem>>, vector<1x64x19xf32>
    %952 = vector.shape_cast %951 : vector<1x64x19xf32> to vector<64x19xf32>
    %c2_531 = arith.constant 2 : index
    %c0_532 = arith.constant 0 : index
    %c0_533 = arith.constant 0 : index
    %953 = vector.load %arg11[%c2_531, %c0_532, %c0_533] : memref<3x1x19xf32, #tpu.memory_space<vmem>>, vector<1x1x19xf32>
    %954 = vector.shape_cast %953 : vector<1x1x19xf32> to vector<1x19xf32>
    %c2_534 = arith.constant 2 : index
    %c0_535 = arith.constant 0 : index
    %c0_536 = arith.constant 0 : index
    %955 = vector.load %arg34[%c2_534, %c0_535, %c0_536] : memref<3x1x16xf32, #tpu.memory_space<vmem>>, vector<1x1x16xf32>
    %956 = vector.shape_cast %955 : vector<1x1x16xf32> to vector<1x16xf32>
    %c2_537 = arith.constant 2 : index
    %c0_538 = arith.constant 0 : index
    %c0_539 = arith.constant 0 : index
    %957 = vector.load %arg35[%c2_537, %c0_538, %c0_539] : memref<3x1x16xf32, #tpu.memory_space<vmem>>, vector<1x1x16xf32>
    %958 = vector.shape_cast %957 : vector<1x1x16xf32> to vector<1x16xf32>
    %c2_540 = arith.constant 2 : index
    %c0_541 = arith.constant 0 : index
    %c0_542 = arith.constant 0 : index
    %959 = vector.load %arg36[%c2_540, %c0_541, %c0_542] : memref<3x16x64xf32, #tpu.memory_space<vmem>>, vector<1x16x64xf32>
    %960 = vector.shape_cast %959 : vector<1x16x64xf32> to vector<16x64xf32>
    %c2_543 = arith.constant 2 : index
    %c0_544 = arith.constant 0 : index
    %c0_545 = arith.constant 0 : index
    %961 = vector.load %arg37[%c2_543, %c0_544, %c0_545] : memref<3x1x19xf32, #tpu.memory_space<vmem>>, vector<1x1x19xf32>
    %962 = vector.shape_cast %961 : vector<1x1x19xf32> to vector<1x19xf32>
    %c2_546 = arith.constant 2 : index
    %c0_547 = arith.constant 0 : index
    %c0_548 = arith.constant 0 : index
    %963 = vector.load %arg38[%c2_546, %c0_547, %c0_548] : memref<3x1x19xf32, #tpu.memory_space<vmem>>, vector<1x1x19xf32>
    %964 = vector.shape_cast %963 : vector<1x1x19xf32> to vector<1x19xf32>
    %c2_549 = arith.constant 2 : index
    %c0_550 = arith.constant 0 : index
    %c0_551 = arith.constant 0 : index
    %965 = vector.load %arg39[%c2_549, %c0_550, %c0_551] : memref<3x19x64xf32, #tpu.memory_space<vmem>>, vector<1x19x64xf32>
    %966 = vector.shape_cast %965 : vector<1x19x64xf32> to vector<19x64xf32>
    %c2_552 = arith.constant 2 : index
    %c0_553 = arith.constant 0 : index
    %c0_554 = arith.constant 0 : index
    %967 = vector.load %arg27[%c2_552, %c0_553, %c0_554] : memref<3x1x64xf32, #tpu.memory_space<vmem>>, vector<1x1x64xf32>
    %968 = vector.shape_cast %967 : vector<1x1x64xf32> to vector<1x64xf32>
    %c2_555 = arith.constant 2 : index
    %c0_556 = arith.constant 0 : index
    %c0_557 = arith.constant 0 : index
    %969 = vector.load %arg32[%c2_555, %c0_556, %c0_557] : memref<3x1x64xf32, #tpu.memory_space<vmem>>, vector<1x1x64xf32>
    %970 = vector.shape_cast %969 : vector<1x1x64xf32> to vector<1x64xf32>
    %c2_558 = arith.constant 2 : index
    %c0_559 = arith.constant 0 : index
    %c0_560 = arith.constant 0 : index
    %971 = vector.load %arg30[%c2_558, %c0_559, %c0_560] : memref<3x1x64xf32, #tpu.memory_space<vmem>>, vector<1x1x64xf32>
    %972 = vector.shape_cast %971 : vector<1x1x64xf32> to vector<1x64xf32>
    %c2_561 = arith.constant 2 : index
    %c0_562 = arith.constant 0 : index
    %c0_563 = arith.constant 0 : index
    %973 = vector.load %arg40[%c2_561, %c0_562, %c0_563] : memref<3x64x64xf32, #tpu.memory_space<vmem>>, vector<1x64x64xf32>
    %974 = vector.shape_cast %973 : vector<1x64x64xf32> to vector<64x64xf32>
    %c2_564 = arith.constant 2 : index
    %c0_565 = arith.constant 0 : index
    %c0_566 = arith.constant 0 : index
    %975 = vector.load %arg28[%c2_564, %c0_565, %c0_566] : memref<3x1x64xf32, #tpu.memory_space<vmem>>, vector<1x1x64xf32>
    %976 = vector.shape_cast %975 : vector<1x1x64xf32> to vector<1x64xf32>
    %c2_567 = arith.constant 2 : index
    %c0_568 = arith.constant 0 : index
    %c0_569 = arith.constant 0 : index
    %977 = vector.load %arg33[%c2_567, %c0_568, %c0_569] : memref<3x1x64xf32, #tpu.memory_space<vmem>>, vector<1x1x64xf32>
    %978 = vector.shape_cast %977 : vector<1x1x64xf32> to vector<1x64xf32>
    %c2_570 = arith.constant 2 : index
    %c0_571 = arith.constant 0 : index
    %c0_572 = arith.constant 0 : index
    %979 = vector.load %arg31[%c2_570, %c0_571, %c0_572] : memref<3x1x64xf32, #tpu.memory_space<vmem>>, vector<1x1x64xf32>
    %980 = vector.shape_cast %979 : vector<1x1x64xf32> to vector<1x64xf32>
    %c2_573 = arith.constant 2 : index
    %c0_574 = arith.constant 0 : index
    %c0_575 = arith.constant 0 : index
    %981 = vector.load %arg41[%c2_573, %c0_574, %c0_575] : memref<3x64x64xf32, #tpu.memory_space<vmem>>, vector<1x64x64xf32>
    %982 = vector.shape_cast %981 : vector<1x64x64xf32> to vector<64x64xf32>
    %c2_576 = arith.constant 2 : index
    %c0_577 = arith.constant 0 : index
    %c0_578 = arith.constant 0 : index
    %983 = vector.load %arg29[%c2_576, %c0_577, %c0_578] : memref<3x1x64xf32, #tpu.memory_space<vmem>>, vector<1x1x64xf32>
    %984 = vector.shape_cast %983 : vector<1x1x64xf32> to vector<1x64xf32>
    %c2_579 = arith.constant 2 : index
    %c0_580 = arith.constant 0 : index
    %c0_581 = arith.constant 0 : index
    %985 = vector.load %arg49[%c2_579, %c0_580, %c0_581] : memref<3x1x16xf32, #tpu.memory_space<vmem>>, vector<1x1x16xf32>
    %986 = vector.shape_cast %985 : vector<1x1x16xf32> to vector<1x16xf32>
    %c2_582 = arith.constant 2 : index
    %c0_583 = arith.constant 0 : index
    %c0_584 = arith.constant 0 : index
    %987 = vector.load %arg50[%c2_582, %c0_583, %c0_584] : memref<3x1x16xf32, #tpu.memory_space<vmem>>, vector<1x1x16xf32>
    %988 = vector.shape_cast %987 : vector<1x1x16xf32> to vector<1x16xf32>
    %c2_585 = arith.constant 2 : index
    %c0_586 = arith.constant 0 : index
    %c0_587 = arith.constant 0 : index
    %989 = vector.load %arg51[%c2_585, %c0_586, %c0_587] : memref<3x16x80xf32, #tpu.memory_space<vmem>>, vector<1x16x80xf32>
    %990 = vector.shape_cast %989 : vector<1x16x80xf32> to vector<16x80xf32>
    %c2_588 = arith.constant 2 : index
    %c0_589 = arith.constant 0 : index
    %c0_590 = arith.constant 0 : index
    %991 = vector.load %arg52[%c2_588, %c0_589, %c0_590] : memref<3x1x64xf32, #tpu.memory_space<vmem>>, vector<1x1x64xf32>
    %992 = vector.shape_cast %991 : vector<1x1x64xf32> to vector<1x64xf32>
    %c2_591 = arith.constant 2 : index
    %c0_592 = arith.constant 0 : index
    %c0_593 = arith.constant 0 : index
    %993 = vector.load %arg53[%c2_591, %c0_592, %c0_593] : memref<3x1x64xf32, #tpu.memory_space<vmem>>, vector<1x1x64xf32>
    %994 = vector.shape_cast %993 : vector<1x1x64xf32> to vector<1x64xf32>
    %c2_594 = arith.constant 2 : index
    %c0_595 = arith.constant 0 : index
    %c0_596 = arith.constant 0 : index
    %995 = vector.load %arg54[%c2_594, %c0_595, %c0_596] : memref<3x64x80xf32, #tpu.memory_space<vmem>>, vector<1x64x80xf32>
    %996 = vector.shape_cast %995 : vector<1x64x80xf32> to vector<64x80xf32>
    %c2_597 = arith.constant 2 : index
    %c0_598 = arith.constant 0 : index
    %c0_599 = arith.constant 0 : index
    %997 = vector.load %arg42[%c2_597, %c0_598, %c0_599] : memref<3x1x80xf32, #tpu.memory_space<vmem>>, vector<1x1x80xf32>
    %998 = vector.shape_cast %997 : vector<1x1x80xf32> to vector<1x80xf32>
    %c2_600 = arith.constant 2 : index
    %c0_601 = arith.constant 0 : index
    %c0_602 = arith.constant 0 : index
    %999 = vector.load %arg47[%c2_600, %c0_601, %c0_602] : memref<3x1x80xf32, #tpu.memory_space<vmem>>, vector<1x1x80xf32>
    %1000 = vector.shape_cast %999 : vector<1x1x80xf32> to vector<1x80xf32>
    %c2_603 = arith.constant 2 : index
    %c0_604 = arith.constant 0 : index
    %c0_605 = arith.constant 0 : index
    %1001 = vector.load %arg45[%c2_603, %c0_604, %c0_605] : memref<3x1x80xf32, #tpu.memory_space<vmem>>, vector<1x1x80xf32>
    %1002 = vector.shape_cast %1001 : vector<1x1x80xf32> to vector<1x80xf32>
    %c2_606 = arith.constant 2 : index
    %c0_607 = arith.constant 0 : index
    %c0_608 = arith.constant 0 : index
    %1003 = vector.load %arg55[%c2_606, %c0_607, %c0_608] : memref<3x80x80xf32, #tpu.memory_space<vmem>>, vector<1x80x80xf32>
    %1004 = vector.shape_cast %1003 : vector<1x80x80xf32> to vector<80x80xf32>
    %c2_609 = arith.constant 2 : index
    %c0_610 = arith.constant 0 : index
    %c0_611 = arith.constant 0 : index
    %1005 = vector.load %arg43[%c2_609, %c0_610, %c0_611] : memref<3x1x80xf32, #tpu.memory_space<vmem>>, vector<1x1x80xf32>
    %1006 = vector.shape_cast %1005 : vector<1x1x80xf32> to vector<1x80xf32>
    %c2_612 = arith.constant 2 : index
    %c0_613 = arith.constant 0 : index
    %c0_614 = arith.constant 0 : index
    %1007 = vector.load %arg48[%c2_612, %c0_613, %c0_614] : memref<3x1x80xf32, #tpu.memory_space<vmem>>, vector<1x1x80xf32>
    %1008 = vector.shape_cast %1007 : vector<1x1x80xf32> to vector<1x80xf32>
    %c2_615 = arith.constant 2 : index
    %c0_616 = arith.constant 0 : index
    %c0_617 = arith.constant 0 : index
    %1009 = vector.load %arg46[%c2_615, %c0_616, %c0_617] : memref<3x1x80xf32, #tpu.memory_space<vmem>>, vector<1x1x80xf32>
    %1010 = vector.shape_cast %1009 : vector<1x1x80xf32> to vector<1x80xf32>
    %c2_618 = arith.constant 2 : index
    %c0_619 = arith.constant 0 : index
    %c0_620 = arith.constant 0 : index
    %1011 = vector.load %arg56[%c2_618, %c0_619, %c0_620] : memref<3x80x16xf32, #tpu.memory_space<vmem>>, vector<1x80x16xf32>
    %1012 = vector.shape_cast %1011 : vector<1x80x16xf32> to vector<80x16xf32>
    %c2_621 = arith.constant 2 : index
    %c0_622 = arith.constant 0 : index
    %c0_623 = arith.constant 0 : index
    %1013 = vector.load %arg44[%c2_621, %c0_622, %c0_623] : memref<3x1x16xf32, #tpu.memory_space<vmem>>, vector<1x1x16xf32>
    %1014 = vector.shape_cast %1013 : vector<1x1x16xf32> to vector<1x16xf32>
    %cst_624 = arith.constant dense<0.000000e+00> : vector<16x16xf32>
    %1015 = tpu.matmul %9, %918, %cst_624 {dimension_numbers = #tpu.dot_dimension_numbers<[1], [0], [0], [1], [0, 0, 1, 1], [], []>} : vector<16x8xf32>, vector<8x16xf32>, vector<16x16xf32> -> vector<16x16xf32>
    %cst_625 = arith.constant dense<0.000000e+00> : vector<16x16xf32>
    %1016 = tpu.matmul %13, %918, %cst_625 {dimension_numbers = #tpu.dot_dimension_numbers<[1], [0], [0], [1], [0, 0, 1, 1], [], []>} : vector<16x8xf32>, vector<8x16xf32>, vector<16x16xf32> -> vector<16x16xf32>
    %cst_626 = arith.constant dense<0.000000e+00> : vector<16xf32>
    %1017 = vector.multi_reduction <add>, %1015, %cst_626 [0] : vector<16x16xf32> to vector<16xf32>
    %1018 = vector.shape_cast %1017 : vector<16xf32> to vector<1x16xf32>
    %cst_627 = arith.constant 1.600000e+01 : f32
    %1019 = vector.broadcast %cst_627 : f32 to vector<1x16xf32>
    %1020 = arith.divf %1018, %1019 : vector<1x16xf32>
    %1021 = vector.broadcast %1020 : vector<1x16xf32> to vector<16x16xf32>
    %1022 = arith.subf %1015, %1021 : vector<16x16xf32>
    %1023 = arith.mulf %1022, %1022 : vector<16x16xf32>
    %cst_628 = arith.constant dense<0.000000e+00> : vector<16xf32>
    %1024 = vector.multi_reduction <add>, %1023, %cst_628 [0] : vector<16x16xf32> to vector<16xf32>
    %1025 = vector.shape_cast %1024 : vector<16xf32> to vector<1x16xf32>
    %cst_629 = arith.constant 1.600000e+01 : f32
    %1026 = vector.broadcast %cst_629 : f32 to vector<1x16xf32>
    %1027 = arith.divf %1025, %1026 : vector<1x16xf32>
    %1028 = vector.broadcast %1020 : vector<1x16xf32> to vector<16x16xf32>
    %1029 = arith.subf %1015, %1028 : vector<16x16xf32>
    %cst_630 = arith.constant 9.99999974E-6 : f32
    %1030 = vector.broadcast %cst_630 : f32 to vector<1x16xf32>
    %1031 = arith.addf %1027, %1030 : vector<1x16xf32>
    %1032 = math.rsqrt %1031 : vector<1x16xf32>
    %1033 = vector.broadcast %1032 : vector<1x16xf32> to vector<16x16xf32>
    %1034 = arith.mulf %1029, %1033 : vector<16x16xf32>
    %1035 = vector.broadcast %920 : vector<1x16xf32> to vector<16x16xf32>
    %1036 = arith.mulf %1034, %1035 : vector<16x16xf32>
    %1037 = vector.broadcast %922 : vector<1x16xf32> to vector<16x16xf32>
    %1038 = arith.addf %1036, %1037 : vector<16x16xf32>
    %cst_631 = arith.constant dense<0.000000e+00> : vector<16x64xf32>
    %1039 = tpu.matmul %1038, %924, %cst_631 {dimension_numbers = #tpu.dot_dimension_numbers<[1], [0], [0], [1], [0, 0, 1, 1], [], []>} : vector<16x16xf32>, vector<16x64xf32>, vector<16x64xf32> -> vector<16x64xf32>
    %cst_632 = arith.constant dense<0.000000e+00> : vector<16xf32>
    %1040 = vector.multi_reduction <add>, %1016, %cst_632 [0] : vector<16x16xf32> to vector<16xf32>
    %1041 = vector.shape_cast %1040 : vector<16xf32> to vector<1x16xf32>
    %cst_633 = arith.constant 1.600000e+01 : f32
    %1042 = vector.broadcast %cst_633 : f32 to vector<1x16xf32>
    %1043 = arith.divf %1041, %1042 : vector<1x16xf32>
    %1044 = vector.broadcast %1043 : vector<1x16xf32> to vector<16x16xf32>
    %1045 = arith.subf %1016, %1044 : vector<16x16xf32>
    %1046 = arith.mulf %1045, %1045 : vector<16x16xf32>
    %cst_634 = arith.constant dense<0.000000e+00> : vector<16xf32>
    %1047 = vector.multi_reduction <add>, %1046, %cst_634 [0] : vector<16x16xf32> to vector<16xf32>
    %1048 = vector.shape_cast %1047 : vector<16xf32> to vector<1x16xf32>
    %cst_635 = arith.constant 1.600000e+01 : f32
    %1049 = vector.broadcast %cst_635 : f32 to vector<1x16xf32>
    %1050 = arith.divf %1048, %1049 : vector<1x16xf32>
    %1051 = vector.broadcast %1043 : vector<1x16xf32> to vector<16x16xf32>
    %1052 = arith.subf %1016, %1051 : vector<16x16xf32>
    %cst_636 = arith.constant 9.99999974E-6 : f32
    %1053 = vector.broadcast %cst_636 : f32 to vector<1x16xf32>
    %1054 = arith.addf %1050, %1053 : vector<1x16xf32>
    %1055 = math.rsqrt %1054 : vector<1x16xf32>
    %1056 = vector.broadcast %1055 : vector<1x16xf32> to vector<16x16xf32>
    %1057 = arith.mulf %1052, %1056 : vector<16x16xf32>
    %1058 = vector.broadcast %926 : vector<1x16xf32> to vector<16x16xf32>
    %1059 = arith.mulf %1057, %1058 : vector<16x16xf32>
    %1060 = vector.broadcast %928 : vector<1x16xf32> to vector<16x16xf32>
    %1061 = arith.addf %1059, %1060 : vector<16x16xf32>
    %cst_637 = arith.constant dense<0.000000e+00> : vector<16x64xf32>
    %1062 = tpu.matmul %1061, %930, %cst_637 {dimension_numbers = #tpu.dot_dimension_numbers<[1], [0], [0], [1], [0, 0, 1, 1], [], []>} : vector<16x16xf32>, vector<16x64xf32>, vector<16x64xf32> -> vector<16x64xf32>
    %1063 = arith.addf %1039, %1062 : vector<16x64xf32>
    %cst_638 = arith.constant dense<0.000000e+00> : vector<19xf32>
    %1064 = vector.multi_reduction <add>, %699, %cst_638 [0] : vector<16x19xf32> to vector<19xf32>
    %1065 = vector.shape_cast %1064 : vector<19xf32> to vector<1x19xf32>
    %cst_639 = arith.constant 1.600000e+01 : f32
    %1066 = vector.broadcast %cst_639 : f32 to vector<1x19xf32>
    %1067 = arith.divf %1065, %1066 : vector<1x19xf32>
    %1068 = vector.broadcast %1067 : vector<1x19xf32> to vector<16x19xf32>
    %1069 = arith.subf %699, %1068 : vector<16x19xf32>
    %1070 = arith.mulf %1069, %1069 : vector<16x19xf32>
    %cst_640 = arith.constant dense<0.000000e+00> : vector<19xf32>
    %1071 = vector.multi_reduction <add>, %1070, %cst_640 [0] : vector<16x19xf32> to vector<19xf32>
    %1072 = vector.shape_cast %1071 : vector<19xf32> to vector<1x19xf32>
    %cst_641 = arith.constant 1.600000e+01 : f32
    %1073 = vector.broadcast %cst_641 : f32 to vector<1x19xf32>
    %1074 = arith.divf %1072, %1073 : vector<1x19xf32>
    %1075 = vector.broadcast %1067 : vector<1x19xf32> to vector<16x19xf32>
    %1076 = arith.subf %699, %1075 : vector<16x19xf32>
    %cst_642 = arith.constant 9.99999974E-6 : f32
    %1077 = vector.broadcast %cst_642 : f32 to vector<1x19xf32>
    %1078 = arith.addf %1074, %1077 : vector<1x19xf32>
    %1079 = math.rsqrt %1078 : vector<1x19xf32>
    %1080 = vector.broadcast %1079 : vector<1x19xf32> to vector<16x19xf32>
    %1081 = arith.mulf %1076, %1080 : vector<16x19xf32>
    %1082 = vector.broadcast %932 : vector<1x19xf32> to vector<16x19xf32>
    %1083 = arith.mulf %1081, %1082 : vector<16x19xf32>
    %1084 = vector.broadcast %934 : vector<1x19xf32> to vector<16x19xf32>
    %1085 = arith.addf %1083, %1084 : vector<16x19xf32>
    %cst_643 = arith.constant dense<0.000000e+00> : vector<16x64xf32>
    %1086 = tpu.matmul %1085, %936, %cst_643 {dimension_numbers = #tpu.dot_dimension_numbers<[1], [0], [0], [1], [0, 0, 1, 1], [], []>} : vector<16x19xf32>, vector<19x64xf32>, vector<16x64xf32> -> vector<16x64xf32>
    %1087 = arith.addf %1063, %1086 : vector<16x64xf32>
    %1088 = vector.broadcast %938 : vector<1x64xf32> to vector<16x64xf32>
    %1089 = arith.addf %1087, %1088 : vector<16x64xf32>
    %cst_644 = arith.constant 0.000000e+00 : f32
    %1090 = vector.broadcast %cst_644 : f32 to vector<16x64xf32>
    %1091 = arith.cmpf oge, %1089, %1090 : vector<16x64xf32>
    %cst_645 = arith.constant 1.000000e-01 : f32
    %1092 = vector.broadcast %cst_645 : f32 to vector<16x64xf32>
    %1093 = arith.mulf %1092, %1089 : vector<16x64xf32>
    %1094 = arith.select %1091, %1089, %1093 : vector<16x64xi1>, vector<16x64xf32>
    %cst_646 = arith.constant dense<0.000000e+00> : vector<64xf32>
    %1095 = vector.multi_reduction <add>, %1094, %cst_646 [0] : vector<16x64xf32> to vector<64xf32>
    %1096 = vector.shape_cast %1095 : vector<64xf32> to vector<1x64xf32>
    %cst_647 = arith.constant 1.600000e+01 : f32
    %1097 = vector.broadcast %cst_647 : f32 to vector<1x64xf32>
    %1098 = arith.divf %1096, %1097 : vector<1x64xf32>
    %1099 = vector.broadcast %1098 : vector<1x64xf32> to vector<16x64xf32>
    %1100 = arith.subf %1094, %1099 : vector<16x64xf32>
    %1101 = arith.mulf %1100, %1100 : vector<16x64xf32>
    %cst_648 = arith.constant dense<0.000000e+00> : vector<64xf32>
    %1102 = vector.multi_reduction <add>, %1101, %cst_648 [0] : vector<16x64xf32> to vector<64xf32>
    %1103 = vector.shape_cast %1102 : vector<64xf32> to vector<1x64xf32>
    %cst_649 = arith.constant 1.600000e+01 : f32
    %1104 = vector.broadcast %cst_649 : f32 to vector<1x64xf32>
    %1105 = arith.divf %1103, %1104 : vector<1x64xf32>
    %1106 = vector.broadcast %1098 : vector<1x64xf32> to vector<16x64xf32>
    %1107 = arith.subf %1094, %1106 : vector<16x64xf32>
    %cst_650 = arith.constant 9.99999974E-6 : f32
    %1108 = vector.broadcast %cst_650 : f32 to vector<1x64xf32>
    %1109 = arith.addf %1105, %1108 : vector<1x64xf32>
    %1110 = math.rsqrt %1109 : vector<1x64xf32>
    %1111 = vector.broadcast %1110 : vector<1x64xf32> to vector<16x64xf32>
    %1112 = arith.mulf %1107, %1111 : vector<16x64xf32>
    %1113 = vector.broadcast %940 : vector<1x64xf32> to vector<16x64xf32>
    %1114 = arith.mulf %1112, %1113 : vector<16x64xf32>
    %1115 = vector.broadcast %942 : vector<1x64xf32> to vector<16x64xf32>
    %1116 = arith.addf %1114, %1115 : vector<16x64xf32>
    %cst_651 = arith.constant dense<0.000000e+00> : vector<16x64xf32>
    %1117 = tpu.matmul %1116, %944, %cst_651 {dimension_numbers = #tpu.dot_dimension_numbers<[1], [0], [0], [1], [0, 0, 1, 1], [], []>} : vector<16x64xf32>, vector<64x64xf32>, vector<16x64xf32> -> vector<16x64xf32>
    %1118 = vector.broadcast %946 : vector<1x64xf32> to vector<16x64xf32>
    %1119 = arith.addf %1117, %1118 : vector<16x64xf32>
    %cst_652 = arith.constant 0.000000e+00 : f32
    %1120 = vector.broadcast %cst_652 : f32 to vector<16x64xf32>
    %1121 = arith.cmpf oge, %1119, %1120 : vector<16x64xf32>
    %cst_653 = arith.constant 1.000000e-01 : f32
    %1122 = vector.broadcast %cst_653 : f32 to vector<16x64xf32>
    %1123 = arith.mulf %1122, %1119 : vector<16x64xf32>
    %1124 = arith.select %1121, %1119, %1123 : vector<16x64xi1>, vector<16x64xf32>
    %cst_654 = arith.constant dense<0.000000e+00> : vector<64xf32>
    %1125 = vector.multi_reduction <add>, %1124, %cst_654 [0] : vector<16x64xf32> to vector<64xf32>
    %1126 = vector.shape_cast %1125 : vector<64xf32> to vector<1x64xf32>
    %cst_655 = arith.constant 1.600000e+01 : f32
    %1127 = vector.broadcast %cst_655 : f32 to vector<1x64xf32>
    %1128 = arith.divf %1126, %1127 : vector<1x64xf32>
    %1129 = vector.broadcast %1128 : vector<1x64xf32> to vector<16x64xf32>
    %1130 = arith.subf %1124, %1129 : vector<16x64xf32>
    %1131 = arith.mulf %1130, %1130 : vector<16x64xf32>
    %cst_656 = arith.constant dense<0.000000e+00> : vector<64xf32>
    %1132 = vector.multi_reduction <add>, %1131, %cst_656 [0] : vector<16x64xf32> to vector<64xf32>
    %1133 = vector.shape_cast %1132 : vector<64xf32> to vector<1x64xf32>
    %cst_657 = arith.constant 1.600000e+01 : f32
    %1134 = vector.broadcast %cst_657 : f32 to vector<1x64xf32>
    %1135 = arith.divf %1133, %1134 : vector<1x64xf32>
    %1136 = vector.broadcast %1128 : vector<1x64xf32> to vector<16x64xf32>
    %1137 = arith.subf %1124, %1136 : vector<16x64xf32>
    %cst_658 = arith.constant 9.99999974E-6 : f32
    %1138 = vector.broadcast %cst_658 : f32 to vector<1x64xf32>
    %1139 = arith.addf %1135, %1138 : vector<1x64xf32>
    %1140 = math.rsqrt %1139 : vector<1x64xf32>
    %1141 = vector.broadcast %1140 : vector<1x64xf32> to vector<16x64xf32>
    %1142 = arith.mulf %1137, %1141 : vector<16x64xf32>
    %1143 = vector.broadcast %948 : vector<1x64xf32> to vector<16x64xf32>
    %1144 = arith.mulf %1142, %1143 : vector<16x64xf32>
    %1145 = vector.broadcast %950 : vector<1x64xf32> to vector<16x64xf32>
    %1146 = arith.addf %1144, %1145 : vector<16x64xf32>
    %cst_659 = arith.constant dense<0.000000e+00> : vector<16x19xf32>
    %1147 = tpu.matmul %1146, %952, %cst_659 {dimension_numbers = #tpu.dot_dimension_numbers<[1], [0], [0], [1], [0, 0, 1, 1], [], []>} : vector<16x64xf32>, vector<64x19xf32>, vector<16x19xf32> -> vector<16x19xf32>
    %1148 = vector.broadcast %954 : vector<1x19xf32> to vector<16x19xf32>
    %1149 = arith.addf %1147, %1148 : vector<16x19xf32>
    %cst_660 = arith.constant dense<0.000000e+00> : vector<16xf32>
    %1150 = vector.multi_reduction <add>, %1015, %cst_660 [0] : vector<16x16xf32> to vector<16xf32>
    %1151 = vector.shape_cast %1150 : vector<16xf32> to vector<1x16xf32>
    %cst_661 = arith.constant 1.600000e+01 : f32
    %1152 = vector.broadcast %cst_661 : f32 to vector<1x16xf32>
    %1153 = arith.divf %1151, %1152 : vector<1x16xf32>
    %1154 = vector.broadcast %1153 : vector<1x16xf32> to vector<16x16xf32>
    %1155 = arith.subf %1015, %1154 : vector<16x16xf32>
    %1156 = arith.mulf %1155, %1155 : vector<16x16xf32>
    %cst_662 = arith.constant dense<0.000000e+00> : vector<16xf32>
    %1157 = vector.multi_reduction <add>, %1156, %cst_662 [0] : vector<16x16xf32> to vector<16xf32>
    %1158 = vector.shape_cast %1157 : vector<16xf32> to vector<1x16xf32>
    %cst_663 = arith.constant 1.600000e+01 : f32
    %1159 = vector.broadcast %cst_663 : f32 to vector<1x16xf32>
    %1160 = arith.divf %1158, %1159 : vector<1x16xf32>
    %1161 = vector.broadcast %1153 : vector<1x16xf32> to vector<16x16xf32>
    %1162 = arith.subf %1015, %1161 : vector<16x16xf32>
    %cst_664 = arith.constant 9.99999974E-6 : f32
    %1163 = vector.broadcast %cst_664 : f32 to vector<1x16xf32>
    %1164 = arith.addf %1160, %1163 : vector<1x16xf32>
    %1165 = math.rsqrt %1164 : vector<1x16xf32>
    %1166 = vector.broadcast %1165 : vector<1x16xf32> to vector<16x16xf32>
    %1167 = arith.mulf %1162, %1166 : vector<16x16xf32>
    %1168 = vector.broadcast %956 : vector<1x16xf32> to vector<16x16xf32>
    %1169 = arith.mulf %1167, %1168 : vector<16x16xf32>
    %1170 = vector.broadcast %958 : vector<1x16xf32> to vector<16x16xf32>
    %1171 = arith.addf %1169, %1170 : vector<16x16xf32>
    %cst_665 = arith.constant dense<0.000000e+00> : vector<16x64xf32>
    %1172 = tpu.matmul %1171, %960, %cst_665 {dimension_numbers = #tpu.dot_dimension_numbers<[1], [0], [0], [1], [0, 0, 1, 1], [], []>} : vector<16x16xf32>, vector<16x64xf32>, vector<16x64xf32> -> vector<16x64xf32>
    %cst_666 = arith.constant dense<0.000000e+00> : vector<19xf32>
    %1173 = vector.multi_reduction <add>, %1149, %cst_666 [0] : vector<16x19xf32> to vector<19xf32>
    %1174 = vector.shape_cast %1173 : vector<19xf32> to vector<1x19xf32>
    %cst_667 = arith.constant 1.600000e+01 : f32
    %1175 = vector.broadcast %cst_667 : f32 to vector<1x19xf32>
    %1176 = arith.divf %1174, %1175 : vector<1x19xf32>
    %1177 = vector.broadcast %1176 : vector<1x19xf32> to vector<16x19xf32>
    %1178 = arith.subf %1149, %1177 : vector<16x19xf32>
    %1179 = arith.mulf %1178, %1178 : vector<16x19xf32>
    %cst_668 = arith.constant dense<0.000000e+00> : vector<19xf32>
    %1180 = vector.multi_reduction <add>, %1179, %cst_668 [0] : vector<16x19xf32> to vector<19xf32>
    %1181 = vector.shape_cast %1180 : vector<19xf32> to vector<1x19xf32>
    %cst_669 = arith.constant 1.600000e+01 : f32
    %1182 = vector.broadcast %cst_669 : f32 to vector<1x19xf32>
    %1183 = arith.divf %1181, %1182 : vector<1x19xf32>
    %1184 = vector.broadcast %1176 : vector<1x19xf32> to vector<16x19xf32>
    %1185 = arith.subf %1149, %1184 : vector<16x19xf32>
    %cst_670 = arith.constant 9.99999974E-6 : f32
    %1186 = vector.broadcast %cst_670 : f32 to vector<1x19xf32>
    %1187 = arith.addf %1183, %1186 : vector<1x19xf32>
    %1188 = math.rsqrt %1187 : vector<1x19xf32>
    %1189 = vector.broadcast %1188 : vector<1x19xf32> to vector<16x19xf32>
    %1190 = arith.mulf %1185, %1189 : vector<16x19xf32>
    %1191 = vector.broadcast %962 : vector<1x19xf32> to vector<16x19xf32>
    %1192 = arith.mulf %1190, %1191 : vector<16x19xf32>
    %1193 = vector.broadcast %964 : vector<1x19xf32> to vector<16x19xf32>
    %1194 = arith.addf %1192, %1193 : vector<16x19xf32>
    %cst_671 = arith.constant dense<0.000000e+00> : vector<16x64xf32>
    %1195 = tpu.matmul %1194, %966, %cst_671 {dimension_numbers = #tpu.dot_dimension_numbers<[1], [0], [0], [1], [0, 0, 1, 1], [], []>} : vector<16x19xf32>, vector<19x64xf32>, vector<16x64xf32> -> vector<16x64xf32>
    %1196 = arith.addf %1172, %1195 : vector<16x64xf32>
    %1197 = vector.broadcast %968 : vector<1x64xf32> to vector<16x64xf32>
    %1198 = arith.addf %1196, %1197 : vector<16x64xf32>
    %cst_672 = arith.constant 0.000000e+00 : f32
    %1199 = vector.broadcast %cst_672 : f32 to vector<16x64xf32>
    %1200 = arith.cmpf oge, %1198, %1199 : vector<16x64xf32>
    %cst_673 = arith.constant 1.000000e-01 : f32
    %1201 = vector.broadcast %cst_673 : f32 to vector<16x64xf32>
    %1202 = arith.mulf %1201, %1198 : vector<16x64xf32>
    %1203 = arith.select %1200, %1198, %1202 : vector<16x64xi1>, vector<16x64xf32>
    %cst_674 = arith.constant dense<0.000000e+00> : vector<64xf32>
    %1204 = vector.multi_reduction <add>, %1203, %cst_674 [0] : vector<16x64xf32> to vector<64xf32>
    %1205 = vector.shape_cast %1204 : vector<64xf32> to vector<1x64xf32>
    %cst_675 = arith.constant 1.600000e+01 : f32
    %1206 = vector.broadcast %cst_675 : f32 to vector<1x64xf32>
    %1207 = arith.divf %1205, %1206 : vector<1x64xf32>
    %1208 = vector.broadcast %1207 : vector<1x64xf32> to vector<16x64xf32>
    %1209 = arith.subf %1203, %1208 : vector<16x64xf32>
    %1210 = arith.mulf %1209, %1209 : vector<16x64xf32>
    %cst_676 = arith.constant dense<0.000000e+00> : vector<64xf32>
    %1211 = vector.multi_reduction <add>, %1210, %cst_676 [0] : vector<16x64xf32> to vector<64xf32>
    %1212 = vector.shape_cast %1211 : vector<64xf32> to vector<1x64xf32>
    %cst_677 = arith.constant 1.600000e+01 : f32
    %1213 = vector.broadcast %cst_677 : f32 to vector<1x64xf32>
    %1214 = arith.divf %1212, %1213 : vector<1x64xf32>
    %1215 = vector.broadcast %1207 : vector<1x64xf32> to vector<16x64xf32>
    %1216 = arith.subf %1203, %1215 : vector<16x64xf32>
    %cst_678 = arith.constant 9.99999974E-6 : f32
    %1217 = vector.broadcast %cst_678 : f32 to vector<1x64xf32>
    %1218 = arith.addf %1214, %1217 : vector<1x64xf32>
    %1219 = math.rsqrt %1218 : vector<1x64xf32>
    %1220 = vector.broadcast %1219 : vector<1x64xf32> to vector<16x64xf32>
    %1221 = arith.mulf %1216, %1220 : vector<16x64xf32>
    %1222 = vector.broadcast %970 : vector<1x64xf32> to vector<16x64xf32>
    %1223 = arith.mulf %1221, %1222 : vector<16x64xf32>
    %1224 = vector.broadcast %972 : vector<1x64xf32> to vector<16x64xf32>
    %1225 = arith.addf %1223, %1224 : vector<16x64xf32>
    %cst_679 = arith.constant dense<0.000000e+00> : vector<16x64xf32>
    %1226 = tpu.matmul %1225, %974, %cst_679 {dimension_numbers = #tpu.dot_dimension_numbers<[1], [0], [0], [1], [0, 0, 1, 1], [], []>} : vector<16x64xf32>, vector<64x64xf32>, vector<16x64xf32> -> vector<16x64xf32>
    %1227 = vector.broadcast %976 : vector<1x64xf32> to vector<16x64xf32>
    %1228 = arith.addf %1226, %1227 : vector<16x64xf32>
    %cst_680 = arith.constant 0.000000e+00 : f32
    %1229 = vector.broadcast %cst_680 : f32 to vector<16x64xf32>
    %1230 = arith.cmpf oge, %1228, %1229 : vector<16x64xf32>
    %cst_681 = arith.constant 1.000000e-01 : f32
    %1231 = vector.broadcast %cst_681 : f32 to vector<16x64xf32>
    %1232 = arith.mulf %1231, %1228 : vector<16x64xf32>
    %1233 = arith.select %1230, %1228, %1232 : vector<16x64xi1>, vector<16x64xf32>
    %cst_682 = arith.constant dense<0.000000e+00> : vector<64xf32>
    %1234 = vector.multi_reduction <add>, %1233, %cst_682 [0] : vector<16x64xf32> to vector<64xf32>
    %1235 = vector.shape_cast %1234 : vector<64xf32> to vector<1x64xf32>
    %cst_683 = arith.constant 1.600000e+01 : f32
    %1236 = vector.broadcast %cst_683 : f32 to vector<1x64xf32>
    %1237 = arith.divf %1235, %1236 : vector<1x64xf32>
    %1238 = vector.broadcast %1237 : vector<1x64xf32> to vector<16x64xf32>
    %1239 = arith.subf %1233, %1238 : vector<16x64xf32>
    %1240 = arith.mulf %1239, %1239 : vector<16x64xf32>
    %cst_684 = arith.constant dense<0.000000e+00> : vector<64xf32>
    %1241 = vector.multi_reduction <add>, %1240, %cst_684 [0] : vector<16x64xf32> to vector<64xf32>
    %1242 = vector.shape_cast %1241 : vector<64xf32> to vector<1x64xf32>
    %cst_685 = arith.constant 1.600000e+01 : f32
    %1243 = vector.broadcast %cst_685 : f32 to vector<1x64xf32>
    %1244 = arith.divf %1242, %1243 : vector<1x64xf32>
    %1245 = vector.broadcast %1237 : vector<1x64xf32> to vector<16x64xf32>
    %1246 = arith.subf %1233, %1245 : vector<16x64xf32>
    %cst_686 = arith.constant 9.99999974E-6 : f32
    %1247 = vector.broadcast %cst_686 : f32 to vector<1x64xf32>
    %1248 = arith.addf %1244, %1247 : vector<1x64xf32>
    %1249 = math.rsqrt %1248 : vector<1x64xf32>
    %1250 = vector.broadcast %1249 : vector<1x64xf32> to vector<16x64xf32>
    %1251 = arith.mulf %1246, %1250 : vector<16x64xf32>
    %1252 = vector.broadcast %978 : vector<1x64xf32> to vector<16x64xf32>
    %1253 = arith.mulf %1251, %1252 : vector<16x64xf32>
    %1254 = vector.broadcast %980 : vector<1x64xf32> to vector<16x64xf32>
    %1255 = arith.addf %1253, %1254 : vector<16x64xf32>
    %cst_687 = arith.constant dense<0.000000e+00> : vector<16x64xf32>
    %1256 = tpu.matmul %1255, %982, %cst_687 {dimension_numbers = #tpu.dot_dimension_numbers<[1], [0], [0], [1], [0, 0, 1, 1], [], []>} : vector<16x64xf32>, vector<64x64xf32>, vector<16x64xf32> -> vector<16x64xf32>
    %1257 = vector.broadcast %984 : vector<1x64xf32> to vector<16x64xf32>
    %1258 = arith.addf %1256, %1257 : vector<16x64xf32>
    %cst_688 = arith.constant dense<0.000000e+00> : vector<8x64xf32>
    %1259 = tpu.matmul %18, %1258, %cst_688 {dimension_numbers = #tpu.dot_dimension_numbers<[1], [0], [0], [1], [0, 0, 1, 1], [], []>} : vector<8x16xf32>, vector<16x64xf32>, vector<8x64xf32> -> vector<8x64xf32>
    %cst_689 = arith.constant dense<0.000000e+00> : vector<16xf32>
    %1260 = vector.multi_reduction <add>, %918, %cst_689 [0] : vector<8x16xf32> to vector<16xf32>
    %1261 = vector.shape_cast %1260 : vector<16xf32> to vector<1x16xf32>
    %cst_690 = arith.constant 8.000000e+00 : f32
    %1262 = vector.broadcast %cst_690 : f32 to vector<1x16xf32>
    %1263 = arith.divf %1261, %1262 : vector<1x16xf32>
    %1264 = vector.broadcast %1263 : vector<1x16xf32> to vector<8x16xf32>
    %1265 = arith.subf %918, %1264 : vector<8x16xf32>
    %1266 = arith.mulf %1265, %1265 : vector<8x16xf32>
    %cst_691 = arith.constant dense<0.000000e+00> : vector<16xf32>
    %1267 = vector.multi_reduction <add>, %1266, %cst_691 [0] : vector<8x16xf32> to vector<16xf32>
    %1268 = vector.shape_cast %1267 : vector<16xf32> to vector<1x16xf32>
    %cst_692 = arith.constant 8.000000e+00 : f32
    %1269 = vector.broadcast %cst_692 : f32 to vector<1x16xf32>
    %1270 = arith.divf %1268, %1269 : vector<1x16xf32>
    %1271 = vector.broadcast %1263 : vector<1x16xf32> to vector<8x16xf32>
    %1272 = arith.subf %918, %1271 : vector<8x16xf32>
    %cst_693 = arith.constant 9.99999974E-6 : f32
    %1273 = vector.broadcast %cst_693 : f32 to vector<1x16xf32>
    %1274 = arith.addf %1270, %1273 : vector<1x16xf32>
    %1275 = math.rsqrt %1274 : vector<1x16xf32>
    %1276 = vector.broadcast %1275 : vector<1x16xf32> to vector<8x16xf32>
    %1277 = arith.mulf %1272, %1276 : vector<8x16xf32>
    %1278 = vector.broadcast %986 : vector<1x16xf32> to vector<8x16xf32>
    %1279 = arith.mulf %1277, %1278 : vector<8x16xf32>
    %1280 = vector.broadcast %988 : vector<1x16xf32> to vector<8x16xf32>
    %1281 = arith.addf %1279, %1280 : vector<8x16xf32>
    %cst_694 = arith.constant dense<0.000000e+00> : vector<8x80xf32>
    %1282 = tpu.matmul %1281, %990, %cst_694 {dimension_numbers = #tpu.dot_dimension_numbers<[1], [0], [0], [1], [0, 0, 1, 1], [], []>} : vector<8x16xf32>, vector<16x80xf32>, vector<8x80xf32> -> vector<8x80xf32>
    %cst_695 = arith.constant dense<0.000000e+00> : vector<64xf32>
    %1283 = vector.multi_reduction <add>, %1259, %cst_695 [0] : vector<8x64xf32> to vector<64xf32>
    %1284 = vector.shape_cast %1283 : vector<64xf32> to vector<1x64xf32>
    %cst_696 = arith.constant 8.000000e+00 : f32
    %1285 = vector.broadcast %cst_696 : f32 to vector<1x64xf32>
    %1286 = arith.divf %1284, %1285 : vector<1x64xf32>
    %1287 = vector.broadcast %1286 : vector<1x64xf32> to vector<8x64xf32>
    %1288 = arith.subf %1259, %1287 : vector<8x64xf32>
    %1289 = arith.mulf %1288, %1288 : vector<8x64xf32>
    %cst_697 = arith.constant dense<0.000000e+00> : vector<64xf32>
    %1290 = vector.multi_reduction <add>, %1289, %cst_697 [0] : vector<8x64xf32> to vector<64xf32>
    %1291 = vector.shape_cast %1290 : vector<64xf32> to vector<1x64xf32>
    %cst_698 = arith.constant 8.000000e+00 : f32
    %1292 = vector.broadcast %cst_698 : f32 to vector<1x64xf32>
    %1293 = arith.divf %1291, %1292 : vector<1x64xf32>
    %1294 = vector.broadcast %1286 : vector<1x64xf32> to vector<8x64xf32>
    %1295 = arith.subf %1259, %1294 : vector<8x64xf32>
    %cst_699 = arith.constant 9.99999974E-6 : f32
    %1296 = vector.broadcast %cst_699 : f32 to vector<1x64xf32>
    %1297 = arith.addf %1293, %1296 : vector<1x64xf32>
    %1298 = math.rsqrt %1297 : vector<1x64xf32>
    %1299 = vector.broadcast %1298 : vector<1x64xf32> to vector<8x64xf32>
    %1300 = arith.mulf %1295, %1299 : vector<8x64xf32>
    %1301 = vector.broadcast %992 : vector<1x64xf32> to vector<8x64xf32>
    %1302 = arith.mulf %1300, %1301 : vector<8x64xf32>
    %1303 = vector.broadcast %994 : vector<1x64xf32> to vector<8x64xf32>
    %1304 = arith.addf %1302, %1303 : vector<8x64xf32>
    %cst_700 = arith.constant dense<0.000000e+00> : vector<8x80xf32>
    %1305 = tpu.matmul %1304, %996, %cst_700 {dimension_numbers = #tpu.dot_dimension_numbers<[1], [0], [0], [1], [0, 0, 1, 1], [], []>} : vector<8x64xf32>, vector<64x80xf32>, vector<8x80xf32> -> vector<8x80xf32>
    %1306 = arith.addf %1282, %1305 : vector<8x80xf32>
    %1307 = vector.broadcast %998 : vector<1x80xf32> to vector<8x80xf32>
    %1308 = arith.addf %1306, %1307 : vector<8x80xf32>
    %cst_701 = arith.constant 0.000000e+00 : f32
    %1309 = vector.broadcast %cst_701 : f32 to vector<8x80xf32>
    %1310 = arith.cmpf oge, %1308, %1309 : vector<8x80xf32>
    %cst_702 = arith.constant 1.000000e-01 : f32
    %1311 = vector.broadcast %cst_702 : f32 to vector<8x80xf32>
    %1312 = arith.mulf %1311, %1308 : vector<8x80xf32>
    %1313 = arith.select %1310, %1308, %1312 : vector<8x80xi1>, vector<8x80xf32>
    %cst_703 = arith.constant dense<0.000000e+00> : vector<80xf32>
    %1314 = vector.multi_reduction <add>, %1313, %cst_703 [0] : vector<8x80xf32> to vector<80xf32>
    %1315 = vector.shape_cast %1314 : vector<80xf32> to vector<1x80xf32>
    %cst_704 = arith.constant 8.000000e+00 : f32
    %1316 = vector.broadcast %cst_704 : f32 to vector<1x80xf32>
    %1317 = arith.divf %1315, %1316 : vector<1x80xf32>
    %1318 = vector.broadcast %1317 : vector<1x80xf32> to vector<8x80xf32>
    %1319 = arith.subf %1313, %1318 : vector<8x80xf32>
    %1320 = arith.mulf %1319, %1319 : vector<8x80xf32>
    %cst_705 = arith.constant dense<0.000000e+00> : vector<80xf32>
    %1321 = vector.multi_reduction <add>, %1320, %cst_705 [0] : vector<8x80xf32> to vector<80xf32>
    %1322 = vector.shape_cast %1321 : vector<80xf32> to vector<1x80xf32>
    %cst_706 = arith.constant 8.000000e+00 : f32
    %1323 = vector.broadcast %cst_706 : f32 to vector<1x80xf32>
    %1324 = arith.divf %1322, %1323 : vector<1x80xf32>
    %1325 = vector.broadcast %1317 : vector<1x80xf32> to vector<8x80xf32>
    %1326 = arith.subf %1313, %1325 : vector<8x80xf32>
    %cst_707 = arith.constant 9.99999974E-6 : f32
    %1327 = vector.broadcast %cst_707 : f32 to vector<1x80xf32>
    %1328 = arith.addf %1324, %1327 : vector<1x80xf32>
    %1329 = math.rsqrt %1328 : vector<1x80xf32>
    %1330 = vector.broadcast %1329 : vector<1x80xf32> to vector<8x80xf32>
    %1331 = arith.mulf %1326, %1330 : vector<8x80xf32>
    %1332 = vector.broadcast %1000 : vector<1x80xf32> to vector<8x80xf32>
    %1333 = arith.mulf %1331, %1332 : vector<8x80xf32>
    %1334 = vector.broadcast %1002 : vector<1x80xf32> to vector<8x80xf32>
    %1335 = arith.addf %1333, %1334 : vector<8x80xf32>
    %cst_708 = arith.constant dense<0.000000e+00> : vector<8x80xf32>
    %1336 = tpu.matmul %1335, %1004, %cst_708 {dimension_numbers = #tpu.dot_dimension_numbers<[1], [0], [0], [1], [0, 0, 1, 1], [], []>} : vector<8x80xf32>, vector<80x80xf32>, vector<8x80xf32> -> vector<8x80xf32>
    %1337 = vector.broadcast %1006 : vector<1x80xf32> to vector<8x80xf32>
    %1338 = arith.addf %1336, %1337 : vector<8x80xf32>
    %cst_709 = arith.constant 0.000000e+00 : f32
    %1339 = vector.broadcast %cst_709 : f32 to vector<8x80xf32>
    %1340 = arith.cmpf oge, %1338, %1339 : vector<8x80xf32>
    %cst_710 = arith.constant 1.000000e-01 : f32
    %1341 = vector.broadcast %cst_710 : f32 to vector<8x80xf32>
    %1342 = arith.mulf %1341, %1338 : vector<8x80xf32>
    %1343 = arith.select %1340, %1338, %1342 : vector<8x80xi1>, vector<8x80xf32>
    %cst_711 = arith.constant dense<0.000000e+00> : vector<80xf32>
    %1344 = vector.multi_reduction <add>, %1343, %cst_711 [0] : vector<8x80xf32> to vector<80xf32>
    %1345 = vector.shape_cast %1344 : vector<80xf32> to vector<1x80xf32>
    %cst_712 = arith.constant 8.000000e+00 : f32
    %1346 = vector.broadcast %cst_712 : f32 to vector<1x80xf32>
    %1347 = arith.divf %1345, %1346 : vector<1x80xf32>
    %1348 = vector.broadcast %1347 : vector<1x80xf32> to vector<8x80xf32>
    %1349 = arith.subf %1343, %1348 : vector<8x80xf32>
    %1350 = arith.mulf %1349, %1349 : vector<8x80xf32>
    %cst_713 = arith.constant dense<0.000000e+00> : vector<80xf32>
    %1351 = vector.multi_reduction <add>, %1350, %cst_713 [0] : vector<8x80xf32> to vector<80xf32>
    %1352 = vector.shape_cast %1351 : vector<80xf32> to vector<1x80xf32>
    %cst_714 = arith.constant 8.000000e+00 : f32
    %1353 = vector.broadcast %cst_714 : f32 to vector<1x80xf32>
    %1354 = arith.divf %1352, %1353 : vector<1x80xf32>
    %1355 = vector.broadcast %1347 : vector<1x80xf32> to vector<8x80xf32>
    %1356 = arith.subf %1343, %1355 : vector<8x80xf32>
    %cst_715 = arith.constant 9.99999974E-6 : f32
    %1357 = vector.broadcast %cst_715 : f32 to vector<1x80xf32>
    %1358 = arith.addf %1354, %1357 : vector<1x80xf32>
    %1359 = math.rsqrt %1358 : vector<1x80xf32>
    %1360 = vector.broadcast %1359 : vector<1x80xf32> to vector<8x80xf32>
    %1361 = arith.mulf %1356, %1360 : vector<8x80xf32>
    %1362 = vector.broadcast %1008 : vector<1x80xf32> to vector<8x80xf32>
    %1363 = arith.mulf %1361, %1362 : vector<8x80xf32>
    %1364 = vector.broadcast %1010 : vector<1x80xf32> to vector<8x80xf32>
    %1365 = arith.addf %1363, %1364 : vector<8x80xf32>
    %cst_716 = arith.constant dense<0.000000e+00> : vector<8x16xf32>
    %1366 = tpu.matmul %1365, %1012, %cst_716 {dimension_numbers = #tpu.dot_dimension_numbers<[1], [0], [0], [1], [0, 0, 1, 1], [], []>} : vector<8x80xf32>, vector<80x16xf32>, vector<8x16xf32> -> vector<8x16xf32>
    %1367 = vector.broadcast %1014 : vector<1x16xf32> to vector<8x16xf32>
    %1368 = arith.addf %1366, %1367 : vector<8x16xf32>
    %c0_717 = arith.constant 0 : index
    %c0_718 = arith.constant 0 : index
    %1369 = vector.load %arg8[%c0_717, %c0_718] : memref<16x1xf32, #tpu.memory_space<vmem>>, vector<16x1xf32>
    %cst_719 = arith.constant dense<0.000000e+00> : vector<8x1xf32>
    %1370 = tpu.matmul %1368, %1369, %cst_719 {dimension_numbers = #tpu.dot_dimension_numbers<[1], [0], [0], [1], [0, 0, 1, 1], [], []>} : vector<8x16xf32>, vector<16x1xf32>, vector<8x1xf32> -> vector<8x1xf32>
    %c0_720 = arith.constant 0 : index
    %c0_721 = arith.constant 0 : index
    %1371 = vector.load %arg7[%c0_720, %c0_721] : memref<1x1xf32, #tpu.memory_space<vmem>>, vector<1x1xf32>
    %1372 = vector.broadcast %1371 : vector<1x1xf32> to vector<8x1xf32>
    %1373 = arith.addf %1370, %1372 : vector<8x1xf32>
    %c0_722 = arith.constant 0 : index
    %c0_723 = arith.constant 0 : index
    %1374 = vector.load %arg6[%c0_722, %c0_723] : memref<19x1xf32, #tpu.memory_space<vmem>>, vector<19x1xf32>
    %cst_724 = arith.constant dense<0.000000e+00> : vector<16x1xf32>
    %1375 = tpu.matmul %1149, %1374, %cst_724 {dimension_numbers = #tpu.dot_dimension_numbers<[1], [0], [0], [1], [0, 0, 1, 1], [], []>} : vector<16x19xf32>, vector<19x1xf32>, vector<16x1xf32> -> vector<16x1xf32>
    %c0_725 = arith.constant 0 : index
    %c0_726 = arith.constant 0 : index
    %1376 = vector.load %arg5[%c0_725, %c0_726] : memref<1x1xf32, #tpu.memory_space<vmem>>, vector<1x1xf32>
    %1377 = vector.broadcast %1376 : vector<1x1xf32> to vector<16x1xf32>
    %1378 = arith.addf %1375, %1377 : vector<16x1xf32>
    %1379 = arith.negf %1373 : vector<8x1xf32>
    %1380 = math.exp %1379 : vector<8x1xf32>
    %cst_727 = arith.constant 1.000000e+00 : f32
    %1381 = vector.broadcast %cst_727 : f32 to vector<8x1xf32>
    %1382 = arith.addf %1381, %1380 : vector<8x1xf32>
    %1383 = arith.divf %1381, %1382 : vector<8x1xf32>
    %c0_728 = arith.constant 0 : index
    %c0_729 = arith.constant 0 : index
    %1384 = vector.load %arg57[%c0_728, %c0_729] : memref<8x1xf32, #tpu.memory_space<vmem>>, vector<8x1xf32>
    tpu.vector_store %arg57[%c0_728, %c0_729], %1383 {strides = array<i32>} : memref<8x1xf32, #tpu.memory_space<vmem>>, vector<8x1xf32>,
    %1385 = arith.negf %1378 : vector<16x1xf32>
    %1386 = math.exp %1385 : vector<16x1xf32>
    %cst_730 = arith.constant 1.000000e+00 : f32
    %1387 = vector.broadcast %cst_730 : f32 to vector<16x1xf32>
    %1388 = arith.addf %1387, %1386 : vector<16x1xf32>
    %1389 = arith.divf %1387, %1388 : vector<16x1xf32>
    %c0_731 = arith.constant 0 : index
    %c0_732 = arith.constant 0 : index
    %1390 = vector.load %arg58[%c0_731, %c0_732] : memref<16x1xf32, #tpu.memory_space<vmem>>, vector<16x1xf32>
    tpu.vector_store %arg58[%c0_731, %c0_732], %1389 {strides = array<i32>} : memref<16x1xf32, #tpu.memory_space<vmem>>, vector<16x1xf32>,
    return
  }
}

</mosaic_0001>

<llo_original>
// kernel: forward.1
$region0: #{forward.1}
  #allocation0 [shape = 'u32[]', space=smem, size = 0x4, offset = 0x4, fixed_abs, tag = 'smem constant byte address 0x4 - core index']
  #allocation1 [shape = 'u32[144,128]{1,0:T(1,128)}', space=vmem, size = 0x12000, scoped, tag = 'internal scratch']
  #allocation2 [shape = 'f32[1,1]{1,0:T(1,128)S(1)}', space=vmem, size = 0x200, scoped, tag = 'scoped memory for forward.1']
  #allocation3 [shape = 'f32[1,1]{1,0:T(1,128)S(1)}', space=vmem, size = 0x200, scoped, tag = 'scoped memory for forward.1']
  %s0 = inlined_call_operand.smem [shape: u32[59], index: -1, kind: input, shape index: {}]
  %s1 = sld [smem:[%s0]]
  %s2 = scalar_lea.smem %s0, 1
  %s3 = sld [smem:[%s2]]
  %s4 = scalar_lea.smem %s0, 2
  %s5 = sld [smem:[%s4]]
  %s6 = scalar_lea.smem %s0, 3
  %s7 = sld [smem:[%s6]]
  %s8 = scalar_lea.smem %s0, 4
  %s9 = sld [smem:[%s8]]
  %s10 = scalar_lea.smem %s0, 5
  %s11 = sld [smem:[%s10]]
  %s12 = scalar_lea.smem %s0, 6
  %s13 = sld [smem:[%s12]]
  %s14 = scalar_lea.smem %s0, 7
  %s15 = sld [smem:[%s14]]
  %s16 = scalar_lea.smem %s0, 8
  %s17 = sld [smem:[%s16]]
  %s18 = scalar_lea.smem %s0, 9
  %s19 = sld [smem:[%s18]]
  %s20 = scalar_lea.smem %s0, 10
  %s21 = sld [smem:[%s20]]
  %s22 = scalar_lea.smem %s0, 11
  %s23 = sld [smem:[%s22]]
  %s24 = scalar_lea.smem %s0, 12
  %s25 = sld [smem:[%s24]]
  %s26 = scalar_lea.smem %s0, 13
  %s27 = sld [smem:[%s26]]
  %s28 = scalar_lea.smem %s0, 14
  %s29 = sld [smem:[%s28]]
  %s30 = scalar_lea.smem %s0, 15
  %s31 = sld [smem:[%s30]]
  %s32 = scalar_lea.smem %s0, 16
  %s33 = sld [smem:[%s32]]
  %s34 = scalar_lea.smem %s0, 17
  %s35 = sld [smem:[%s34]]
  %s36 = scalar_lea.smem %s0, 18
  %s37 = sld [smem:[%s36]]
  %s38 = scalar_lea.smem %s0, 19
  %s39 = sld [smem:[%s38]]
  %s40 = scalar_lea.smem %s0, 20
  %s41 = sld [smem:[%s40]]
  %s42 = scalar_lea.smem %s0, 21
  %s43 = sld [smem:[%s42]]
  %s44 = scalar_lea.smem %s0, 22
  %s45 = sld [smem:[%s44]]
  %s46 = scalar_lea.smem %s0, 23
  %s47 = sld [smem:[%s46]]
  %s48 = scalar_lea.smem %s0, 24
  %s49 = sld [smem:[%s48]]
  %s50 = scalar_lea.smem %s0, 25
  %s51 = sld [smem:[%s50]]
  %s52 = scalar_lea.smem %s0, 26
  %s53 = sld [smem:[%s52]]
  %s54 = scalar_lea.smem %s0, 27
  %s55 = sld [smem:[%s54]]
  %s56 = scalar_lea.smem %s0, 28
  %s57 = sld [smem:[%s56]]
  %s58 = scalar_lea.smem %s0, 29
  %s59 = sld [smem:[%s58]]
  %s60 = scalar_lea.smem %s0, 30
  %s61 = sld [smem:[%s60]]
  %s62 = scalar_lea.smem %s0, 31
  %s63 = sld [smem:[%s62]]
  %s64 = scalar_lea.smem %s0, 32
  %s65 = sld [smem:[%s64]]
  %s66 = scalar_lea.smem %s0, 33
  %s67 = sld [smem:[%s66]]
  %s68 = scalar_lea.smem %s0, 34
  %s69 = sld [smem:[%s68]]
  %s70 = scalar_lea.smem %s0, 35
  %s71 = sld [smem:[%s70]]
  %s72 = scalar_lea.smem %s0, 36
  %s73 = sld [smem:[%s72]]
  %s74 = scalar_lea.smem %s0, 37
  %s75 = sld [smem:[%s74]]
  %s76 = scalar_lea.smem %s0, 38
  %s77 = sld [smem:[%s76]]
  %s78 = scalar_lea.smem %s0, 39
  %s79 = sld [smem:[%s78]]
  %s80 = scalar_lea.smem %s0, 40
  %s81 = sld [smem:[%s80]]
  %s82 = scalar_lea.smem %s0, 41
  %s83 = sld [smem:[%s82]]
  %s84 = scalar_lea.smem %s0, 42
  %s85 = sld [smem:[%s84]]
  %s86 = scalar_lea.smem %s0, 43
  %s87 = sld [smem:[%s86]]
  %s88 = scalar_lea.smem %s0, 44
  %s89 = sld [smem:[%s88]]
  %s90 = scalar_lea.smem %s0, 45
  %s91 = sld [smem:[%s90]]
  %s92 = scalar_lea.smem %s0, 46
  %s93 = sld [smem:[%s92]]
  %s94 = scalar_lea.smem %s0, 47
  %s95 = sld [smem:[%s94]]
  %s96 = scalar_lea.smem %s0, 48
  %s97 = sld [smem:[%s96]]
  %s98 = scalar_lea.smem %s0, 49
  %s99 = sld [smem:[%s98]]
  %s100 = scalar_lea.smem %s0, 50
  %s101 = sld [smem:[%s100]]
  %s102 = scalar_lea.smem %s0, 51
  %s103 = sld [smem:[%s102]]
  %s104 = scalar_lea.smem %s0, 52
  %s105 = sld [smem:[%s104]]
  %s106 = scalar_lea.smem %s0, 53
  %s107 = sld [smem:[%s106]]
  %s108 = scalar_lea.smem %s0, 54
  %s109 = sld [smem:[%s108]]
  %s110 = scalar_lea.smem %s0, 55
  %s111 = sld [smem:[%s110]]
  %s112 = scalar_lea.smem %s0, 56
  %s113 = sld [smem:[%s112]]
  %s114 = scalar_lea.smem %s0, 57
  %s115 = sld [smem:[%s114]]
  %s116 = scalar_lea.smem %s0, 58
  %s117 = sld [smem:[%s116]]
  %118 = xla_tuple %s115, %s117
  %s119 = sld [smem:[#allocation0]]
  $region326: #{forward.1} parent=0
    _
  %s121 = ssub.s32 1, %s119
  %s122 = scalar_select 0, %s121, %s119
  %v123 = vstv %s11
  %124 = vst [vmem:[#allocation2] sm:$0x1] %v123
  %v125 = vstv %s15
  %126 = vst [vmem:[#allocation3] sm:$0x1] %v125
  $region1: #{forward.1} parent=0
    #allocation4 [shape = 'u8[4096]{0}', space=vmem, size = 0x1000, scoped, tag = 'input window, operand 0, single buffered']
    #allocation5 [shape = 's32[1]{0}', space=sflag, size = 0x4, scoped, tag = 'scoped memory for forward.1']
    #allocation6 [shape = 'u8[12288]{0}', space=vmem, size = 0x3000, scoped, tag = 'input window, operand 6, single buffered']
    #allocation7 [shape = 's32[1]{0}', space=sflag, size = 0x4, scoped, tag = 'scoped memory for forward.1']
    #allocation8 [shape = 'u8[8192]{0}', space=vmem, size = 0x2000, scoped, tag = 'input window, operand 8, single buffered']
    #allocation9 [shape = 'u8[1536]{0}', space=vmem, size = 0x800, scoped, tag = 'input window, operand 9, single buffered']
    #allocation10 [shape = 's32[1]{0}', space=sflag, size = 0x4, scoped, tag = 'scoped memory for forward.1']
    #allocation11 [shape = 'u8[1536]{0}', space=vmem, size = 0x800, scoped, tag = 'input window, operand 10, single buffered']
    #allocation12 [shape = 'u8[1536]{0}', space=vmem, size = 0x800, scoped, tag = 'input window, operand 11, single buffered']
    #allocation13 [shape = 's32[1]{0}', space=sflag, size = 0x4, scoped, tag = 'scoped memory for forward.1']
    #allocation14 [shape = 'u8[24576]{0}', space=vmem, size = 0x6000, scoped, tag = 'input window, operand 18, single buffered']
    #allocation15 [shape = 'u8[24576]{0}', space=vmem, size = 0x6000, scoped, tag = 'input window, operand 21, single buffered']
    #allocation16 [shape = 's32[1]{0}', space=sflag, size = 0x4, scoped, tag = 'scoped memory for forward.1']
    #allocation17 [shape = 'u8[36864]{0}', space=vmem, size = 0x9000, scoped, tag = 'input window, operand 24, single buffered']
    #allocation18 [shape = 'u8[98304]{0}', space=vmem, size = 0x18000, scoped, tag = 'input window, operand 25, single buffered']
    #allocation19 [shape = 's32[1]{0}', space=sflag, size = 0x4, scoped, tag = 'scoped memory for forward.1']
    #allocation20 [shape = 'u8[98304]{0}', space=vmem, size = 0x18000, scoped, tag = 'input window, operand 26, single buffered']
    #allocation21 [shape = 'u8[1536]{0}', space=vmem, size = 0x800, scoped, tag = 'input window, operand 27, single buffered']
    #allocation22 [shape = 's32[1]{0}', space=sflag, size = 0x4, scoped, tag = 'scoped memory for forward.1']
    #allocation23 [shape = 'u8[1536]{0}', space=vmem, size = 0x800, scoped, tag = 'input window, operand 28, single buffered']
    #allocation24 [shape = 'u8[1536]{0}', space=vmem, size = 0x800, scoped, tag = 'input window, operand 29, single buffered']
    #allocation25 [shape = 's32[1]{0}', space=sflag, size = 0x4, scoped, tag = 'scoped memory for forward.1']
    #allocation26 [shape = 'u8[24576]{0}', space=vmem, size = 0x6000, scoped, tag = 'input window, operand 36, single buffered']
    #allocation27 [shape = 'u8[98304]{0}', space=vmem, size = 0x18000, scoped, tag = 'input window, operand 40, single buffered']
    #allocation28 [shape = 's32[1]{0}', space=sflag, size = 0x4, scoped, tag = 'scoped memory for forward.1']
    #allocation29 [shape = 'u8[98304]{0}', space=vmem, size = 0x18000, scoped, tag = 'input window, operand 41, single buffered']
    #allocation30 [shape = 'u8[98304]{0}', space=vmem, size = 0x18000, scoped, tag = 'input window, operand 54, single buffered']
    #allocation31 [shape = 's32[1]{0}', space=sflag, size = 0x4, scoped, tag = 'scoped memory for forward.1']
    #allocation32 [shape = 'u8[122880]{0}', space=vmem, size = 0x1e000, scoped, tag = 'input window, operand 55, single buffered']
    #allocation33 [shape = 'u8[122880]{0}', space=vmem, size = 0x1e000, scoped, tag = 'input window, operand 56, single buffered']
    #allocation34 [shape = 's32[1]{0}', space=sflag, size = 0x4, scoped, tag = 'scoped memory for forward.1']
    %127 = vsyncpa [#allocation5], 0
    %128 = vsyncpa [#allocation7], 0
    %129 = vsyncpa [#allocation10], 0
    %130 = vsyncpa [#allocation13], 0
    %131 = vsyncpa [#allocation16], 0
    %132 = vsyncpa [#allocation19], 0
    %133 = vsyncpa [#allocation22], 0
    %134 = vsyncpa [#allocation25], 0
    %135 = vsyncpa [#allocation28], 0
    %136 = vsyncpa [#allocation31], 0
    %137 = vsyncpa [#allocation34], 0
    // Predicated region
    $region2: #{forward.1} parent=1 // pred_check
      _
    $region3: #{forward.1} parent=1 // pred_check_branch
      %139 = sbr.rel (0) target = $region5
    $region4: #{forward.1} parent=1 // pred_region
      %s141 = ssub.s32 128, 128
      %142 = vsyncadd [#allocation5], %s141
      %s144 = sshll.u32 [#allocation4], 4
      %s145 = int_to_ptr.vmem [resolvable:$true] %s144
      %147 = dma.hbm_to_vmem [thread:$0]  %s1, 128, %s145, [#allocation5]
    $region5: #{forward.1} parent=1 // pred_fallthru
      _
    // Predicated region
    $region6: #{forward.1} parent=1 // pred_check
      _
    $region7: #{forward.1} parent=1 // pred_check_branch
      %149 = sbr.rel (0) target = $region9
    $region8: #{forward.1} parent=1 // pred_region
      _
    $region9: #{forward.1} parent=1 // pred_fallthru
      _
    // Predicated region
    $region10: #{forward.1} parent=1 // pred_check
      _
    $region11: #{forward.1} parent=1 // pred_check_branch
      %151 = sbr.rel (0) target = $region13
    $region12: #{forward.1} parent=1 // pred_region
      _
    $region13: #{forward.1} parent=1 // pred_fallthru
      _
    // Predicated region
    $region14: #{forward.1} parent=1 // pred_check
      _
    $region15: #{forward.1} parent=1 // pred_check_branch
      %153 = sbr.rel (0) target = $region17
    $region16: #{forward.1} parent=1 // pred_region
      _
    $region17: #{forward.1} parent=1 // pred_fallthru
      _
    // Predicated region
    $region18: #{forward.1} parent=1 // pred_check
      _
    $region19: #{forward.1} parent=1 // pred_check_branch
      %155 = sbr.rel (0) target = $region21
    $region20: #{forward.1} parent=1 // pred_region
      _
    $region21: #{forward.1} parent=1 // pred_fallthru
      _
    // Predicated region
    $region22: #{forward.1} parent=1 // pred_check
      _
    $region23: #{forward.1} parent=1 // pred_check_branch
      %157 = sbr.rel (0) target = $region25
    $region24: #{forward.1} parent=1 // pred_region
      _
    $region25: #{forward.1} parent=1 // pred_fallthru
      _
    // Predicated region
    $region26: #{forward.1} parent=1 // pred_check
      _
    $region27: #{forward.1} parent=1 // pred_check_branch
      %159 = sbr.rel (0) target = $region29
    $region28: #{forward.1} parent=1 // pred_region
      %s161 = ssub.s32 384, 384
      %162 = vsyncadd [#allocation7], %s161
      %s163 = sshll.u32 [#allocation6], 4
      %s164 = int_to_ptr.vmem [resolvable:$true] %s163
      %169 = dma.hbm_to_vmem [thread:$0]  %s13, 384, %s164, [#allocation7], 128, 128, 8
    $region29: #{forward.1} parent=1 // pred_fallthru
      _
    // Predicated region
    $region30: #{forward.1} parent=1 // pred_check
      _
    $region31: #{forward.1} parent=1 // pred_check_branch
      %171 = sbr.rel (0) target = $region33
    $region32: #{forward.1} parent=1 // pred_region
      _
    $region33: #{forward.1} parent=1 // pred_fallthru
      _
    // Predicated region
    $region34: #{forward.1} parent=1 // pred_check
      _
    $region35: #{forward.1} parent=1 // pred_check_branch
      %173 = sbr.rel (0) target = $region37
    $region36: #{forward.1} parent=1 // pred_region
      %s175 = ssub.s32 256, 256
      %176 = vsyncadd [#allocation7], %s175
      %s177 = sshll.u32 [#allocation8], 4
      %s178 = int_to_ptr.vmem [resolvable:$true] %s177
      %183 = dma.hbm_to_vmem [thread:$0]  %s17, 256, %s178, [#allocation7], 128, 128, 8
    $region37: #{forward.1} parent=1 // pred_fallthru
      _
    // Predicated region
    $region38: #{forward.1} parent=1 // pred_check
      _
    $region39: #{forward.1} parent=1 // pred_check_branch
      %185 = sbr.rel (0) target = $region41
    $region40: #{forward.1} parent=1 // pred_region
      %s187 = ssub.s32 48, 48
      %188 = vsyncadd [#allocation10], %s187
      %s189 = sshll.u32 [#allocation9], 4
      %s190 = int_to_ptr.vmem [resolvable:$true] %s189
      %195 = dma.hbm_to_vmem [thread:$0]  %s19, 48, %s190, [#allocation10], 16, 16, 1
    $region41: #{forward.1} parent=1 // pred_fallthru
      _
    // Predicated region
    $region42: #{forward.1} parent=1 // pred_check
      _
    $region43: #{forward.1} parent=1 // pred_check_branch
      %197 = sbr.rel (0) target = $region45
    $region44: #{forward.1} parent=1 // pred_region
      %s199 = ssub.s32 48, 48
      %200 = vsyncadd [#allocation10], %s199
      %s201 = sshll.u32 [#allocation11], 4
      %s202 = int_to_ptr.vmem [resolvable:$true] %s201
      %207 = dma.hbm_to_vmem [thread:$0]  %s21, 48, %s202, [#allocation10], 16, 16, 1
    $region45: #{forward.1} parent=1 // pred_fallthru
      _
    // Predicated region
    $region46: #{forward.1} parent=1 // pred_check
      _
    $region47: #{forward.1} parent=1 // pred_check_branch
      %209 = sbr.rel (0) target = $region49
    $region48: #{forward.1} parent=1 // pred_region
      %s211 = ssub.s32 48, 48
      %212 = vsyncadd [#allocation13], %s211
      %s213 = sshll.u32 [#allocation12], 4
      %s214 = int_to_ptr.vmem [resolvable:$true] %s213
      %219 = dma.hbm_to_vmem [thread:$0]  %s23, 48, %s214, [#allocation13], 16, 16, 1
    $region49: #{forward.1} parent=1 // pred_fallthru
      _
    // Predicated region
    $region50: #{forward.1} parent=1 // pred_check
      _
    $region51: #{forward.1} parent=1 // pred_check_branch
      %221 = sbr.rel (0) target = $region53
    $region52: #{forward.1} parent=1 // pred_region
      _
    $region53: #{forward.1} parent=1 // pred_fallthru
      _
    // Predicated region
    $region54: #{forward.1} parent=1 // pred_check
      _
    $region55: #{forward.1} parent=1 // pred_check_branch
      %223 = sbr.rel (0) target = $region57
    $region56: #{forward.1} parent=1 // pred_region
      _
    $region57: #{forward.1} parent=1 // pred_fallthru
      _
    // Predicated region
    $region58: #{forward.1} parent=1 // pred_check
      _
    $region59: #{forward.1} parent=1 // pred_check_branch
      %225 = sbr.rel (0) target = $region61
    $region60: #{forward.1} parent=1 // pred_region
      _
    $region61: #{forward.1} parent=1 // pred_fallthru
      _
    // Predicated region
    $region62: #{forward.1} parent=1 // pred_check
      _
    $region63: #{forward.1} parent=1 // pred_check_branch
      %227 = sbr.rel (0) target = $region65
    $region64: #{forward.1} parent=1 // pred_region
      _
    $region65: #{forward.1} parent=1 // pred_fallthru
      _
    // Predicated region
    $region66: #{forward.1} parent=1 // pred_check
      _
    $region67: #{forward.1} parent=1 // pred_check_branch
      %229 = sbr.rel (0) target = $region69
    $region68: #{forward.1} parent=1 // pred_region
      _
    $region69: #{forward.1} parent=1 // pred_fallthru
      _
    // Predicated region
    $region70: #{forward.1} parent=1 // pred_check
      _
    $region71: #{forward.1} parent=1 // pred_check_branch
      %231 = sbr.rel (0) target = $region73
    $region72: #{forward.1} parent=1 // pred_region
      _
    $region73: #{forward.1} parent=1 // pred_fallthru
      _
    // Predicated region
    $region74: #{forward.1} parent=1 // pred_check
      _
    $region75: #{forward.1} parent=1 // pred_check_branch
      %233 = sbr.rel (0) target = $region77
    $region76: #{forward.1} parent=1 // pred_region
      %s235 = ssub.s32 768, 768
      %236 = vsyncadd [#allocation13], %s235
      %s237 = sshll.u32 [#allocation14], 4
      %s238 = int_to_ptr.vmem [resolvable:$true] %s237
      %243 = dma.hbm_to_vmem [thread:$0]  %s37, 768, %s238, [#allocation13], 128, 128, 8
    $region77: #{forward.1} parent=1 // pred_fallthru
      _
    // Predicated region
    $region78: #{forward.1} parent=1 // pred_check
      _
    $region79: #{forward.1} parent=1 // pred_check_branch
      %245 = sbr.rel (0) target = $region81
    $region80: #{forward.1} parent=1 // pred_region
      _
    $region81: #{forward.1} parent=1 // pred_fallthru
      _
    // Predicated region
    $region82: #{forward.1} parent=1 // pred_check
      _
    $region83: #{forward.1} parent=1 // pred_check_branch
      %247 = sbr.rel (0) target = $region85
    $region84: #{forward.1} parent=1 // pred_region
      _
    $region85: #{forward.1} parent=1 // pred_fallthru
      _
    // Predicated region
    $region86: #{forward.1} parent=1 // pred_check
      _
    $region87: #{forward.1} parent=1 // pred_check_branch
      %249 = sbr.rel (0) target = $region89
    $region88: #{forward.1} parent=1 // pred_region
      %s251 = ssub.s32 768, 768
      %252 = vsyncadd [#allocation16], %s251
      %s253 = sshll.u32 [#allocation15], 4
      %s254 = int_to_ptr.vmem [resolvable:$true] %s253
      %259 = dma.hbm_to_vmem [thread:$0]  %s43, 768, %s254, [#allocation16], 128, 128, 8
    $region89: #{forward.1} parent=1 // pred_fallthru
      _
    // Predicated region
    $region90: #{forward.1} parent=1 // pred_check
      _
    $region91: #{forward.1} parent=1 // pred_check_branch
      %261 = sbr.rel (0) target = $region93
    $region92: #{forward.1} parent=1 // pred_region
      _
    $region93: #{forward.1} parent=1 // pred_fallthru
      _
    // Predicated region
    $region94: #{forward.1} parent=1 // pred_check
      _
    $region95: #{forward.1} parent=1 // pred_check_branch
      %263 = sbr.rel (0) target = $region97
    $region96: #{forward.1} parent=1 // pred_region
      _
    $region97: #{forward.1} parent=1 // pred_fallthru
      _
    // Predicated region
    $region98: #{forward.1} parent=1 // pred_check
      _
    $region99: #{forward.1} parent=1 // pred_check_branch
      %265 = sbr.rel (0) target = $region101
    $region100: #{forward.1} parent=1 // pred_region
      %s267 = ssub.s32 1152, 1152
      %268 = vsyncadd [#allocation16], %s267
      %s269 = sshll.u32 [#allocation17], 4
      %s270 = int_to_ptr.vmem [resolvable:$true] %s269
      %275 = dma.hbm_to_vmem [thread:$0]  %s49, 1152, %s270, [#allocation16], 128, 128, 8
    $region101: #{forward.1} parent=1 // pred_fallthru
      _
    // Predicated region
    $region102: #{forward.1} parent=1 // pred_check
      _
    $region103: #{forward.1} parent=1 // pred_check_branch
      %277 = sbr.rel (0) target = $region105
    $region104: #{forward.1} parent=1 // pred_region
      %s279 = ssub.s32 3072, 3072
      %280 = vsyncadd [#allocation19], %s279
      %s281 = sshll.u32 [#allocation18], 4
      %s282 = int_to_ptr.vmem [resolvable:$true] %s281
      %287 = dma.hbm_to_vmem [thread:$0]  %s51, 3072, %s282, [#allocation19], 128, 128, 8
    $region105: #{forward.1} parent=1 // pred_fallthru
      _
    // Predicated region
    $region106: #{forward.1} parent=1 // pred_check
      _
    $region107: #{forward.1} parent=1 // pred_check_branch
      %289 = sbr.rel (0) target = $region109
    $region108: #{forward.1} parent=1 // pred_region
      %s291 = ssub.s32 3072, 3072
      %292 = vsyncadd [#allocation19], %s291
      %s293 = sshll.u32 [#allocation20], 4
      %s294 = int_to_ptr.vmem [resolvable:$true] %s293
      %299 = dma.hbm_to_vmem [thread:$0]  %s53, 3072, %s294, [#allocation19], 128, 128, 8
    $region109: #{forward.1} parent=1 // pred_fallthru
      _
    // Predicated region
    $region110: #{forward.1} parent=1 // pred_check
      _
    $region111: #{forward.1} parent=1 // pred_check_branch
      %301 = sbr.rel (0) target = $region113
    $region112: #{forward.1} parent=1 // pred_region
      %s303 = ssub.s32 48, 48
      %304 = vsyncadd [#allocation22], %s303
      %s305 = sshll.u32 [#allocation21], 4
      %s306 = int_to_ptr.vmem [resolvable:$true] %s305
      %311 = dma.hbm_to_vmem [thread:$0]  %s55, 48, %s306, [#allocation22], 16, 16, 1
    $region113: #{forward.1} parent=1 // pred_fallthru
      _
    // Predicated region
    $region114: #{forward.1} parent=1 // pred_check
      _
    $region115: #{forward.1} parent=1 // pred_check_branch
      %313 = sbr.rel (0) target = $region117
    $region116: #{forward.1} parent=1 // pred_region
      %s315 = ssub.s32 48, 48
      %316 = vsyncadd [#allocation22], %s315
      %s317 = sshll.u32 [#allocation23], 4
      %s318 = int_to_ptr.vmem [resolvable:$true] %s317
      %323 = dma.hbm_to_vmem [thread:$0]  %s57, 48, %s318, [#allocation22], 16, 16, 1
    $region117: #{forward.1} parent=1 // pred_fallthru
      _
    // Predicated region
    $region118: #{forward.1} parent=1 // pred_check
      _
    $region119: #{forward.1} parent=1 // pred_check_branch
      %325 = sbr.rel (0) target = $region121
    $region120: #{forward.1} parent=1 // pred_region
      %s327 = ssub.s32 48, 48
      %328 = vsyncadd [#allocation25], %s327
      %s329 = sshll.u32 [#allocation24], 4
      %s330 = int_to_ptr.vmem [resolvable:$true] %s329
      %335 = dma.hbm_to_vmem [thread:$0]  %s59, 48, %s330, [#allocation25], 16, 16, 1
    $region121: #{forward.1} parent=1 // pred_fallthru
      _
    // Predicated region
    $region122: #{forward.1} parent=1 // pred_check
      _
    $region123: #{forward.1} parent=1 // pred_check_branch
      %337 = sbr.rel (0) target = $region125
    $region124: #{forward.1} parent=1 // pred_region
      _
    $region125: #{forward.1} parent=1 // pred_fallthru
      _
    // Predicated region
    $region126: #{forward.1} parent=1 // pred_check
      _
    $region127: #{forward.1} parent=1 // pred_check_branch
      %339 = sbr.rel (0) target = $region129
    $region128: #{forward.1} parent=1 // pred_region
      _
    $region129: #{forward.1} parent=1 // pred_fallthru
      _
    // Predicated region
    $region130: #{forward.1} parent=1 // pred_check
      _
    $region131: #{forward.1} parent=1 // pred_check_branch
      %341 = sbr.rel (0) target = $region133
    $region132: #{forward.1} parent=1 // pred_region
      _
    $region133: #{forward.1} parent=1 // pred_fallthru
      _
    // Predicated region
    $region134: #{forward.1} parent=1 // pred_check
      _
    $region135: #{forward.1} parent=1 // pred_check_branch
      %343 = sbr.rel (0) target = $region137
    $region136: #{forward.1} parent=1 // pred_region
      _
    $region137: #{forward.1} parent=1 // pred_fallthru
      _
    // Predicated region
    $region138: #{forward.1} parent=1 // pred_check
      _
    $region139: #{forward.1} parent=1 // pred_check_branch
      %345 = sbr.rel (0) target = $region141
    $region140: #{forward.1} parent=1 // pred_region
      _
    $region141: #{forward.1} parent=1 // pred_fallthru
      _
    // Predicated region
    $region142: #{forward.1} parent=1 // pred_check
      _
    $region143: #{forward.1} parent=1 // pred_check_branch
      %347 = sbr.rel (0) target = $region145
    $region144: #{forward.1} parent=1 // pred_region
      _
    $region145: #{forward.1} parent=1 // pred_fallthru
      _
    // Predicated region
    $region146: #{forward.1} parent=1 // pred_check
      _
    $region147: #{forward.1} parent=1 // pred_check_branch
      %349 = sbr.rel (0) target = $region149
    $region148: #{forward.1} parent=1 // pred_region
      %s351 = ssub.s32 768, 768
      %352 = vsyncadd [#allocation25], %s351
      %s353 = sshll.u32 [#allocation26], 4
      %s354 = int_to_ptr.vmem [resolvable:$true] %s353
      %359 = dma.hbm_to_vmem [thread:$0]  %s73, 768, %s354, [#allocation25], 128, 128, 8
    $region149: #{forward.1} parent=1 // pred_fallthru
      _
    // Predicated region
    $region150: #{forward.1} parent=1 // pred_check
      _
    $region151: #{forward.1} parent=1 // pred_check_branch
      %361 = sbr.rel (0) target = $region153
    $region152: #{forward.1} parent=1 // pred_region
      _
    $region153: #{forward.1} parent=1 // pred_fallthru
      _
    // Predicated region
    $region154: #{forward.1} parent=1 // pred_check
      _
    $region155: #{forward.1} parent=1 // pred_check_branch
      %363 = sbr.rel (0) target = $region157
    $region156: #{forward.1} parent=1 // pred_region
      _
    $region157: #{forward.1} parent=1 // pred_fallthru
      _
    // Predicated region
    $region158: #{forward.1} parent=1 // pred_check
      _
    $region159: #{forward.1} parent=1 // pred_check_branch
      %365 = sbr.rel (0) target = $region161
    $region160: #{forward.1} parent=1 // pred_region
      _
    $region161: #{forward.1} parent=1 // pred_fallthru
      _
    // Predicated region
    $region162: #{forward.1} parent=1 // pred_check
      _
    $region163: #{forward.1} parent=1 // pred_check_branch
      %367 = sbr.rel (0) target = $region165
    $region164: #{forward.1} parent=1 // pred_region
      %s369 = ssub.s32 3072, 3072
      %370 = vsyncadd [#allocation28], %s369
      %s371 = sshll.u32 [#allocation27], 4
      %s372 = int_to_ptr.vmem [resolvable:$true] %s371
      %377 = dma.hbm_to_vmem [thread:$0]  %s81, 3072, %s372, [#allocation28], 128, 128, 8
    $region165: #{forward.1} parent=1 // pred_fallthru
      _
    // Predicated region
    $region166: #{forward.1} parent=1 // pred_check
      _
    $region167: #{forward.1} parent=1 // pred_check_branch
      %379 = sbr.rel (0) target = $region169
    $region168: #{forward.1} parent=1 // pred_region
      %s381 = ssub.s32 3072, 3072
      %382 = vsyncadd [#allocation28], %s381
      %s383 = sshll.u32 [#allocation29], 4
      %s384 = int_to_ptr.vmem [resolvable:$true] %s383
      %389 = dma.hbm_to_vmem [thread:$0]  %s83, 3072, %s384, [#allocation28], 128, 128, 8
    $region169: #{forward.1} parent=1 // pred_fallthru
      _
    // Predicated region
    $region170: #{forward.1} parent=1 // pred_check
      _
    $region171: #{forward.1} parent=1 // pred_check_branch
      %391 = sbr.rel (0) target = $region173
    $region172: #{forward.1} parent=1 // pred_region
      _
    $region173: #{forward.1} parent=1 // pred_fallthru
      _
    // Predicated region
    $region174: #{forward.1} parent=1 // pred_check
      _
    $region175: #{forward.1} parent=1 // pred_check_branch
      %393 = sbr.rel (0) target = $region177
    $region176: #{forward.1} parent=1 // pred_region
      _
    $region177: #{forward.1} parent=1 // pred_fallthru
      _
    // Predicated region
    $region178: #{forward.1} parent=1 // pred_check
      _
    $region179: #{forward.1} parent=1 // pred_check_branch
      %395 = sbr.rel (0) target = $region181
    $region180: #{forward.1} parent=1 // pred_region
      _
    $region181: #{forward.1} parent=1 // pred_fallthru
      _
    // Predicated region
    $region182: #{forward.1} parent=1 // pred_check
      _
    $region183: #{forward.1} parent=1 // pred_check_branch
      %397 = sbr.rel (0) target = $region185
    $region184: #{forward.1} parent=1 // pred_region
      _
    $region185: #{forward.1} parent=1 // pred_fallthru
      _
    // Predicated region
    $region186: #{forward.1} parent=1 // pred_check
      _
    $region187: #{forward.1} parent=1 // pred_check_branch
      %399 = sbr.rel (0) target = $region189
    $region188: #{forward.1} parent=1 // pred_region
      _
    $region189: #{forward.1} parent=1 // pred_fallthru
      _
    // Predicated region
    $region190: #{forward.1} parent=1 // pred_check
      _
    $region191: #{forward.1} parent=1 // pred_check_branch
      %401 = sbr.rel (0) target = $region193
    $region192: #{forward.1} parent=1 // pred_region
      _
    $region193: #{forward.1} parent=1 // pred_fallthru
      _
    // Predicated region
    $region194: #{forward.1} parent=1 // pred_check
      _
    $region195: #{forward.1} parent=1 // pred_check_branch
      %403 = sbr.rel (0) target = $region197
    $region196: #{forward.1} parent=1 // pred_region
      _
    $region197: #{forward.1} parent=1 // pred_fallthru
      _
    // Predicated region
    $region198: #{forward.1} parent=1 // pred_check
      _
    $region199: #{forward.1} parent=1 // pred_check_branch
      %405 = sbr.rel (0) target = $region201
    $region200: #{forward.1} parent=1 // pred_region
      _
    $region201: #{forward.1} parent=1 // pred_fallthru
      _
    // Predicated region
    $region202: #{forward.1} parent=1 // pred_check
      _
    $region203: #{forward.1} parent=1 // pred_check_branch
      %407 = sbr.rel (0) target = $region205
    $region204: #{forward.1} parent=1 // pred_region
      _
    $region205: #{forward.1} parent=1 // pred_fallthru
      _
    // Predicated region
    $region206: #{forward.1} parent=1 // pred_check
      _
    $region207: #{forward.1} parent=1 // pred_check_branch
      %409 = sbr.rel (0) target = $region209
    $region208: #{forward.1} parent=1 // pred_region
      _
    $region209: #{forward.1} parent=1 // pred_fallthru
      _
    // Predicated region
    $region210: #{forward.1} parent=1 // pred_check
      _
    $region211: #{forward.1} parent=1 // pred_check_branch
      %411 = sbr.rel (0) target = $region213
    $region212: #{forward.1} parent=1 // pred_region
      _
    $region213: #{forward.1} parent=1 // pred_fallthru
      _
    // Predicated region
    $region214: #{forward.1} parent=1 // pred_check
      _
    $region215: #{forward.1} parent=1 // pred_check_branch
      %413 = sbr.rel (0) target = $region217
    $region216: #{forward.1} parent=1 // pred_region
      _
    $region217: #{forward.1} parent=1 // pred_fallthru
      _
    // Predicated region
    $region218: #{forward.1} parent=1 // pred_check
      _
    $region219: #{forward.1} parent=1 // pred_check_branch
      %415 = sbr.rel (0) target = $region221
    $region220: #{forward.1} parent=1 // pred_region
      %s417 = ssub.s32 3072, 3072
      %418 = vsyncadd [#allocation31], %s417
      %s419 = sshll.u32 [#allocation30], 4
      %s420 = int_to_ptr.vmem [resolvable:$true] %s419
      %425 = dma.hbm_to_vmem [thread:$0]  %s109, 3072, %s420, [#allocation31], 128, 128, 8
    $region221: #{forward.1} parent=1 // pred_fallthru
      _
    // Predicated region
    $region222: #{forward.1} parent=1 // pred_check
      _
    $region223: #{forward.1} parent=1 // pred_check_branch
      %427 = sbr.rel (0) target = $region225
    $region224: #{forward.1} parent=1 // pred_region
      %s429 = ssub.s32 3840, 3840
      %430 = vsyncadd [#allocation31], %s429
      %s431 = sshll.u32 [#allocation32], 4
      %s432 = int_to_ptr.vmem [resolvable:$true] %s431
      %437 = dma.hbm_to_vmem [thread:$0]  %s111, 3840, %s432, [#allocation31], 128, 128, 8
    $region225: #{forward.1} parent=1 // pred_fallthru
      _
    // Predicated region
    $region226: #{forward.1} parent=1 // pred_check
      _
    $region227: #{forward.1} parent=1 // pred_check_branch
      %439 = sbr.rel (0) target = $region229
    $region228: #{forward.1} parent=1 // pred_region
      %s441 = ssub.s32 3840, 3840
      %442 = vsyncadd [#allocation34], %s441
      %s443 = sshll.u32 [#allocation33], 4
      %s444 = int_to_ptr.vmem [resolvable:$true] %s443
      %449 = dma.hbm_to_vmem [thread:$0]  %s113, 3840, %s444, [#allocation34], 128, 128, 8
    $region229: #{forward.1} parent=1 // pred_fallthru
      _
    // Predicated region
    $region230: #{forward.1} parent=1 // pred_check
      _
    $region231: #{forward.1} parent=1 // pred_check_branch
      %451 = sbr.rel (0) target = $region233
    $region232: #{forward.1} parent=1 // pred_region
      %452 = dma.done [#allocation5], 128
    $region233: #{forward.1} parent=1 // pred_fallthru
      _
    // Predicated region
    $region234: #{forward.1} parent=1 // pred_check
      _
    $region235: #{forward.1} parent=1 // pred_check_branch
      %454 = sbr.rel (0) target = $region237
    $region236: #{forward.1} parent=1 // pred_region
      %455 = dma.done [#allocation7], 384
    $region237: #{forward.1} parent=1 // pred_fallthru
      _
    // Predicated region
    $region238: #{forward.1} parent=1 // pred_check
      _
    $region239: #{forward.1} parent=1 // pred_check_branch
      %457 = sbr.rel (0) target = $region241
    $region240: #{forward.1} parent=1 // pred_region
      %458 = dma.done [#allocation7], 256
    $region241: #{forward.1} parent=1 // pred_fallthru
      _
    // Predicated region
    $region242: #{forward.1} parent=1 // pred_check
      _
    $region243: #{forward.1} parent=1 // pred_check_branch
      %460 = sbr.rel (0) target = $region245
    $region244: #{forward.1} parent=1 // pred_region
      %461 = dma.done [#allocation10], 48
    $region245: #{forward.1} parent=1 // pred_fallthru
      _
    // Predicated region
    $region246: #{forward.1} parent=1 // pred_check
      _
    $region247: #{forward.1} parent=1 // pred_check_branch
      %463 = sbr.rel (0) target = $region249
    $region248: #{forward.1} parent=1 // pred_region
      %464 = dma.done [#allocation10], 48
    $region249: #{forward.1} parent=1 // pred_fallthru
      _
    // Predicated region
    $region250: #{forward.1} parent=1 // pred_check
      _
    $region251: #{forward.1} parent=1 // pred_check_branch
      %466 = sbr.rel (0) target = $region253
    $region252: #{forward.1} parent=1 // pred_region
      %467 = dma.done [#allocation13], 48
    $region253: #{forward.1} parent=1 // pred_fallthru
      _
    // Predicated region
    $region254: #{forward.1} parent=1 // pred_check
      _
    $region255: #{forward.1} parent=1 // pred_check_branch
      %469 = sbr.rel (0) target = $region257
    $region256: #{forward.1} parent=1 // pred_region
      %470 = dma.done [#allocation13], 768
    $region257: #{forward.1} parent=1 // pred_fallthru
      _
    // Predicated region
    $region258: #{forward.1} parent=1 // pred_check
      _
    $region259: #{forward.1} parent=1 // pred_check_branch
      %472 = sbr.rel (0) target = $region261
    $region260: #{forward.1} parent=1 // pred_region
      %473 = dma.done [#allocation16], 768
    $region261: #{forward.1} parent=1 // pred_fallthru
      _
    // Predicated region
    $region262: #{forward.1} parent=1 // pred_check
      _
    $region263: #{forward.1} parent=1 // pred_check_branch
      %475 = sbr.rel (0) target = $region265
    $region264: #{forward.1} parent=1 // pred_region
      %476 = dma.done [#allocation16], 1152
    $region265: #{forward.1} parent=1 // pred_fallthru
      _
    // Predicated region
    $region266: #{forward.1} parent=1 // pred_check
      _
    $region267: #{forward.1} parent=1 // pred_check_branch
      %478 = sbr.rel (0) target = $region269
    $region268: #{forward.1} parent=1 // pred_region
      %479 = dma.done [#allocation19], 3072
    $region269: #{forward.1} parent=1 // pred_fallthru
      _
    // Predicated region
    $region270: #{forward.1} parent=1 // pred_check
      _
    $region271: #{forward.1} parent=1 // pred_check_branch
      %481 = sbr.rel (0) target = $region273
    $region272: #{forward.1} parent=1 // pred_region
      %482 = dma.done [#allocation19], 3072
    $region273: #{forward.1} parent=1 // pred_fallthru
      _
    // Predicated region
    $region274: #{forward.1} parent=1 // pred_check
      _
    $region275: #{forward.1} parent=1 // pred_check_branch
      %484 = sbr.rel (0) target = $region277
    $region276: #{forward.1} parent=1 // pred_region
      %485 = dma.done [#allocation22], 48
    $region277: #{forward.1} parent=1 // pred_fallthru
      _
    // Predicated region
    $region278: #{forward.1} parent=1 // pred_check
      _
    $region279: #{forward.1} parent=1 // pred_check_branch
      %487 = sbr.rel (0) target = $region281
    $region280: #{forward.1} parent=1 // pred_region
      %488 = dma.done [#allocation22], 48
    $region281: #{forward.1} parent=1 // pred_fallthru
      _
    // Predicated region
    $region282: #{forward.1} parent=1 // pred_check
      _
    $region283: #{forward.1} parent=1 // pred_check_branch
      %490 = sbr.rel (0) target = $region285
    $region284: #{forward.1} parent=1 // pred_region
      %491 = dma.done [#allocation25], 48
    $region285: #{forward.1} parent=1 // pred_fallthru
      _
    // Predicated region
    $region286: #{forward.1} parent=1 // pred_check
      _
    $region287: #{forward.1} parent=1 // pred_check_branch
      %493 = sbr.rel (0) target = $region289
    $region288: #{forward.1} parent=1 // pred_region
      %494 = dma.done [#allocation25], 768
    $region289: #{forward.1} parent=1 // pred_fallthru
      _
    // Predicated region
    $region290: #{forward.1} parent=1 // pred_check
      _
    $region291: #{forward.1} parent=1 // pred_check_branch
      %496 = sbr.rel (0) target = $region293
    $region292: #{forward.1} parent=1 // pred_region
      %497 = dma.done [#allocation28], 3072
    $region293: #{forward.1} parent=1 // pred_fallthru
      _
    // Predicated region
    $region294: #{forward.1} parent=1 // pred_check
      _
    $region295: #{forward.1} parent=1 // pred_check_branch
      %499 = sbr.rel (0) target = $region297
    $region296: #{forward.1} parent=1 // pred_region
      %500 = dma.done [#allocation28], 3072
    $region297: #{forward.1} parent=1 // pred_fallthru
      _
    // Predicated region
    $region298: #{forward.1} parent=1 // pred_check
      _
    $region299: #{forward.1} parent=1 // pred_check_branch
      %502 = sbr.rel (0) target = $region301
    $region300: #{forward.1} parent=1 // pred_region
      %503 = dma.done [#allocation31], 3072
    $region301: #{forward.1} parent=1 // pred_fallthru
      _
    // Predicated region
    $region302: #{forward.1} parent=1 // pred_check
      _
    $region303: #{forward.1} parent=1 // pred_check_branch
      %505 = sbr.rel (0) target = $region305
    $region304: #{forward.1} parent=1 // pred_region
      %506 = dma.done [#allocation31], 3840
    $region305: #{forward.1} parent=1 // pred_fallthru
      _
    // Predicated region
    $region306: #{forward.1} parent=1 // pred_check
      _
    $region307: #{forward.1} parent=1 // pred_check_branch
      %508 = sbr.rel (0) target = $region309
    $region308: #{forward.1} parent=1 // pred_region
      %509 = dma.done [#allocation34], 3840
    $region309: #{forward.1} parent=1 // pred_fallthru
      _
    %v510 = vld [vmem:[#allocation4] sm:$0xff]
    %v511 = vld [vmem:[%s3] sm:$0xff]
    %v512 = vld [vmem:[%s3 + $0x8] sm:$0xff]
    %v513 = vld [vmem:[%s5] sm:$0xff]
    %v514 = vld [vmem:[%s5 + $0x8] sm:$0xff]
    %v515 = vld [vmem:[%s7] sm:$0xff]
    %v516 = vld [vmem:[%s7 + $0x8] sm:$0xff]
    %v517 = vld [vmem:[%s9] sm:$0x1]
    %v518 = vlaneseq
    %v519 = vand.u32 %v518, 127
    %520 = vset.pattern.permute.xlu0 0
    %521 = vperm.xlu0 %520, %v513
    %v522 = vpop.permute.xlu0 %521
    %523 = vset.pattern.permute.xlu0 0
    %524 = vperm.xlu0 %523, %v514
    %v525 = vpop.permute.xlu0 %524
    %vm526 = vcmp.eq.s32.totalorder %v519, %v522
    %vm527 = vcmp.eq.s32.totalorder %v519, %v525
    %v528 = vsel %vm526, 1, 0
    %v529 = vsel %vm527, 1, 0
    %v530 = vcvt.s32.f32 %v528
    %v531 = vcvt.s32.f32 %v529
    %532 = vset.pattern.permute.xlu0 0
    %533 = vperm.xlu0 %532, %v515
    %v534 = vpop.permute.xlu0 %533
    %535 = vset.pattern.permute.xlu0 0
    %536 = vperm.xlu0 %535, %v516
    %v537 = vpop.permute.xlu0 %536
    %vm538 = vcmp.eq.s32.totalorder %v519, %v534
    %vm539 = vcmp.eq.s32.totalorder %v519, %v537
    %v540 = vsel %vm538, 1, 0
    %v541 = vsel %vm539, 1, 0
    %v542 = vcvt.s32.f32 %v540
    %v543 = vcvt.s32.f32 %v541
    %v544 = vlaneseq
    %v545 = vshrl.u32 %v544, 7
    %v546 = vlaneseq
    %v547 = vshrl.u32 %v546, 7
    %v548 = vsub.s32 0, %v547
    %v549 = vrot.slane %v517, %v548
    %vm550 = vcmp.eq.s32.totalorder %v545, %v549
    %v551 = vsel %vm550, 1, 0
    %v552 = vcvt.s32.f32 %v551
    %v553 = vld [vmem:[%s33] sm:$0x1]
    %v554 = vld [vmem:[%s35] sm:$0x1]
    %v555 = vld [vmem:[#allocation14] sm:$0xff]
    %v556 = vld [vmem:[#allocation14 + $0x8] sm:$0xff]
    %v557 = vld [vmem:[%s39] sm:$0x1]
    %v558 = vld [vmem:[%s41] sm:$0x1]
    %v559 = vld [vmem:[#allocation15] sm:$0xff]
    %v560 = vld [vmem:[#allocation15 + $0x8] sm:$0xff]
    %v561 = vld [vmem:[%s45] sm:$0x1]
    %v562 = vld [vmem:[%s47] sm:$0x1]
    %v563 = vld [vmem:[#allocation17] sm:$0xff]
    %v564 = vld [vmem:[#allocation17 + $0x8] sm:$0xff]
    %v565 = vld [vmem:[#allocation17 + $0x10] sm:$0x7]
    %v566 = vld [vmem:[#allocation9] sm:$0x1]
    %v567 = vld [vmem:[%s29] sm:$0x1]
    %v568 = vld [vmem:[%s25] sm:$0x1]
    %v569 = vld [vmem:[#allocation18] sm:$0xff]
    %v570 = vld [vmem:[#allocation18 + $0x8] sm:$0xff]
    %v571 = vld [vmem:[#allocation18 + $0x10] sm:$0xff]
    %v572 = vld [vmem:[#allocation18 + $0x18] sm:$0xff]
    %v573 = vld [vmem:[#allocation18 + $0x20] sm:$0xff]
    %v574 = vld [vmem:[#allocation18 + $0x28] sm:$0xff]
    %v575 = vld [vmem:[#allocation18 + $0x30] sm:$0xff]
    %v576 = vld [vmem:[#allocation18 + $0x38] sm:$0xff]
    %v577 = vld [vmem:[#allocation11] sm:$0x1]
    %v578 = vld [vmem:[%s31] sm:$0x1]
    %v579 = vld [vmem:[%s27] sm:$0x1]
    %v580 = vld [vmem:[#allocation20] sm:$0xff]
    %v581 = vld [vmem:[#allocation20 + $0x8] sm:$0xff]
    %v582 = vld [vmem:[#allocation20 + $0x10] sm:$0xff]
    %v583 = vld [vmem:[#allocation20 + $0x18] sm:$0xff]
    %v584 = vld [vmem:[#allocation20 + $0x20] sm:$0xff]
    %v585 = vld [vmem:[#allocation20 + $0x28] sm:$0xff]
    %v586 = vld [vmem:[#allocation20 + $0x30] sm:$0xff]
    %v587 = vld [vmem:[#allocation20 + $0x38] sm:$0xff]
    %v588 = vld [vmem:[#allocation12] sm:$0x1]
    %v589 = vld [vmem:[%s69] sm:$0x1]
    %v590 = vld [vmem:[%s71] sm:$0x1]
    %v591 = vld [vmem:[#allocation26] sm:$0xff]
    %v592 = vld [vmem:[#allocation26 + $0x8] sm:$0xff]
    %v593 = vld [vmem:[%s75] sm:$0x1]
    %v594 = vld [vmem:[%s77] sm:$0x1]
    %v595 = vld [vmem:[%s79] sm:$0xff]
    %v596 = vld [vmem:[%s79 + $0x8] sm:$0xff]
    %v597 = vld [vmem:[%s79 + $0x10] sm:$0x7]
    %v598 = vld [vmem:[#allocation21] sm:$0x1]
    %v599 = vld [vmem:[%s65] sm:$0x1]
    %v600 = vld [vmem:[%s61] sm:$0x1]
    %v601 = vld [vmem:[#allocation27] sm:$0xff]
    %v602 = vld [vmem:[#allocation27 + $0x8] sm:$0xff]
    %v603 = vld [vmem:[#allocation27 + $0x10] sm:$0xff]
    %v604 = vld [vmem:[#allocation27 + $0x18] sm:$0xff]
    %v605 = vld [vmem:[#allocation27 + $0x20] sm:$0xff]
    %v606 = vld [vmem:[#allocation27 + $0x28] sm:$0xff]
    %v607 = vld [vmem:[#allocation27 + $0x30] sm:$0xff]
    %v608 = vld [vmem:[#allocation27 + $0x38] sm:$0xff]
    %v609 = vld [vmem:[#allocation23] sm:$0x1]
    %v610 = vld [vmem:[%s67] sm:$0x1]
    %v611 = vld [vmem:[%s63] sm:$0x1]
    %v612 = vld [vmem:[#allocation29] sm:$0xff]
    %v613 = vld [vmem:[#allocation29 + $0x8] sm:$0xff]
    %v614 = vld [vmem:[#allocation29 + $0x10] sm:$0xff]
    %v615 = vld [vmem:[#allocation29 + $0x18] sm:$0xff]
    %v616 = vld [vmem:[#allocation29 + $0x20] sm:$0xff]
    %v617 = vld [vmem:[#allocation29 + $0x28] sm:$0xff]
    %v618 = vld [vmem:[#allocation29 + $0x30] sm:$0xff]
    %v619 = vld [vmem:[#allocation29 + $0x38] sm:$0xff]
    %v620 = vld [vmem:[#allocation24] sm:$0x1]
    %v621 = vld [vmem:[%s99] sm:$0x1]
    %v622 = vld [vmem:[%s101] sm:$0x1]
    %v623 = vld [vmem:[%s103] sm:$0xff]
    %v624 = vld [vmem:[%s103 + $0x8] sm:$0xff]
    %v625 = vld [vmem:[%s105] sm:$0x1]
    %v626 = vld [vmem:[%s107] sm:$0x1]
    %v627 = vld [vmem:[#allocation30] sm:$0xff]
    %v628 = vld [vmem:[#allocation30 + $0x8] sm:$0xff]
    %v629 = vld [vmem:[#allocation30 + $0x10] sm:$0xff]
    %v630 = vld [vmem:[#allocation30 + $0x18] sm:$0xff]
    %v631 = vld [vmem:[#allocation30 + $0x20] sm:$0xff]
    %v632 = vld [vmem:[#allocation30 + $0x28] sm:$0xff]
    %v633 = vld [vmem:[#allocation30 + $0x30] sm:$0xff]
    %v634 = vld [vmem:[#allocation30 + $0x38] sm:$0xff]
    %v635 = vld [vmem:[%s85] sm:$0x1]
    %v636 = vld [vmem:[%s95] sm:$0x1]
    %v637 = vld [vmem:[%s91] sm:$0x1]
    %v638 = vld [vmem:[#allocation32] sm:$0xff]
    %v639 = vld [vmem:[#allocation32 + $0x8] sm:$0xff]
    %v640 = vld [vmem:[#allocation32 + $0x10] sm:$0xff]
    %v641 = vld [vmem:[#allocation32 + $0x18] sm:$0xff]
    %v642 = vld [vmem:[#allocation32 + $0x20] sm:$0xff]
    %v643 = vld [vmem:[#allocation32 + $0x28] sm:$0xff]
    %v644 = vld [vmem:[#allocation32 + $0x30] sm:$0xff]
    %v645 = vld [vmem:[#allocation32 + $0x38] sm:$0xff]
    %v646 = vld [vmem:[#allocation32 + $0x40] sm:$0xff]
    %v647 = vld [vmem:[#allocation32 + $0x48] sm:$0xff]
    %v648 = vld [vmem:[%s87] sm:$0x1]
    %v649 = vld [vmem:[%s97] sm:$0x1]
    %v650 = vld [vmem:[%s93] sm:$0x1]
    %v651 = vld [vmem:[#allocation33] sm:$0xff]
    %v652 = vld [vmem:[#allocation33 + $0x8] sm:$0xff]
    %v653 = vld [vmem:[#allocation33 + $0x10] sm:$0xff]
    %v654 = vld [vmem:[#allocation33 + $0x18] sm:$0xff]
    %v655 = vld [vmem:[#allocation33 + $0x20] sm:$0xff]
    %v656 = vld [vmem:[#allocation33 + $0x28] sm:$0xff]
    %v657 = vld [vmem:[#allocation33 + $0x30] sm:$0xff]
    %v658 = vld [vmem:[#allocation33 + $0x38] sm:$0xff]
    %v659 = vld [vmem:[#allocation33 + $0x40] sm:$0xff]
    %v660 = vld [vmem:[#allocation33 + $0x48] sm:$0xff]
    %v661 = vld [vmem:[%s89] sm:$0x1]
    %vm662 = vcmask 64512
    %v664 = vsel %vm662, %v530, 0
    %v667 = vsel %vm662, %v531, 0
    %669 = vmatprep.subr.mxu0 0.0
    %670 = vmatpush1.msra.mxu0 %v510
    %671 = vmatprep.subr.mxu0 0.0
    %672 = vmatpush1.msra.mxu0 0.0
    %673 = vmatprep.subr.mxu0 0.0
    %674 = vmatpush1.msra.mxu0 0.0
    %675 = vmatprep.subr.mxu0 0.0
    %676 = vmatpush1.msra.mxu0 0.0
    %677 = vmatprep.subr.mxu0 0.0
    %678 = vmatpush1.msra.mxu0 0.0
    %679 = vmatprep.subr.mxu0 0.0
    %680 = vmatpush1.msra.mxu0 0.0
    %681 = vmatprep.subr.mxu0 0.0
    %682 = vmatpush1.msra.mxu0 0.0
    %683 = vmatprep.subr.mxu0 0.0
    %684 = vmatpush1.msra.mxu0 0.0
    %685 = vmatprep.subr.mxu0 0.0
    %686 = vmatpush1.msra.mxu0 0.0
    %687 = vmatprep.subr.mxu0 0.0
    %688 = vmatpush1.msra.mxu0 0.0
    %689 = vmatprep.subr.mxu0 0.0
    %690 = vmatpush1.msra.mxu0 0.0
    %691 = vmatprep.subr.mxu0 0.0
    %692 = vmatpush1.msra.mxu0 0.0
    %693 = vmatprep.subr.mxu0 0.0
    %694 = vmatpush1.msra.mxu0 0.0
    %695 = vmatprep.subr.mxu0 0.0
    %696 = vmatpush1.msra.mxu0 0.0
    %697 = vmatprep.subr.mxu0 0.0
    %698 = vmatpush1.msra.mxu0 0.0
    %699 = vmatprep.subr.mxu0 0.0
    %700 = vmatpush1.msra.mxu0 0.0
    %701 = vmatprep.subr.mxu0 0.0
    %702 = vmatpush1.msra.mxu0 0.0
    %703 = vmatprep.subr.mxu0 0.0
    %704 = vmatpush1.msra.mxu0 0.0
    %705 = vmatprep.subr.mxu0 0.0
    %706 = vmatpush1.msra.mxu0 0.0
    %707 = vmatprep.subr.mxu0 0.0
    %708 = vmatpush1.msra.mxu0 0.0
    %709 = vmatprep.subr.mxu0 0.0
    %710 = vmatpush1.msra.mxu0 0.0
    %711 = vmatprep.subr.mxu0 0.0
    %712 = vmatpush1.msra.mxu0 0.0
    %713 = vmatprep.subr.mxu0 0.0
    %714 = vmatpush1.msra.mxu0 0.0
    %715 = vmatprep.subr.mxu0 0.0
    %716 = vmatpush1.msra.mxu0 0.0
    %717 = vmatprep.subr.mxu0 0.0
    %718 = vmatpush1.msra.mxu0 0.0
    %719 = vmatprep.subr.mxu0 0.0
    %720 = vmatpush1.msra.mxu0 0.0
    %721 = vmatprep.subr.mxu0 0.0
    %722 = vmatpush1.msra.mxu0 0.0
    %723 = vmatprep.subr.mxu0 0.0
    %724 = vmatpush1.msra.mxu0 0.0
    %725 = vmatprep.subr.mxu0 0.0
    %726 = vmatpush1.msra.mxu0 0.0
    %727 = vmatprep.subr.mxu0 0.0
    %728 = vmatpush1.msra.mxu0 0.0
    %729 = vmatprep.subr.mxu0 0.0
    %730 = vmatpush1.msra.mxu0 0.0
    %731 = vmatprep.subr.mxu0 0.0
    %732 = vmatpush1.msra.mxu0 0.0
    %733 = vmatprep.mubr.f32.mxu0 0.0
    %734 = vmatmul.mubr.f32.gmra.mrb[0].mxu0 %v664
    %v735 = vpop.f32.mrb[0].mxu0
    %v736 = vadd.f32 0.0, %v735
    %v737 = vpop.f32.mrb[0].mxu0
    %738 = vmatprep.mubr.f32.mxu0 0.0
    %739 = vmatmul.mubr.f32.gmra.mrb[0].mxu0 %v667
    %v740 = vpop.f32.mrb[0].mxu0
    %v741 = vadd.f32 0.0, %v740
    %v742 = vpop.f32.mrb[0].mxu0
    %743 = vdwg.mxu0
    %v745 = vsel %vm662, %v542, 0
    %v748 = vsel %vm662, %v543, 0
    %750 = vmatprep.subr.mxu0 0.0
    %751 = vmatpush1.msra.mxu0 %v510
    %752 = vmatprep.subr.mxu0 0.0
    %753 = vmatpush1.msra.mxu0 0.0
    %754 = vmatprep.subr.mxu0 0.0
    %755 = vmatpush1.msra.mxu0 0.0
    %756 = vmatprep.subr.mxu0 0.0
    %757 = vmatpush1.msra.mxu0 0.0
    %758 = vmatprep.subr.mxu0 0.0
    %759 = vmatpush1.msra.mxu0 0.0
    %760 = vmatprep.subr.mxu0 0.0
    %761 = vmatpush1.msra.mxu0 0.0
    %762 = vmatprep.subr.mxu0 0.0
    %763 = vmatpush1.msra.mxu0 0.0
    %764 = vmatprep.subr.mxu0 0.0
    %765 = vmatpush1.msra.mxu0 0.0
    %766 = vmatprep.subr.mxu0 0.0
    %767 = vmatpush1.msra.mxu0 0.0
    %768 = vmatprep.subr.mxu0 0.0
    %769 = vmatpush1.msra.mxu0 0.0
    %770 = vmatprep.subr.mxu0 0.0
    %771 = vmatpush1.msra.mxu0 0.0
    %772 = vmatprep.subr.mxu0 0.0
    %773 = vmatpush1.msra.mxu0 0.0
    %774 = vmatprep.subr.mxu0 0.0
    %775 = vmatpush1.msra.mxu0 0.0
    %776 = vmatprep.subr.mxu0 0.0
    %777 = vmatpush1.msra.mxu0 0.0
    %778 = vmatprep.subr.mxu0 0.0
    %779 = vmatpush1.msra.mxu0 0.0
    %780 = vmatprep.subr.mxu0 0.0
    %781 = vmatpush1.msra.mxu0 0.0
    %782 = vmatprep.subr.mxu0 0.0
    %783 = vmatpush1.msra.mxu0 0.0
    %784 = vmatprep.subr.mxu0 0.0
    %785 = vmatpush1.msra.mxu0 0.0
    %786 = vmatprep.subr.mxu0 0.0
    %787 = vmatpush1.msra.mxu0 0.0
    %788 = vmatprep.subr.mxu0 0.0
    %789 = vmatpush1.msra.mxu0 0.0
    %790 = vmatprep.subr.mxu0 0.0
    %791 = vmatpush1.msra.mxu0 0.0
    %792 = vmatprep.subr.mxu0 0.0
    %793 = vmatpush1.msra.mxu0 0.0
    %794 = vmatprep.subr.mxu0 0.0
    %795 = vmatpush1.msra.mxu0 0.0
    %796 = vmatprep.subr.mxu0 0.0
    %797 = vmatpush1.msra.mxu0 0.0
    %798 = vmatprep.subr.mxu0 0.0
    %799 = vmatpush1.msra.mxu0 0.0
    %800 = vmatprep.subr.mxu0 0.0
    %801 = vmatpush1.msra.mxu0 0.0
    %802 = vmatprep.subr.mxu0 0.0
    %803 = vmatpush1.msra.mxu0 0.0
    %804 = vmatprep.subr.mxu0 0.0
    %805 = vmatpush1.msra.mxu0 0.0
    %806 = vmatprep.subr.mxu0 0.0
    %807 = vmatpush1.msra.mxu0 0.0
    %808 = vmatprep.subr.mxu0 0.0
    %809 = vmatpush1.msra.mxu0 0.0
    %810 = vmatprep.subr.mxu0 0.0
    %811 = vmatpush1.msra.mxu0 0.0
    %812 = vmatprep.subr.mxu0 0.0
    %813 = vmatpush1.msra.mxu0 0.0
    %814 = vmatprep.mubr.f32.mxu0 0.0
    %815 = vmatmul.mubr.f32.gmra.mrb[0].mxu0 %v745
    %v816 = vpop.f32.mrb[0].mxu0
    %v817 = vadd.f32 0.0, %v816
    %v818 = vpop.f32.mrb[0].mxu0
    %819 = vmatprep.mubr.f32.mxu0 0.0
    %820 = vmatmul.mubr.f32.gmra.mrb[0].mxu0 %v748
    %v821 = vpop.f32.mrb[0].mxu0
    %v822 = vadd.f32 0.0, %v821
    %v823 = vpop.f32.mrb[0].mxu0
    %824 = vdwg.mxu0
    %vm825 = vcmask 130048
    %v826 = vsel %vm825, %v736, 0.0
    %v827 = vsel %vm825, %v741, 0.0
    %v828 = vadd.f32 %v826, %v827
    %v829 = vrot.slane %v828, 4
    %v830 = vadd.f32 %v828, %v829
    %v831 = vrot.slane %v830, 2
    %v832 = vadd.f32 %v830, %v831
    %v833 = vrot.slane %v832, 1
    %v834 = vadd.f32 %v832, %v833
    %v835 = vrcp.pop 16.0
    %v836 = vmul.f32 %v834, %v835
    %v837 = vsub.f32 %v736, %v836
    %v838 = vsub.f32 %v741, %v836
    %v839 = vmul.f32 %v837, %v837
    %v840 = vmul.f32 %v838, %v838
    %v841 = vsel %vm825, %v839, 0.0
    %v842 = vsel %vm825, %v840, 0.0
    %v843 = vadd.f32 %v841, %v842
    %v844 = vrot.slane %v843, 4
    %v845 = vadd.f32 %v843, %v844
    %v846 = vrot.slane %v845, 2
    %v847 = vadd.f32 %v845, %v846
    %v848 = vrot.slane %v847, 1
    %v849 = vadd.f32 %v847, %v848
    %v850 = vmul.f32 %v849, %v835
    %v851 = vadd.f32 %v850, 1e-05
    %v852 = vrsqrt.pop %v851
    %v853 = vmul.f32 %v837, %v852
    %v854 = vmul.f32 %v838, %v852
    %v856 = vlaneseq
    %v857 = vshrl.u32 %v856, 7
    %v858 = vsub.s32 0, %v857
    %v859 = vrot.slane %v553, %v858
    %v861 = vmul.f32 %v853, %v859
    %v862 = vmul.f32 %v854, %v859
    %v864 = vlaneseq
    %v865 = vshrl.u32 %v864, 7
    %v866 = vsub.s32 0, %v865
    %v867 = vrot.slane %v554, %v866
    %v869 = vadd.f32 %v861, %v867
    %v870 = vadd.f32 %v862, %v867
    %v871 = vsel %vm825, %v817, 0.0
    %v872 = vsel %vm825, %v822, 0.0
    %v873 = vadd.f32 %v871, %v872
    %v874 = vrot.slane %v873, 4
    %v875 = vadd.f32 %v873, %v874
    %v876 = vrot.slane %v875, 2
    %v877 = vadd.f32 %v875, %v876
    %v878 = vrot.slane %v877, 1
    %v879 = vadd.f32 %v877, %v878
    %v880 = vmul.f32 %v879, %v835
    %v881 = vsub.f32 %v817, %v880
    %v882 = vsub.f32 %v822, %v880
    %v883 = vmul.f32 %v881, %v881
    %v884 = vmul.f32 %v882, %v882
    %v885 = vsel %vm825, %v883, 0.0
    %v886 = vsel %vm825, %v884, 0.0
    %v887 = vadd.f32 %v885, %v886
    %v888 = vrot.slane %v887, 4
    %v889 = vadd.f32 %v887, %v888
    %v890 = vrot.slane %v889, 2
    %v891 = vadd.f32 %v889, %v890
    %v892 = vrot.slane %v891, 1
    %v893 = vadd.f32 %v891, %v892
    %v894 = vmul.f32 %v893, %v835
    %v895 = vadd.f32 %v894, 1e-05
    %v896 = vrsqrt.pop %v895
    %v897 = vmul.f32 %v881, %v896
    %v898 = vmul.f32 %v882, %v896
    %v900 = vlaneseq
    %v901 = vshrl.u32 %v900, 7
    %v902 = vsub.s32 0, %v901
    %v903 = vrot.slane %v557, %v902
    %v905 = vmul.f32 %v897, %v903
    %v906 = vmul.f32 %v898, %v903
    %v908 = vlaneseq
    %v909 = vshrl.u32 %v908, 7
    %v910 = vsub.s32 0, %v909
    %v911 = vrot.slane %v558, %v910
    %v913 = vadd.f32 %v905, %v911
    %v914 = vadd.f32 %v906, %v911
    %v916 = vsel %vm825, %v913, 0
    %v919 = vsel %vm825, %v914, 0
    %921 = vmatprep.subr.mxu0 0.0
    %922 = vmatpush1.msra.mxu0 %v559
    %923 = vmatprep.subr.mxu0 0.0
    %924 = vmatpush1.msra.mxu0 %v560
    %925 = vmatprep.subr.mxu0 0.0
    %926 = vmatpush1.msra.mxu0 0.0
    %927 = vmatprep.subr.mxu0 0.0
    %928 = vmatpush1.msra.mxu0 0.0
    %929 = vmatprep.subr.mxu0 0.0
    %930 = vmatpush1.msra.mxu0 0.0
    %931 = vmatprep.subr.mxu0 0.0
    %932 = vmatpush1.msra.mxu0 0.0
    %933 = vmatprep.subr.mxu0 0.0
    %934 = vmatpush1.msra.mxu0 0.0
    %935 = vmatprep.subr.mxu0 0.0
    %936 = vmatpush1.msra.mxu0 0.0
    %937 = vmatprep.subr.mxu0 0.0
    %938 = vmatpush1.msra.mxu0 0.0
    %939 = vmatprep.subr.mxu0 0.0
    %940 = vmatpush1.msra.mxu0 0.0
    %941 = vmatprep.subr.mxu0 0.0
    %942 = vmatpush1.msra.mxu0 0.0
    %943 = vmatprep.subr.mxu0 0.0
    %944 = vmatpush1.msra.mxu0 0.0
    %945 = vmatprep.subr.mxu0 0.0
    %946 = vmatpush1.msra.mxu0 0.0
    %947 = vmatprep.subr.mxu0 0.0
    %948 = vmatpush1.msra.mxu0 0.0
    %949 = vmatprep.subr.mxu0 0.0
    %950 = vmatpush1.msra.mxu0 0.0
    %951 = vmatprep.subr.mxu0 0.0
    %952 = vmatpush1.msra.mxu0 0.0
    %953 = vmatprep.subr.mxu0 0.0
    %954 = vmatpush1.msra.mxu0 0.0
    %955 = vmatprep.subr.mxu0 0.0
    %956 = vmatpush1.msra.mxu0 0.0
    %957 = vmatprep.subr.mxu0 0.0
    %958 = vmatpush1.msra.mxu0 0.0
    %959 = vmatprep.subr.mxu0 0.0
    %960 = vmatpush1.msra.mxu0 0.0
    %961 = vmatprep.subr.mxu0 0.0
    %962 = vmatpush1.msra.mxu0 0.0
    %963 = vmatprep.subr.mxu0 0.0
    %964 = vmatpush1.msra.mxu0 0.0
    %965 = vmatprep.subr.mxu0 0.0
    %966 = vmatpush1.msra.mxu0 0.0
    %967 = vmatprep.subr.mxu0 0.0
    %968 = vmatpush1.msra.mxu0 0.0
    %969 = vmatprep.subr.mxu0 0.0
    %970 = vmatpush1.msra.mxu0 0.0
    %971 = vmatprep.subr.mxu0 0.0
    %972 = vmatpush1.msra.mxu0 0.0
    %973 = vmatprep.subr.mxu0 0.0
    %974 = vmatpush1.msra.mxu0 0.0
    %975 = vmatprep.subr.mxu0 0.0
    %976 = vmatpush1.msra.mxu0 0.0
    %977 = vmatprep.subr.mxu0 0.0
    %978 = vmatpush1.msra.mxu0 0.0
    %979 = vmatprep.subr.mxu0 0.0
    %980 = vmatpush1.msra.mxu0 0.0
    %981 = vmatprep.subr.mxu0 0.0
    %982 = vmatpush1.msra.mxu0 0.0
    %983 = vmatprep.subr.mxu0 0.0
    %984 = vmatpush1.msra.mxu0 0.0
    %985 = vmatprep.mubr.f32.mxu0 0.0
    %986 = vmatmul.mubr.f32.gmra.mrb[0].mxu0 %v916
    %v987 = vpop.f32.mrb[0].mxu0
    %v988 = vadd.f32 0.0, %v987
    %v989 = vpop.f32.mrb[0].mxu0
    %990 = vmatprep.mubr.f32.mxu0 0.0
    %991 = vmatmul.mubr.f32.gmra.mrb[0].mxu0 %v919
    %v992 = vpop.f32.mrb[0].mxu0
    %v993 = vadd.f32 0.0, %v992
    %v994 = vpop.f32.mrb[0].mxu0
    %995 = vdwg.mxu0
    %v997 = vsel %vm825, %v869, 0
    %v1000 = vsel %vm825, %v870, 0
    %1002 = vmatprep.subr.mxu0 0.0
    %1003 = vmatpush1.msra.mxu0 %v555
    %1004 = vmatprep.subr.mxu0 0.0
    %1005 = vmatpush1.msra.mxu0 %v556
    %1006 = vmatprep.subr.mxu0 0.0
    %1007 = vmatpush1.msra.mxu0 0.0
    %1008 = vmatprep.subr.mxu0 0.0
    %1009 = vmatpush1.msra.mxu0 0.0
    %1010 = vmatprep.subr.mxu0 0.0
    %1011 = vmatpush1.msra.mxu0 0.0
    %1012 = vmatprep.subr.mxu0 0.0
    %1013 = vmatpush1.msra.mxu0 0.0
    %1014 = vmatprep.subr.mxu0 0.0
    %1015 = vmatpush1.msra.mxu0 0.0
    %1016 = vmatprep.subr.mxu0 0.0
    %1017 = vmatpush1.msra.mxu0 0.0
    %1018 = vmatprep.subr.mxu0 0.0
    %1019 = vmatpush1.msra.mxu0 0.0
    %1020 = vmatprep.subr.mxu0 0.0
    %1021 = vmatpush1.msra.mxu0 0.0
    %1022 = vmatprep.subr.mxu0 0.0
    %1023 = vmatpush1.msra.mxu0 0.0
    %1024 = vmatprep.subr.mxu0 0.0
    %1025 = vmatpush1.msra.mxu0 0.0
    %1026 = vmatprep.subr.mxu0 0.0
    %1027 = vmatpush1.msra.mxu0 0.0
    %1028 = vmatprep.subr.mxu0 0.0
    %1029 = vmatpush1.msra.mxu0 0.0
    %1030 = vmatprep.subr.mxu0 0.0
    %1031 = vmatpush1.msra.mxu0 0.0
    %1032 = vmatprep.subr.mxu0 0.0
    %1033 = vmatpush1.msra.mxu0 0.0
    %1034 = vmatprep.subr.mxu0 0.0
    %1035 = vmatpush1.msra.mxu0 0.0
    %1036 = vmatprep.subr.mxu0 0.0
    %1037 = vmatpush1.msra.mxu0 0.0
    %1038 = vmatprep.subr.mxu0 0.0
    %1039 = vmatpush1.msra.mxu0 0.0
    %1040 = vmatprep.subr.mxu0 0.0
    %1041 = vmatpush1.msra.mxu0 0.0
    %1042 = vmatprep.subr.mxu0 0.0
    %1043 = vmatpush1.msra.mxu0 0.0
    %1044 = vmatprep.subr.mxu0 0.0
    %1045 = vmatpush1.msra.mxu0 0.0
    %1046 = vmatprep.subr.mxu0 0.0
    %1047 = vmatpush1.msra.mxu0 0.0
    %1048 = vmatprep.subr.mxu0 0.0
    %1049 = vmatpush1.msra.mxu0 0.0
    %1050 = vmatprep.subr.mxu0 0.0
    %1051 = vmatpush1.msra.mxu0 0.0
    %1052 = vmatprep.subr.mxu0 0.0
    %1053 = vmatpush1.msra.mxu0 0.0
    %1054 = vmatprep.subr.mxu0 0.0
    %1055 = vmatpush1.msra.mxu0 0.0
    %1056 = vmatprep.subr.mxu0 0.0
    %1057 = vmatpush1.msra.mxu0 0.0
    %1058 = vmatprep.subr.mxu0 0.0
    %1059 = vmatpush1.msra.mxu0 0.0
    %1060 = vmatprep.subr.mxu0 0.0
    %1061 = vmatpush1.msra.mxu0 0.0
    %1062 = vmatprep.subr.mxu0 0.0
    %1063 = vmatpush1.msra.mxu0 0.0
    %1064 = vmatprep.subr.mxu0 0.0
    %1065 = vmatpush1.msra.mxu0 0.0
    %1066 = vmatprep.mubr.f32.mxu0 0.0
    %1067 = vmatmul.mubr.f32.gmra.mrb[0].mxu0 %v997
    %v1068 = vpop.f32.mrb[0].mxu0
    %v1069 = vadd.f32 %v988, %v1068
    %v1070 = vpop.f32.mrb[0].mxu0
    %1071 = vmatprep.mubr.f32.mxu0 0.0
    %1072 = vmatmul.mubr.f32.gmra.mrb[0].mxu0 %v1000
    %v1073 = vpop.f32.mrb[0].mxu0
    %v1074 = vadd.f32 %v993, %v1073
    %v1075 = vpop.f32.mrb[0].mxu0
    %1076 = vdwg.mxu0
    %vm1077 = vcmask 154624
    %v1078 = vsel %vm1077, %v511, 0.0
    %v1079 = vsel %vm1077, %v512, 0.0
    %v1080 = vadd.f32 %v1078, %v1079
    %v1081 = vrot.slane %v1080, 4
    %v1082 = vadd.f32 %v1080, %v1081
    %v1083 = vrot.slane %v1082, 2
    %v1084 = vadd.f32 %v1082, %v1083
    %v1085 = vrot.slane %v1084, 1
    %v1086 = vadd.f32 %v1084, %v1085
    %v1087 = vmul.f32 %v1086, %v835
    %v1088 = vsub.f32 %v511, %v1087
    %v1089 = vsub.f32 %v512, %v1087
    %v1090 = vmul.f32 %v1088, %v1088
    %v1091 = vmul.f32 %v1089, %v1089
    %v1092 = vsel %vm1077, %v1090, 0.0
    %v1093 = vsel %vm1077, %v1091, 0.0
    %v1094 = vadd.f32 %v1092, %v1093
    %v1095 = vrot.slane %v1094, 4
    %v1096 = vadd.f32 %v1094, %v1095
    %v1097 = vrot.slane %v1096, 2
    %v1098 = vadd.f32 %v1096, %v1097
    %v1099 = vrot.slane %v1098, 1
    %v1100 = vadd.f32 %v1098, %v1099
    %v1101 = vmul.f32 %v1100, %v835
    %v1102 = vadd.f32 %v1101, 1e-05
    %v1103 = vrsqrt.pop %v1102
    %v1104 = vmul.f32 %v1088, %v1103
    %v1105 = vmul.f32 %v1089, %v1103
    %v1107 = vlaneseq
    %v1108 = vshrl.u32 %v1107, 7
    %v1109 = vsub.s32 0, %v1108
    %v1110 = vrot.slane %v561, %v1109
    %v1112 = vmul.f32 %v1104, %v1110
    %v1113 = vmul.f32 %v1105, %v1110
    %v1115 = vlaneseq
    %v1116 = vshrl.u32 %v1115, 7
    %v1117 = vsub.s32 0, %v1116
    %v1118 = vrot.slane %v562, %v1117
    %v1120 = vadd.f32 %v1112, %v1118
    %v1121 = vadd.f32 %v1113, %v1118
    %v1123 = vsel %vm1077, %v1120, 0
    %v1126 = vsel %vm1077, %v1121, 0
    %vm1128 = vcmask 1042432
    %v1130 = vsel %vm1128, %v565, 0
    %1132 = vmatprep.subr.mxu0 0.0
    %1133 = vmatpush1.msra.mxu0 %v563
    %1134 = vmatprep.subr.mxu0 0.0
    %1135 = vmatpush1.msra.mxu0 %v564
    %1136 = vmatprep.subr.mxu0 0.0
    %1137 = vmatpush1.msra.mxu0 %v1130
    %1138 = vmatprep.subr.mxu0 0.0
    %1139 = vmatpush1.msra.mxu0 0.0
    %1140 = vmatprep.subr.mxu0 0.0
    %1141 = vmatpush1.msra.mxu0 0.0
    %1142 = vmatprep.subr.mxu0 0.0
    %1143 = vmatpush1.msra.mxu0 0.0
    %1144 = vmatprep.subr.mxu0 0.0
    %1145 = vmatpush1.msra.mxu0 0.0
    %1146 = vmatprep.subr.mxu0 0.0
    %1147 = vmatpush1.msra.mxu0 0.0
    %1148 = vmatprep.subr.mxu0 0.0
    %1149 = vmatpush1.msra.mxu0 0.0
    %1150 = vmatprep.subr.mxu0 0.0
    %1151 = vmatpush1.msra.mxu0 0.0
    %1152 = vmatprep.subr.mxu0 0.0
    %1153 = vmatpush1.msra.mxu0 0.0
    %1154 = vmatprep.subr.mxu0 0.0
    %1155 = vmatpush1.msra.mxu0 0.0
    %1156 = vmatprep.subr.mxu0 0.0
    %1157 = vmatpush1.msra.mxu0 0.0
    %1158 = vmatprep.subr.mxu0 0.0
    %1159 = vmatpush1.msra.mxu0 0.0
    %1160 = vmatprep.subr.mxu0 0.0
    %1161 = vmatpush1.msra.mxu0 0.0
    %1162 = vmatprep.subr.mxu0 0.0
    %1163 = vmatpush1.msra.mxu0 0.0
    %1164 = vmatprep.subr.mxu0 0.0
    %1165 = vmatpush1.msra.mxu0 0.0
    %1166 = vmatprep.subr.mxu0 0.0
    %1167 = vmatpush1.msra.mxu0 0.0
    %1168 = vmatprep.subr.mxu0 0.0
    %1169 = vmatpush1.msra.mxu0 0.0
    %1170 = vmatprep.subr.mxu0 0.0
    %1171 = vmatpush1.msra.mxu0 0.0
    %1172 = vmatprep.subr.mxu0 0.0
    %1173 = vmatpush1.msra.mxu0 0.0
    %1174 = vmatprep.subr.mxu0 0.0
    %1175 = vmatpush1.msra.mxu0 0.0
    %1176 = vmatprep.subr.mxu0 0.0
    %1177 = vmatpush1.msra.mxu0 0.0
    %1178 = vmatprep.subr.mxu0 0.0
    %1179 = vmatpush1.msra.mxu0 0.0
    %1180 = vmatprep.subr.mxu0 0.0
    %1181 = vmatpush1.msra.mxu0 0.0
    %1182 = vmatprep.subr.mxu0 0.0
    %1183 = vmatpush1.msra.mxu0 0.0
    %1184 = vmatprep.subr.mxu0 0.0
    %1185 = vmatpush1.msra.mxu0 0.0
    %1186 = vmatprep.subr.mxu0 0.0
    %1187 = vmatpush1.msra.mxu0 0.0
    %1188 = vmatprep.subr.mxu0 0.0
    %1189 = vmatpush1.msra.mxu0 0.0
    %1190 = vmatprep.subr.mxu0 0.0
    %1191 = vmatpush1.msra.mxu0 0.0
    %1192 = vmatprep.subr.mxu0 0.0
    %1193 = vmatpush1.msra.mxu0 0.0
    %1194 = vmatprep.subr.mxu0 0.0
    %1195 = vmatpush1.msra.mxu0 0.0
    %1196 = vmatprep.mubr.f32.mxu0 0.0
    %1197 = vmatmul.mubr.f32.gmra.mrb[0].mxu0 %v1123
    %v1198 = vpop.f32.mrb[0].mxu0
    %v1199 = vadd.f32 0.0, %v1198
    %v1200 = vpop.f32.mrb[0].mxu0
    %1201 = vmatprep.mubr.f32.mxu0 0.0
    %1202 = vmatmul.mubr.f32.gmra.mrb[0].mxu0 %v1126
    %v1203 = vpop.f32.mrb[0].mxu0
    %v1204 = vadd.f32 0.0, %v1203
    %v1205 = vpop.f32.mrb[0].mxu0
    %1206 = vdwg.mxu0
    %v1207 = vadd.f32 %v1069, %v1199
    %v1208 = vadd.f32 %v1074, %v1204
    %v1210 = vlaneseq
    %v1211 = vshrl.u32 %v1210, 7
    %v1212 = vsub.s32 0, %v1211
    %v1213 = vrot.slane %v566, %v1212
    %v1215 = vadd.f32 %v1207, %v1213
    %v1216 = vadd.f32 %v1208, %v1213
    %vm1217 = vcmp.ge.f32.partialorder %v1215, 0.0
    %vm1218 = vcmp.ge.f32.partialorder %v1216, 0.0
    %v1219 = vmul.f32 %v1215, 0.1
    %v1220 = vmul.f32 %v1216, 0.1
    %v1221 = vsel %vm1217, %v1215, %v1219
    %v1222 = vsel %vm1218, %v1216, %v1220
    %vm1223 = vcmask 523264
    %v1224 = vsel %vm1223, %v1221, 0.0
    %v1225 = vsel %vm1223, %v1222, 0.0
    %v1226 = vadd.f32 %v1224, %v1225
    %v1227 = vrot.slane %v1226, 4
    %v1228 = vadd.f32 %v1226, %v1227
    %v1229 = vrot.slane %v1228, 2
    %v1230 = vadd.f32 %v1228, %v1229
    %v1231 = vrot.slane %v1230, 1
    %v1232 = vadd.f32 %v1230, %v1231
    %v1233 = vmul.f32 %v1232, %v835
    %v1234 = vsub.f32 %v1221, %v1233
    %v1235 = vsub.f32 %v1222, %v1233
    %v1236 = vmul.f32 %v1234, %v1234
    %v1237 = vmul.f32 %v1235, %v1235
    %v1238 = vsel %vm1223, %v1236, 0.0
    %v1239 = vsel %vm1223, %v1237, 0.0
    %v1240 = vadd.f32 %v1238, %v1239
    %v1241 = vrot.slane %v1240, 4
    %v1242 = vadd.f32 %v1240, %v1241
    %v1243 = vrot.slane %v1242, 2
    %v1244 = vadd.f32 %v1242, %v1243
    %v1245 = vrot.slane %v1244, 1
    %v1246 = vadd.f32 %v1244, %v1245
    %v1247 = vmul.f32 %v1246, %v835
    %v1248 = vadd.f32 %v1247, 1e-05
    %v1249 = vrsqrt.pop %v1248
    %v1250 = vmul.f32 %v1234, %v1249
    %v1251 = vmul.f32 %v1235, %v1249
    %v1253 = vlaneseq
    %v1254 = vshrl.u32 %v1253, 7
    %v1255 = vsub.s32 0, %v1254
    %v1256 = vrot.slane %v567, %v1255
    %v1258 = vmul.f32 %v1250, %v1256
    %v1259 = vmul.f32 %v1251, %v1256
    %v1261 = vlaneseq
    %v1262 = vshrl.u32 %v1261, 7
    %v1263 = vsub.s32 0, %v1262
    %v1264 = vrot.slane %v568, %v1263
    %v1266 = vadd.f32 %v1258, %v1264
    %v1267 = vadd.f32 %v1259, %v1264
    %v1269 = vlaneseq
    %v1270 = vshrl.u32 %v1269, 7
    %v1271 = vsub.s32 0, %v1270
    %v1272 = vrot.slane %v577, %v1271
    %v1275 = vsel %vm1223, %v1266, 0
    %v1278 = vsel %vm1223, %v1267, 0
    %1280 = vmatprep.subr.mxu0 0.0
    %1281 = vmatpush1.msra.mxu0 %v569
    %1282 = vmatprep.subr.mxu0 0.0
    %1283 = vmatpush1.msra.mxu0 %v570
    %1284 = vmatprep.subr.mxu0 0.0
    %1285 = vmatpush1.msra.mxu0 %v571
    %1286 = vmatprep.subr.mxu0 0.0
    %1287 = vmatpush1.msra.mxu0 %v572
    %1288 = vmatprep.subr.mxu0 0.0
    %1289 = vmatpush1.msra.mxu0 %v573
    %1290 = vmatprep.subr.mxu0 0.0
    %1291 = vmatpush1.msra.mxu0 %v574
    %1292 = vmatprep.subr.mxu0 0.0
    %1293 = vmatpush1.msra.mxu0 %v575
    %1294 = vmatprep.subr.mxu0 0.0
    %1295 = vmatpush1.msra.mxu0 %v576
    %1296 = vmatprep.subr.mxu0 0.0
    %1297 = vmatpush1.msra.mxu0 0.0
    %1298 = vmatprep.subr.mxu0 0.0
    %1299 = vmatpush1.msra.mxu0 0.0
    %1300 = vmatprep.subr.mxu0 0.0
    %1301 = vmatpush1.msra.mxu0 0.0
    %1302 = vmatprep.subr.mxu0 0.0
    %1303 = vmatpush1.msra.mxu0 0.0
    %1304 = vmatprep.subr.mxu0 0.0
    %1305 = vmatpush1.msra.mxu0 0.0
    %1306 = vmatprep.subr.mxu0 0.0
    %1307 = vmatpush1.msra.mxu0 0.0
    %1308 = vmatprep.subr.mxu0 0.0
    %1309 = vmatpush1.msra.mxu0 0.0
    %1310 = vmatprep.subr.mxu0 0.0
    %1311 = vmatpush1.msra.mxu0 0.0
    %1312 = vmatprep.subr.mxu0 0.0
    %1313 = vmatpush1.msra.mxu0 0.0
    %1314 = vmatprep.subr.mxu0 0.0
    %1315 = vmatpush1.msra.mxu0 0.0
    %1316 = vmatprep.subr.mxu0 0.0
    %1317 = vmatpush1.msra.mxu0 0.0
    %1318 = vmatprep.subr.mxu0 0.0
    %1319 = vmatpush1.msra.mxu0 0.0
    %1320 = vmatprep.subr.mxu0 0.0
    %1321 = vmatpush1.msra.mxu0 0.0
    %1322 = vmatprep.subr.mxu0 0.0
    %1323 = vmatpush1.msra.mxu0 0.0
    %1324 = vmatprep.subr.mxu0 0.0
    %1325 = vmatpush1.msra.mxu0 0.0
    %1326 = vmatprep.subr.mxu0 0.0
    %1327 = vmatpush1.msra.mxu0 0.0
    %1328 = vmatprep.subr.mxu0 0.0
    %1329 = vmatpush1.msra.mxu0 0.0
    %1330 = vmatprep.subr.mxu0 0.0
    %1331 = vmatpush1.msra.mxu0 0.0
    %1332 = vmatprep.subr.mxu0 0.0
    %1333 = vmatpush1.msra.mxu0 0.0
    %1334 = vmatprep.subr.mxu0 0.0
    %1335 = vmatpush1.msra.mxu0 0.0
    %1336 = vmatprep.subr.mxu0 0.0
    %1337 = vmatpush1.msra.mxu0 0.0
    %1338 = vmatprep.subr.mxu0 0.0
    %1339 = vmatpush1.msra.mxu0 0.0
    %1340 = vmatprep.subr.mxu0 0.0
    %1341 = vmatpush1.msra.mxu0 0.0
    %1342 = vmatprep.subr.mxu0 0.0
    %1343 = vmatpush1.msra.mxu0 0.0
    %1344 = vmatprep.mubr.f32.mxu0 0.0
    %1345 = vmatmul.mubr.f32.gmra.mrb[0].mxu0 %v1275
    %v1346 = vpop.f32.mrb[0].mxu0
    %v1347 = vadd.f32 %v1272, %v1346
    %v1348 = vpop.f32.mrb[0].mxu0
    %1349 = vmatprep.mubr.f32.mxu0 0.0
    %1350 = vmatmul.mubr.f32.gmra.mrb[0].mxu0 %v1278
    %v1351 = vpop.f32.mrb[0].mxu0
    %v1352 = vadd.f32 %v1272, %v1351
    %v1353 = vpop.f32.mrb[0].mxu0
    %1354 = vdwg.mxu0
    %vm1355 = vcmp.ge.f32.partialorder %v1347, 0.0
    %vm1356 = vcmp.ge.f32.partialorder %v1352, 0.0
    %v1357 = vmul.f32 %v1347, 0.1
    %v1358 = vmul.f32 %v1352, 0.1
    %v1359 = vsel %vm1355, %v1347, %v1357
    %v1360 = vsel %vm1356, %v1352, %v1358
    %v1361 = vsel %vm1223, %v1359, 0.0
    %v1362 = vsel %vm1223, %v1360, 0.0
    %v1363 = vadd.f32 %v1361, %v1362
    %v1364 = vrot.slane %v1363, 4
    %v1365 = vadd.f32 %v1363, %v1364
    %v1366 = vrot.slane %v1365, 2
    %v1367 = vadd.f32 %v1365, %v1366
    %v1368 = vrot.slane %v1367, 1
    %v1369 = vadd.f32 %v1367, %v1368
    %v1370 = vmul.f32 %v1369, %v835
    %v1371 = vsub.f32 %v1359, %v1370
    %v1372 = vsub.f32 %v1360, %v1370
    %v1373 = vmul.f32 %v1371, %v1371
    %v1374 = vmul.f32 %v1372, %v1372
    %v1375 = vsel %vm1223, %v1373, 0.0
    %v1376 = vsel %vm1223, %v1374, 0.0
    %v1377 = vadd.f32 %v1375, %v1376
    %v1378 = vrot.slane %v1377, 4
    %v1379 = vadd.f32 %v1377, %v1378
    %v1380 = vrot.slane %v1379, 2
    %v1381 = vadd.f32 %v1379, %v1380
    %v1382 = vrot.slane %v1381, 1
    %v1383 = vadd.f32 %v1381, %v1382
    %v1384 = vmul.f32 %v1383, %v835
    %v1385 = vadd.f32 %v1384, 1e-05
    %v1386 = vrsqrt.pop %v1385
    %v1387 = vmul.f32 %v1371, %v1386
    %v1388 = vmul.f32 %v1372, %v1386
    %v1390 = vlaneseq
    %v1391 = vshrl.u32 %v1390, 7
    %v1392 = vsub.s32 0, %v1391
    %v1393 = vrot.slane %v578, %v1392
    %v1395 = vmul.f32 %v1387, %v1393
    %v1396 = vmul.f32 %v1388, %v1393
    %v1398 = vlaneseq
    %v1399 = vshrl.u32 %v1398, 7
    %v1400 = vsub.s32 0, %v1399
    %v1401 = vrot.slane %v579, %v1400
    %v1403 = vadd.f32 %v1395, %v1401
    %v1404 = vadd.f32 %v1396, %v1401
    %v1406 = vlaneseq
    %v1407 = vshrl.u32 %v1406, 7
    %v1408 = vsub.s32 0, %v1407
    %v1409 = vrot.slane %v588, %v1408
    %v1412 = vsel %vm1223, %v1403, 0
    %v1415 = vsel %vm1223, %v1404, 0
    %1417 = vmatprep.subr.mxu0 0.0
    %1418 = vmatpush1.msra.mxu0 %v580
    %1419 = vmatprep.subr.mxu0 0.0
    %1420 = vmatpush1.msra.mxu0 %v581
    %1421 = vmatprep.subr.mxu0 0.0
    %1422 = vmatpush1.msra.mxu0 %v582
    %1423 = vmatprep.subr.mxu0 0.0
    %1424 = vmatpush1.msra.mxu0 %v583
    %1425 = vmatprep.subr.mxu0 0.0
    %1426 = vmatpush1.msra.mxu0 %v584
    %1427 = vmatprep.subr.mxu0 0.0
    %1428 = vmatpush1.msra.mxu0 %v585
    %1429 = vmatprep.subr.mxu0 0.0
    %1430 = vmatpush1.msra.mxu0 %v586
    %1431 = vmatprep.subr.mxu0 0.0
    %1432 = vmatpush1.msra.mxu0 %v587
    %1433 = vmatprep.subr.mxu0 0.0
    %1434 = vmatpush1.msra.mxu0 0.0
    %1435 = vmatprep.subr.mxu0 0.0
    %1436 = vmatpush1.msra.mxu0 0.0
    %1437 = vmatprep.subr.mxu0 0.0
    %1438 = vmatpush1.msra.mxu0 0.0
    %1439 = vmatprep.subr.mxu0 0.0
    %1440 = vmatpush1.msra.mxu0 0.0
    %1441 = vmatprep.subr.mxu0 0.0
    %1442 = vmatpush1.msra.mxu0 0.0
    %1443 = vmatprep.subr.mxu0 0.0
    %1444 = vmatpush1.msra.mxu0 0.0
    %1445 = vmatprep.subr.mxu0 0.0
    %1446 = vmatpush1.msra.mxu0 0.0
    %1447 = vmatprep.subr.mxu0 0.0
    %1448 = vmatpush1.msra.mxu0 0.0
    %1449 = vmatprep.subr.mxu0 0.0
    %1450 = vmatpush1.msra.mxu0 0.0
    %1451 = vmatprep.subr.mxu0 0.0
    %1452 = vmatpush1.msra.mxu0 0.0
    %1453 = vmatprep.subr.mxu0 0.0
    %1454 = vmatpush1.msra.mxu0 0.0
    %1455 = vmatprep.subr.mxu0 0.0
    %1456 = vmatpush1.msra.mxu0 0.0
    %1457 = vmatprep.subr.mxu0 0.0
    %1458 = vmatpush1.msra.mxu0 0.0
    %1459 = vmatprep.subr.mxu0 0.0
    %1460 = vmatpush1.msra.mxu0 0.0
    %1461 = vmatprep.subr.mxu0 0.0
    %1462 = vmatpush1.msra.mxu0 0.0
    %1463 = vmatprep.subr.mxu0 0.0
    %1464 = vmatpush1.msra.mxu0 0.0
    %1465 = vmatprep.subr.mxu0 0.0
    %1466 = vmatpush1.msra.mxu0 0.0
    %1467 = vmatprep.subr.mxu0 0.0
    %1468 = vmatpush1.msra.mxu0 0.0
    %1469 = vmatprep.subr.mxu0 0.0
    %1470 = vmatpush1.msra.mxu0 0.0
    %1471 = vmatprep.subr.mxu0 0.0
    %1472 = vmatpush1.msra.mxu0 0.0
    %1473 = vmatprep.subr.mxu0 0.0
    %1474 = vmatpush1.msra.mxu0 0.0
    %1475 = vmatprep.subr.mxu0 0.0
    %1476 = vmatpush1.msra.mxu0 0.0
    %1477 = vmatprep.subr.mxu0 0.0
    %1478 = vmatpush1.msra.mxu0 0.0
    %1479 = vmatprep.subr.mxu0 0.0
    %1480 = vmatpush1.msra.mxu0 0.0
    %1481 = vmatprep.mubr.f32.mxu0 0.0
    %1482 = vmatmul.mubr.f32.gmra.mrb[0].mxu0 %v1412
    %v1483 = vpop.f32.mrb[0].mxu0
    %v1484 = vadd.f32 %v1409, %v1483
    %v1485 = vpop.f32.mrb[0].mxu0
    %1486 = vmatprep.mubr.f32.mxu0 0.0
    %1487 = vmatmul.mubr.f32.gmra.mrb[0].mxu0 %v1415
    %v1488 = vpop.f32.mrb[0].mxu0
    %v1489 = vadd.f32 %v1409, %v1488
    %v1490 = vpop.f32.mrb[0].mxu0
    %1491 = vdwg.mxu0
    %v1493 = vlaneseq
    %v1494 = vshrl.u32 %v1493, 7
    %v1495 = vsub.s32 0, %v1494
    %v1496 = vrot.slane %v589, %v1495
    %v1498 = vmul.f32 %v853, %v1496
    %v1499 = vmul.f32 %v854, %v1496
    %v1501 = vlaneseq
    %v1502 = vshrl.u32 %v1501, 7
    %v1503 = vsub.s32 0, %v1502
    %v1504 = vrot.slane %v590, %v1503
    %v1506 = vadd.f32 %v1498, %v1504
    %v1507 = vadd.f32 %v1499, %v1504
    %v1508 = vsel %vm1077, %v1484, 0.0
    %v1509 = vsel %vm1077, %v1489, 0.0
    %v1510 = vadd.f32 %v1508, %v1509
    %v1511 = vrot.slane %v1510, 4
    %v1512 = vadd.f32 %v1510, %v1511
    %v1513 = vrot.slane %v1512, 2
    %v1514 = vadd.f32 %v1512, %v1513
    %v1515 = vrot.slane %v1514, 1
    %v1516 = vadd.f32 %v1514, %v1515
    %v1517 = vmul.f32 %v1516, %v835
    %v1518 = vsub.f32 %v1484, %v1517
    %v1519 = vsub.f32 %v1489, %v1517
    %v1520 = vmul.f32 %v1518, %v1518
    %v1521 = vmul.f32 %v1519, %v1519
    %v1522 = vsel %vm1077, %v1520, 0.0
    %v1523 = vsel %vm1077, %v1521, 0.0
    %v1524 = vadd.f32 %v1522, %v1523
    %v1525 = vrot.slane %v1524, 4
    %v1526 = vadd.f32 %v1524, %v1525
    %v1527 = vrot.slane %v1526, 2
    %v1528 = vadd.f32 %v1526, %v1527
    %v1529 = vrot.slane %v1528, 1
    %v1530 = vadd.f32 %v1528, %v1529
    %v1531 = vmul.f32 %v1530, %v835
    %v1532 = vadd.f32 %v1531, 1e-05
    %v1533 = vrsqrt.pop %v1532
    %v1534 = vmul.f32 %v1518, %v1533
    %v1535 = vmul.f32 %v1519, %v1533
    %v1537 = vlaneseq
    %v1538 = vshrl.u32 %v1537, 7
    %v1539 = vsub.s32 0, %v1538
    %v1540 = vrot.slane %v593, %v1539
    %v1542 = vmul.f32 %v1534, %v1540
    %v1543 = vmul.f32 %v1535, %v1540
    %v1545 = vlaneseq
    %v1546 = vshrl.u32 %v1545, 7
    %v1547 = vsub.s32 0, %v1546
    %v1548 = vrot.slane %v594, %v1547
    %v1550 = vadd.f32 %v1542, %v1548
    %v1551 = vadd.f32 %v1543, %v1548
    %v1553 = vsel %vm1077, %v1550, 0
    %v1556 = vsel %vm1077, %v1551, 0
    %v1559 = vsel %vm1128, %v597, 0
    %1561 = vmatprep.subr.mxu0 0.0
    %1562 = vmatpush1.msra.mxu0 %v595
    %1563 = vmatprep.subr.mxu0 0.0
    %1564 = vmatpush1.msra.mxu0 %v596
    %1565 = vmatprep.subr.mxu0 0.0
    %1566 = vmatpush1.msra.mxu0 %v1559
    %1567 = vmatprep.subr.mxu0 0.0
    %1568 = vmatpush1.msra.mxu0 0.0
    %1569 = vmatprep.subr.mxu0 0.0
    %1570 = vmatpush1.msra.mxu0 0.0
    %1571 = vmatprep.subr.mxu0 0.0
    %1572 = vmatpush1.msra.mxu0 0.0
    %1573 = vmatprep.subr.mxu0 0.0
    %1574 = vmatpush1.msra.mxu0 0.0
    %1575 = vmatprep.subr.mxu0 0.0
    %1576 = vmatpush1.msra.mxu0 0.0
    %1577 = vmatprep.subr.mxu0 0.0
    %1578 = vmatpush1.msra.mxu0 0.0
    %1579 = vmatprep.subr.mxu0 0.0
    %1580 = vmatpush1.msra.mxu0 0.0
    %1581 = vmatprep.subr.mxu0 0.0
    %1582 = vmatpush1.msra.mxu0 0.0
    %1583 = vmatprep.subr.mxu0 0.0
    %1584 = vmatpush1.msra.mxu0 0.0
    %1585 = vmatprep.subr.mxu0 0.0
    %1586 = vmatpush1.msra.mxu0 0.0
    %1587 = vmatprep.subr.mxu0 0.0
    %1588 = vmatpush1.msra.mxu0 0.0
    %1589 = vmatprep.subr.mxu0 0.0
    %1590 = vmatpush1.msra.mxu0 0.0
    %1591 = vmatprep.subr.mxu0 0.0
    %1592 = vmatpush1.msra.mxu0 0.0
    %1593 = vmatprep.subr.mxu0 0.0
    %1594 = vmatpush1.msra.mxu0 0.0
    %1595 = vmatprep.subr.mxu0 0.0
    %1596 = vmatpush1.msra.mxu0 0.0
    %1597 = vmatprep.subr.mxu0 0.0
    %1598 = vmatpush1.msra.mxu0 0.0
    %1599 = vmatprep.subr.mxu0 0.0
    %1600 = vmatpush1.msra.mxu0 0.0
    %1601 = vmatprep.subr.mxu0 0.0
    %1602 = vmatpush1.msra.mxu0 0.0
    %1603 = vmatprep.subr.mxu0 0.0
    %1604 = vmatpush1.msra.mxu0 0.0
    %1605 = vmatprep.subr.mxu0 0.0
    %1606 = vmatpush1.msra.mxu0 0.0
    %1607 = vmatprep.subr.mxu0 0.0
    %1608 = vmatpush1.msra.mxu0 0.0
    %1609 = vmatprep.subr.mxu0 0.0
    %1610 = vmatpush1.msra.mxu0 0.0
    %1611 = vmatprep.subr.mxu0 0.0
    %1612 = vmatpush1.msra.mxu0 0.0
    %1613 = vmatprep.subr.mxu0 0.0
    %1614 = vmatpush1.msra.mxu0 0.0
    %1615 = vmatprep.subr.mxu0 0.0
    %1616 = vmatpush1.msra.mxu0 0.0
    %1617 = vmatprep.subr.mxu0 0.0
    %1618 = vmatpush1.msra.mxu0 0.0
    %1619 = vmatprep.subr.mxu0 0.0
    %1620 = vmatpush1.msra.mxu0 0.0
    %1621 = vmatprep.subr.mxu0 0.0
    %1622 = vmatpush1.msra.mxu0 0.0
    %1623 = vmatprep.subr.mxu0 0.0
    %1624 = vmatpush1.msra.mxu0 0.0
    %1625 = vmatprep.mubr.f32.mxu0 0.0
    %1626 = vmatmul.mubr.f32.gmra.mrb[0].mxu0 %v1553
    %v1627 = vpop.f32.mrb[0].mxu0
    %v1628 = vadd.f32 0.0, %v1627
    %v1629 = vpop.f32.mrb[0].mxu0
    %1630 = vmatprep.mubr.f32.mxu0 0.0
    %1631 = vmatmul.mubr.f32.gmra.mrb[0].mxu0 %v1556
    %v1632 = vpop.f32.mrb[0].mxu0
    %v1633 = vadd.f32 0.0, %v1632
    %v1634 = vpop.f32.mrb[0].mxu0
    %1635 = vdwg.mxu0
    %v1637 = vsel %vm825, %v1506, 0
    %v1640 = vsel %vm825, %v1507, 0
    %1642 = vmatprep.subr.mxu0 0.0
    %1643 = vmatpush1.msra.mxu0 %v591
    %1644 = vmatprep.subr.mxu0 0.0
    %1645 = vmatpush1.msra.mxu0 %v592
    %1646 = vmatprep.subr.mxu0 0.0
    %1647 = vmatpush1.msra.mxu0 0.0
    %1648 = vmatprep.subr.mxu0 0.0
    %1649 = vmatpush1.msra.mxu0 0.0
    %1650 = vmatprep.subr.mxu0 0.0
    %1651 = vmatpush1.msra.mxu0 0.0
    %1652 = vmatprep.subr.mxu0 0.0
    %1653 = vmatpush1.msra.mxu0 0.0
    %1654 = vmatprep.subr.mxu0 0.0
    %1655 = vmatpush1.msra.mxu0 0.0
    %1656 = vmatprep.subr.mxu0 0.0
    %1657 = vmatpush1.msra.mxu0 0.0
    %1658 = vmatprep.subr.mxu0 0.0
    %1659 = vmatpush1.msra.mxu0 0.0
    %1660 = vmatprep.subr.mxu0 0.0
    %1661 = vmatpush1.msra.mxu0 0.0
    %1662 = vmatprep.subr.mxu0 0.0
    %1663 = vmatpush1.msra.mxu0 0.0
    %1664 = vmatprep.subr.mxu0 0.0
    %1665 = vmatpush1.msra.mxu0 0.0
    %1666 = vmatprep.subr.mxu0 0.0
    %1667 = vmatpush1.msra.mxu0 0.0
    %1668 = vmatprep.subr.mxu0 0.0
    %1669 = vmatpush1.msra.mxu0 0.0
    %1670 = vmatprep.subr.mxu0 0.0
    %1671 = vmatpush1.msra.mxu0 0.0
    %1672 = vmatprep.subr.mxu0 0.0
    %1673 = vmatpush1.msra.mxu0 0.0
    %1674 = vmatprep.subr.mxu0 0.0
    %1675 = vmatpush1.msra.mxu0 0.0
    %1676 = vmatprep.subr.mxu0 0.0
    %1677 = vmatpush1.msra.mxu0 0.0
    %1678 = vmatprep.subr.mxu0 0.0
    %1679 = vmatpush1.msra.mxu0 0.0
    %1680 = vmatprep.subr.mxu0 0.0
    %1681 = vmatpush1.msra.mxu0 0.0
    %1682 = vmatprep.subr.mxu0 0.0
    %1683 = vmatpush1.msra.mxu0 0.0
    %1684 = vmatprep.subr.mxu0 0.0
    %1685 = vmatpush1.msra.mxu0 0.0
    %1686 = vmatprep.subr.mxu0 0.0
    %1687 = vmatpush1.msra.mxu0 0.0
    %1688 = vmatprep.subr.mxu0 0.0
    %1689 = vmatpush1.msra.mxu0 0.0
    %1690 = vmatprep.subr.mxu0 0.0
    %1691 = vmatpush1.msra.mxu0 0.0
    %1692 = vmatprep.subr.mxu0 0.0
    %1693 = vmatpush1.msra.mxu0 0.0
    %1694 = vmatprep.subr.mxu0 0.0
    %1695 = vmatpush1.msra.mxu0 0.0
    %1696 = vmatprep.subr.mxu0 0.0
    %1697 = vmatpush1.msra.mxu0 0.0
    %1698 = vmatprep.subr.mxu0 0.0
    %1699 = vmatpush1.msra.mxu0 0.0
    %1700 = vmatprep.subr.mxu0 0.0
    %1701 = vmatpush1.msra.mxu0 0.0
    %1702 = vmatprep.subr.mxu0 0.0
    %1703 = vmatpush1.msra.mxu0 0.0
    %1704 = vmatprep.subr.mxu0 0.0
    %1705 = vmatpush1.msra.mxu0 0.0
    %1706 = vmatprep.mubr.f32.mxu0 0.0
    %1707 = vmatmul.mubr.f32.gmra.mrb[0].mxu0 %v1637
    %v1708 = vpop.f32.mrb[0].mxu0
    %v1709 = vadd.f32 %v1628, %v1708
    %v1710 = vpop.f32.mrb[0].mxu0
    %1711 = vmatprep.mubr.f32.mxu0 0.0
    %1712 = vmatmul.mubr.f32.gmra.mrb[0].mxu0 %v1640
    %v1713 = vpop.f32.mrb[0].mxu0
    %v1714 = vadd.f32 %v1633, %v1713
    %v1715 = vpop.f32.mrb[0].mxu0
    %1716 = vdwg.mxu0
    %v1718 = vlaneseq
    %v1719 = vshrl.u32 %v1718, 7
    %v1720 = vsub.s32 0, %v1719
    %v1721 = vrot.slane %v598, %v1720
    %v1723 = vadd.f32 %v1709, %v1721
    %v1724 = vadd.f32 %v1714, %v1721
    %vm1725 = vcmp.ge.f32.partialorder %v1723, 0.0
    %vm1726 = vcmp.ge.f32.partialorder %v1724, 0.0
    %v1727 = vmul.f32 %v1723, 0.1
    %v1728 = vmul.f32 %v1724, 0.1
    %v1729 = vsel %vm1725, %v1723, %v1727
    %v1730 = vsel %vm1726, %v1724, %v1728
    %v1731 = vsel %vm1223, %v1729, 0.0
    %v1732 = vsel %vm1223, %v1730, 0.0
    %v1733 = vadd.f32 %v1731, %v1732
    %v1734 = vrot.slane %v1733, 4
    %v1735 = vadd.f32 %v1733, %v1734
    %v1736 = vrot.slane %v1735, 2
    %v1737 = vadd.f32 %v1735, %v1736
    %v1738 = vrot.slane %v1737, 1
    %v1739 = vadd.f32 %v1737, %v1738
    %v1740 = vmul.f32 %v1739, %v835
    %v1741 = vsub.f32 %v1729, %v1740
    %v1742 = vsub.f32 %v1730, %v1740
    %v1743 = vmul.f32 %v1741, %v1741
    %v1744 = vmul.f32 %v1742, %v1742
    %v1745 = vsel %vm1223, %v1743, 0.0
    %v1746 = vsel %vm1223, %v1744, 0.0
    %v1747 = vadd.f32 %v1745, %v1746
    %v1748 = vrot.slane %v1747, 4
    %v1749 = vadd.f32 %v1747, %v1748
    %v1750 = vrot.slane %v1749, 2
    %v1751 = vadd.f32 %v1749, %v1750
    %v1752 = vrot.slane %v1751, 1
    %v1753 = vadd.f32 %v1751, %v1752
    %v1754 = vmul.f32 %v1753, %v835
    %v1755 = vadd.f32 %v1754, 1e-05
    %v1756 = vrsqrt.pop %v1755
    %v1757 = vmul.f32 %v1741, %v1756
    %v1758 = vmul.f32 %v1742, %v1756
    %v1760 = vlaneseq
    %v1761 = vshrl.u32 %v1760, 7
    %v1762 = vsub.s32 0, %v1761
    %v1763 = vrot.slane %v599, %v1762
    %v1765 = vmul.f32 %v1757, %v1763
    %v1766 = vmul.f32 %v1758, %v1763
    %v1768 = vlaneseq
    %v1769 = vshrl.u32 %v1768, 7
    %v1770 = vsub.s32 0, %v1769
    %v1771 = vrot.slane %v600, %v1770
    %v1773 = vadd.f32 %v1765, %v1771
    %v1774 = vadd.f32 %v1766, %v1771
    %v1776 = vlaneseq
    %v1777 = vshrl.u32 %v1776, 7
    %v1778 = vsub.s32 0, %v1777
    %v1779 = vrot.slane %v609, %v1778
    %v1782 = vsel %vm1223, %v1773, 0
    %v1785 = vsel %vm1223, %v1774, 0
    %1787 = vmatprep.subr.mxu0 0.0
    %1788 = vmatpush1.msra.mxu0 %v601
    %1789 = vmatprep.subr.mxu0 0.0
    %1790 = vmatpush1.msra.mxu0 %v602
    %1791 = vmatprep.subr.mxu0 0.0
    %1792 = vmatpush1.msra.mxu0 %v603
    %1793 = vmatprep.subr.mxu0 0.0
    %1794 = vmatpush1.msra.mxu0 %v604
    %1795 = vmatprep.subr.mxu0 0.0
    %1796 = vmatpush1.msra.mxu0 %v605
    %1797 = vmatprep.subr.mxu0 0.0
    %1798 = vmatpush1.msra.mxu0 %v606
    %1799 = vmatprep.subr.mxu0 0.0
    %1800 = vmatpush1.msra.mxu0 %v607
    %1801 = vmatprep.subr.mxu0 0.0
    %1802 = vmatpush1.msra.mxu0 %v608
    %1803 = vmatprep.subr.mxu0 0.0
    %1804 = vmatpush1.msra.mxu0 0.0
    %1805 = vmatprep.subr.mxu0 0.0
    %1806 = vmatpush1.msra.mxu0 0.0
    %1807 = vmatprep.subr.mxu0 0.0
    %1808 = vmatpush1.msra.mxu0 0.0
    %1809 = vmatprep.subr.mxu0 0.0
    %1810 = vmatpush1.msra.mxu0 0.0
    %1811 = vmatprep.subr.mxu0 0.0
    %1812 = vmatpush1.msra.mxu0 0.0
    %1813 = vmatprep.subr.mxu0 0.0
    %1814 = vmatpush1.msra.mxu0 0.0
    %1815 = vmatprep.subr.mxu0 0.0
    %1816 = vmatpush1.msra.mxu0 0.0
    %1817 = vmatprep.subr.mxu0 0.0
    %1818 = vmatpush1.msra.mxu0 0.0
    %1819 = vmatprep.subr.mxu0 0.0
    %1820 = vmatpush1.msra.mxu0 0.0
    %1821 = vmatprep.subr.mxu0 0.0
    %1822 = vmatpush1.msra.mxu0 0.0
    %1823 = vmatprep.subr.mxu0 0.0
    %1824 = vmatpush1.msra.mxu0 0.0
    %1825 = vmatprep.subr.mxu0 0.0
    %1826 = vmatpush1.msra.mxu0 0.0
    %1827 = vmatprep.subr.mxu0 0.0
    %1828 = vmatpush1.msra.mxu0 0.0
    %1829 = vmatprep.subr.mxu0 0.0
    %1830 = vmatpush1.msra.mxu0 0.0
    %1831 = vmatprep.subr.mxu0 0.0
    %1832 = vmatpush1.msra.mxu0 0.0
    %1833 = vmatprep.subr.mxu0 0.0
    %1834 = vmatpush1.msra.mxu0 0.0
    %1835 = vmatprep.subr.mxu0 0.0
    %1836 = vmatpush1.msra.mxu0 0.0
    %1837 = vmatprep.subr.mxu0 0.0
    %1838 = vmatpush1.msra.mxu0 0.0
    %1839 = vmatprep.subr.mxu0 0.0
    %1840 = vmatpush1.msra.mxu0 0.0
    %1841 = vmatprep.subr.mxu0 0.0
    %1842 = vmatpush1.msra.mxu0 0.0
    %1843 = vmatprep.subr.mxu0 0.0
    %1844 = vmatpush1.msra.mxu0 0.0
    %1845 = vmatprep.subr.mxu0 0.0
    %1846 = vmatpush1.msra.mxu0 0.0
    %1847 = vmatprep.subr.mxu0 0.0
    %1848 = vmatpush1.msra.mxu0 0.0
    %1849 = vmatprep.subr.mxu0 0.0
    %1850 = vmatpush1.msra.mxu0 0.0
    %1851 = vmatprep.mubr.f32.mxu0 0.0
    %1852 = vmatmul.mubr.f32.gmra.mrb[0].mxu0 %v1782
    %v1853 = vpop.f32.mrb[0].mxu0
    %v1854 = vadd.f32 %v1779, %v1853
    %v1855 = vpop.f32.mrb[0].mxu0
    %1856 = vmatprep.mubr.f32.mxu0 0.0
    %1857 = vmatmul.mubr.f32.gmra.mrb[0].mxu0 %v1785
    %v1858 = vpop.f32.mrb[0].mxu0
    %v1859 = vadd.f32 %v1779, %v1858
    %v1860 = vpop.f32.mrb[0].mxu0
    %1861 = vdwg.mxu0
    %vm1862 = vcmp.ge.f32.partialorder %v1854, 0.0
    %vm1863 = vcmp.ge.f32.partialorder %v1859, 0.0
    %v1864 = vmul.f32 %v1854, 0.1
    %v1865 = vmul.f32 %v1859, 0.1
    %v1866 = vsel %vm1862, %v1854, %v1864
    %v1867 = vsel %vm1863, %v1859, %v1865
    %v1868 = vsel %vm1223, %v1866, 0.0
    %v1869 = vsel %vm1223, %v1867, 0.0
    %v1870 = vadd.f32 %v1868, %v1869
    %v1871 = vrot.slane %v1870, 4
    %v1872 = vadd.f32 %v1870, %v1871
    %v1873 = vrot.slane %v1872, 2
    %v1874 = vadd.f32 %v1872, %v1873
    %v1875 = vrot.slane %v1874, 1
    %v1876 = vadd.f32 %v1874, %v1875
    %v1877 = vmul.f32 %v1876, %v835
    %v1878 = vsub.f32 %v1866, %v1877
    %v1879 = vsub.f32 %v1867, %v1877
    %v1880 = vmul.f32 %v1878, %v1878
    %v1881 = vmul.f32 %v1879, %v1879
    %v1882 = vsel %vm1223, %v1880, 0.0
    %v1883 = vsel %vm1223, %v1881, 0.0
    %v1884 = vadd.f32 %v1882, %v1883
    %v1885 = vrot.slane %v1884, 4
    %v1886 = vadd.f32 %v1884, %v1885
    %v1887 = vrot.slane %v1886, 2
    %v1888 = vadd.f32 %v1886, %v1887
    %v1889 = vrot.slane %v1888, 1
    %v1890 = vadd.f32 %v1888, %v1889
    %v1891 = vmul.f32 %v1890, %v835
    %v1892 = vadd.f32 %v1891, 1e-05
    %v1893 = vrsqrt.pop %v1892
    %v1894 = vmul.f32 %v1878, %v1893
    %v1895 = vmul.f32 %v1879, %v1893
    %v1897 = vlaneseq
    %v1898 = vshrl.u32 %v1897, 7
    %v1899 = vsub.s32 0, %v1898
    %v1900 = vrot.slane %v610, %v1899
    %v1902 = vmul.f32 %v1894, %v1900
    %v1903 = vmul.f32 %v1895, %v1900
    %v1905 = vlaneseq
    %v1906 = vshrl.u32 %v1905, 7
    %v1907 = vsub.s32 0, %v1906
    %v1908 = vrot.slane %v611, %v1907
    %v1910 = vadd.f32 %v1902, %v1908
    %v1911 = vadd.f32 %v1903, %v1908
    %v1913 = vlaneseq
    %v1914 = vshrl.u32 %v1913, 7
    %v1915 = vsub.s32 0, %v1914
    %v1916 = vrot.slane %v620, %v1915
    %v1919 = vsel %vm1223, %v1910, 0
    %v1922 = vsel %vm1223, %v1911, 0
    %1924 = vmatprep.subr.mxu0 0.0
    %1925 = vmatpush1.msra.mxu0 %v612
    %1926 = vmatprep.subr.mxu0 0.0
    %1927 = vmatpush1.msra.mxu0 %v613
    %1928 = vmatprep.subr.mxu0 0.0
    %1929 = vmatpush1.msra.mxu0 %v614
    %1930 = vmatprep.subr.mxu0 0.0
    %1931 = vmatpush1.msra.mxu0 %v615
    %1932 = vmatprep.subr.mxu0 0.0
    %1933 = vmatpush1.msra.mxu0 %v616
    %1934 = vmatprep.subr.mxu0 0.0
    %1935 = vmatpush1.msra.mxu0 %v617
    %1936 = vmatprep.subr.mxu0 0.0
    %1937 = vmatpush1.msra.mxu0 %v618
    %1938 = vmatprep.subr.mxu0 0.0
    %1939 = vmatpush1.msra.mxu0 %v619
    %1940 = vmatprep.subr.mxu0 0.0
    %1941 = vmatpush1.msra.mxu0 0.0
    %1942 = vmatprep.subr.mxu0 0.0
    %1943 = vmatpush1.msra.mxu0 0.0
    %1944 = vmatprep.subr.mxu0 0.0
    %1945 = vmatpush1.msra.mxu0 0.0
    %1946 = vmatprep.subr.mxu0 0.0
    %1947 = vmatpush1.msra.mxu0 0.0
    %1948 = vmatprep.subr.mxu0 0.0
    %1949 = vmatpush1.msra.mxu0 0.0
    %1950 = vmatprep.subr.mxu0 0.0
    %1951 = vmatpush1.msra.mxu0 0.0
    %1952 = vmatprep.subr.mxu0 0.0
    %1953 = vmatpush1.msra.mxu0 0.0
    %1954 = vmatprep.subr.mxu0 0.0
    %1955 = vmatpush1.msra.mxu0 0.0
    %1956 = vmatprep.subr.mxu0 0.0
    %1957 = vmatpush1.msra.mxu0 0.0
    %1958 = vmatprep.subr.mxu0 0.0
    %1959 = vmatpush1.msra.mxu0 0.0
    %1960 = vmatprep.subr.mxu0 0.0
    %1961 = vmatpush1.msra.mxu0 0.0
    %1962 = vmatprep.subr.mxu0 0.0
    %1963 = vmatpush1.msra.mxu0 0.0
    %1964 = vmatprep.subr.mxu0 0.0
    %1965 = vmatpush1.msra.mxu0 0.0
    %1966 = vmatprep.subr.mxu0 0.0
    %1967 = vmatpush1.msra.mxu0 0.0
    %1968 = vmatprep.subr.mxu0 0.0
    %1969 = vmatpush1.msra.mxu0 0.0
    %1970 = vmatprep.subr.mxu0 0.0
    %1971 = vmatpush1.msra.mxu0 0.0
    %1972 = vmatprep.subr.mxu0 0.0
    %1973 = vmatpush1.msra.mxu0 0.0
    %1974 = vmatprep.subr.mxu0 0.0
    %1975 = vmatpush1.msra.mxu0 0.0
    %1976 = vmatprep.subr.mxu0 0.0
    %1977 = vmatpush1.msra.mxu0 0.0
    %1978 = vmatprep.subr.mxu0 0.0
    %1979 = vmatpush1.msra.mxu0 0.0
    %1980 = vmatprep.subr.mxu0 0.0
    %1981 = vmatpush1.msra.mxu0 0.0
    %1982 = vmatprep.subr.mxu0 0.0
    %1983 = vmatpush1.msra.mxu0 0.0
    %1984 = vmatprep.subr.mxu0 0.0
    %1985 = vmatpush1.msra.mxu0 0.0
    %1986 = vmatprep.subr.mxu0 0.0
    %1987 = vmatpush1.msra.mxu0 0.0
    %1988 = vmatprep.mubr.f32.mxu0 0.0
    %1989 = vmatmul.mubr.f32.gmra.mrb[0].mxu0 %v1919
    %v1990 = vpop.f32.mrb[0].mxu0
    %v1991 = vadd.f32 %v1916, %v1990
    %v1992 = vpop.f32.mrb[0].mxu0
    %1993 = vmatprep.mubr.f32.mxu0 0.0
    %1994 = vmatmul.mubr.f32.gmra.mrb[0].mxu0 %v1922
    %v1995 = vpop.f32.mrb[0].mxu0
    %v1996 = vadd.f32 %v1916, %v1995
    %v1997 = vpop.f32.mrb[0].mxu0
    %1998 = vdwg.mxu0
    %v2000 = vsel %vm825, %v552, 0
    %2002 = vmatprep.subr.mxu0 0.0
    %2003 = vmatpush1.msra.mxu0 %v1991
    %2004 = vmatprep.subr.mxu0 0.0
    %2005 = vmatpush1.msra.mxu0 %v1996
    %2006 = vmatprep.subr.mxu0 0.0
    %2007 = vmatpush1.msra.mxu0 0.0
    %2008 = vmatprep.subr.mxu0 0.0
    %2009 = vmatpush1.msra.mxu0 0.0
    %2010 = vmatprep.subr.mxu0 0.0
    %2011 = vmatpush1.msra.mxu0 0.0
    %2012 = vmatprep.subr.mxu0 0.0
    %2013 = vmatpush1.msra.mxu0 0.0
    %2014 = vmatprep.subr.mxu0 0.0
    %2015 = vmatpush1.msra.mxu0 0.0
    %2016 = vmatprep.subr.mxu0 0.0
    %2017 = vmatpush1.msra.mxu0 0.0
    %2018 = vmatprep.subr.mxu0 0.0
    %2019 = vmatpush1.msra.mxu0 0.0
    %2020 = vmatprep.subr.mxu0 0.0
    %2021 = vmatpush1.msra.mxu0 0.0
    %2022 = vmatprep.subr.mxu0 0.0
    %2023 = vmatpush1.msra.mxu0 0.0
    %2024 = vmatprep.subr.mxu0 0.0
    %2025 = vmatpush1.msra.mxu0 0.0
    %2026 = vmatprep.subr.mxu0 0.0
    %2027 = vmatpush1.msra.mxu0 0.0
    %2028 = vmatprep.subr.mxu0 0.0
    %2029 = vmatpush1.msra.mxu0 0.0
    %2030 = vmatprep.subr.mxu0 0.0
    %2031 = vmatpush1.msra.mxu0 0.0
    %2032 = vmatprep.subr.mxu0 0.0
    %2033 = vmatpush1.msra.mxu0 0.0
    %2034 = vmatprep.subr.mxu0 0.0
    %2035 = vmatpush1.msra.mxu0 0.0
    %2036 = vmatprep.subr.mxu0 0.0
    %2037 = vmatpush1.msra.mxu0 0.0
    %2038 = vmatprep.subr.mxu0 0.0
    %2039 = vmatpush1.msra.mxu0 0.0
    %2040 = vmatprep.subr.mxu0 0.0
    %2041 = vmatpush1.msra.mxu0 0.0
    %2042 = vmatprep.subr.mxu0 0.0
    %2043 = vmatpush1.msra.mxu0 0.0
    %2044 = vmatprep.subr.mxu0 0.0
    %2045 = vmatpush1.msra.mxu0 0.0
    %2046 = vmatprep.subr.mxu0 0.0
    %2047 = vmatpush1.msra.mxu0 0.0
    %2048 = vmatprep.subr.mxu0 0.0
    %2049 = vmatpush1.msra.mxu0 0.0
    %2050 = vmatprep.subr.mxu0 0.0
    %2051 = vmatpush1.msra.mxu0 0.0
    %2052 = vmatprep.subr.mxu0 0.0
    %2053 = vmatpush1.msra.mxu0 0.0
    %2054 = vmatprep.subr.mxu0 0.0
    %2055 = vmatpush1.msra.mxu0 0.0
    %2056 = vmatprep.subr.mxu0 0.0
    %2057 = vmatpush1.msra.mxu0 0.0
    %2058 = vmatprep.subr.mxu0 0.0
    %2059 = vmatpush1.msra.mxu0 0.0
    %2060 = vmatprep.subr.mxu0 0.0
    %2061 = vmatpush1.msra.mxu0 0.0
    %2062 = vmatprep.subr.mxu0 0.0
    %2063 = vmatpush1.msra.mxu0 0.0
    %2064 = vmatprep.subr.mxu0 0.0
    %2065 = vmatpush1.msra.mxu0 0.0
    %2066 = vmatprep.mubr.f32.mxu0 0.0
    %2067 = vmatmul.mubr.f32.gmra.mrb[0].mxu0 %v2000
    %v2068 = vpop.f32.mrb[0].mxu0
    %v2069 = vadd.f32 0.0, %v2068
    %v2070 = vpop.f32.mrb[0].mxu0
    %2071 = vdwg.mxu0
    %v2072 = vsel %vm825, %v510, 0.0
    %v2073 = vrot.slane %v2072, 4
    %v2074 = vadd.f32 %v2072, %v2073
    %v2075 = vrot.slane %v2074, 2
    %v2076 = vadd.f32 %v2074, %v2075
    %v2077 = vrot.slane %v2076, 1
    %v2078 = vadd.f32 %v2076, %v2077
    %v2079 = vrcp.pop 8.0
    %v2080 = vmul.f32 %v2078, %v2079
    %v2081 = vsub.f32 %v510, %v2080
    %v2082 = vmul.f32 %v2081, %v2081
    %v2083 = vsel %vm825, %v2082, 0.0
    %v2084 = vrot.slane %v2083, 4
    %v2085 = vadd.f32 %v2083, %v2084
    %v2086 = vrot.slane %v2085, 2
    %v2087 = vadd.f32 %v2085, %v2086
    %v2088 = vrot.slane %v2087, 1
    %v2089 = vadd.f32 %v2087, %v2088
    %v2090 = vmul.f32 %v2089, %v2079
    %v2091 = vadd.f32 %v2090, 1e-05
    %v2092 = vrsqrt.pop %v2091
    %v2093 = vmul.f32 %v2081, %v2092
    %v2095 = vlaneseq
    %v2096 = vshrl.u32 %v2095, 7
    %v2097 = vsub.s32 0, %v2096
    %v2098 = vrot.slane %v621, %v2097
    %v2100 = vmul.f32 %v2093, %v2098
    %v2102 = vlaneseq
    %v2103 = vshrl.u32 %v2102, 7
    %v2104 = vsub.s32 0, %v2103
    %v2105 = vrot.slane %v622, %v2104
    %v2107 = vadd.f32 %v2100, %v2105
    %v2108 = vsel %vm1223, %v2069, 0.0
    %v2109 = vrot.slane %v2108, 4
    %v2110 = vadd.f32 %v2108, %v2109
    %v2111 = vrot.slane %v2110, 2
    %v2112 = vadd.f32 %v2110, %v2111
    %v2113 = vrot.slane %v2112, 1
    %v2114 = vadd.f32 %v2112, %v2113
    %v2115 = vmul.f32 %v2114, %v2079
    %v2116 = vsub.f32 %v2069, %v2115
    %v2117 = vmul.f32 %v2116, %v2116
    %v2118 = vsel %vm1223, %v2117, 0.0
    %v2119 = vrot.slane %v2118, 4
    %v2120 = vadd.f32 %v2118, %v2119
    %v2121 = vrot.slane %v2120, 2
    %v2122 = vadd.f32 %v2120, %v2121
    %v2123 = vrot.slane %v2122, 1
    %v2124 = vadd.f32 %v2122, %v2123
    %v2125 = vmul.f32 %v2124, %v2079
    %v2126 = vadd.f32 %v2125, 1e-05
    %v2127 = vrsqrt.pop %v2126
    %v2128 = vmul.f32 %v2116, %v2127
    %v2130 = vlaneseq
    %v2131 = vshrl.u32 %v2130, 7
    %v2132 = vsub.s32 0, %v2131
    %v2133 = vrot.slane %v625, %v2132
    %v2135 = vmul.f32 %v2128, %v2133
    %v2137 = vlaneseq
    %v2138 = vshrl.u32 %v2137, 7
    %v2139 = vsub.s32 0, %v2138
    %v2140 = vrot.slane %v626, %v2139
    %v2142 = vadd.f32 %v2135, %v2140
    %v2144 = vsel %vm1223, %v2142, 0
    %2146 = vmatprep.subr.mxu0 0.0
    %2147 = vmatpush1.msra.mxu0 %v627
    %2148 = vmatprep.subr.mxu0 0.0
    %2149 = vmatpush1.msra.mxu0 %v628
    %2150 = vmatprep.subr.mxu0 0.0
    %2151 = vmatpush1.msra.mxu0 %v629
    %2152 = vmatprep.subr.mxu0 0.0
    %2153 = vmatpush1.msra.mxu0 %v630
    %2154 = vmatprep.subr.mxu0 0.0
    %2155 = vmatpush1.msra.mxu0 %v631
    %2156 = vmatprep.subr.mxu0 0.0
    %2157 = vmatpush1.msra.mxu0 %v632
    %2158 = vmatprep.subr.mxu0 0.0
    %2159 = vmatpush1.msra.mxu0 %v633
    %2160 = vmatprep.subr.mxu0 0.0
    %2161 = vmatpush1.msra.mxu0 %v634
    %2162 = vmatprep.subr.mxu0 0.0
    %2163 = vmatpush1.msra.mxu0 0.0
    %2164 = vmatprep.subr.mxu0 0.0
    %2165 = vmatpush1.msra.mxu0 0.0
    %2166 = vmatprep.subr.mxu0 0.0
    %2167 = vmatpush1.msra.mxu0 0.0
    %2168 = vmatprep.subr.mxu0 0.0
    %2169 = vmatpush1.msra.mxu0 0.0
    %2170 = vmatprep.subr.mxu0 0.0
    %2171 = vmatpush1.msra.mxu0 0.0
    %2172 = vmatprep.subr.mxu0 0.0
    %2173 = vmatpush1.msra.mxu0 0.0
    %2174 = vmatprep.subr.mxu0 0.0
    %2175 = vmatpush1.msra.mxu0 0.0
    %2176 = vmatprep.subr.mxu0 0.0
    %2177 = vmatpush1.msra.mxu0 0.0
    %2178 = vmatprep.subr.mxu0 0.0
    %2179 = vmatpush1.msra.mxu0 0.0
    %2180 = vmatprep.subr.mxu0 0.0
    %2181 = vmatpush1.msra.mxu0 0.0
    %2182 = vmatprep.subr.mxu0 0.0
    %2183 = vmatpush1.msra.mxu0 0.0
    %2184 = vmatprep.subr.mxu0 0.0
    %2185 = vmatpush1.msra.mxu0 0.0
    %2186 = vmatprep.subr.mxu0 0.0
    %2187 = vmatpush1.msra.mxu0 0.0
    %2188 = vmatprep.subr.mxu0 0.0
    %2189 = vmatpush1.msra.mxu0 0.0
    %2190 = vmatprep.subr.mxu0 0.0
    %2191 = vmatpush1.msra.mxu0 0.0
    %2192 = vmatprep.subr.mxu0 0.0
    %2193 = vmatpush1.msra.mxu0 0.0
    %2194 = vmatprep.subr.mxu0 0.0
    %2195 = vmatpush1.msra.mxu0 0.0
    %2196 = vmatprep.subr.mxu0 0.0
    %2197 = vmatpush1.msra.mxu0 0.0
    %2198 = vmatprep.subr.mxu0 0.0
    %2199 = vmatpush1.msra.mxu0 0.0
    %2200 = vmatprep.subr.mxu0 0.0
    %2201 = vmatpush1.msra.mxu0 0.0
    %2202 = vmatprep.subr.mxu0 0.0
    %2203 = vmatpush1.msra.mxu0 0.0
    %2204 = vmatprep.subr.mxu0 0.0
    %2205 = vmatpush1.msra.mxu0 0.0
    %2206 = vmatprep.subr.mxu0 0.0
    %2207 = vmatpush1.msra.mxu0 0.0
    %2208 = vmatprep.subr.mxu0 0.0
    %2209 = vmatpush1.msra.mxu0 0.0
    %2210 = vmatprep.mubr.f32.mxu0 0.0
    %2211 = vmatmul.mubr.f32.gmra.mrb[0].mxu0 %v2144
    %v2212 = vpop.f32.mrb[0].mxu0
    %v2213 = vadd.f32 0.0, %v2212
    %v2214 = vpop.f32.mrb[0].mxu0
    %2215 = vdwg.mxu0
    %v2217 = vsel %vm825, %v2107, 0
    %2219 = vmatprep.subr.mxu0 0.0
    %2220 = vmatpush1.msra.mxu0 %v623
    %2221 = vmatprep.subr.mxu0 0.0
    %2222 = vmatpush1.msra.mxu0 %v624
    %2223 = vmatprep.subr.mxu0 0.0
    %2224 = vmatpush1.msra.mxu0 0.0
    %2225 = vmatprep.subr.mxu0 0.0
    %2226 = vmatpush1.msra.mxu0 0.0
    %2227 = vmatprep.subr.mxu0 0.0
    %2228 = vmatpush1.msra.mxu0 0.0
    %2229 = vmatprep.subr.mxu0 0.0
    %2230 = vmatpush1.msra.mxu0 0.0
    %2231 = vmatprep.subr.mxu0 0.0
    %2232 = vmatpush1.msra.mxu0 0.0
    %2233 = vmatprep.subr.mxu0 0.0
    %2234 = vmatpush1.msra.mxu0 0.0
    %2235 = vmatprep.subr.mxu0 0.0
    %2236 = vmatpush1.msra.mxu0 0.0
    %2237 = vmatprep.subr.mxu0 0.0
    %2238 = vmatpush1.msra.mxu0 0.0
    %2239 = vmatprep.subr.mxu0 0.0
    %2240 = vmatpush1.msra.mxu0 0.0
    %2241 = vmatprep.subr.mxu0 0.0
    %2242 = vmatpush1.msra.mxu0 0.0
    %2243 = vmatprep.subr.mxu0 0.0
    %2244 = vmatpush1.msra.mxu0 0.0
    %2245 = vmatprep.subr.mxu0 0.0
    %2246 = vmatpush1.msra.mxu0 0.0
    %2247 = vmatprep.subr.mxu0 0.0
    %2248 = vmatpush1.msra.mxu0 0.0
    %2249 = vmatprep.subr.mxu0 0.0
    %2250 = vmatpush1.msra.mxu0 0.0
    %2251 = vmatprep.subr.mxu0 0.0
    %2252 = vmatpush1.msra.mxu0 0.0
    %2253 = vmatprep.subr.mxu0 0.0
    %2254 = vmatpush1.msra.mxu0 0.0
    %2255 = vmatprep.subr.mxu0 0.0
    %2256 = vmatpush1.msra.mxu0 0.0
    %2257 = vmatprep.subr.mxu0 0.0
    %2258 = vmatpush1.msra.mxu0 0.0
    %2259 = vmatprep.subr.mxu0 0.0
    %2260 = vmatpush1.msra.mxu0 0.0
    %2261 = vmatprep.subr.mxu0 0.0
    %2262 = vmatpush1.msra.mxu0 0.0
    %2263 = vmatprep.subr.mxu0 0.0
    %2264 = vmatpush1.msra.mxu0 0.0
    %2265 = vmatprep.subr.mxu0 0.0
    %2266 = vmatpush1.msra.mxu0 0.0
    %2267 = vmatprep.subr.mxu0 0.0
    %2268 = vmatpush1.msra.mxu0 0.0
    %2269 = vmatprep.subr.mxu0 0.0
    %2270 = vmatpush1.msra.mxu0 0.0
    %2271 = vmatprep.subr.mxu0 0.0
    %2272 = vmatpush1.msra.mxu0 0.0
    %2273 = vmatprep.subr.mxu0 0.0
    %2274 = vmatpush1.msra.mxu0 0.0
    %2275 = vmatprep.subr.mxu0 0.0
    %2276 = vmatpush1.msra.mxu0 0.0
    %2277 = vmatprep.subr.mxu0 0.0
    %2278 = vmatpush1.msra.mxu0 0.0
    %2279 = vmatprep.subr.mxu0 0.0
    %2280 = vmatpush1.msra.mxu0 0.0
    %2281 = vmatprep.subr.mxu0 0.0
    %2282 = vmatpush1.msra.mxu0 0.0
    %2283 = vmatprep.mubr.f32.mxu0 0.0
    %2284 = vmatmul.mubr.f32.gmra.mrb[0].mxu0 %v2217
    %v2285 = vpop.f32.mrb[0].mxu0
    %v2286 = vadd.f32 %v2213, %v2285
    %v2287 = vpop.f32.mrb[0].mxu0
    %2288 = vdwg.mxu0
    %v2290 = vlaneseq
    %v2291 = vshrl.u32 %v2290, 7
    %v2292 = vsub.s32 0, %v2291
    %v2293 = vrot.slane %v635, %v2292
    %v2295 = vadd.f32 %v2286, %v2293
    %vm2296 = vcmp.ge.f32.partialorder %v2295, 0.0
    %v2297 = vmul.f32 %v2295, 0.1
    %v2298 = vsel %vm2296, %v2295, %v2297
    %vm2299 = vcmask 654336
    %v2300 = vsel %vm2299, %v2298, 0.0
    %v2301 = vrot.slane %v2300, 4
    %v2302 = vadd.f32 %v2300, %v2301
    %v2303 = vrot.slane %v2302, 2
    %v2304 = vadd.f32 %v2302, %v2303
    %v2305 = vrot.slane %v2304, 1
    %v2306 = vadd.f32 %v2304, %v2305
    %v2307 = vmul.f32 %v2306, %v2079
    %v2308 = vsub.f32 %v2298, %v2307
    %v2309 = vmul.f32 %v2308, %v2308
    %v2310 = vsel %vm2299, %v2309, 0.0
    %v2311 = vrot.slane %v2310, 4
    %v2312 = vadd.f32 %v2310, %v2311
    %v2313 = vrot.slane %v2312, 2
    %v2314 = vadd.f32 %v2312, %v2313
    %v2315 = vrot.slane %v2314, 1
    %v2316 = vadd.f32 %v2314, %v2315
    %v2317 = vmul.f32 %v2316, %v2079
    %v2318 = vadd.f32 %v2317, 1e-05
    %v2319 = vrsqrt.pop %v2318
    %v2320 = vmul.f32 %v2308, %v2319
    %v2322 = vlaneseq
    %v2323 = vshrl.u32 %v2322, 7
    %v2324 = vsub.s32 0, %v2323
    %v2325 = vrot.slane %v636, %v2324
    %v2327 = vmul.f32 %v2320, %v2325
    %v2329 = vlaneseq
    %v2330 = vshrl.u32 %v2329, 7
    %v2331 = vsub.s32 0, %v2330
    %v2332 = vrot.slane %v637, %v2331
    %v2334 = vadd.f32 %v2327, %v2332
    %v2336 = vlaneseq
    %v2337 = vshrl.u32 %v2336, 7
    %v2338 = vsub.s32 0, %v2337
    %v2339 = vrot.slane %v648, %v2338
    %v2342 = vsel %vm2299, %v2334, 0
    %2344 = vmatprep.subr.mxu0 0.0
    %2345 = vmatpush1.msra.mxu0 %v638
    %2346 = vmatprep.subr.mxu0 0.0
    %2347 = vmatpush1.msra.mxu0 %v639
    %2348 = vmatprep.subr.mxu0 0.0
    %2349 = vmatpush1.msra.mxu0 %v640
    %2350 = vmatprep.subr.mxu0 0.0
    %2351 = vmatpush1.msra.mxu0 %v641
    %2352 = vmatprep.subr.mxu0 0.0
    %2353 = vmatpush1.msra.mxu0 %v642
    %2354 = vmatprep.subr.mxu0 0.0
    %2355 = vmatpush1.msra.mxu0 %v643
    %2356 = vmatprep.subr.mxu0 0.0
    %2357 = vmatpush1.msra.mxu0 %v644
    %2358 = vmatprep.subr.mxu0 0.0
    %2359 = vmatpush1.msra.mxu0 %v645
    %2360 = vmatprep.subr.mxu0 0.0
    %2361 = vmatpush1.msra.mxu0 %v646
    %2362 = vmatprep.subr.mxu0 0.0
    %2363 = vmatpush1.msra.mxu0 %v647
    %2364 = vmatprep.subr.mxu0 0.0
    %2365 = vmatpush1.msra.mxu0 0.0
    %2366 = vmatprep.subr.mxu0 0.0
    %2367 = vmatpush1.msra.mxu0 0.0
    %2368 = vmatprep.subr.mxu0 0.0
    %2369 = vmatpush1.msra.mxu0 0.0
    %2370 = vmatprep.subr.mxu0 0.0
    %2371 = vmatpush1.msra.mxu0 0.0
    %2372 = vmatprep.subr.mxu0 0.0
    %2373 = vmatpush1.msra.mxu0 0.0
    %2374 = vmatprep.subr.mxu0 0.0
    %2375 = vmatpush1.msra.mxu0 0.0
    %2376 = vmatprep.subr.mxu0 0.0
    %2377 = vmatpush1.msra.mxu0 0.0
    %2378 = vmatprep.subr.mxu0 0.0
    %2379 = vmatpush1.msra.mxu0 0.0
    %2380 = vmatprep.subr.mxu0 0.0
    %2381 = vmatpush1.msra.mxu0 0.0
    %2382 = vmatprep.subr.mxu0 0.0
    %2383 = vmatpush1.msra.mxu0 0.0
    %2384 = vmatprep.subr.mxu0 0.0
    %2385 = vmatpush1.msra.mxu0 0.0
    %2386 = vmatprep.subr.mxu0 0.0
    %2387 = vmatpush1.msra.mxu0 0.0
    %2388 = vmatprep.subr.mxu0 0.0
    %2389 = vmatpush1.msra.mxu0 0.0
    %2390 = vmatprep.subr.mxu0 0.0
    %2391 = vmatpush1.msra.mxu0 0.0
    %2392 = vmatprep.subr.mxu0 0.0
    %2393 = vmatpush1.msra.mxu0 0.0
    %2394 = vmatprep.subr.mxu0 0.0
    %2395 = vmatpush1.msra.mxu0 0.0
    %2396 = vmatprep.subr.mxu0 0.0
    %2397 = vmatpush1.msra.mxu0 0.0
    %2398 = vmatprep.subr.mxu0 0.0
    %2399 = vmatpush1.msra.mxu0 0.0
    %2400 = vmatprep.subr.mxu0 0.0
    %2401 = vmatpush1.msra.mxu0 0.0
    %2402 = vmatprep.subr.mxu0 0.0
    %2403 = vmatpush1.msra.mxu0 0.0
    %2404 = vmatprep.subr.mxu0 0.0
    %2405 = vmatpush1.msra.mxu0 0.0
    %2406 = vmatprep.subr.mxu0 0.0
    %2407 = vmatpush1.msra.mxu0 0.0
    %2408 = vmatprep.mubr.f32.mxu0 0.0
    %2409 = vmatmul.mubr.f32.gmra.mrb[0].mxu0 %v2342
    %v2410 = vpop.f32.mrb[0].mxu0
    %v2411 = vadd.f32 %v2339, %v2410
    %v2412 = vpop.f32.mrb[0].mxu0
    %2413 = vdwg.mxu0
    %vm2414 = vcmp.ge.f32.partialorder %v2411, 0.0
    %v2415 = vmul.f32 %v2411, 0.1
    %v2416 = vsel %vm2414, %v2411, %v2415
    %v2417 = vsel %vm2299, %v2416, 0.0
    %v2418 = vrot.slane %v2417, 4
    %v2419 = vadd.f32 %v2417, %v2418
    %v2420 = vrot.slane %v2419, 2
    %v2421 = vadd.f32 %v2419, %v2420
    %v2422 = vrot.slane %v2421, 1
    %v2423 = vadd.f32 %v2421, %v2422
    %v2424 = vmul.f32 %v2423, %v2079
    %v2425 = vsub.f32 %v2416, %v2424
    %v2426 = vmul.f32 %v2425, %v2425
    %v2427 = vsel %vm2299, %v2426, 0.0
    %v2428 = vrot.slane %v2427, 4
    %v2429 = vadd.f32 %v2427, %v2428
    %v2430 = vrot.slane %v2429, 2
    %v2431 = vadd.f32 %v2429, %v2430
    %v2432 = vrot.slane %v2431, 1
    %v2433 = vadd.f32 %v2431, %v2432
    %v2434 = vmul.f32 %v2433, %v2079
    %v2435 = vadd.f32 %v2434, 1e-05
    %v2436 = vrsqrt.pop %v2435
    %v2437 = vmul.f32 %v2425, %v2436
    %v2439 = vlaneseq
    %v2440 = vshrl.u32 %v2439, 7
    %v2441 = vsub.s32 0, %v2440
    %v2442 = vrot.slane %v649, %v2441
    %v2444 = vmul.f32 %v2437, %v2442
    %v2446 = vlaneseq
    %v2447 = vshrl.u32 %v2446, 7
    %v2448 = vsub.s32 0, %v2447
    %v2449 = vrot.slane %v650, %v2448
    %v2451 = vadd.f32 %v2444, %v2449
    %v2453 = vlaneseq
    %v2454 = vshrl.u32 %v2453, 7
    %v2455 = vsub.s32 0, %v2454
    %v2456 = vrot.slane %v661, %v2455
    %v2459 = vsel %vm2299, %v2451, 0
    %2461 = vmatprep.subr.mxu0 0.0
    %2462 = vmatpush1.msra.mxu0 %v651
    %2463 = vmatprep.subr.mxu0 0.0
    %2464 = vmatpush1.msra.mxu0 %v652
    %2465 = vmatprep.subr.mxu0 0.0
    %2466 = vmatpush1.msra.mxu0 %v653
    %2467 = vmatprep.subr.mxu0 0.0
    %2468 = vmatpush1.msra.mxu0 %v654
    %2469 = vmatprep.subr.mxu0 0.0
    %2470 = vmatpush1.msra.mxu0 %v655
    %2471 = vmatprep.subr.mxu0 0.0
    %2472 = vmatpush1.msra.mxu0 %v656
    %2473 = vmatprep.subr.mxu0 0.0
    %2474 = vmatpush1.msra.mxu0 %v657
    %2475 = vmatprep.subr.mxu0 0.0
    %2476 = vmatpush1.msra.mxu0 %v658
    %2477 = vmatprep.subr.mxu0 0.0
    %2478 = vmatpush1.msra.mxu0 %v659
    %2479 = vmatprep.subr.mxu0 0.0
    %2480 = vmatpush1.msra.mxu0 %v660
    %2481 = vmatprep.subr.mxu0 0.0
    %2482 = vmatpush1.msra.mxu0 0.0
    %2483 = vmatprep.subr.mxu0 0.0
    %2484 = vmatpush1.msra.mxu0 0.0
    %2485 = vmatprep.subr.mxu0 0.0
    %2486 = vmatpush1.msra.mxu0 0.0
    %2487 = vmatprep.subr.mxu0 0.0
    %2488 = vmatpush1.msra.mxu0 0.0
    %2489 = vmatprep.subr.mxu0 0.0
    %2490 = vmatpush1.msra.mxu0 0.0
    %2491 = vmatprep.subr.mxu0 0.0
    %2492 = vmatpush1.msra.mxu0 0.0
    %2493 = vmatprep.subr.mxu0 0.0
    %2494 = vmatpush1.msra.mxu0 0.0
    %2495 = vmatprep.subr.mxu0 0.0
    %2496 = vmatpush1.msra.mxu0 0.0
    %2497 = vmatprep.subr.mxu0 0.0
    %2498 = vmatpush1.msra.mxu0 0.0
    %2499 = vmatprep.subr.mxu0 0.0
    %2500 = vmatpush1.msra.mxu0 0.0
    %2501 = vmatprep.subr.mxu0 0.0
    %2502 = vmatpush1.msra.mxu0 0.0
    %2503 = vmatprep.subr.mxu0 0.0
    %2504 = vmatpush1.msra.mxu0 0.0
    %2505 = vmatprep.subr.mxu0 0.0
    %2506 = vmatpush1.msra.mxu0 0.0
    %2507 = vmatprep.subr.mxu0 0.0
    %2508 = vmatpush1.msra.mxu0 0.0
    %2509 = vmatprep.subr.mxu0 0.0
    %2510 = vmatpush1.msra.mxu0 0.0
    %2511 = vmatprep.subr.mxu0 0.0
    %2512 = vmatpush1.msra.mxu0 0.0
    %2513 = vmatprep.subr.mxu0 0.0
    %2514 = vmatpush1.msra.mxu0 0.0
    %2515 = vmatprep.subr.mxu0 0.0
    %2516 = vmatpush1.msra.mxu0 0.0
    %2517 = vmatprep.subr.mxu0 0.0
    %2518 = vmatpush1.msra.mxu0 0.0
    %2519 = vmatprep.subr.mxu0 0.0
    %2520 = vmatpush1.msra.mxu0 0.0
    %2521 = vmatprep.subr.mxu0 0.0
    %2522 = vmatpush1.msra.mxu0 0.0
    %2523 = vmatprep.subr.mxu0 0.0
    %2524 = vmatpush1.msra.mxu0 0.0
    %2525 = vmatprep.mubr.f32.mxu0 0.0
    %2526 = vmatmul.mubr.f32.gmra.mrb[0].mxu0 %v2459
    %v2527 = vpop.f32.mrb[0].mxu0
    %v2528 = vadd.f32 %v2456, %v2527
    %v2529 = vpop.f32.mrb[0].mxu0
    %2530 = vdwg.mxu0
    %s2531 = scalar_lea.vmem %s33, 1
    %v2532 = vld [vmem:[%s2531] sm:$0x1]
    %s2533 = scalar_lea.vmem %s35, 1
    %v2534 = vld [vmem:[%s2533] sm:$0x1]
    %s2535 = scalar_lea.vmem [#allocation14], 16
    %v2536 = vld [vmem:[%s2535] sm:$0xff]
    %v2537 = vld [vmem:[%s2535 + $0x8] sm:$0xff]
    %s2538 = scalar_lea.vmem %s39, 1
    %v2539 = vld [vmem:[%s2538] sm:$0x1]
    %s2540 = scalar_lea.vmem %s41, 1
    %v2541 = vld [vmem:[%s2540] sm:$0x1]
    %s2542 = scalar_lea.vmem [#allocation15], 16
    %v2543 = vld [vmem:[%s2542] sm:$0xff]
    %v2544 = vld [vmem:[%s2542 + $0x8] sm:$0xff]
    %s2545 = scalar_lea.vmem %s45, 1
    %v2546 = vld [vmem:[%s2545] sm:$0x1]
    %s2547 = scalar_lea.vmem %s47, 1
    %v2548 = vld [vmem:[%s2547] sm:$0x1]
    %s2549 = scalar_lea.vmem [#allocation17], 24
    %v2550 = vld [vmem:[%s2549] sm:$0xff]
    %v2551 = vld [vmem:[%s2549 + $0x8] sm:$0xff]
    %v2552 = vld [vmem:[%s2549 + $0x10] sm:$0x7]
    %s2553 = scalar_lea.vmem [#allocation9], 1
    %v2554 = vld [vmem:[%s2553] sm:$0x1]
    %s2555 = scalar_lea.vmem %s29, 1
    %v2556 = vld [vmem:[%s2555] sm:$0x1]
    %s2557 = scalar_lea.vmem %s25, 1
    %v2558 = vld [vmem:[%s2557] sm:$0x1]
    %s2559 = scalar_lea.vmem [#allocation18], 64
    %v2560 = vld [vmem:[%s2559] sm:$0xff]
    %v2561 = vld [vmem:[%s2559 + $0x8] sm:$0xff]
    %v2562 = vld [vmem:[%s2559 + $0x10] sm:$0xff]
    %v2563 = vld [vmem:[%s2559 + $0x18] sm:$0xff]
    %v2564 = vld [vmem:[%s2559 + $0x20] sm:$0xff]
    %v2565 = vld [vmem:[%s2559 + $0x28] sm:$0xff]
    %v2566 = vld [vmem:[%s2559 + $0x30] sm:$0xff]
    %v2567 = vld [vmem:[%s2559 + $0x38] sm:$0xff]
    %s2568 = scalar_lea.vmem [#allocation11], 1
    %v2569 = vld [vmem:[%s2568] sm:$0x1]
    %s2570 = scalar_lea.vmem %s31, 1
    %v2571 = vld [vmem:[%s2570] sm:$0x1]
    %s2572 = scalar_lea.vmem %s27, 1
    %v2573 = vld [vmem:[%s2572] sm:$0x1]
    %s2574 = scalar_lea.vmem [#allocation20], 64
    %v2575 = vld [vmem:[%s2574] sm:$0xff]
    %v2576 = vld [vmem:[%s2574 + $0x8] sm:$0xff]
    %v2577 = vld [vmem:[%s2574 + $0x10] sm:$0xff]
    %v2578 = vld [vmem:[%s2574 + $0x18] sm:$0xff]
    %v2579 = vld [vmem:[%s2574 + $0x20] sm:$0xff]
    %v2580 = vld [vmem:[%s2574 + $0x28] sm:$0xff]
    %v2581 = vld [vmem:[%s2574 + $0x30] sm:$0xff]
    %v2582 = vld [vmem:[%s2574 + $0x38] sm:$0xff]
    %s2583 = scalar_lea.vmem [#allocation12], 1
    %v2584 = vld [vmem:[%s2583] sm:$0x1]
    %s2585 = scalar_lea.vmem %s69, 1
    %v2586 = vld [vmem:[%s2585] sm:$0x1]
    %s2587 = scalar_lea.vmem %s71, 1
    %v2588 = vld [vmem:[%s2587] sm:$0x1]
    %s2589 = scalar_lea.vmem [#allocation26], 16
    %v2590 = vld [vmem:[%s2589] sm:$0xff]
    %v2591 = vld [vmem:[%s2589 + $0x8] sm:$0xff]
    %s2592 = scalar_lea.vmem %s75, 1
    %v2593 = vld [vmem:[%s2592] sm:$0x1]
    %s2594 = scalar_lea.vmem %s77, 1
    %v2595 = vld [vmem:[%s2594] sm:$0x1]
    %s2596 = scalar_lea.vmem %s79, 24
    %v2597 = vld [vmem:[%s2596] sm:$0xff]
    %v2598 = vld [vmem:[%s2596 + $0x8] sm:$0xff]
    %v2599 = vld [vmem:[%s2596 + $0x10] sm:$0x7]
    %s2600 = scalar_lea.vmem [#allocation21], 1
    %v2601 = vld [vmem:[%s2600] sm:$0x1]
    %s2602 = scalar_lea.vmem %s65, 1
    %v2603 = vld [vmem:[%s2602] sm:$0x1]
    %s2604 = scalar_lea.vmem %s61, 1
    %v2605 = vld [vmem:[%s2604] sm:$0x1]
    %s2606 = scalar_lea.vmem [#allocation27], 64
    %v2607 = vld [vmem:[%s2606] sm:$0xff]
    %v2608 = vld [vmem:[%s2606 + $0x8] sm:$0xff]
    %v2609 = vld [vmem:[%s2606 + $0x10] sm:$0xff]
    %v2610 = vld [vmem:[%s2606 + $0x18] sm:$0xff]
    %v2611 = vld [vmem:[%s2606 + $0x20] sm:$0xff]
    %v2612 = vld [vmem:[%s2606 + $0x28] sm:$0xff]
    %v2613 = vld [vmem:[%s2606 + $0x30] sm:$0xff]
    %v2614 = vld [vmem:[%s2606 + $0x38] sm:$0xff]
    %s2615 = scalar_lea.vmem [#allocation23], 1
    %v2616 = vld [vmem:[%s2615] sm:$0x1]
    %s2617 = scalar_lea.vmem %s67, 1
    %v2618 = vld [vmem:[%s2617] sm:$0x1]
    %s2619 = scalar_lea.vmem %s63, 1
    %v2620 = vld [vmem:[%s2619] sm:$0x1]
    %s2621 = scalar_lea.vmem [#allocation29], 64
    %v2622 = vld [vmem:[%s2621] sm:$0xff]
    %v2623 = vld [vmem:[%s2621 + $0x8] sm:$0xff]
    %v2624 = vld [vmem:[%s2621 + $0x10] sm:$0xff]
    %v2625 = vld [vmem:[%s2621 + $0x18] sm:$0xff]
    %v2626 = vld [vmem:[%s2621 + $0x20] sm:$0xff]
    %v2627 = vld [vmem:[%s2621 + $0x28] sm:$0xff]
    %v2628 = vld [vmem:[%s2621 + $0x30] sm:$0xff]
    %v2629 = vld [vmem:[%s2621 + $0x38] sm:$0xff]
    %s2630 = scalar_lea.vmem [#allocation24], 1
    %v2631 = vld [vmem:[%s2630] sm:$0x1]
    %s2632 = scalar_lea.vmem %s99, 1
    %v2633 = vld [vmem:[%s2632] sm:$0x1]
    %s2634 = scalar_lea.vmem %s101, 1
    %v2635 = vld [vmem:[%s2634] sm:$0x1]
    %s2636 = scalar_lea.vmem %s103, 16
    %v2637 = vld [vmem:[%s2636] sm:$0xff]
    %v2638 = vld [vmem:[%s2636 + $0x8] sm:$0xff]
    %s2639 = scalar_lea.vmem %s105, 1
    %v2640 = vld [vmem:[%s2639] sm:$0x1]
    %s2641 = scalar_lea.vmem %s107, 1
    %v2642 = vld [vmem:[%s2641] sm:$0x1]
    %s2643 = scalar_lea.vmem [#allocation30], 64
    %v2644 = vld [vmem:[%s2643] sm:$0xff]
    %v2645 = vld [vmem:[%s2643 + $0x8] sm:$0xff]
    %v2646 = vld [vmem:[%s2643 + $0x10] sm:$0xff]
    %v2647 = vld [vmem:[%s2643 + $0x18] sm:$0xff]
    %v2648 = vld [vmem:[%s2643 + $0x20] sm:$0xff]
    %v2649 = vld [vmem:[%s2643 + $0x28] sm:$0xff]
    %v2650 = vld [vmem:[%s2643 + $0x30] sm:$0xff]
    %v2651 = vld [vmem:[%s2643 + $0x38] sm:$0xff]
    %s2652 = scalar_lea.vmem %s85, 1
    %v2653 = vld [vmem:[%s2652] sm:$0x1]
    %s2654 = scalar_lea.vmem %s95, 1
    %v2655 = vld [vmem:[%s2654] sm:$0x1]
    %s2656 = scalar_lea.vmem %s91, 1
    %v2657 = vld [vmem:[%s2656] sm:$0x1]
    %s2658 = scalar_lea.vmem [#allocation32], 80
    %v2659 = vld [vmem:[%s2658] sm:$0xff]
    %v2660 = vld [vmem:[%s2658 + $0x8] sm:$0xff]
    %v2661 = vld [vmem:[%s2658 + $0x10] sm:$0xff]
    %v2662 = vld [vmem:[%s2658 + $0x18] sm:$0xff]
    %v2663 = vld [vmem:[%s2658 + $0x20] sm:$0xff]
    %v2664 = vld [vmem:[%s2658 + $0x28] sm:$0xff]
    %v2665 = vld [vmem:[%s2658 + $0x30] sm:$0xff]
    %v2666 = vld [vmem:[%s2658 + $0x38] sm:$0xff]
    %v2667 = vld [vmem:[%s2658 + $0x40] sm:$0xff]
    %v2668 = vld [vmem:[%s2658 + $0x48] sm:$0xff]
    %s2669 = scalar_lea.vmem %s87, 1
    %v2670 = vld [vmem:[%s2669] sm:$0x1]
    %s2671 = scalar_lea.vmem %s97, 1
    %v2672 = vld [vmem:[%s2671] sm:$0x1]
    %s2673 = scalar_lea.vmem %s93, 1
    %v2674 = vld [vmem:[%s2673] sm:$0x1]
    %s2675 = scalar_lea.vmem [#allocation33], 80
    %v2676 = vld [vmem:[%s2675] sm:$0xff]
    %v2677 = vld [vmem:[%s2675 + $0x8] sm:$0xff]
    %v2678 = vld [vmem:[%s2675 + $0x10] sm:$0xff]
    %v2679 = vld [vmem:[%s2675 + $0x18] sm:$0xff]
    %v2680 = vld [vmem:[%s2675 + $0x20] sm:$0xff]
    %v2681 = vld [vmem:[%s2675 + $0x28] sm:$0xff]
    %v2682 = vld [vmem:[%s2675 + $0x30] sm:$0xff]
    %v2683 = vld [vmem:[%s2675 + $0x38] sm:$0xff]
    %v2684 = vld [vmem:[%s2675 + $0x40] sm:$0xff]
    %v2685 = vld [vmem:[%s2675 + $0x48] sm:$0xff]
    %s2686 = scalar_lea.vmem %s89, 1
    %v2687 = vld [vmem:[%s2686] sm:$0x1]
    %2688 = vmatprep.subr.mxu0 0.0
    %2689 = vmatpush1.msra.mxu0 %v2528
    %2690 = vmatprep.subr.mxu0 0.0
    %2691 = vmatpush1.msra.mxu0 0.0
    %2692 = vmatprep.subr.mxu0 0.0
    %2693 = vmatpush1.msra.mxu0 0.0
    %2694 = vmatprep.subr.mxu0 0.0
    %2695 = vmatpush1.msra.mxu0 0.0
    %2696 = vmatprep.subr.mxu0 0.0
    %2697 = vmatpush1.msra.mxu0 0.0
    %2698 = vmatprep.subr.mxu0 0.0
    %2699 = vmatpush1.msra.mxu0 0.0
    %2700 = vmatprep.subr.mxu0 0.0
    %2701 = vmatpush1.msra.mxu0 0.0
    %2702 = vmatprep.subr.mxu0 0.0
    %2703 = vmatpush1.msra.mxu0 0.0
    %2704 = vmatprep.subr.mxu0 0.0
    %2705 = vmatpush1.msra.mxu0 0.0
    %2706 = vmatprep.subr.mxu0 0.0
    %2707 = vmatpush1.msra.mxu0 0.0
    %2708 = vmatprep.subr.mxu0 0.0
    %2709 = vmatpush1.msra.mxu0 0.0
    %2710 = vmatprep.subr.mxu0 0.0
    %2711 = vmatpush1.msra.mxu0 0.0
    %2712 = vmatprep.subr.mxu0 0.0
    %2713 = vmatpush1.msra.mxu0 0.0
    %2714 = vmatprep.subr.mxu0 0.0
    %2715 = vmatpush1.msra.mxu0 0.0
    %2716 = vmatprep.subr.mxu0 0.0
    %2717 = vmatpush1.msra.mxu0 0.0
    %2718 = vmatprep.subr.mxu0 0.0
    %2719 = vmatpush1.msra.mxu0 0.0
    %2720 = vmatprep.subr.mxu0 0.0
    %2721 = vmatpush1.msra.mxu0 0.0
    %2722 = vmatprep.subr.mxu0 0.0
    %2723 = vmatpush1.msra.mxu0 0.0
    %2724 = vmatprep.subr.mxu0 0.0
    %2725 = vmatpush1.msra.mxu0 0.0
    %2726 = vmatprep.subr.mxu0 0.0
    %2727 = vmatpush1.msra.mxu0 0.0
    %2728 = vmatprep.subr.mxu0 0.0
    %2729 = vmatpush1.msra.mxu0 0.0
    %2730 = vmatprep.subr.mxu0 0.0
    %2731 = vmatpush1.msra.mxu0 0.0
    %2732 = vmatprep.subr.mxu0 0.0
    %2733 = vmatpush1.msra.mxu0 0.0
    %2734 = vmatprep.subr.mxu0 0.0
    %2735 = vmatpush1.msra.mxu0 0.0
    %2736 = vmatprep.subr.mxu0 0.0
    %2737 = vmatpush1.msra.mxu0 0.0
    %2738 = vmatprep.subr.mxu0 0.0
    %2739 = vmatpush1.msra.mxu0 0.0
    %2740 = vmatprep.subr.mxu0 0.0
    %2741 = vmatpush1.msra.mxu0 0.0
    %2742 = vmatprep.subr.mxu0 0.0
    %2743 = vmatpush1.msra.mxu0 0.0
    %2744 = vmatprep.subr.mxu0 0.0
    %2745 = vmatpush1.msra.mxu0 0.0
    %2746 = vmatprep.subr.mxu0 0.0
    %2747 = vmatpush1.msra.mxu0 0.0
    %2748 = vmatprep.subr.mxu0 0.0
    %2749 = vmatpush1.msra.mxu0 0.0
    %2750 = vmatprep.subr.mxu0 0.0
    %2751 = vmatpush1.msra.mxu0 0.0
    %2752 = vmatprep.mubr.f32.mxu0 0.0
    %2753 = vmatmul.mubr.f32.gmra.mrb[0].mxu0 %v664
    %v2754 = vpop.f32.mrb[0].mxu0
    %v2755 = vadd.f32 0.0, %v2754
    %v2756 = vpop.f32.mrb[0].mxu0
    %2757 = vmatprep.mubr.f32.mxu0 0.0
    %2758 = vmatmul.mubr.f32.gmra.mrb[0].mxu0 %v667
    %v2759 = vpop.f32.mrb[0].mxu0
    %v2760 = vadd.f32 0.0, %v2759
    %v2761 = vpop.f32.mrb[0].mxu0
    %2762 = vdwg.mxu0
    %2763 = vmatprep.subr.mxu0 0.0
    %2764 = vmatpush1.msra.mxu0 %v2528
    %2765 = vmatprep.subr.mxu0 0.0
    %2766 = vmatpush1.msra.mxu0 0.0
    %2767 = vmatprep.subr.mxu0 0.0
    %2768 = vmatpush1.msra.mxu0 0.0
    %2769 = vmatprep.subr.mxu0 0.0
    %2770 = vmatpush1.msra.mxu0 0.0
    %2771 = vmatprep.subr.mxu0 0.0
    %2772 = vmatpush1.msra.mxu0 0.0
    %2773 = vmatprep.subr.mxu0 0.0
    %2774 = vmatpush1.msra.mxu0 0.0
    %2775 = vmatprep.subr.mxu0 0.0
    %2776 = vmatpush1.msra.mxu0 0.0
    %2777 = vmatprep.subr.mxu0 0.0
    %2778 = vmatpush1.msra.mxu0 0.0
    %2779 = vmatprep.subr.mxu0 0.0
    %2780 = vmatpush1.msra.mxu0 0.0
    %2781 = vmatprep.subr.mxu0 0.0
    %2782 = vmatpush1.msra.mxu0 0.0
    %2783 = vmatprep.subr.mxu0 0.0
    %2784 = vmatpush1.msra.mxu0 0.0
    %2785 = vmatprep.subr.mxu0 0.0
    %2786 = vmatpush1.msra.mxu0 0.0
    %2787 = vmatprep.subr.mxu0 0.0
    %2788 = vmatpush1.msra.mxu0 0.0
    %2789 = vmatprep.subr.mxu0 0.0
    %2790 = vmatpush1.msra.mxu0 0.0
    %2791 = vmatprep.subr.mxu0 0.0
    %2792 = vmatpush1.msra.mxu0 0.0
    %2793 = vmatprep.subr.mxu0 0.0
    %2794 = vmatpush1.msra.mxu0 0.0
    %2795 = vmatprep.subr.mxu0 0.0
    %2796 = vmatpush1.msra.mxu0 0.0
    %2797 = vmatprep.subr.mxu0 0.0
    %2798 = vmatpush1.msra.mxu0 0.0
    %2799 = vmatprep.subr.mxu0 0.0
    %2800 = vmatpush1.msra.mxu0 0.0
    %2801 = vmatprep.subr.mxu0 0.0
    %2802 = vmatpush1.msra.mxu0 0.0
    %2803 = vmatprep.subr.mxu0 0.0
    %2804 = vmatpush1.msra.mxu0 0.0
    %2805 = vmatprep.subr.mxu0 0.0
    %2806 = vmatpush1.msra.mxu0 0.0
    %2807 = vmatprep.subr.mxu0 0.0
    %2808 = vmatpush1.msra.mxu0 0.0
    %2809 = vmatprep.subr.mxu0 0.0
    %2810 = vmatpush1.msra.mxu0 0.0
    %2811 = vmatprep.subr.mxu0 0.0
    %2812 = vmatpush1.msra.mxu0 0.0
    %2813 = vmatprep.subr.mxu0 0.0
    %2814 = vmatpush1.msra.mxu0 0.0
    %2815 = vmatprep.subr.mxu0 0.0
    %2816 = vmatpush1.msra.mxu0 0.0
    %2817 = vmatprep.subr.mxu0 0.0
    %2818 = vmatpush1.msra.mxu0 0.0
    %2819 = vmatprep.subr.mxu0 0.0
    %2820 = vmatpush1.msra.mxu0 0.0
    %2821 = vmatprep.subr.mxu0 0.0
    %2822 = vmatpush1.msra.mxu0 0.0
    %2823 = vmatprep.subr.mxu0 0.0
    %2824 = vmatpush1.msra.mxu0 0.0
    %2825 = vmatprep.subr.mxu0 0.0
    %2826 = vmatpush1.msra.mxu0 0.0
    %2827 = vmatprep.mubr.f32.mxu0 0.0
    %2828 = vmatmul.mubr.f32.gmra.mrb[0].mxu0 %v745
    %v2829 = vpop.f32.mrb[0].mxu0
    %v2830 = vadd.f32 0.0, %v2829
    %v2831 = vpop.f32.mrb[0].mxu0
    %2832 = vmatprep.mubr.f32.mxu0 0.0
    %2833 = vmatmul.mubr.f32.gmra.mrb[0].mxu0 %v748
    %v2834 = vpop.f32.mrb[0].mxu0
    %v2835 = vadd.f32 0.0, %v2834
    %v2836 = vpop.f32.mrb[0].mxu0
    %2837 = vdwg.mxu0
    %v2838 = vsel %vm825, %v2755, 0.0
    %v2839 = vsel %vm825, %v2760, 0.0
    %v2840 = vadd.f32 %v2838, %v2839
    %v2841 = vrot.slane %v2840, 4
    %v2842 = vadd.f32 %v2840, %v2841
    %v2843 = vrot.slane %v2842, 2
    %v2844 = vadd.f32 %v2842, %v2843
    %v2845 = vrot.slane %v2844, 1
    %v2846 = vadd.f32 %v2844, %v2845
    %v2847 = vmul.f32 %v2846, %v835
    %v2848 = vsub.f32 %v2755, %v2847
    %v2849 = vsub.f32 %v2760, %v2847
    %v2850 = vmul.f32 %v2848, %v2848
    %v2851 = vmul.f32 %v2849, %v2849
    %v2852 = vsel %vm825, %v2850, 0.0
    %v2853 = vsel %vm825, %v2851, 0.0
    %v2854 = vadd.f32 %v2852, %v2853
    %v2855 = vrot.slane %v2854, 4
    %v2856 = vadd.f32 %v2854, %v2855
    %v2857 = vrot.slane %v2856, 2
    %v2858 = vadd.f32 %v2856, %v2857
    %v2859 = vrot.slane %v2858, 1
    %v2860 = vadd.f32 %v2858, %v2859
    %v2861 = vmul.f32 %v2860, %v835
    %v2862 = vadd.f32 %v2861, 1e-05
    %v2863 = vrsqrt.pop %v2862
    %v2864 = vmul.f32 %v2848, %v2863
    %v2865 = vmul.f32 %v2849, %v2863
    %v2867 = vlaneseq
    %v2868 = vshrl.u32 %v2867, 7
    %v2869 = vsub.s32 0, %v2868
    %v2870 = vrot.slane %v2532, %v2869
    %v2872 = vmul.f32 %v2864, %v2870
    %v2873 = vmul.f32 %v2865, %v2870
    %v2875 = vlaneseq
    %v2876 = vshrl.u32 %v2875, 7
    %v2877 = vsub.s32 0, %v2876
    %v2878 = vrot.slane %v2534, %v2877
    %v2880 = vadd.f32 %v2872, %v2878
    %v2881 = vadd.f32 %v2873, %v2878
    %v2882 = vsel %vm825, %v2830, 0.0
    %v2883 = vsel %vm825, %v2835, 0.0
    %v2884 = vadd.f32 %v2882, %v2883
    %v2885 = vrot.slane %v2884, 4
    %v2886 = vadd.f32 %v2884, %v2885
    %v2887 = vrot.slane %v2886, 2
    %v2888 = vadd.f32 %v2886, %v2887
    %v2889 = vrot.slane %v2888, 1
    %v2890 = vadd.f32 %v2888, %v2889
    %v2891 = vmul.f32 %v2890, %v835
    %v2892 = vsub.f32 %v2830, %v2891
    %v2893 = vsub.f32 %v2835, %v2891
    %v2894 = vmul.f32 %v2892, %v2892
    %v2895 = vmul.f32 %v2893, %v2893
    %v2896 = vsel %vm825, %v2894, 0.0
    %v2897 = vsel %vm825, %v2895, 0.0
    %v2898 = vadd.f32 %v2896, %v2897
    %v2899 = vrot.slane %v2898, 4
    %v2900 = vadd.f32 %v2898, %v2899
    %v2901 = vrot.slane %v2900, 2
    %v2902 = vadd.f32 %v2900, %v2901
    %v2903 = vrot.slane %v2902, 1
    %v2904 = vadd.f32 %v2902, %v2903
    %v2905 = vmul.f32 %v2904, %v835
    %v2906 = vadd.f32 %v2905, 1e-05
    %v2907 = vrsqrt.pop %v2906
    %v2908 = vmul.f32 %v2892, %v2907
    %v2909 = vmul.f32 %v2893, %v2907
    %v2911 = vlaneseq
    %v2912 = vshrl.u32 %v2911, 7
    %v2913 = vsub.s32 0, %v2912
    %v2914 = vrot.slane %v2539, %v2913
    %v2916 = vmul.f32 %v2908, %v2914
    %v2917 = vmul.f32 %v2909, %v2914
    %v2919 = vlaneseq
    %v2920 = vshrl.u32 %v2919, 7
    %v2921 = vsub.s32 0, %v2920
    %v2922 = vrot.slane %v2541, %v2921
    %v2924 = vadd.f32 %v2916, %v2922
    %v2925 = vadd.f32 %v2917, %v2922
    %v2927 = vsel %vm825, %v2924, 0
    %v2930 = vsel %vm825, %v2925, 0
    %2932 = vmatprep.subr.mxu0 0.0
    %2933 = vmatpush1.msra.mxu0 %v2543
    %2934 = vmatprep.subr.mxu0 0.0
    %2935 = vmatpush1.msra.mxu0 %v2544
    %2936 = vmatprep.subr.mxu0 0.0
    %2937 = vmatpush1.msra.mxu0 0.0
    %2938 = vmatprep.subr.mxu0 0.0
    %2939 = vmatpush1.msra.mxu0 0.0
    %2940 = vmatprep.subr.mxu0 0.0
    %2941 = vmatpush1.msra.mxu0 0.0
    %2942 = vmatprep.subr.mxu0 0.0
    %2943 = vmatpush1.msra.mxu0 0.0
    %2944 = vmatprep.subr.mxu0 0.0
    %2945 = vmatpush1.msra.mxu0 0.0
    %2946 = vmatprep.subr.mxu0 0.0
    %2947 = vmatpush1.msra.mxu0 0.0
    %2948 = vmatprep.subr.mxu0 0.0
    %2949 = vmatpush1.msra.mxu0 0.0
    %2950 = vmatprep.subr.mxu0 0.0
    %2951 = vmatpush1.msra.mxu0 0.0
    %2952 = vmatprep.subr.mxu0 0.0
    %2953 = vmatpush1.msra.mxu0 0.0
    %2954 = vmatprep.subr.mxu0 0.0
    %2955 = vmatpush1.msra.mxu0 0.0
    %2956 = vmatprep.subr.mxu0 0.0
    %2957 = vmatpush1.msra.mxu0 0.0
    %2958 = vmatprep.subr.mxu0 0.0
    %2959 = vmatpush1.msra.mxu0 0.0
    %2960 = vmatprep.subr.mxu0 0.0
    %2961 = vmatpush1.msra.mxu0 0.0
    %2962 = vmatprep.subr.mxu0 0.0
    %2963 = vmatpush1.msra.mxu0 0.0
    %2964 = vmatprep.subr.mxu0 0.0
    %2965 = vmatpush1.msra.mxu0 0.0
    %2966 = vmatprep.subr.mxu0 0.0
    %2967 = vmatpush1.msra.mxu0 0.0
    %2968 = vmatprep.subr.mxu0 0.0
    %2969 = vmatpush1.msra.mxu0 0.0
    %2970 = vmatprep.subr.mxu0 0.0
    %2971 = vmatpush1.msra.mxu0 0.0
    %2972 = vmatprep.subr.mxu0 0.0
    %2973 = vmatpush1.msra.mxu0 0.0
    %2974 = vmatprep.subr.mxu0 0.0
    %2975 = vmatpush1.msra.mxu0 0.0
    %2976 = vmatprep.subr.mxu0 0.0
    %2977 = vmatpush1.msra.mxu0 0.0
    %2978 = vmatprep.subr.mxu0 0.0
    %2979 = vmatpush1.msra.mxu0 0.0
    %2980 = vmatprep.subr.mxu0 0.0
    %2981 = vmatpush1.msra.mxu0 0.0
    %2982 = vmatprep.subr.mxu0 0.0
    %2983 = vmatpush1.msra.mxu0 0.0
    %2984 = vmatprep.subr.mxu0 0.0
    %2985 = vmatpush1.msra.mxu0 0.0
    %2986 = vmatprep.subr.mxu0 0.0
    %2987 = vmatpush1.msra.mxu0 0.0
    %2988 = vmatprep.subr.mxu0 0.0
    %2989 = vmatpush1.msra.mxu0 0.0
    %2990 = vmatprep.subr.mxu0 0.0
    %2991 = vmatpush1.msra.mxu0 0.0
    %2992 = vmatprep.subr.mxu0 0.0
    %2993 = vmatpush1.msra.mxu0 0.0
    %2994 = vmatprep.subr.mxu0 0.0
    %2995 = vmatpush1.msra.mxu0 0.0
    %2996 = vmatprep.mubr.f32.mxu0 0.0
    %2997 = vmatmul.mubr.f32.gmra.mrb[0].mxu0 %v2927
    %v2998 = vpop.f32.mrb[0].mxu0
    %v2999 = vadd.f32 0.0, %v2998
    %v3000 = vpop.f32.mrb[0].mxu0
    %3001 = vmatprep.mubr.f32.mxu0 0.0
    %3002 = vmatmul.mubr.f32.gmra.mrb[0].mxu0 %v2930
    %v3003 = vpop.f32.mrb[0].mxu0
    %v3004 = vadd.f32 0.0, %v3003
    %v3005 = vpop.f32.mrb[0].mxu0
    %3006 = vdwg.mxu0
    %v3008 = vsel %vm825, %v2880, 0
    %v3011 = vsel %vm825, %v2881, 0
    %3013 = vmatprep.subr.mxu0 0.0
    %3014 = vmatpush1.msra.mxu0 %v2536
    %3015 = vmatprep.subr.mxu0 0.0
    %3016 = vmatpush1.msra.mxu0 %v2537
    %3017 = vmatprep.subr.mxu0 0.0
    %3018 = vmatpush1.msra.mxu0 0.0
    %3019 = vmatprep.subr.mxu0 0.0
    %3020 = vmatpush1.msra.mxu0 0.0
    %3021 = vmatprep.subr.mxu0 0.0
    %3022 = vmatpush1.msra.mxu0 0.0
    %3023 = vmatprep.subr.mxu0 0.0
    %3024 = vmatpush1.msra.mxu0 0.0
    %3025 = vmatprep.subr.mxu0 0.0
    %3026 = vmatpush1.msra.mxu0 0.0
    %3027 = vmatprep.subr.mxu0 0.0
    %3028 = vmatpush1.msra.mxu0 0.0
    %3029 = vmatprep.subr.mxu0 0.0
    %3030 = vmatpush1.msra.mxu0 0.0
    %3031 = vmatprep.subr.mxu0 0.0
    %3032 = vmatpush1.msra.mxu0 0.0
    %3033 = vmatprep.subr.mxu0 0.0
    %3034 = vmatpush1.msra.mxu0 0.0
    %3035 = vmatprep.subr.mxu0 0.0
    %3036 = vmatpush1.msra.mxu0 0.0
    %3037 = vmatprep.subr.mxu0 0.0
    %3038 = vmatpush1.msra.mxu0 0.0
    %3039 = vmatprep.subr.mxu0 0.0
    %3040 = vmatpush1.msra.mxu0 0.0
    %3041 = vmatprep.subr.mxu0 0.0
    %3042 = vmatpush1.msra.mxu0 0.0
    %3043 = vmatprep.subr.mxu0 0.0
    %3044 = vmatpush1.msra.mxu0 0.0
    %3045 = vmatprep.subr.mxu0 0.0
    %3046 = vmatpush1.msra.mxu0 0.0
    %3047 = vmatprep.subr.mxu0 0.0
    %3048 = vmatpush1.msra.mxu0 0.0
    %3049 = vmatprep.subr.mxu0 0.0
    %3050 = vmatpush1.msra.mxu0 0.0
    %3051 = vmatprep.subr.mxu0 0.0
    %3052 = vmatpush1.msra.mxu0 0.0
    %3053 = vmatprep.subr.mxu0 0.0
    %3054 = vmatpush1.msra.mxu0 0.0
    %3055 = vmatprep.subr.mxu0 0.0
    %3056 = vmatpush1.msra.mxu0 0.0
    %3057 = vmatprep.subr.mxu0 0.0
    %3058 = vmatpush1.msra.mxu0 0.0
    %3059 = vmatprep.subr.mxu0 0.0
    %3060 = vmatpush1.msra.mxu0 0.0
    %3061 = vmatprep.subr.mxu0 0.0
    %3062 = vmatpush1.msra.mxu0 0.0
    %3063 = vmatprep.subr.mxu0 0.0
    %3064 = vmatpush1.msra.mxu0 0.0
    %3065 = vmatprep.subr.mxu0 0.0
    %3066 = vmatpush1.msra.mxu0 0.0
    %3067 = vmatprep.subr.mxu0 0.0
    %3068 = vmatpush1.msra.mxu0 0.0
    %3069 = vmatprep.subr.mxu0 0.0
    %3070 = vmatpush1.msra.mxu0 0.0
    %3071 = vmatprep.subr.mxu0 0.0
    %3072 = vmatpush1.msra.mxu0 0.0
    %3073 = vmatprep.subr.mxu0 0.0
    %3074 = vmatpush1.msra.mxu0 0.0
    %3075 = vmatprep.subr.mxu0 0.0
    %3076 = vmatpush1.msra.mxu0 0.0
    %3077 = vmatprep.mubr.f32.mxu0 0.0
    %3078 = vmatmul.mubr.f32.gmra.mrb[0].mxu0 %v3008
    %v3079 = vpop.f32.mrb[0].mxu0
    %v3080 = vadd.f32 %v2999, %v3079
    %v3081 = vpop.f32.mrb[0].mxu0
    %3082 = vmatprep.mubr.f32.mxu0 0.0
    %3083 = vmatmul.mubr.f32.gmra.mrb[0].mxu0 %v3011
    %v3084 = vpop.f32.mrb[0].mxu0
    %v3085 = vadd.f32 %v3004, %v3084
    %v3086 = vpop.f32.mrb[0].mxu0
    %3087 = vdwg.mxu0
    %v3089 = vlaneseq
    %v3090 = vshrl.u32 %v3089, 7
    %v3091 = vsub.s32 0, %v3090
    %v3092 = vrot.slane %v2546, %v3091
    %v3094 = vmul.f32 %v1534, %v3092
    %v3095 = vmul.f32 %v1535, %v3092
    %v3097 = vlaneseq
    %v3098 = vshrl.u32 %v3097, 7
    %v3099 = vsub.s32 0, %v3098
    %v3100 = vrot.slane %v2548, %v3099
    %v3102 = vadd.f32 %v3094, %v3100
    %v3103 = vadd.f32 %v3095, %v3100
    %v3105 = vsel %vm1077, %v3102, 0
    %v3108 = vsel %vm1077, %v3103, 0
    %v3111 = vsel %vm1128, %v2552, 0
    %3113 = vmatprep.subr.mxu0 0.0
    %3114 = vmatpush1.msra.mxu0 %v2550
    %3115 = vmatprep.subr.mxu0 0.0
    %3116 = vmatpush1.msra.mxu0 %v2551
    %3117 = vmatprep.subr.mxu0 0.0
    %3118 = vmatpush1.msra.mxu0 %v3111
    %3119 = vmatprep.subr.mxu0 0.0
    %3120 = vmatpush1.msra.mxu0 0.0
    %3121 = vmatprep.subr.mxu0 0.0
    %3122 = vmatpush1.msra.mxu0 0.0
    %3123 = vmatprep.subr.mxu0 0.0
    %3124 = vmatpush1.msra.mxu0 0.0
    %3125 = vmatprep.subr.mxu0 0.0
    %3126 = vmatpush1.msra.mxu0 0.0
    %3127 = vmatprep.subr.mxu0 0.0
    %3128 = vmatpush1.msra.mxu0 0.0
    %3129 = vmatprep.subr.mxu0 0.0
    %3130 = vmatpush1.msra.mxu0 0.0
    %3131 = vmatprep.subr.mxu0 0.0
    %3132 = vmatpush1.msra.mxu0 0.0
    %3133 = vmatprep.subr.mxu0 0.0
    %3134 = vmatpush1.msra.mxu0 0.0
    %3135 = vmatprep.subr.mxu0 0.0
    %3136 = vmatpush1.msra.mxu0 0.0
    %3137 = vmatprep.subr.mxu0 0.0
    %3138 = vmatpush1.msra.mxu0 0.0
    %3139 = vmatprep.subr.mxu0 0.0
    %3140 = vmatpush1.msra.mxu0 0.0
    %3141 = vmatprep.subr.mxu0 0.0
    %3142 = vmatpush1.msra.mxu0 0.0
    %3143 = vmatprep.subr.mxu0 0.0
    %3144 = vmatpush1.msra.mxu0 0.0
    %3145 = vmatprep.subr.mxu0 0.0
    %3146 = vmatpush1.msra.mxu0 0.0
    %3147 = vmatprep.subr.mxu0 0.0
    %3148 = vmatpush1.msra.mxu0 0.0
    %3149 = vmatprep.subr.mxu0 0.0
    %3150 = vmatpush1.msra.mxu0 0.0
    %3151 = vmatprep.subr.mxu0 0.0
    %3152 = vmatpush1.msra.mxu0 0.0
    %3153 = vmatprep.subr.mxu0 0.0
    %3154 = vmatpush1.msra.mxu0 0.0
    %3155 = vmatprep.subr.mxu0 0.0
    %3156 = vmatpush1.msra.mxu0 0.0
    %3157 = vmatprep.subr.mxu0 0.0
    %3158 = vmatpush1.msra.mxu0 0.0
    %3159 = vmatprep.subr.mxu0 0.0
    %3160 = vmatpush1.msra.mxu0 0.0
    %3161 = vmatprep.subr.mxu0 0.0
    %3162 = vmatpush1.msra.mxu0 0.0
    %3163 = vmatprep.subr.mxu0 0.0
    %3164 = vmatpush1.msra.mxu0 0.0
    %3165 = vmatprep.subr.mxu0 0.0
    %3166 = vmatpush1.msra.mxu0 0.0
    %3167 = vmatprep.subr.mxu0 0.0
    %3168 = vmatpush1.msra.mxu0 0.0
    %3169 = vmatprep.subr.mxu0 0.0
    %3170 = vmatpush1.msra.mxu0 0.0
    %3171 = vmatprep.subr.mxu0 0.0
    %3172 = vmatpush1.msra.mxu0 0.0
    %3173 = vmatprep.subr.mxu0 0.0
    %3174 = vmatpush1.msra.mxu0 0.0
    %3175 = vmatprep.subr.mxu0 0.0
    %3176 = vmatpush1.msra.mxu0 0.0
    %3177 = vmatprep.mubr.f32.mxu0 0.0
    %3178 = vmatmul.mubr.f32.gmra.mrb[0].mxu0 %v3105
    %v3179 = vpop.f32.mrb[0].mxu0
    %v3180 = vadd.f32 0.0, %v3179
    %v3181 = vpop.f32.mrb[0].mxu0
    %3182 = vmatprep.mubr.f32.mxu0 0.0
    %3183 = vmatmul.mubr.f32.gmra.mrb[0].mxu0 %v3108
    %v3184 = vpop.f32.mrb[0].mxu0
    %v3185 = vadd.f32 0.0, %v3184
    %v3186 = vpop.f32.mrb[0].mxu0
    %3187 = vdwg.mxu0
    %v3188 = vadd.f32 %v3080, %v3180
    %v3189 = vadd.f32 %v3085, %v3185
    %v3191 = vlaneseq
    %v3192 = vshrl.u32 %v3191, 7
    %v3193 = vsub.s32 0, %v3192
    %v3194 = vrot.slane %v2554, %v3193
    %v3196 = vadd.f32 %v3188, %v3194
    %v3197 = vadd.f32 %v3189, %v3194
    %vm3198 = vcmp.ge.f32.partialorder %v3196, 0.0
    %vm3199 = vcmp.ge.f32.partialorder %v3197, 0.0
    %v3200 = vmul.f32 %v3196, 0.1
    %v3201 = vmul.f32 %v3197, 0.1
    %v3202 = vsel %vm3198, %v3196, %v3200
    %v3203 = vsel %vm3199, %v3197, %v3201
    %v3204 = vsel %vm1223, %v3202, 0.0
    %v3205 = vsel %vm1223, %v3203, 0.0
    %v3206 = vadd.f32 %v3204, %v3205
    %v3207 = vrot.slane %v3206, 4
    %v3208 = vadd.f32 %v3206, %v3207
    %v3209 = vrot.slane %v3208, 2
    %v3210 = vadd.f32 %v3208, %v3209
    %v3211 = vrot.slane %v3210, 1
    %v3212 = vadd.f32 %v3210, %v3211
    %v3213 = vmul.f32 %v3212, %v835
    %v3214 = vsub.f32 %v3202, %v3213
    %v3215 = vsub.f32 %v3203, %v3213
    %v3216 = vmul.f32 %v3214, %v3214
    %v3217 = vmul.f32 %v3215, %v3215
    %v3218 = vsel %vm1223, %v3216, 0.0
    %v3219 = vsel %vm1223, %v3217, 0.0
    %v3220 = vadd.f32 %v3218, %v3219
    %v3221 = vrot.slane %v3220, 4
    %v3222 = vadd.f32 %v3220, %v3221
    %v3223 = vrot.slane %v3222, 2
    %v3224 = vadd.f32 %v3222, %v3223
    %v3225 = vrot.slane %v3224, 1
    %v3226 = vadd.f32 %v3224, %v3225
    %v3227 = vmul.f32 %v3226, %v835
    %v3228 = vadd.f32 %v3227, 1e-05
    %v3229 = vrsqrt.pop %v3228
    %v3230 = vmul.f32 %v3214, %v3229
    %v3231 = vmul.f32 %v3215, %v3229
    %v3233 = vlaneseq
    %v3234 = vshrl.u32 %v3233, 7
    %v3235 = vsub.s32 0, %v3234
    %v3236 = vrot.slane %v2556, %v3235
    %v3238 = vmul.f32 %v3230, %v3236
    %v3239 = vmul.f32 %v3231, %v3236
    %v3241 = vlaneseq
    %v3242 = vshrl.u32 %v3241, 7
    %v3243 = vsub.s32 0, %v3242
    %v3244 = vrot.slane %v2558, %v3243
    %v3246 = vadd.f32 %v3238, %v3244
    %v3247 = vadd.f32 %v3239, %v3244
    %v3249 = vlaneseq
    %v3250 = vshrl.u32 %v3249, 7
    %v3251 = vsub.s32 0, %v3250
    %v3252 = vrot.slane %v2569, %v3251
    %v3255 = vsel %vm1223, %v3246, 0
    %v3258 = vsel %vm1223, %v3247, 0
    %3260 = vmatprep.subr.mxu0 0.0
    %3261 = vmatpush1.msra.mxu0 %v2560
    %3262 = vmatprep.subr.mxu0 0.0
    %3263 = vmatpush1.msra.mxu0 %v2561
    %3264 = vmatprep.subr.mxu0 0.0
    %3265 = vmatpush1.msra.mxu0 %v2562
    %3266 = vmatprep.subr.mxu0 0.0
    %3267 = vmatpush1.msra.mxu0 %v2563
    %3268 = vmatprep.subr.mxu0 0.0
    %3269 = vmatpush1.msra.mxu0 %v2564
    %3270 = vmatprep.subr.mxu0 0.0
    %3271 = vmatpush1.msra.mxu0 %v2565
    %3272 = vmatprep.subr.mxu0 0.0
    %3273 = vmatpush1.msra.mxu0 %v2566
    %3274 = vmatprep.subr.mxu0 0.0
    %3275 = vmatpush1.msra.mxu0 %v2567
    %3276 = vmatprep.subr.mxu0 0.0
    %3277 = vmatpush1.msra.mxu0 0.0
    %3278 = vmatprep.subr.mxu0 0.0
    %3279 = vmatpush1.msra.mxu0 0.0
    %3280 = vmatprep.subr.mxu0 0.0
    %3281 = vmatpush1.msra.mxu0 0.0
    %3282 = vmatprep.subr.mxu0 0.0
    %3283 = vmatpush1.msra.mxu0 0.0
    %3284 = vmatprep.subr.mxu0 0.0
    %3285 = vmatpush1.msra.mxu0 0.0
    %3286 = vmatprep.subr.mxu0 0.0
    %3287 = vmatpush1.msra.mxu0 0.0
    %3288 = vmatprep.subr.mxu0 0.0
    %3289 = vmatpush1.msra.mxu0 0.0
    %3290 = vmatprep.subr.mxu0 0.0
    %3291 = vmatpush1.msra.mxu0 0.0
    %3292 = vmatprep.subr.mxu0 0.0
    %3293 = vmatpush1.msra.mxu0 0.0
    %3294 = vmatprep.subr.mxu0 0.0
    %3295 = vmatpush1.msra.mxu0 0.0
    %3296 = vmatprep.subr.mxu0 0.0
    %3297 = vmatpush1.msra.mxu0 0.0
    %3298 = vmatprep.subr.mxu0 0.0
    %3299 = vmatpush1.msra.mxu0 0.0
    %3300 = vmatprep.subr.mxu0 0.0
    %3301 = vmatpush1.msra.mxu0 0.0
    %3302 = vmatprep.subr.mxu0 0.0
    %3303 = vmatpush1.msra.mxu0 0.0
    %3304 = vmatprep.subr.mxu0 0.0
    %3305 = vmatpush1.msra.mxu0 0.0
    %3306 = vmatprep.subr.mxu0 0.0
    %3307 = vmatpush1.msra.mxu0 0.0
    %3308 = vmatprep.subr.mxu0 0.0
    %3309 = vmatpush1.msra.mxu0 0.0
    %3310 = vmatprep.subr.mxu0 0.0
    %3311 = vmatpush1.msra.mxu0 0.0
    %3312 = vmatprep.subr.mxu0 0.0
    %3313 = vmatpush1.msra.mxu0 0.0
    %3314 = vmatprep.subr.mxu0 0.0
    %3315 = vmatpush1.msra.mxu0 0.0
    %3316 = vmatprep.subr.mxu0 0.0
    %3317 = vmatpush1.msra.mxu0 0.0
    %3318 = vmatprep.subr.mxu0 0.0
    %3319 = vmatpush1.msra.mxu0 0.0
    %3320 = vmatprep.subr.mxu0 0.0
    %3321 = vmatpush1.msra.mxu0 0.0
    %3322 = vmatprep.subr.mxu0 0.0
    %3323 = vmatpush1.msra.mxu0 0.0
    %3324 = vmatprep.mubr.f32.mxu0 0.0
    %3325 = vmatmul.mubr.f32.gmra.mrb[0].mxu0 %v3255
    %v3326 = vpop.f32.mrb[0].mxu0
    %v3327 = vadd.f32 %v3252, %v3326
    %v3328 = vpop.f32.mrb[0].mxu0
    %3329 = vmatprep.mubr.f32.mxu0 0.0
    %3330 = vmatmul.mubr.f32.gmra.mrb[0].mxu0 %v3258
    %v3331 = vpop.f32.mrb[0].mxu0
    %v3332 = vadd.f32 %v3252, %v3331
    %v3333 = vpop.f32.mrb[0].mxu0
    %3334 = vdwg.mxu0
    %vm3335 = vcmp.ge.f32.partialorder %v3327, 0.0
    %vm3336 = vcmp.ge.f32.partialorder %v3332, 0.0
    %v3337 = vmul.f32 %v3327, 0.1
    %v3338 = vmul.f32 %v3332, 0.1
    %v3339 = vsel %vm3335, %v3327, %v3337
    %v3340 = vsel %vm3336, %v3332, %v3338
    %v3341 = vsel %vm1223, %v3339, 0.0
    %v3342 = vsel %vm1223, %v3340, 0.0
    %v3343 = vadd.f32 %v3341, %v3342
    %v3344 = vrot.slane %v3343, 4
    %v3345 = vadd.f32 %v3343, %v3344
    %v3346 = vrot.slane %v3345, 2
    %v3347 = vadd.f32 %v3345, %v3346
    %v3348 = vrot.slane %v3347, 1
    %v3349 = vadd.f32 %v3347, %v3348
    %v3350 = vmul.f32 %v3349, %v835
    %v3351 = vsub.f32 %v3339, %v3350
    %v3352 = vsub.f32 %v3340, %v3350
    %v3353 = vmul.f32 %v3351, %v3351
    %v3354 = vmul.f32 %v3352, %v3352
    %v3355 = vsel %vm1223, %v3353, 0.0
    %v3356 = vsel %vm1223, %v3354, 0.0
    %v3357 = vadd.f32 %v3355, %v3356
    %v3358 = vrot.slane %v3357, 4
    %v3359 = vadd.f32 %v3357, %v3358
    %v3360 = vrot.slane %v3359, 2
    %v3361 = vadd.f32 %v3359, %v3360
    %v3362 = vrot.slane %v3361, 1
    %v3363 = vadd.f32 %v3361, %v3362
    %v3364 = vmul.f32 %v3363, %v835
    %v3365 = vadd.f32 %v3364, 1e-05
    %v3366 = vrsqrt.pop %v3365
    %v3367 = vmul.f32 %v3351, %v3366
    %v3368 = vmul.f32 %v3352, %v3366
    %v3370 = vlaneseq
    %v3371 = vshrl.u32 %v3370, 7
    %v3372 = vsub.s32 0, %v3371
    %v3373 = vrot.slane %v2571, %v3372
    %v3375 = vmul.f32 %v3367, %v3373
    %v3376 = vmul.f32 %v3368, %v3373
    %v3378 = vlaneseq
    %v3379 = vshrl.u32 %v3378, 7
    %v3380 = vsub.s32 0, %v3379
    %v3381 = vrot.slane %v2573, %v3380
    %v3383 = vadd.f32 %v3375, %v3381
    %v3384 = vadd.f32 %v3376, %v3381
    %v3386 = vlaneseq
    %v3387 = vshrl.u32 %v3386, 7
    %v3388 = vsub.s32 0, %v3387
    %v3389 = vrot.slane %v2584, %v3388
    %v3392 = vsel %vm1223, %v3383, 0
    %v3395 = vsel %vm1223, %v3384, 0
    %3397 = vmatprep.subr.mxu0 0.0
    %3398 = vmatpush1.msra.mxu0 %v2575
    %3399 = vmatprep.subr.mxu0 0.0
    %3400 = vmatpush1.msra.mxu0 %v2576
    %3401 = vmatprep.subr.mxu0 0.0
    %3402 = vmatpush1.msra.mxu0 %v2577
    %3403 = vmatprep.subr.mxu0 0.0
    %3404 = vmatpush1.msra.mxu0 %v2578
    %3405 = vmatprep.subr.mxu0 0.0
    %3406 = vmatpush1.msra.mxu0 %v2579
    %3407 = vmatprep.subr.mxu0 0.0
    %3408 = vmatpush1.msra.mxu0 %v2580
    %3409 = vmatprep.subr.mxu0 0.0
    %3410 = vmatpush1.msra.mxu0 %v2581
    %3411 = vmatprep.subr.mxu0 0.0
    %3412 = vmatpush1.msra.mxu0 %v2582
    %3413 = vmatprep.subr.mxu0 0.0
    %3414 = vmatpush1.msra.mxu0 0.0
    %3415 = vmatprep.subr.mxu0 0.0
    %3416 = vmatpush1.msra.mxu0 0.0
    %3417 = vmatprep.subr.mxu0 0.0
    %3418 = vmatpush1.msra.mxu0 0.0
    %3419 = vmatprep.subr.mxu0 0.0
    %3420 = vmatpush1.msra.mxu0 0.0
    %3421 = vmatprep.subr.mxu0 0.0
    %3422 = vmatpush1.msra.mxu0 0.0
    %3423 = vmatprep.subr.mxu0 0.0
    %3424 = vmatpush1.msra.mxu0 0.0
    %3425 = vmatprep.subr.mxu0 0.0
    %3426 = vmatpush1.msra.mxu0 0.0
    %3427 = vmatprep.subr.mxu0 0.0
    %3428 = vmatpush1.msra.mxu0 0.0
    %3429 = vmatprep.subr.mxu0 0.0
    %3430 = vmatpush1.msra.mxu0 0.0
    %3431 = vmatprep.subr.mxu0 0.0
    %3432 = vmatpush1.msra.mxu0 0.0
    %3433 = vmatprep.subr.mxu0 0.0
    %3434 = vmatpush1.msra.mxu0 0.0
    %3435 = vmatprep.subr.mxu0 0.0
    %3436 = vmatpush1.msra.mxu0 0.0
    %3437 = vmatprep.subr.mxu0 0.0
    %3438 = vmatpush1.msra.mxu0 0.0
    %3439 = vmatprep.subr.mxu0 0.0
    %3440 = vmatpush1.msra.mxu0 0.0
    %3441 = vmatprep.subr.mxu0 0.0
    %3442 = vmatpush1.msra.mxu0 0.0
    %3443 = vmatprep.subr.mxu0 0.0
    %3444 = vmatpush1.msra.mxu0 0.0
    %3445 = vmatprep.subr.mxu0 0.0
    %3446 = vmatpush1.msra.mxu0 0.0
    %3447 = vmatprep.subr.mxu0 0.0
    %3448 = vmatpush1.msra.mxu0 0.0
    %3449 = vmatprep.subr.mxu0 0.0
    %3450 = vmatpush1.msra.mxu0 0.0
    %3451 = vmatprep.subr.mxu0 0.0
    %3452 = vmatpush1.msra.mxu0 0.0
    %3453 = vmatprep.subr.mxu0 0.0
    %3454 = vmatpush1.msra.mxu0 0.0
    %3455 = vmatprep.subr.mxu0 0.0
    %3456 = vmatpush1.msra.mxu0 0.0
    %3457 = vmatprep.subr.mxu0 0.0
    %3458 = vmatpush1.msra.mxu0 0.0
    %3459 = vmatprep.subr.mxu0 0.0
    %3460 = vmatpush1.msra.mxu0 0.0
    %3461 = vmatprep.mubr.f32.mxu0 0.0
    %3462 = vmatmul.mubr.f32.gmra.mrb[0].mxu0 %v3392
    %v3463 = vpop.f32.mrb[0].mxu0
    %v3464 = vadd.f32 %v3389, %v3463
    %v3465 = vpop.f32.mrb[0].mxu0
    %3466 = vmatprep.mubr.f32.mxu0 0.0
    %3467 = vmatmul.mubr.f32.gmra.mrb[0].mxu0 %v3395
    %v3468 = vpop.f32.mrb[0].mxu0
    %v3469 = vadd.f32 %v3389, %v3468
    %v3470 = vpop.f32.mrb[0].mxu0
    %3471 = vdwg.mxu0
    %v3473 = vlaneseq
    %v3474 = vshrl.u32 %v3473, 7
    %v3475 = vsub.s32 0, %v3474
    %v3476 = vrot.slane %v2586, %v3475
    %v3478 = vmul.f32 %v2864, %v3476
    %v3479 = vmul.f32 %v2865, %v3476
    %v3481 = vlaneseq
    %v3482 = vshrl.u32 %v3481, 7
    %v3483 = vsub.s32 0, %v3482
    %v3484 = vrot.slane %v2588, %v3483
    %v3486 = vadd.f32 %v3478, %v3484
    %v3487 = vadd.f32 %v3479, %v3484
    %v3488 = vsel %vm1077, %v3464, 0.0
    %v3489 = vsel %vm1077, %v3469, 0.0
    %v3490 = vadd.f32 %v3488, %v3489
    %v3491 = vrot.slane %v3490, 4
    %v3492 = vadd.f32 %v3490, %v3491
    %v3493 = vrot.slane %v3492, 2
    %v3494 = vadd.f32 %v3492, %v3493
    %v3495 = vrot.slane %v3494, 1
    %v3496 = vadd.f32 %v3494, %v3495
    %v3497 = vmul.f32 %v3496, %v835
    %v3498 = vsub.f32 %v3464, %v3497
    %v3499 = vsub.f32 %v3469, %v3497
    %v3500 = vmul.f32 %v3498, %v3498
    %v3501 = vmul.f32 %v3499, %v3499
    %v3502 = vsel %vm1077, %v3500, 0.0
    %v3503 = vsel %vm1077, %v3501, 0.0
    %v3504 = vadd.f32 %v3502, %v3503
    %v3505 = vrot.slane %v3504, 4
    %v3506 = vadd.f32 %v3504, %v3505
    %v3507 = vrot.slane %v3506, 2
    %v3508 = vadd.f32 %v3506, %v3507
    %v3509 = vrot.slane %v3508, 1
    %v3510 = vadd.f32 %v3508, %v3509
    %v3511 = vmul.f32 %v3510, %v835
    %v3512 = vadd.f32 %v3511, 1e-05
    %v3513 = vrsqrt.pop %v3512
    %v3514 = vmul.f32 %v3498, %v3513
    %v3515 = vmul.f32 %v3499, %v3513
    %v3517 = vlaneseq
    %v3518 = vshrl.u32 %v3517, 7
    %v3519 = vsub.s32 0, %v3518
    %v3520 = vrot.slane %v2593, %v3519
    %v3522 = vmul.f32 %v3514, %v3520
    %v3523 = vmul.f32 %v3515, %v3520
    %v3525 = vlaneseq
    %v3526 = vshrl.u32 %v3525, 7
    %v3527 = vsub.s32 0, %v3526
    %v3528 = vrot.slane %v2595, %v3527
    %v3530 = vadd.f32 %v3522, %v3528
    %v3531 = vadd.f32 %v3523, %v3528
    %v3533 = vsel %vm1077, %v3530, 0
    %v3536 = vsel %vm1077, %v3531, 0
    %v3539 = vsel %vm1128, %v2599, 0
    %3541 = vmatprep.subr.mxu0 0.0
    %3542 = vmatpush1.msra.mxu0 %v2597
    %3543 = vmatprep.subr.mxu0 0.0
    %3544 = vmatpush1.msra.mxu0 %v2598
    %3545 = vmatprep.subr.mxu0 0.0
    %3546 = vmatpush1.msra.mxu0 %v3539
    %3547 = vmatprep.subr.mxu0 0.0
    %3548 = vmatpush1.msra.mxu0 0.0
    %3549 = vmatprep.subr.mxu0 0.0
    %3550 = vmatpush1.msra.mxu0 0.0
    %3551 = vmatprep.subr.mxu0 0.0
    %3552 = vmatpush1.msra.mxu0 0.0
    %3553 = vmatprep.subr.mxu0 0.0
    %3554 = vmatpush1.msra.mxu0 0.0
    %3555 = vmatprep.subr.mxu0 0.0
    %3556 = vmatpush1.msra.mxu0 0.0
    %3557 = vmatprep.subr.mxu0 0.0
    %3558 = vmatpush1.msra.mxu0 0.0
    %3559 = vmatprep.subr.mxu0 0.0
    %3560 = vmatpush1.msra.mxu0 0.0
    %3561 = vmatprep.subr.mxu0 0.0
    %3562 = vmatpush1.msra.mxu0 0.0
    %3563 = vmatprep.subr.mxu0 0.0
    %3564 = vmatpush1.msra.mxu0 0.0
    %3565 = vmatprep.subr.mxu0 0.0
    %3566 = vmatpush1.msra.mxu0 0.0
    %3567 = vmatprep.subr.mxu0 0.0
    %3568 = vmatpush1.msra.mxu0 0.0
    %3569 = vmatprep.subr.mxu0 0.0
    %3570 = vmatpush1.msra.mxu0 0.0
    %3571 = vmatprep.subr.mxu0 0.0
    %3572 = vmatpush1.msra.mxu0 0.0
    %3573 = vmatprep.subr.mxu0 0.0
    %3574 = vmatpush1.msra.mxu0 0.0
    %3575 = vmatprep.subr.mxu0 0.0
    %3576 = vmatpush1.msra.mxu0 0.0
    %3577 = vmatprep.subr.mxu0 0.0
    %3578 = vmatpush1.msra.mxu0 0.0
    %3579 = vmatprep.subr.mxu0 0.0
    %3580 = vmatpush1.msra.mxu0 0.0
    %3581 = vmatprep.subr.mxu0 0.0
    %3582 = vmatpush1.msra.mxu0 0.0
    %3583 = vmatprep.subr.mxu0 0.0
    %3584 = vmatpush1.msra.mxu0 0.0
    %3585 = vmatprep.subr.mxu0 0.0
    %3586 = vmatpush1.msra.mxu0 0.0
    %3587 = vmatprep.subr.mxu0 0.0
    %3588 = vmatpush1.msra.mxu0 0.0
    %3589 = vmatprep.subr.mxu0 0.0
    %3590 = vmatpush1.msra.mxu0 0.0
    %3591 = vmatprep.subr.mxu0 0.0
    %3592 = vmatpush1.msra.mxu0 0.0
    %3593 = vmatprep.subr.mxu0 0.0
    %3594 = vmatpush1.msra.mxu0 0.0
    %3595 = vmatprep.subr.mxu0 0.0
    %3596 = vmatpush1.msra.mxu0 0.0
    %3597 = vmatprep.subr.mxu0 0.0
    %3598 = vmatpush1.msra.mxu0 0.0
    %3599 = vmatprep.subr.mxu0 0.0
    %3600 = vmatpush1.msra.mxu0 0.0
    %3601 = vmatprep.subr.mxu0 0.0
    %3602 = vmatpush1.msra.mxu0 0.0
    %3603 = vmatprep.subr.mxu0 0.0
    %3604 = vmatpush1.msra.mxu0 0.0
    %3605 = vmatprep.mubr.f32.mxu0 0.0
    %3606 = vmatmul.mubr.f32.gmra.mrb[0].mxu0 %v3533
    %v3607 = vpop.f32.mrb[0].mxu0
    %v3608 = vadd.f32 0.0, %v3607
    %v3609 = vpop.f32.mrb[0].mxu0
    %3610 = vmatprep.mubr.f32.mxu0 0.0
    %3611 = vmatmul.mubr.f32.gmra.mrb[0].mxu0 %v3536
    %v3612 = vpop.f32.mrb[0].mxu0
    %v3613 = vadd.f32 0.0, %v3612
    %v3614 = vpop.f32.mrb[0].mxu0
    %3615 = vdwg.mxu0
    %v3617 = vsel %vm825, %v3486, 0
    %v3620 = vsel %vm825, %v3487, 0
    %3622 = vmatprep.subr.mxu0 0.0
    %3623 = vmatpush1.msra.mxu0 %v2590
    %3624 = vmatprep.subr.mxu0 0.0
    %3625 = vmatpush1.msra.mxu0 %v2591
    %3626 = vmatprep.subr.mxu0 0.0
    %3627 = vmatpush1.msra.mxu0 0.0
    %3628 = vmatprep.subr.mxu0 0.0
    %3629 = vmatpush1.msra.mxu0 0.0
    %3630 = vmatprep.subr.mxu0 0.0
    %3631 = vmatpush1.msra.mxu0 0.0
    %3632 = vmatprep.subr.mxu0 0.0
    %3633 = vmatpush1.msra.mxu0 0.0
    %3634 = vmatprep.subr.mxu0 0.0
    %3635 = vmatpush1.msra.mxu0 0.0
    %3636 = vmatprep.subr.mxu0 0.0
    %3637 = vmatpush1.msra.mxu0 0.0
    %3638 = vmatprep.subr.mxu0 0.0
    %3639 = vmatpush1.msra.mxu0 0.0
    %3640 = vmatprep.subr.mxu0 0.0
    %3641 = vmatpush1.msra.mxu0 0.0
    %3642 = vmatprep.subr.mxu0 0.0
    %3643 = vmatpush1.msra.mxu0 0.0
    %3644 = vmatprep.subr.mxu0 0.0
    %3645 = vmatpush1.msra.mxu0 0.0
    %3646 = vmatprep.subr.mxu0 0.0
    %3647 = vmatpush1.msra.mxu0 0.0
    %3648 = vmatprep.subr.mxu0 0.0
    %3649 = vmatpush1.msra.mxu0 0.0
    %3650 = vmatprep.subr.mxu0 0.0
    %3651 = vmatpush1.msra.mxu0 0.0
    %3652 = vmatprep.subr.mxu0 0.0
    %3653 = vmatpush1.msra.mxu0 0.0
    %3654 = vmatprep.subr.mxu0 0.0
    %3655 = vmatpush1.msra.mxu0 0.0
    %3656 = vmatprep.subr.mxu0 0.0
    %3657 = vmatpush1.msra.mxu0 0.0
    %3658 = vmatprep.subr.mxu0 0.0
    %3659 = vmatpush1.msra.mxu0 0.0
    %3660 = vmatprep.subr.mxu0 0.0
    %3661 = vmatpush1.msra.mxu0 0.0
    %3662 = vmatprep.subr.mxu0 0.0
    %3663 = vmatpush1.msra.mxu0 0.0
    %3664 = vmatprep.subr.mxu0 0.0
    %3665 = vmatpush1.msra.mxu0 0.0
    %3666 = vmatprep.subr.mxu0 0.0
    %3667 = vmatpush1.msra.mxu0 0.0
    %3668 = vmatprep.subr.mxu0 0.0
    %3669 = vmatpush1.msra.mxu0 0.0
    %3670 = vmatprep.subr.mxu0 0.0
    %3671 = vmatpush1.msra.mxu0 0.0
    %3672 = vmatprep.subr.mxu0 0.0
    %3673 = vmatpush1.msra.mxu0 0.0
    %3674 = vmatprep.subr.mxu0 0.0
    %3675 = vmatpush1.msra.mxu0 0.0
    %3676 = vmatprep.subr.mxu0 0.0
    %3677 = vmatpush1.msra.mxu0 0.0
    %3678 = vmatprep.subr.mxu0 0.0
    %3679 = vmatpush1.msra.mxu0 0.0
    %3680 = vmatprep.subr.mxu0 0.0
    %3681 = vmatpush1.msra.mxu0 0.0
    %3682 = vmatprep.subr.mxu0 0.0
    %3683 = vmatpush1.msra.mxu0 0.0
    %3684 = vmatprep.subr.mxu0 0.0
    %3685 = vmatpush1.msra.mxu0 0.0
    %3686 = vmatprep.mubr.f32.mxu0 0.0
    %3687 = vmatmul.mubr.f32.gmra.mrb[0].mxu0 %v3617
    %v3688 = vpop.f32.mrb[0].mxu0
    %v3689 = vadd.f32 %v3608, %v3688
    %v3690 = vpop.f32.mrb[0].mxu0
    %3691 = vmatprep.mubr.f32.mxu0 0.0
    %3692 = vmatmul.mubr.f32.gmra.mrb[0].mxu0 %v3620
    %v3693 = vpop.f32.mrb[0].mxu0
    %v3694 = vadd.f32 %v3613, %v3693
    %v3695 = vpop.f32.mrb[0].mxu0
    %3696 = vdwg.mxu0
    %v3698 = vlaneseq
    %v3699 = vshrl.u32 %v3698, 7
    %v3700 = vsub.s32 0, %v3699
    %v3701 = vrot.slane %v2601, %v3700
    %v3703 = vadd.f32 %v3689, %v3701
    %v3704 = vadd.f32 %v3694, %v3701
    %vm3705 = vcmp.ge.f32.partialorder %v3703, 0.0
    %vm3706 = vcmp.ge.f32.partialorder %v3704, 0.0
    %v3707 = vmul.f32 %v3703, 0.1
    %v3708 = vmul.f32 %v3704, 0.1
    %v3709 = vsel %vm3705, %v3703, %v3707
    %v3710 = vsel %vm3706, %v3704, %v3708
    %v3711 = vsel %vm1223, %v3709, 0.0
    %v3712 = vsel %vm1223, %v3710, 0.0
    %v3713 = vadd.f32 %v3711, %v3712
    %v3714 = vrot.slane %v3713, 4
    %v3715 = vadd.f32 %v3713, %v3714
    %v3716 = vrot.slane %v3715, 2
    %v3717 = vadd.f32 %v3715, %v3716
    %v3718 = vrot.slane %v3717, 1
    %v3719 = vadd.f32 %v3717, %v3718
    %v3720 = vmul.f32 %v3719, %v835
    %v3721 = vsub.f32 %v3709, %v3720
    %v3722 = vsub.f32 %v3710, %v3720
    %v3723 = vmul.f32 %v3721, %v3721
    %v3724 = vmul.f32 %v3722, %v3722
    %v3725 = vsel %vm1223, %v3723, 0.0
    %v3726 = vsel %vm1223, %v3724, 0.0
    %v3727 = vadd.f32 %v3725, %v3726
    %v3728 = vrot.slane %v3727, 4
    %v3729 = vadd.f32 %v3727, %v3728
    %v3730 = vrot.slane %v3729, 2
    %v3731 = vadd.f32 %v3729, %v3730
    %v3732 = vrot.slane %v3731, 1
    %v3733 = vadd.f32 %v3731, %v3732
    %v3734 = vmul.f32 %v3733, %v835
    %v3735 = vadd.f32 %v3734, 1e-05
    %v3736 = vrsqrt.pop %v3735
    %v3737 = vmul.f32 %v3721, %v3736
    %v3738 = vmul.f32 %v3722, %v3736
    %v3740 = vlaneseq
    %v3741 = vshrl.u32 %v3740, 7
    %v3742 = vsub.s32 0, %v3741
    %v3743 = vrot.slane %v2603, %v3742
    %v3745 = vmul.f32 %v3737, %v3743
    %v3746 = vmul.f32 %v3738, %v3743
    %v3748 = vlaneseq
    %v3749 = vshrl.u32 %v3748, 7
    %v3750 = vsub.s32 0, %v3749
    %v3751 = vrot.slane %v2605, %v3750
    %v3753 = vadd.f32 %v3745, %v3751
    %v3754 = vadd.f32 %v3746, %v3751
    %v3756 = vlaneseq
    %v3757 = vshrl.u32 %v3756, 7
    %v3758 = vsub.s32 0, %v3757
    %v3759 = vrot.slane %v2616, %v3758
    %v3762 = vsel %vm1223, %v3753, 0
    %v3765 = vsel %vm1223, %v3754, 0
    %3767 = vmatprep.subr.mxu0 0.0
    %3768 = vmatpush1.msra.mxu0 %v2607
    %3769 = vmatprep.subr.mxu0 0.0
    %3770 = vmatpush1.msra.mxu0 %v2608
    %3771 = vmatprep.subr.mxu0 0.0
    %3772 = vmatpush1.msra.mxu0 %v2609
    %3773 = vmatprep.subr.mxu0 0.0
    %3774 = vmatpush1.msra.mxu0 %v2610
    %3775 = vmatprep.subr.mxu0 0.0
    %3776 = vmatpush1.msra.mxu0 %v2611
    %3777 = vmatprep.subr.mxu0 0.0
    %3778 = vmatpush1.msra.mxu0 %v2612
    %3779 = vmatprep.subr.mxu0 0.0
    %3780 = vmatpush1.msra.mxu0 %v2613
    %3781 = vmatprep.subr.mxu0 0.0
    %3782 = vmatpush1.msra.mxu0 %v2614
    %3783 = vmatprep.subr.mxu0 0.0
    %3784 = vmatpush1.msra.mxu0 0.0
    %3785 = vmatprep.subr.mxu0 0.0
    %3786 = vmatpush1.msra.mxu0 0.0
    %3787 = vmatprep.subr.mxu0 0.0
    %3788 = vmatpush1.msra.mxu0 0.0
    %3789 = vmatprep.subr.mxu0 0.0
    %3790 = vmatpush1.msra.mxu0 0.0
    %3791 = vmatprep.subr.mxu0 0.0
    %3792 = vmatpush1.msra.mxu0 0.0
    %3793 = vmatprep.subr.mxu0 0.0
    %3794 = vmatpush1.msra.mxu0 0.0
    %3795 = vmatprep.subr.mxu0 0.0
    %3796 = vmatpush1.msra.mxu0 0.0
    %3797 = vmatprep.subr.mxu0 0.0
    %3798 = vmatpush1.msra.mxu0 0.0
    %3799 = vmatprep.subr.mxu0 0.0
    %3800 = vmatpush1.msra.mxu0 0.0
    %3801 = vmatprep.subr.mxu0 0.0
    %3802 = vmatpush1.msra.mxu0 0.0
    %3803 = vmatprep.subr.mxu0 0.0
    %3804 = vmatpush1.msra.mxu0 0.0
    %3805 = vmatprep.subr.mxu0 0.0
    %3806 = vmatpush1.msra.mxu0 0.0
    %3807 = vmatprep.subr.mxu0 0.0
    %3808 = vmatpush1.msra.mxu0 0.0
    %3809 = vmatprep.subr.mxu0 0.0
    %3810 = vmatpush1.msra.mxu0 0.0
    %3811 = vmatprep.subr.mxu0 0.0
    %3812 = vmatpush1.msra.mxu0 0.0
    %3813 = vmatprep.subr.mxu0 0.0
    %3814 = vmatpush1.msra.mxu0 0.0
    %3815 = vmatprep.subr.mxu0 0.0
    %3816 = vmatpush1.msra.mxu0 0.0
    %3817 = vmatprep.subr.mxu0 0.0
    %3818 = vmatpush1.msra.mxu0 0.0
    %3819 = vmatprep.subr.mxu0 0.0
    %3820 = vmatpush1.msra.mxu0 0.0
    %3821 = vmatprep.subr.mxu0 0.0
    %3822 = vmatpush1.msra.mxu0 0.0
    %3823 = vmatprep.subr.mxu0 0.0
    %3824 = vmatpush1.msra.mxu0 0.0
    %3825 = vmatprep.subr.mxu0 0.0
    %3826 = vmatpush1.msra.mxu0 0.0
    %3827 = vmatprep.subr.mxu0 0.0
    %3828 = vmatpush1.msra.mxu0 0.0
    %3829 = vmatprep.subr.mxu0 0.0
    %3830 = vmatpush1.msra.mxu0 0.0
    %3831 = vmatprep.mubr.f32.mxu0 0.0
    %3832 = vmatmul.mubr.f32.gmra.mrb[0].mxu0 %v3762
    %v3833 = vpop.f32.mrb[0].mxu0
    %v3834 = vadd.f32 %v3759, %v3833
    %v3835 = vpop.f32.mrb[0].mxu0
    %3836 = vmatprep.mubr.f32.mxu0 0.0
    %3837 = vmatmul.mubr.f32.gmra.mrb[0].mxu0 %v3765
    %v3838 = vpop.f32.mrb[0].mxu0
    %v3839 = vadd.f32 %v3759, %v3838
    %v3840 = vpop.f32.mrb[0].mxu0
    %3841 = vdwg.mxu0
    %vm3842 = vcmp.ge.f32.partialorder %v3834, 0.0
    %vm3843 = vcmp.ge.f32.partialorder %v3839, 0.0
    %v3844 = vmul.f32 %v3834, 0.1
    %v3845 = vmul.f32 %v3839, 0.1
    %v3846 = vsel %vm3842, %v3834, %v3844
    %v3847 = vsel %vm3843, %v3839, %v3845
    %v3848 = vsel %vm1223, %v3846, 0.0
    %v3849 = vsel %vm1223, %v3847, 0.0
    %v3850 = vadd.f32 %v3848, %v3849
    %v3851 = vrot.slane %v3850, 4
    %v3852 = vadd.f32 %v3850, %v3851
    %v3853 = vrot.slane %v3852, 2
    %v3854 = vadd.f32 %v3852, %v3853
    %v3855 = vrot.slane %v3854, 1
    %v3856 = vadd.f32 %v3854, %v3855
    %v3857 = vmul.f32 %v3856, %v835
    %v3858 = vsub.f32 %v3846, %v3857
    %v3859 = vsub.f32 %v3847, %v3857
    %v3860 = vmul.f32 %v3858, %v3858
    %v3861 = vmul.f32 %v3859, %v3859
    %v3862 = vsel %vm1223, %v3860, 0.0
    %v3863 = vsel %vm1223, %v3861, 0.0
    %v3864 = vadd.f32 %v3862, %v3863
    %v3865 = vrot.slane %v3864, 4
    %v3866 = vadd.f32 %v3864, %v3865
    %v3867 = vrot.slane %v3866, 2
    %v3868 = vadd.f32 %v3866, %v3867
    %v3869 = vrot.slane %v3868, 1
    %v3870 = vadd.f32 %v3868, %v3869
    %v3871 = vmul.f32 %v3870, %v835
    %v3872 = vadd.f32 %v3871, 1e-05
    %v3873 = vrsqrt.pop %v3872
    %v3874 = vmul.f32 %v3858, %v3873
    %v3875 = vmul.f32 %v3859, %v3873
    %v3877 = vlaneseq
    %v3878 = vshrl.u32 %v3877, 7
    %v3879 = vsub.s32 0, %v3878
    %v3880 = vrot.slane %v2618, %v3879
    %v3882 = vmul.f32 %v3874, %v3880
    %v3883 = vmul.f32 %v3875, %v3880
    %v3885 = vlaneseq
    %v3886 = vshrl.u32 %v3885, 7
    %v3887 = vsub.s32 0, %v3886
    %v3888 = vrot.slane %v2620, %v3887
    %v3890 = vadd.f32 %v3882, %v3888
    %v3891 = vadd.f32 %v3883, %v3888
    %v3893 = vlaneseq
    %v3894 = vshrl.u32 %v3893, 7
    %v3895 = vsub.s32 0, %v3894
    %v3896 = vrot.slane %v2631, %v3895
    %v3899 = vsel %vm1223, %v3890, 0
    %v3902 = vsel %vm1223, %v3891, 0
    %3904 = vmatprep.subr.mxu0 0.0
    %3905 = vmatpush1.msra.mxu0 %v2622
    %3906 = vmatprep.subr.mxu0 0.0
    %3907 = vmatpush1.msra.mxu0 %v2623
    %3908 = vmatprep.subr.mxu0 0.0
    %3909 = vmatpush1.msra.mxu0 %v2624
    %3910 = vmatprep.subr.mxu0 0.0
    %3911 = vmatpush1.msra.mxu0 %v2625
    %3912 = vmatprep.subr.mxu0 0.0
    %3913 = vmatpush1.msra.mxu0 %v2626
    %3914 = vmatprep.subr.mxu0 0.0
    %3915 = vmatpush1.msra.mxu0 %v2627
    %3916 = vmatprep.subr.mxu0 0.0
    %3917 = vmatpush1.msra.mxu0 %v2628
    %3918 = vmatprep.subr.mxu0 0.0
    %3919 = vmatpush1.msra.mxu0 %v2629
    %3920 = vmatprep.subr.mxu0 0.0
    %3921 = vmatpush1.msra.mxu0 0.0
    %3922 = vmatprep.subr.mxu0 0.0
    %3923 = vmatpush1.msra.mxu0 0.0
    %3924 = vmatprep.subr.mxu0 0.0
    %3925 = vmatpush1.msra.mxu0 0.0
    %3926 = vmatprep.subr.mxu0 0.0
    %3927 = vmatpush1.msra.mxu0 0.0
    %3928 = vmatprep.subr.mxu0 0.0
    %3929 = vmatpush1.msra.mxu0 0.0
    %3930 = vmatprep.subr.mxu0 0.0
    %3931 = vmatpush1.msra.mxu0 0.0
    %3932 = vmatprep.subr.mxu0 0.0
    %3933 = vmatpush1.msra.mxu0 0.0
    %3934 = vmatprep.subr.mxu0 0.0
    %3935 = vmatpush1.msra.mxu0 0.0
    %3936 = vmatprep.subr.mxu0 0.0
    %3937 = vmatpush1.msra.mxu0 0.0
    %3938 = vmatprep.subr.mxu0 0.0
    %3939 = vmatpush1.msra.mxu0 0.0
    %3940 = vmatprep.subr.mxu0 0.0
    %3941 = vmatpush1.msra.mxu0 0.0
    %3942 = vmatprep.subr.mxu0 0.0
    %3943 = vmatpush1.msra.mxu0 0.0
    %3944 = vmatprep.subr.mxu0 0.0
    %3945 = vmatpush1.msra.mxu0 0.0
    %3946 = vmatprep.subr.mxu0 0.0
    %3947 = vmatpush1.msra.mxu0 0.0
    %3948 = vmatprep.subr.mxu0 0.0
    %3949 = vmatpush1.msra.mxu0 0.0
    %3950 = vmatprep.subr.mxu0 0.0
    %3951 = vmatpush1.msra.mxu0 0.0
    %3952 = vmatprep.subr.mxu0 0.0
    %3953 = vmatpush1.msra.mxu0 0.0
    %3954 = vmatprep.subr.mxu0 0.0
    %3955 = vmatpush1.msra.mxu0 0.0
    %3956 = vmatprep.subr.mxu0 0.0
    %3957 = vmatpush1.msra.mxu0 0.0
    %3958 = vmatprep.subr.mxu0 0.0
    %3959 = vmatpush1.msra.mxu0 0.0
    %3960 = vmatprep.subr.mxu0 0.0
    %3961 = vmatpush1.msra.mxu0 0.0
    %3962 = vmatprep.subr.mxu0 0.0
    %3963 = vmatpush1.msra.mxu0 0.0
    %3964 = vmatprep.subr.mxu0 0.0
    %3965 = vmatpush1.msra.mxu0 0.0
    %3966 = vmatprep.subr.mxu0 0.0
    %3967 = vmatpush1.msra.mxu0 0.0
    %3968 = vmatprep.mubr.f32.mxu0 0.0
    %3969 = vmatmul.mubr.f32.gmra.mrb[0].mxu0 %v3899
    %v3970 = vpop.f32.mrb[0].mxu0
    %v3971 = vadd.f32 %v3896, %v3970
    %v3972 = vpop.f32.mrb[0].mxu0
    %3973 = vmatprep.mubr.f32.mxu0 0.0
    %3974 = vmatmul.mubr.f32.gmra.mrb[0].mxu0 %v3902
    %v3975 = vpop.f32.mrb[0].mxu0
    %v3976 = vadd.f32 %v3896, %v3975
    %v3977 = vpop.f32.mrb[0].mxu0
    %3978 = vdwg.mxu0
    %3979 = vmatprep.subr.mxu0 0.0
    %3980 = vmatpush1.msra.mxu0 %v3971
    %3981 = vmatprep.subr.mxu0 0.0
    %3982 = vmatpush1.msra.mxu0 %v3976
    %3983 = vmatprep.subr.mxu0 0.0
    %3984 = vmatpush1.msra.mxu0 0.0
    %3985 = vmatprep.subr.mxu0 0.0
    %3986 = vmatpush1.msra.mxu0 0.0
    %3987 = vmatprep.subr.mxu0 0.0
    %3988 = vmatpush1.msra.mxu0 0.0
    %3989 = vmatprep.subr.mxu0 0.0
    %3990 = vmatpush1.msra.mxu0 0.0
    %3991 = vmatprep.subr.mxu0 0.0
    %3992 = vmatpush1.msra.mxu0 0.0
    %3993 = vmatprep.subr.mxu0 0.0
    %3994 = vmatpush1.msra.mxu0 0.0
    %3995 = vmatprep.subr.mxu0 0.0
    %3996 = vmatpush1.msra.mxu0 0.0
    %3997 = vmatprep.subr.mxu0 0.0
    %3998 = vmatpush1.msra.mxu0 0.0
    %3999 = vmatprep.subr.mxu0 0.0
    %4000 = vmatpush1.msra.mxu0 0.0
    %4001 = vmatprep.subr.mxu0 0.0
    %4002 = vmatpush1.msra.mxu0 0.0
    %4003 = vmatprep.subr.mxu0 0.0
    %4004 = vmatpush1.msra.mxu0 0.0
    %4005 = vmatprep.subr.mxu0 0.0
    %4006 = vmatpush1.msra.mxu0 0.0
    %4007 = vmatprep.subr.mxu0 0.0
    %4008 = vmatpush1.msra.mxu0 0.0
    %4009 = vmatprep.subr.mxu0 0.0
    %4010 = vmatpush1.msra.mxu0 0.0
    %4011 = vmatprep.subr.mxu0 0.0
    %4012 = vmatpush1.msra.mxu0 0.0
    %4013 = vmatprep.subr.mxu0 0.0
    %4014 = vmatpush1.msra.mxu0 0.0
    %4015 = vmatprep.subr.mxu0 0.0
    %4016 = vmatpush1.msra.mxu0 0.0
    %4017 = vmatprep.subr.mxu0 0.0
    %4018 = vmatpush1.msra.mxu0 0.0
    %4019 = vmatprep.subr.mxu0 0.0
    %4020 = vmatpush1.msra.mxu0 0.0
    %4021 = vmatprep.subr.mxu0 0.0
    %4022 = vmatpush1.msra.mxu0 0.0
    %4023 = vmatprep.subr.mxu0 0.0
    %4024 = vmatpush1.msra.mxu0 0.0
    %4025 = vmatprep.subr.mxu0 0.0
    %4026 = vmatpush1.msra.mxu0 0.0
    %4027 = vmatprep.subr.mxu0 0.0
    %4028 = vmatpush1.msra.mxu0 0.0
    %4029 = vmatprep.subr.mxu0 0.0
    %4030 = vmatpush1.msra.mxu0 0.0
    %4031 = vmatprep.subr.mxu0 0.0
    %4032 = vmatpush1.msra.mxu0 0.0
    %4033 = vmatprep.subr.mxu0 0.0
    %4034 = vmatpush1.msra.mxu0 0.0
    %4035 = vmatprep.subr.mxu0 0.0
    %4036 = vmatpush1.msra.mxu0 0.0
    %4037 = vmatprep.subr.mxu0 0.0
    %4038 = vmatpush1.msra.mxu0 0.0
    %4039 = vmatprep.subr.mxu0 0.0
    %4040 = vmatpush1.msra.mxu0 0.0
    %4041 = vmatprep.subr.mxu0 0.0
    %4042 = vmatpush1.msra.mxu0 0.0
    %4043 = vmatprep.mubr.f32.mxu0 0.0
    %4044 = vmatmul.mubr.f32.gmra.mrb[0].mxu0 %v2000
    %v4045 = vpop.f32.mrb[0].mxu0
    %v4046 = vadd.f32 0.0, %v4045
    %v4047 = vpop.f32.mrb[0].mxu0
    %4048 = vdwg.mxu0
    %v4049 = vsel %vm825, %v2528, 0.0
    %v4050 = vrot.slane %v4049, 4
    %v4051 = vadd.f32 %v4049, %v4050
    %v4052 = vrot.slane %v4051, 2
    %v4053 = vadd.f32 %v4051, %v4052
    %v4054 = vrot.slane %v4053, 1
    %v4055 = vadd.f32 %v4053, %v4054
    %v4056 = vmul.f32 %v4055, %v2079
    %v4057 = vsub.f32 %v2528, %v4056
    %v4058 = vmul.f32 %v4057, %v4057
    %v4059 = vsel %vm825, %v4058, 0.0
    %v4060 = vrot.slane %v4059, 4
    %v4061 = vadd.f32 %v4059, %v4060
    %v4062 = vrot.slane %v4061, 2
    %v4063 = vadd.f32 %v4061, %v4062
    %v4064 = vrot.slane %v4063, 1
    %v4065 = vadd.f32 %v4063, %v4064
    %v4066 = vmul.f32 %v4065, %v2079
    %v4067 = vadd.f32 %v4066, 1e-05
    %v4068 = vrsqrt.pop %v4067
    %v4069 = vmul.f32 %v4057, %v4068
    %v4071 = vlaneseq
    %v4072 = vshrl.u32 %v4071, 7
    %v4073 = vsub.s32 0, %v4072
    %v4074 = vrot.slane %v2633, %v4073
    %v4076 = vmul.f32 %v4069, %v4074
    %v4078 = vlaneseq
    %v4079 = vshrl.u32 %v4078, 7
    %v4080 = vsub.s32 0, %v4079
    %v4081 = vrot.slane %v2635, %v4080
    %v4083 = vadd.f32 %v4076, %v4081
    %v4084 = vsel %vm1223, %v4046, 0.0
    %v4085 = vrot.slane %v4084, 4
    %v4086 = vadd.f32 %v4084, %v4085
    %v4087 = vrot.slane %v4086, 2
    %v4088 = vadd.f32 %v4086, %v4087
    %v4089 = vrot.slane %v4088, 1
    %v4090 = vadd.f32 %v4088, %v4089
    %v4091 = vmul.f32 %v4090, %v2079
    %v4092 = vsub.f32 %v4046, %v4091
    %v4093 = vmul.f32 %v4092, %v4092
    %v4094 = vsel %vm1223, %v4093, 0.0
    %v4095 = vrot.slane %v4094, 4
    %v4096 = vadd.f32 %v4094, %v4095
    %v4097 = vrot.slane %v4096, 2
    %v4098 = vadd.f32 %v4096, %v4097
    %v4099 = vrot.slane %v4098, 1
    %v4100 = vadd.f32 %v4098, %v4099
    %v4101 = vmul.f32 %v4100, %v2079
    %v4102 = vadd.f32 %v4101, 1e-05
    %v4103 = vrsqrt.pop %v4102
    %v4104 = vmul.f32 %v4092, %v4103
    %v4106 = vlaneseq
    %v4107 = vshrl.u32 %v4106, 7
    %v4108 = vsub.s32 0, %v4107
    %v4109 = vrot.slane %v2640, %v4108
    %v4111 = vmul.f32 %v4104, %v4109
    %v4113 = vlaneseq
    %v4114 = vshrl.u32 %v4113, 7
    %v4115 = vsub.s32 0, %v4114
    %v4116 = vrot.slane %v2642, %v4115
    %v4118 = vadd.f32 %v4111, %v4116
    %v4120 = vsel %vm1223, %v4118, 0
    %4122 = vmatprep.subr.mxu0 0.0
    %4123 = vmatpush1.msra.mxu0 %v2644
    %4124 = vmatprep.subr.mxu0 0.0
    %4125 = vmatpush1.msra.mxu0 %v2645
    %4126 = vmatprep.subr.mxu0 0.0
    %4127 = vmatpush1.msra.mxu0 %v2646
    %4128 = vmatprep.subr.mxu0 0.0
    %4129 = vmatpush1.msra.mxu0 %v2647
    %4130 = vmatprep.subr.mxu0 0.0
    %4131 = vmatpush1.msra.mxu0 %v2648
    %4132 = vmatprep.subr.mxu0 0.0
    %4133 = vmatpush1.msra.mxu0 %v2649
    %4134 = vmatprep.subr.mxu0 0.0
    %4135 = vmatpush1.msra.mxu0 %v2650
    %4136 = vmatprep.subr.mxu0 0.0
    %4137 = vmatpush1.msra.mxu0 %v2651
    %4138 = vmatprep.subr.mxu0 0.0
    %4139 = vmatpush1.msra.mxu0 0.0
    %4140 = vmatprep.subr.mxu0 0.0
    %4141 = vmatpush1.msra.mxu0 0.0
    %4142 = vmatprep.subr.mxu0 0.0
    %4143 = vmatpush1.msra.mxu0 0.0
    %4144 = vmatprep.subr.mxu0 0.0
    %4145 = vmatpush1.msra.mxu0 0.0
    %4146 = vmatprep.subr.mxu0 0.0
    %4147 = vmatpush1.msra.mxu0 0.0
    %4148 = vmatprep.subr.mxu0 0.0
    %4149 = vmatpush1.msra.mxu0 0.0
    %4150 = vmatprep.subr.mxu0 0.0
    %4151 = vmatpush1.msra.mxu0 0.0
    %4152 = vmatprep.subr.mxu0 0.0
    %4153 = vmatpush1.msra.mxu0 0.0
    %4154 = vmatprep.subr.mxu0 0.0
    %4155 = vmatpush1.msra.mxu0 0.0
    %4156 = vmatprep.subr.mxu0 0.0
    %4157 = vmatpush1.msra.mxu0 0.0
    %4158 = vmatprep.subr.mxu0 0.0
    %4159 = vmatpush1.msra.mxu0 0.0
    %4160 = vmatprep.subr.mxu0 0.0
    %4161 = vmatpush1.msra.mxu0 0.0
    %4162 = vmatprep.subr.mxu0 0.0
    %4163 = vmatpush1.msra.mxu0 0.0
    %4164 = vmatprep.subr.mxu0 0.0
    %4165 = vmatpush1.msra.mxu0 0.0
    %4166 = vmatprep.subr.mxu0 0.0
    %4167 = vmatpush1.msra.mxu0 0.0
    %4168 = vmatprep.subr.mxu0 0.0
    %4169 = vmatpush1.msra.mxu0 0.0
    %4170 = vmatprep.subr.mxu0 0.0
    %4171 = vmatpush1.msra.mxu0 0.0
    %4172 = vmatprep.subr.mxu0 0.0
    %4173 = vmatpush1.msra.mxu0 0.0
    %4174 = vmatprep.subr.mxu0 0.0
    %4175 = vmatpush1.msra.mxu0 0.0
    %4176 = vmatprep.subr.mxu0 0.0
    %4177 = vmatpush1.msra.mxu0 0.0
    %4178 = vmatprep.subr.mxu0 0.0
    %4179 = vmatpush1.msra.mxu0 0.0
    %4180 = vmatprep.subr.mxu0 0.0
    %4181 = vmatpush1.msra.mxu0 0.0
    %4182 = vmatprep.subr.mxu0 0.0
    %4183 = vmatpush1.msra.mxu0 0.0
    %4184 = vmatprep.subr.mxu0 0.0
    %4185 = vmatpush1.msra.mxu0 0.0
    %4186 = vmatprep.mubr.f32.mxu0 0.0
    %4187 = vmatmul.mubr.f32.gmra.mrb[0].mxu0 %v4120
    %v4188 = vpop.f32.mrb[0].mxu0
    %v4189 = vadd.f32 0.0, %v4188
    %v4190 = vpop.f32.mrb[0].mxu0
    %4191 = vdwg.mxu0
    %v4193 = vsel %vm825, %v4083, 0
    %4195 = vmatprep.subr.mxu0 0.0
    %4196 = vmatpush1.msra.mxu0 %v2637
    %4197 = vmatprep.subr.mxu0 0.0
    %4198 = vmatpush1.msra.mxu0 %v2638
    %4199 = vmatprep.subr.mxu0 0.0
    %4200 = vmatpush1.msra.mxu0 0.0
    %4201 = vmatprep.subr.mxu0 0.0
    %4202 = vmatpush1.msra.mxu0 0.0
    %4203 = vmatprep.subr.mxu0 0.0
    %4204 = vmatpush1.msra.mxu0 0.0
    %4205 = vmatprep.subr.mxu0 0.0
    %4206 = vmatpush1.msra.mxu0 0.0
    %4207 = vmatprep.subr.mxu0 0.0
    %4208 = vmatpush1.msra.mxu0 0.0
    %4209 = vmatprep.subr.mxu0 0.0
    %4210 = vmatpush1.msra.mxu0 0.0
    %4211 = vmatprep.subr.mxu0 0.0
    %4212 = vmatpush1.msra.mxu0 0.0
    %4213 = vmatprep.subr.mxu0 0.0
    %4214 = vmatpush1.msra.mxu0 0.0
    %4215 = vmatprep.subr.mxu0 0.0
    %4216 = vmatpush1.msra.mxu0 0.0
    %4217 = vmatprep.subr.mxu0 0.0
    %4218 = vmatpush1.msra.mxu0 0.0
    %4219 = vmatprep.subr.mxu0 0.0
    %4220 = vmatpush1.msra.mxu0 0.0
    %4221 = vmatprep.subr.mxu0 0.0
    %4222 = vmatpush1.msra.mxu0 0.0
    %4223 = vmatprep.subr.mxu0 0.0
    %4224 = vmatpush1.msra.mxu0 0.0
    %4225 = vmatprep.subr.mxu0 0.0
    %4226 = vmatpush1.msra.mxu0 0.0
    %4227 = vmatprep.subr.mxu0 0.0
    %4228 = vmatpush1.msra.mxu0 0.0
    %4229 = vmatprep.subr.mxu0 0.0
    %4230 = vmatpush1.msra.mxu0 0.0
    %4231 = vmatprep.subr.mxu0 0.0
    %4232 = vmatpush1.msra.mxu0 0.0
    %4233 = vmatprep.subr.mxu0 0.0
    %4234 = vmatpush1.msra.mxu0 0.0
    %4235 = vmatprep.subr.mxu0 0.0
    %4236 = vmatpush1.msra.mxu0 0.0
    %4237 = vmatprep.subr.mxu0 0.0
    %4238 = vmatpush1.msra.mxu0 0.0
    %4239 = vmatprep.subr.mxu0 0.0
    %4240 = vmatpush1.msra.mxu0 0.0
    %4241 = vmatprep.subr.mxu0 0.0
    %4242 = vmatpush1.msra.mxu0 0.0
    %4243 = vmatprep.subr.mxu0 0.0
    %4244 = vmatpush1.msra.mxu0 0.0
    %4245 = vmatprep.subr.mxu0 0.0
    %4246 = vmatpush1.msra.mxu0 0.0
    %4247 = vmatprep.subr.mxu0 0.0
    %4248 = vmatpush1.msra.mxu0 0.0
    %4249 = vmatprep.subr.mxu0 0.0
    %4250 = vmatpush1.msra.mxu0 0.0
    %4251 = vmatprep.subr.mxu0 0.0
    %4252 = vmatpush1.msra.mxu0 0.0
    %4253 = vmatprep.subr.mxu0 0.0
    %4254 = vmatpush1.msra.mxu0 0.0
    %4255 = vmatprep.subr.mxu0 0.0
    %4256 = vmatpush1.msra.mxu0 0.0
    %4257 = vmatprep.subr.mxu0 0.0
    %4258 = vmatpush1.msra.mxu0 0.0
    %4259 = vmatprep.mubr.f32.mxu0 0.0
    %4260 = vmatmul.mubr.f32.gmra.mrb[0].mxu0 %v4193
    %v4261 = vpop.f32.mrb[0].mxu0
    %v4262 = vadd.f32 %v4189, %v4261
    %v4263 = vpop.f32.mrb[0].mxu0
    %4264 = vdwg.mxu0
    %v4266 = vlaneseq
    %v4267 = vshrl.u32 %v4266, 7
    %v4268 = vsub.s32 0, %v4267
    %v4269 = vrot.slane %v2653, %v4268
    %v4271 = vadd.f32 %v4262, %v4269
    %vm4272 = vcmp.ge.f32.partialorder %v4271, 0.0
    %v4273 = vmul.f32 %v4271, 0.1
    %v4274 = vsel %vm4272, %v4271, %v4273
    %v4275 = vsel %vm2299, %v4274, 0.0
    %v4276 = vrot.slane %v4275, 4
    %v4277 = vadd.f32 %v4275, %v4276
    %v4278 = vrot.slane %v4277, 2
    %v4279 = vadd.f32 %v4277, %v4278
    %v4280 = vrot.slane %v4279, 1
    %v4281 = vadd.f32 %v4279, %v4280
    %v4282 = vmul.f32 %v4281, %v2079
    %v4283 = vsub.f32 %v4274, %v4282
    %v4284 = vmul.f32 %v4283, %v4283
    %v4285 = vsel %vm2299, %v4284, 0.0
    %v4286 = vrot.slane %v4285, 4
    %v4287 = vadd.f32 %v4285, %v4286
    %v4288 = vrot.slane %v4287, 2
    %v4289 = vadd.f32 %v4287, %v4288
    %v4290 = vrot.slane %v4289, 1
    %v4291 = vadd.f32 %v4289, %v4290
    %v4292 = vmul.f32 %v4291, %v2079
    %v4293 = vadd.f32 %v4292, 1e-05
    %v4294 = vrsqrt.pop %v4293
    %v4295 = vmul.f32 %v4283, %v4294
    %v4297 = vlaneseq
    %v4298 = vshrl.u32 %v4297, 7
    %v4299 = vsub.s32 0, %v4298
    %v4300 = vrot.slane %v2655, %v4299
    %v4302 = vmul.f32 %v4295, %v4300
    %v4304 = vlaneseq
    %v4305 = vshrl.u32 %v4304, 7
    %v4306 = vsub.s32 0, %v4305
    %v4307 = vrot.slane %v2657, %v4306
    %v4309 = vadd.f32 %v4302, %v4307
    %v4311 = vlaneseq
    %v4312 = vshrl.u32 %v4311, 7
    %v4313 = vsub.s32 0, %v4312
    %v4314 = vrot.slane %v2670, %v4313
    %v4317 = vsel %vm2299, %v4309, 0
    %4319 = vmatprep.subr.mxu0 0.0
    %4320 = vmatpush1.msra.mxu0 %v2659
    %4321 = vmatprep.subr.mxu0 0.0
    %4322 = vmatpush1.msra.mxu0 %v2660
    %4323 = vmatprep.subr.mxu0 0.0
    %4324 = vmatpush1.msra.mxu0 %v2661
    %4325 = vmatprep.subr.mxu0 0.0
    %4326 = vmatpush1.msra.mxu0 %v2662
    %4327 = vmatprep.subr.mxu0 0.0
    %4328 = vmatpush1.msra.mxu0 %v2663
    %4329 = vmatprep.subr.mxu0 0.0
    %4330 = vmatpush1.msra.mxu0 %v2664
    %4331 = vmatprep.subr.mxu0 0.0
    %4332 = vmatpush1.msra.mxu0 %v2665
    %4333 = vmatprep.subr.mxu0 0.0
    %4334 = vmatpush1.msra.mxu0 %v2666
    %4335 = vmatprep.subr.mxu0 0.0
    %4336 = vmatpush1.msra.mxu0 %v2667
    %4337 = vmatprep.subr.mxu0 0.0
    %4338 = vmatpush1.msra.mxu0 %v2668
    %4339 = vmatprep.subr.mxu0 0.0
    %4340 = vmatpush1.msra.mxu0 0.0
    %4341 = vmatprep.subr.mxu0 0.0
    %4342 = vmatpush1.msra.mxu0 0.0
    %4343 = vmatprep.subr.mxu0 0.0
    %4344 = vmatpush1.msra.mxu0 0.0
    %4345 = vmatprep.subr.mxu0 0.0
    %4346 = vmatpush1.msra.mxu0 0.0
    %4347 = vmatprep.subr.mxu0 0.0
    %4348 = vmatpush1.msra.mxu0 0.0
    %4349 = vmatprep.subr.mxu0 0.0
    %4350 = vmatpush1.msra.mxu0 0.0
    %4351 = vmatprep.subr.mxu0 0.0
    %4352 = vmatpush1.msra.mxu0 0.0
    %4353 = vmatprep.subr.mxu0 0.0
    %4354 = vmatpush1.msra.mxu0 0.0
    %4355 = vmatprep.subr.mxu0 0.0
    %4356 = vmatpush1.msra.mxu0 0.0
    %4357 = vmatprep.subr.mxu0 0.0
    %4358 = vmatpush1.msra.mxu0 0.0
    %4359 = vmatprep.subr.mxu0 0.0
    %4360 = vmatpush1.msra.mxu0 0.0
    %4361 = vmatprep.subr.mxu0 0.0
    %4362 = vmatpush1.msra.mxu0 0.0
    %4363 = vmatprep.subr.mxu0 0.0
    %4364 = vmatpush1.msra.mxu0 0.0
    %4365 = vmatprep.subr.mxu0 0.0
    %4366 = vmatpush1.msra.mxu0 0.0
    %4367 = vmatprep.subr.mxu0 0.0
    %4368 = vmatpush1.msra.mxu0 0.0
    %4369 = vmatprep.subr.mxu0 0.0
    %4370 = vmatpush1.msra.mxu0 0.0
    %4371 = vmatprep.subr.mxu0 0.0
    %4372 = vmatpush1.msra.mxu0 0.0
    %4373 = vmatprep.subr.mxu0 0.0
    %4374 = vmatpush1.msra.mxu0 0.0
    %4375 = vmatprep.subr.mxu0 0.0
    %4376 = vmatpush1.msra.mxu0 0.0
    %4377 = vmatprep.subr.mxu0 0.0
    %4378 = vmatpush1.msra.mxu0 0.0
    %4379 = vmatprep.subr.mxu0 0.0
    %4380 = vmatpush1.msra.mxu0 0.0
    %4381 = vmatprep.subr.mxu0 0.0
    %4382 = vmatpush1.msra.mxu0 0.0
    %4383 = vmatprep.mubr.f32.mxu0 0.0
    %4384 = vmatmul.mubr.f32.gmra.mrb[0].mxu0 %v4317
    %v4385 = vpop.f32.mrb[0].mxu0
    %v4386 = vadd.f32 %v4314, %v4385
    %v4387 = vpop.f32.mrb[0].mxu0
    %4388 = vdwg.mxu0
    %vm4389 = vcmp.ge.f32.partialorder %v4386, 0.0
    %v4390 = vmul.f32 %v4386, 0.1
    %v4391 = vsel %vm4389, %v4386, %v4390
    %v4392 = vsel %vm2299, %v4391, 0.0
    %v4393 = vrot.slane %v4392, 4
    %v4394 = vadd.f32 %v4392, %v4393
    %v4395 = vrot.slane %v4394, 2
    %v4396 = vadd.f32 %v4394, %v4395
    %v4397 = vrot.slane %v4396, 1
    %v4398 = vadd.f32 %v4396, %v4397
    %v4399 = vmul.f32 %v4398, %v2079
    %v4400 = vsub.f32 %v4391, %v4399
    %v4401 = vmul.f32 %v4400, %v4400
    %v4402 = vsel %vm2299, %v4401, 0.0
    %v4403 = vrot.slane %v4402, 4
    %v4404 = vadd.f32 %v4402, %v4403
    %v4405 = vrot.slane %v4404, 2
    %v4406 = vadd.f32 %v4404, %v4405
    %v4407 = vrot.slane %v4406, 1
    %v4408 = vadd.f32 %v4406, %v4407
    %v4409 = vmul.f32 %v4408, %v2079
    %v4410 = vadd.f32 %v4409, 1e-05
    %v4411 = vrsqrt.pop %v4410
    %v4412 = vmul.f32 %v4400, %v4411
    %v4414 = vlaneseq
    %v4415 = vshrl.u32 %v4414, 7
    %v4416 = vsub.s32 0, %v4415
    %v4417 = vrot.slane %v2672, %v4416
    %v4419 = vmul.f32 %v4412, %v4417
    %v4421 = vlaneseq
    %v4422 = vshrl.u32 %v4421, 7
    %v4423 = vsub.s32 0, %v4422
    %v4424 = vrot.slane %v2674, %v4423
    %v4426 = vadd.f32 %v4419, %v4424
    %v4428 = vlaneseq
    %v4429 = vshrl.u32 %v4428, 7
    %v4430 = vsub.s32 0, %v4429
    %v4431 = vrot.slane %v2687, %v4430
    %v4434 = vsel %vm2299, %v4426, 0
    %4436 = vmatprep.subr.mxu0 0.0
    %4437 = vmatpush1.msra.mxu0 %v2676
    %4438 = vmatprep.subr.mxu0 0.0
    %4439 = vmatpush1.msra.mxu0 %v2677
    %4440 = vmatprep.subr.mxu0 0.0
    %4441 = vmatpush1.msra.mxu0 %v2678
    %4442 = vmatprep.subr.mxu0 0.0
    %4443 = vmatpush1.msra.mxu0 %v2679
    %4444 = vmatprep.subr.mxu0 0.0
    %4445 = vmatpush1.msra.mxu0 %v2680
    %4446 = vmatprep.subr.mxu0 0.0
    %4447 = vmatpush1.msra.mxu0 %v2681
    %4448 = vmatprep.subr.mxu0 0.0
    %4449 = vmatpush1.msra.mxu0 %v2682
    %4450 = vmatprep.subr.mxu0 0.0
    %4451 = vmatpush1.msra.mxu0 %v2683
    %4452 = vmatprep.subr.mxu0 0.0
    %4453 = vmatpush1.msra.mxu0 %v2684
    %4454 = vmatprep.subr.mxu0 0.0
    %4455 = vmatpush1.msra.mxu0 %v2685
    %4456 = vmatprep.subr.mxu0 0.0
    %4457 = vmatpush1.msra.mxu0 0.0
    %4458 = vmatprep.subr.mxu0 0.0
    %4459 = vmatpush1.msra.mxu0 0.0
    %4460 = vmatprep.subr.mxu0 0.0
    %4461 = vmatpush1.msra.mxu0 0.0
    %4462 = vmatprep.subr.mxu0 0.0
    %4463 = vmatpush1.msra.mxu0 0.0
    %4464 = vmatprep.subr.mxu0 0.0
    %4465 = vmatpush1.msra.mxu0 0.0
    %4466 = vmatprep.subr.mxu0 0.0
    %4467 = vmatpush1.msra.mxu0 0.0
    %4468 = vmatprep.subr.mxu0 0.0
    %4469 = vmatpush1.msra.mxu0 0.0
    %4470 = vmatprep.subr.mxu0 0.0
    %4471 = vmatpush1.msra.mxu0 0.0
    %4472 = vmatprep.subr.mxu0 0.0
    %4473 = vmatpush1.msra.mxu0 0.0
    %4474 = vmatprep.subr.mxu0 0.0
    %4475 = vmatpush1.msra.mxu0 0.0
    %4476 = vmatprep.subr.mxu0 0.0
    %4477 = vmatpush1.msra.mxu0 0.0
    %4478 = vmatprep.subr.mxu0 0.0
    %4479 = vmatpush1.msra.mxu0 0.0
    %4480 = vmatprep.subr.mxu0 0.0
    %4481 = vmatpush1.msra.mxu0 0.0
    %4482 = vmatprep.subr.mxu0 0.0
    %4483 = vmatpush1.msra.mxu0 0.0
    %4484 = vmatprep.subr.mxu0 0.0
    %4485 = vmatpush1.msra.mxu0 0.0
    %4486 = vmatprep.subr.mxu0 0.0
    %4487 = vmatpush1.msra.mxu0 0.0
    %4488 = vmatprep.subr.mxu0 0.0
    %4489 = vmatpush1.msra.mxu0 0.0
    %4490 = vmatprep.subr.mxu0 0.0
    %4491 = vmatpush1.msra.mxu0 0.0
    %4492 = vmatprep.subr.mxu0 0.0
    %4493 = vmatpush1.msra.mxu0 0.0
    %4494 = vmatprep.subr.mxu0 0.0
    %4495 = vmatpush1.msra.mxu0 0.0
    %4496 = vmatprep.subr.mxu0 0.0
    %4497 = vmatpush1.msra.mxu0 0.0
    %4498 = vmatprep.subr.mxu0 0.0
    %4499 = vmatpush1.msra.mxu0 0.0
    %4500 = vmatprep.mubr.f32.mxu0 0.0
    %4501 = vmatmul.mubr.f32.gmra.mrb[0].mxu0 %v4434
    %v4502 = vpop.f32.mrb[0].mxu0
    %v4503 = vadd.f32 %v4431, %v4502
    %v4504 = vpop.f32.mrb[0].mxu0
    %4505 = vdwg.mxu0
    %s4506 = scalar_lea.vmem %s33, 2
    %v4507 = vld [vmem:[%s4506] sm:$0x1]
    %s4508 = scalar_lea.vmem %s35, 2
    %v4509 = vld [vmem:[%s4508] sm:$0x1]
    %s4510 = scalar_lea.vmem [#allocation14], 32
    %v4511 = vld [vmem:[%s4510] sm:$0xff]
    %v4512 = vld [vmem:[%s4510 + $0x8] sm:$0xff]
    %s4513 = scalar_lea.vmem %s39, 2
    %v4514 = vld [vmem:[%s4513] sm:$0x1]
    %s4515 = scalar_lea.vmem %s41, 2
    %v4516 = vld [vmem:[%s4515] sm:$0x1]
    %s4517 = scalar_lea.vmem [#allocation15], 32
    %v4518 = vld [vmem:[%s4517] sm:$0xff]
    %v4519 = vld [vmem:[%s4517 + $0x8] sm:$0xff]
    %s4520 = scalar_lea.vmem %s45, 2
    %v4521 = vld [vmem:[%s4520] sm:$0x1]
    %s4522 = scalar_lea.vmem %s47, 2
    %v4523 = vld [vmem:[%s4522] sm:$0x1]
    %s4524 = scalar_lea.vmem [#allocation17], 48
    %v4525 = vld [vmem:[%s4524] sm:$0xff]
    %v4526 = vld [vmem:[%s4524 + $0x8] sm:$0xff]
    %v4527 = vld [vmem:[%s4524 + $0x10] sm:$0x7]
    %s4528 = scalar_lea.vmem [#allocation9], 2
    %v4529 = vld [vmem:[%s4528] sm:$0x1]
    %s4530 = scalar_lea.vmem %s29, 2
    %v4531 = vld [vmem:[%s4530] sm:$0x1]
    %s4532 = scalar_lea.vmem %s25, 2
    %v4533 = vld [vmem:[%s4532] sm:$0x1]
    %s4534 = scalar_lea.vmem [#allocation18], 128
    %v4535 = vld [vmem:[%s4534] sm:$0xff]
    %v4536 = vld [vmem:[%s4534 + $0x8] sm:$0xff]
    %v4537 = vld [vmem:[%s4534 + $0x10] sm:$0xff]
    %v4538 = vld [vmem:[%s4534 + $0x18] sm:$0xff]
    %v4539 = vld [vmem:[%s4534 + $0x20] sm:$0xff]
    %v4540 = vld [vmem:[%s4534 + $0x28] sm:$0xff]
    %v4541 = vld [vmem:[%s4534 + $0x30] sm:$0xff]
    %v4542 = vld [vmem:[%s4534 + $0x38] sm:$0xff]
    %s4543 = scalar_lea.vmem [#allocation11], 2
    %v4544 = vld [vmem:[%s4543] sm:$0x1]
    %s4545 = scalar_lea.vmem %s31, 2
    %v4546 = vld [vmem:[%s4545] sm:$0x1]
    %s4547 = scalar_lea.vmem %s27, 2
    %v4548 = vld [vmem:[%s4547] sm:$0x1]
    %s4549 = scalar_lea.vmem [#allocation20], 128
    %v4550 = vld [vmem:[%s4549] sm:$0xff]
    %v4551 = vld [vmem:[%s4549 + $0x8] sm:$0xff]
    %v4552 = vld [vmem:[%s4549 + $0x10] sm:$0xff]
    %v4553 = vld [vmem:[%s4549 + $0x18] sm:$0xff]
    %v4554 = vld [vmem:[%s4549 + $0x20] sm:$0xff]
    %v4555 = vld [vmem:[%s4549 + $0x28] sm:$0xff]
    %v4556 = vld [vmem:[%s4549 + $0x30] sm:$0xff]
    %v4557 = vld [vmem:[%s4549 + $0x38] sm:$0xff]
    %s4558 = scalar_lea.vmem [#allocation12], 2
    %v4559 = vld [vmem:[%s4558] sm:$0x1]
    %s4560 = scalar_lea.vmem %s69, 2
    %v4561 = vld [vmem:[%s4560] sm:$0x1]
    %s4562 = scalar_lea.vmem %s71, 2
    %v4563 = vld [vmem:[%s4562] sm:$0x1]
    %s4564 = scalar_lea.vmem [#allocation26], 32
    %v4565 = vld [vmem:[%s4564] sm:$0xff]
    %v4566 = vld [vmem:[%s4564 + $0x8] sm:$0xff]
    %s4567 = scalar_lea.vmem %s75, 2
    %v4568 = vld [vmem:[%s4567] sm:$0x1]
    %s4569 = scalar_lea.vmem %s77, 2
    %v4570 = vld [vmem:[%s4569] sm:$0x1]
    %s4571 = scalar_lea.vmem %s79, 48
    %v4572 = vld [vmem:[%s4571] sm:$0xff]
    %v4573 = vld [vmem:[%s4571 + $0x8] sm:$0xff]
    %v4574 = vld [vmem:[%s4571 + $0x10] sm:$0x7]
    %s4575 = scalar_lea.vmem [#allocation21], 2
    %v4576 = vld [vmem:[%s4575] sm:$0x1]
    %s4577 = scalar_lea.vmem %s65, 2
    %v4578 = vld [vmem:[%s4577] sm:$0x1]
    %s4579 = scalar_lea.vmem %s61, 2
    %v4580 = vld [vmem:[%s4579] sm:$0x1]
    %s4581 = scalar_lea.vmem [#allocation27], 128
    %v4582 = vld [vmem:[%s4581] sm:$0xff]
    %v4583 = vld [vmem:[%s4581 + $0x8] sm:$0xff]
    %v4584 = vld [vmem:[%s4581 + $0x10] sm:$0xff]
    %v4585 = vld [vmem:[%s4581 + $0x18] sm:$0xff]
    %v4586 = vld [vmem:[%s4581 + $0x20] sm:$0xff]
    %v4587 = vld [vmem:[%s4581 + $0x28] sm:$0xff]
    %v4588 = vld [vmem:[%s4581 + $0x30] sm:$0xff]
    %v4589 = vld [vmem:[%s4581 + $0x38] sm:$0xff]
    %s4590 = scalar_lea.vmem [#allocation23], 2
    %v4591 = vld [vmem:[%s4590] sm:$0x1]
    %s4592 = scalar_lea.vmem %s67, 2
    %v4593 = vld [vmem:[%s4592] sm:$0x1]
    %s4594 = scalar_lea.vmem %s63, 2
    %v4595 = vld [vmem:[%s4594] sm:$0x1]
    %s4596 = scalar_lea.vmem [#allocation29], 128
    %v4597 = vld [vmem:[%s4596] sm:$0xff]
    %v4598 = vld [vmem:[%s4596 + $0x8] sm:$0xff]
    %v4599 = vld [vmem:[%s4596 + $0x10] sm:$0xff]
    %v4600 = vld [vmem:[%s4596 + $0x18] sm:$0xff]
    %v4601 = vld [vmem:[%s4596 + $0x20] sm:$0xff]
    %v4602 = vld [vmem:[%s4596 + $0x28] sm:$0xff]
    %v4603 = vld [vmem:[%s4596 + $0x30] sm:$0xff]
    %v4604 = vld [vmem:[%s4596 + $0x38] sm:$0xff]
    %s4605 = scalar_lea.vmem [#allocation24], 2
    %v4606 = vld [vmem:[%s4605] sm:$0x1]
    %s4607 = scalar_lea.vmem %s99, 2
    %v4608 = vld [vmem:[%s4607] sm:$0x1]
    %s4609 = scalar_lea.vmem %s101, 2
    %v4610 = vld [vmem:[%s4609] sm:$0x1]
    %s4611 = scalar_lea.vmem %s103, 32
    %v4612 = vld [vmem:[%s4611] sm:$0xff]
    %v4613 = vld [vmem:[%s4611 + $0x8] sm:$0xff]
    %s4614 = scalar_lea.vmem %s105, 2
    %v4615 = vld [vmem:[%s4614] sm:$0x1]
    %s4616 = scalar_lea.vmem %s107, 2
    %v4617 = vld [vmem:[%s4616] sm:$0x1]
    %s4618 = scalar_lea.vmem [#allocation30], 128
    %v4619 = vld [vmem:[%s4618] sm:$0xff]
    %v4620 = vld [vmem:[%s4618 + $0x8] sm:$0xff]
    %v4621 = vld [vmem:[%s4618 + $0x10] sm:$0xff]
    %v4622 = vld [vmem:[%s4618 + $0x18] sm:$0xff]
    %v4623 = vld [vmem:[%s4618 + $0x20] sm:$0xff]
    %v4624 = vld [vmem:[%s4618 + $0x28] sm:$0xff]
    %v4625 = vld [vmem:[%s4618 + $0x30] sm:$0xff]
    %v4626 = vld [vmem:[%s4618 + $0x38] sm:$0xff]
    %s4627 = scalar_lea.vmem %s85, 2
    %v4628 = vld [vmem:[%s4627] sm:$0x1]
    %s4629 = scalar_lea.vmem %s95, 2
    %v4630 = vld [vmem:[%s4629] sm:$0x1]
    %s4631 = scalar_lea.vmem %s91, 2
    %v4632 = vld [vmem:[%s4631] sm:$0x1]
    %s4633 = scalar_lea.vmem [#allocation32], 160
    %v4634 = vld [vmem:[%s4633] sm:$0xff]
    %v4635 = vld [vmem:[%s4633 + $0x8] sm:$0xff]
    %v4636 = vld [vmem:[%s4633 + $0x10] sm:$0xff]
    %v4637 = vld [vmem:[%s4633 + $0x18] sm:$0xff]
    %v4638 = vld [vmem:[%s4633 + $0x20] sm:$0xff]
    %v4639 = vld [vmem:[%s4633 + $0x28] sm:$0xff]
    %v4640 = vld [vmem:[%s4633 + $0x30] sm:$0xff]
    %v4641 = vld [vmem:[%s4633 + $0x38] sm:$0xff]
    %v4642 = vld [vmem:[%s4633 + $0x40] sm:$0xff]
    %v4643 = vld [vmem:[%s4633 + $0x48] sm:$0xff]
    %s4644 = scalar_lea.vmem %s87, 2
    %v4645 = vld [vmem:[%s4644] sm:$0x1]
    %s4646 = scalar_lea.vmem %s97, 2
    %v4647 = vld [vmem:[%s4646] sm:$0x1]
    %s4648 = scalar_lea.vmem %s93, 2
    %v4649 = vld [vmem:[%s4648] sm:$0x1]
    %s4650 = scalar_lea.vmem [#allocation33], 160
    %v4651 = vld [vmem:[%s4650] sm:$0xff]
    %v4652 = vld [vmem:[%s4650 + $0x8] sm:$0xff]
    %v4653 = vld [vmem:[%s4650 + $0x10] sm:$0xff]
    %v4654 = vld [vmem:[%s4650 + $0x18] sm:$0xff]
    %v4655 = vld [vmem:[%s4650 + $0x20] sm:$0xff]
    %v4656 = vld [vmem:[%s4650 + $0x28] sm:$0xff]
    %v4657 = vld [vmem:[%s4650 + $0x30] sm:$0xff]
    %v4658 = vld [vmem:[%s4650 + $0x38] sm:$0xff]
    %v4659 = vld [vmem:[%s4650 + $0x40] sm:$0xff]
    %v4660 = vld [vmem:[%s4650 + $0x48] sm:$0xff]
    %s4661 = scalar_lea.vmem %s89, 2
    %v4662 = vld [vmem:[%s4661] sm:$0x1]
    %4663 = vmatprep.subr.mxu0 0.0
    %4664 = vmatpush1.msra.mxu0 %v4503
    %4665 = vmatprep.subr.mxu0 0.0
    %4666 = vmatpush1.msra.mxu0 0.0
    %4667 = vmatprep.subr.mxu0 0.0
    %4668 = vmatpush1.msra.mxu0 0.0
    %4669 = vmatprep.subr.mxu0 0.0
    %4670 = vmatpush1.msra.mxu0 0.0
    %4671 = vmatprep.subr.mxu0 0.0
    %4672 = vmatpush1.msra.mxu0 0.0
    %4673 = vmatprep.subr.mxu0 0.0
    %4674 = vmatpush1.msra.mxu0 0.0
    %4675 = vmatprep.subr.mxu0 0.0
    %4676 = vmatpush1.msra.mxu0 0.0
    %4677 = vmatprep.subr.mxu0 0.0
    %4678 = vmatpush1.msra.mxu0 0.0
    %4679 = vmatprep.subr.mxu0 0.0
    %4680 = vmatpush1.msra.mxu0 0.0
    %4681 = vmatprep.subr.mxu0 0.0
    %4682 = vmatpush1.msra.mxu0 0.0
    %4683 = vmatprep.subr.mxu0 0.0
    %4684 = vmatpush1.msra.mxu0 0.0
    %4685 = vmatprep.subr.mxu0 0.0
    %4686 = vmatpush1.msra.mxu0 0.0
    %4687 = vmatprep.subr.mxu0 0.0
    %4688 = vmatpush1.msra.mxu0 0.0
    %4689 = vmatprep.subr.mxu0 0.0
    %4690 = vmatpush1.msra.mxu0 0.0
    %4691 = vmatprep.subr.mxu0 0.0
    %4692 = vmatpush1.msra.mxu0 0.0
    %4693 = vmatprep.subr.mxu0 0.0
    %4694 = vmatpush1.msra.mxu0 0.0
    %4695 = vmatprep.subr.mxu0 0.0
    %4696 = vmatpush1.msra.mxu0 0.0
    %4697 = vmatprep.subr.mxu0 0.0
    %4698 = vmatpush1.msra.mxu0 0.0
    %4699 = vmatprep.subr.mxu0 0.0
    %4700 = vmatpush1.msra.mxu0 0.0
    %4701 = vmatprep.subr.mxu0 0.0
    %4702 = vmatpush1.msra.mxu0 0.0
    %4703 = vmatprep.subr.mxu0 0.0
    %4704 = vmatpush1.msra.mxu0 0.0
    %4705 = vmatprep.subr.mxu0 0.0
    %4706 = vmatpush1.msra.mxu0 0.0
    %4707 = vmatprep.subr.mxu0 0.0
    %4708 = vmatpush1.msra.mxu0 0.0
    %4709 = vmatprep.subr.mxu0 0.0
    %4710 = vmatpush1.msra.mxu0 0.0
    %4711 = vmatprep.subr.mxu0 0.0
    %4712 = vmatpush1.msra.mxu0 0.0
    %4713 = vmatprep.subr.mxu0 0.0
    %4714 = vmatpush1.msra.mxu0 0.0
    %4715 = vmatprep.subr.mxu0 0.0
    %4716 = vmatpush1.msra.mxu0 0.0
    %4717 = vmatprep.subr.mxu0 0.0
    %4718 = vmatpush1.msra.mxu0 0.0
    %4719 = vmatprep.subr.mxu0 0.0
    %4720 = vmatpush1.msra.mxu0 0.0
    %4721 = vmatprep.subr.mxu0 0.0
    %4722 = vmatpush1.msra.mxu0 0.0
    %4723 = vmatprep.subr.mxu0 0.0
    %4724 = vmatpush1.msra.mxu0 0.0
    %4725 = vmatprep.subr.mxu0 0.0
    %4726 = vmatpush1.msra.mxu0 0.0
    %4727 = vmatprep.mubr.f32.mxu0 0.0
    %4728 = vmatmul.mubr.f32.gmra.mrb[0].mxu0 %v664
    %v4729 = vpop.f32.mrb[0].mxu0
    %v4730 = vadd.f32 0.0, %v4729
    %v4731 = vpop.f32.mrb[0].mxu0
    %4732 = vmatprep.mubr.f32.mxu0 0.0
    %4733 = vmatmul.mubr.f32.gmra.mrb[0].mxu0 %v667
    %v4734 = vpop.f32.mrb[0].mxu0
    %v4735 = vadd.f32 0.0, %v4734
    %v4736 = vpop.f32.mrb[0].mxu0
    %4737 = vdwg.mxu0
    %4738 = vmatprep.subr.mxu0 0.0
    %4739 = vmatpush1.msra.mxu0 %v4503
    %4740 = vmatprep.subr.mxu0 0.0
    %4741 = vmatpush1.msra.mxu0 0.0
    %4742 = vmatprep.subr.mxu0 0.0
    %4743 = vmatpush1.msra.mxu0 0.0
    %4744 = vmatprep.subr.mxu0 0.0
    %4745 = vmatpush1.msra.mxu0 0.0
    %4746 = vmatprep.subr.mxu0 0.0
    %4747 = vmatpush1.msra.mxu0 0.0
    %4748 = vmatprep.subr.mxu0 0.0
    %4749 = vmatpush1.msra.mxu0 0.0
    %4750 = vmatprep.subr.mxu0 0.0
    %4751 = vmatpush1.msra.mxu0 0.0
    %4752 = vmatprep.subr.mxu0 0.0
    %4753 = vmatpush1.msra.mxu0 0.0
    %4754 = vmatprep.subr.mxu0 0.0
    %4755 = vmatpush1.msra.mxu0 0.0
    %4756 = vmatprep.subr.mxu0 0.0
    %4757 = vmatpush1.msra.mxu0 0.0
    %4758 = vmatprep.subr.mxu0 0.0
    %4759 = vmatpush1.msra.mxu0 0.0
    %4760 = vmatprep.subr.mxu0 0.0
    %4761 = vmatpush1.msra.mxu0 0.0
    %4762 = vmatprep.subr.mxu0 0.0
    %4763 = vmatpush1.msra.mxu0 0.0
    %4764 = vmatprep.subr.mxu0 0.0
    %4765 = vmatpush1.msra.mxu0 0.0
    %4766 = vmatprep.subr.mxu0 0.0
    %4767 = vmatpush1.msra.mxu0 0.0
    %4768 = vmatprep.subr.mxu0 0.0
    %4769 = vmatpush1.msra.mxu0 0.0
    %4770 = vmatprep.subr.mxu0 0.0
    %4771 = vmatpush1.msra.mxu0 0.0
    %4772 = vmatprep.subr.mxu0 0.0
    %4773 = vmatpush1.msra.mxu0 0.0
    %4774 = vmatprep.subr.mxu0 0.0
    %4775 = vmatpush1.msra.mxu0 0.0
    %4776 = vmatprep.subr.mxu0 0.0
    %4777 = vmatpush1.msra.mxu0 0.0
    %4778 = vmatprep.subr.mxu0 0.0
    %4779 = vmatpush1.msra.mxu0 0.0
    %4780 = vmatprep.subr.mxu0 0.0
    %4781 = vmatpush1.msra.mxu0 0.0
    %4782 = vmatprep.subr.mxu0 0.0
    %4783 = vmatpush1.msra.mxu0 0.0
    %4784 = vmatprep.subr.mxu0 0.0
    %4785 = vmatpush1.msra.mxu0 0.0
    %4786 = vmatprep.subr.mxu0 0.0
    %4787 = vmatpush1.msra.mxu0 0.0
    %4788 = vmatprep.subr.mxu0 0.0
    %4789 = vmatpush1.msra.mxu0 0.0
    %4790 = vmatprep.subr.mxu0 0.0
    %4791 = vmatpush1.msra.mxu0 0.0
    %4792 = vmatprep.subr.mxu0 0.0
    %4793 = vmatpush1.msra.mxu0 0.0
    %4794 = vmatprep.subr.mxu0 0.0
    %4795 = vmatpush1.msra.mxu0 0.0
    %4796 = vmatprep.subr.mxu0 0.0
    %4797 = vmatpush1.msra.mxu0 0.0
    %4798 = vmatprep.subr.mxu0 0.0
    %4799 = vmatpush1.msra.mxu0 0.0
    %4800 = vmatprep.subr.mxu0 0.0
    %4801 = vmatpush1.msra.mxu0 0.0
    %4802 = vmatprep.mubr.f32.mxu0 0.0
    %4803 = vmatmul.mubr.f32.gmra.mrb[0].mxu0 %v745
    %v4804 = vpop.f32.mrb[0].mxu0
    %v4805 = vadd.f32 0.0, %v4804
    %v4806 = vpop.f32.mrb[0].mxu0
    %4807 = vmatprep.mubr.f32.mxu0 0.0
    %4808 = vmatmul.mubr.f32.gmra.mrb[0].mxu0 %v748
    %v4809 = vpop.f32.mrb[0].mxu0
    %v4810 = vadd.f32 0.0, %v4809
    %v4811 = vpop.f32.mrb[0].mxu0
    %4812 = vdwg.mxu0
    %v4813 = vsel %vm825, %v4730, 0.0
    %v4814 = vsel %vm825, %v4735, 0.0
    %v4815 = vadd.f32 %v4813, %v4814
    %v4816 = vrot.slane %v4815, 4
    %v4817 = vadd.f32 %v4815, %v4816
    %v4818 = vrot.slane %v4817, 2
    %v4819 = vadd.f32 %v4817, %v4818
    %v4820 = vrot.slane %v4819, 1
    %v4821 = vadd.f32 %v4819, %v4820
    %v4822 = vmul.f32 %v4821, %v835
    %v4823 = vsub.f32 %v4730, %v4822
    %v4824 = vsub.f32 %v4735, %v4822
    %v4825 = vmul.f32 %v4823, %v4823
    %v4826 = vmul.f32 %v4824, %v4824
    %v4827 = vsel %vm825, %v4825, 0.0
    %v4828 = vsel %vm825, %v4826, 0.0
    %v4829 = vadd.f32 %v4827, %v4828
    %v4830 = vrot.slane %v4829, 4
    %v4831 = vadd.f32 %v4829, %v4830
    %v4832 = vrot.slane %v4831, 2
    %v4833 = vadd.f32 %v4831, %v4832
    %v4834 = vrot.slane %v4833, 1
    %v4835 = vadd.f32 %v4833, %v4834
    %v4836 = vmul.f32 %v4835, %v835
    %v4837 = vadd.f32 %v4836, 1e-05
    %v4838 = vrsqrt.pop %v4837
    %v4839 = vmul.f32 %v4823, %v4838
    %v4840 = vmul.f32 %v4824, %v4838
    %v4842 = vlaneseq
    %v4843 = vshrl.u32 %v4842, 7
    %v4844 = vsub.s32 0, %v4843
    %v4845 = vrot.slane %v4507, %v4844
    %v4847 = vmul.f32 %v4839, %v4845
    %v4848 = vmul.f32 %v4840, %v4845
    %v4850 = vlaneseq
    %v4851 = vshrl.u32 %v4850, 7
    %v4852 = vsub.s32 0, %v4851
    %v4853 = vrot.slane %v4509, %v4852
    %v4855 = vadd.f32 %v4847, %v4853
    %v4856 = vadd.f32 %v4848, %v4853
    %v4857 = vsel %vm825, %v4805, 0.0
    %v4858 = vsel %vm825, %v4810, 0.0
    %v4859 = vadd.f32 %v4857, %v4858
    %v4860 = vrot.slane %v4859, 4
    %v4861 = vadd.f32 %v4859, %v4860
    %v4862 = vrot.slane %v4861, 2
    %v4863 = vadd.f32 %v4861, %v4862
    %v4864 = vrot.slane %v4863, 1
    %v4865 = vadd.f32 %v4863, %v4864
    %v4866 = vmul.f32 %v4865, %v835
    %v4867 = vsub.f32 %v4805, %v4866
    %v4868 = vsub.f32 %v4810, %v4866
    %v4869 = vmul.f32 %v4867, %v4867
    %v4870 = vmul.f32 %v4868, %v4868
    %v4871 = vsel %vm825, %v4869, 0.0
    %v4872 = vsel %vm825, %v4870, 0.0
    %v4873 = vadd.f32 %v4871, %v4872
    %v4874 = vrot.slane %v4873, 4
    %v4875 = vadd.f32 %v4873, %v4874
    %v4876 = vrot.slane %v4875, 2
    %v4877 = vadd.f32 %v4875, %v4876
    %v4878 = vrot.slane %v4877, 1
    %v4879 = vadd.f32 %v4877, %v4878
    %v4880 = vmul.f32 %v4879, %v835
    %v4881 = vadd.f32 %v4880, 1e-05
    %v4882 = vrsqrt.pop %v4881
    %v4883 = vmul.f32 %v4867, %v4882
    %v4884 = vmul.f32 %v4868, %v4882
    %v4886 = vlaneseq
    %v4887 = vshrl.u32 %v4886, 7
    %v4888 = vsub.s32 0, %v4887
    %v4889 = vrot.slane %v4514, %v4888
    %v4891 = vmul.f32 %v4883, %v4889
    %v4892 = vmul.f32 %v4884, %v4889
    %v4894 = vlaneseq
    %v4895 = vshrl.u32 %v4894, 7
    %v4896 = vsub.s32 0, %v4895
    %v4897 = vrot.slane %v4516, %v4896
    %v4899 = vadd.f32 %v4891, %v4897
    %v4900 = vadd.f32 %v4892, %v4897
    %v4902 = vsel %vm825, %v4899, 0
    %v4905 = vsel %vm825, %v4900, 0
    %4907 = vmatprep.subr.mxu0 0.0
    %4908 = vmatpush1.msra.mxu0 %v4518
    %4909 = vmatprep.subr.mxu0 0.0
    %4910 = vmatpush1.msra.mxu0 %v4519
    %4911 = vmatprep.subr.mxu0 0.0
    %4912 = vmatpush1.msra.mxu0 0.0
    %4913 = vmatprep.subr.mxu0 0.0
    %4914 = vmatpush1.msra.mxu0 0.0
    %4915 = vmatprep.subr.mxu0 0.0
    %4916 = vmatpush1.msra.mxu0 0.0
    %4917 = vmatprep.subr.mxu0 0.0
    %4918 = vmatpush1.msra.mxu0 0.0
    %4919 = vmatprep.subr.mxu0 0.0
    %4920 = vmatpush1.msra.mxu0 0.0
    %4921 = vmatprep.subr.mxu0 0.0
    %4922 = vmatpush1.msra.mxu0 0.0
    %4923 = vmatprep.subr.mxu0 0.0
    %4924 = vmatpush1.msra.mxu0 0.0
    %4925 = vmatprep.subr.mxu0 0.0
    %4926 = vmatpush1.msra.mxu0 0.0
    %4927 = vmatprep.subr.mxu0 0.0
    %4928 = vmatpush1.msra.mxu0 0.0
    %4929 = vmatprep.subr.mxu0 0.0
    %4930 = vmatpush1.msra.mxu0 0.0
    %4931 = vmatprep.subr.mxu0 0.0
    %4932 = vmatpush1.msra.mxu0 0.0
    %4933 = vmatprep.subr.mxu0 0.0
    %4934 = vmatpush1.msra.mxu0 0.0
    %4935 = vmatprep.subr.mxu0 0.0
    %4936 = vmatpush1.msra.mxu0 0.0
    %4937 = vmatprep.subr.mxu0 0.0
    %4938 = vmatpush1.msra.mxu0 0.0
    %4939 = vmatprep.subr.mxu0 0.0
    %4940 = vmatpush1.msra.mxu0 0.0
    %4941 = vmatprep.subr.mxu0 0.0
    %4942 = vmatpush1.msra.mxu0 0.0
    %4943 = vmatprep.subr.mxu0 0.0
    %4944 = vmatpush1.msra.mxu0 0.0
    %4945 = vmatprep.subr.mxu0 0.0
    %4946 = vmatpush1.msra.mxu0 0.0
    %4947 = vmatprep.subr.mxu0 0.0
    %4948 = vmatpush1.msra.mxu0 0.0
    %4949 = vmatprep.subr.mxu0 0.0
    %4950 = vmatpush1.msra.mxu0 0.0
    %4951 = vmatprep.subr.mxu0 0.0
    %4952 = vmatpush1.msra.mxu0 0.0
    %4953 = vmatprep.subr.mxu0 0.0
    %4954 = vmatpush1.msra.mxu0 0.0
    %4955 = vmatprep.subr.mxu0 0.0
    %4956 = vmatpush1.msra.mxu0 0.0
    %4957 = vmatprep.subr.mxu0 0.0
    %4958 = vmatpush1.msra.mxu0 0.0
    %4959 = vmatprep.subr.mxu0 0.0
    %4960 = vmatpush1.msra.mxu0 0.0
    %4961 = vmatprep.subr.mxu0 0.0
    %4962 = vmatpush1.msra.mxu0 0.0
    %4963 = vmatprep.subr.mxu0 0.0
    %4964 = vmatpush1.msra.mxu0 0.0
    %4965 = vmatprep.subr.mxu0 0.0
    %4966 = vmatpush1.msra.mxu0 0.0
    %4967 = vmatprep.subr.mxu0 0.0
    %4968 = vmatpush1.msra.mxu0 0.0
    %4969 = vmatprep.subr.mxu0 0.0
    %4970 = vmatpush1.msra.mxu0 0.0
    %4971 = vmatprep.mubr.f32.mxu0 0.0
    %4972 = vmatmul.mubr.f32.gmra.mrb[0].mxu0 %v4902
    %v4973 = vpop.f32.mrb[0].mxu0
    %v4974 = vadd.f32 0.0, %v4973
    %v4975 = vpop.f32.mrb[0].mxu0
    %4976 = vmatprep.mubr.f32.mxu0 0.0
    %4977 = vmatmul.mubr.f32.gmra.mrb[0].mxu0 %v4905
    %v4978 = vpop.f32.mrb[0].mxu0
    %v4979 = vadd.f32 0.0, %v4978
    %v4980 = vpop.f32.mrb[0].mxu0
    %4981 = vdwg.mxu0
    %v4983 = vsel %vm825, %v4855, 0
    %v4986 = vsel %vm825, %v4856, 0
    %4988 = vmatprep.subr.mxu0 0.0
    %4989 = vmatpush1.msra.mxu0 %v4511
    %4990 = vmatprep.subr.mxu0 0.0
    %4991 = vmatpush1.msra.mxu0 %v4512
    %4992 = vmatprep.subr.mxu0 0.0
    %4993 = vmatpush1.msra.mxu0 0.0
    %4994 = vmatprep.subr.mxu0 0.0
    %4995 = vmatpush1.msra.mxu0 0.0
    %4996 = vmatprep.subr.mxu0 0.0
    %4997 = vmatpush1.msra.mxu0 0.0
    %4998 = vmatprep.subr.mxu0 0.0
    %4999 = vmatpush1.msra.mxu0 0.0
    %5000 = vmatprep.subr.mxu0 0.0
    %5001 = vmatpush1.msra.mxu0 0.0
    %5002 = vmatprep.subr.mxu0 0.0
    %5003 = vmatpush1.msra.mxu0 0.0
    %5004 = vmatprep.subr.mxu0 0.0
    %5005 = vmatpush1.msra.mxu0 0.0
    %5006 = vmatprep.subr.mxu0 0.0
    %5007 = vmatpush1.msra.mxu0 0.0
    %5008 = vmatprep.subr.mxu0 0.0
    %5009 = vmatpush1.msra.mxu0 0.0
    %5010 = vmatprep.subr.mxu0 0.0
    %5011 = vmatpush1.msra.mxu0 0.0
    %5012 = vmatprep.subr.mxu0 0.0
    %5013 = vmatpush1.msra.mxu0 0.0
    %5014 = vmatprep.subr.mxu0 0.0
    %5015 = vmatpush1.msra.mxu0 0.0
    %5016 = vmatprep.subr.mxu0 0.0
    %5017 = vmatpush1.msra.mxu0 0.0
    %5018 = vmatprep.subr.mxu0 0.0
    %5019 = vmatpush1.msra.mxu0 0.0
    %5020 = vmatprep.subr.mxu0 0.0
    %5021 = vmatpush1.msra.mxu0 0.0
    %5022 = vmatprep.subr.mxu0 0.0
    %5023 = vmatpush1.msra.mxu0 0.0
    %5024 = vmatprep.subr.mxu0 0.0
    %5025 = vmatpush1.msra.mxu0 0.0
    %5026 = vmatprep.subr.mxu0 0.0
    %5027 = vmatpush1.msra.mxu0 0.0
    %5028 = vmatprep.subr.mxu0 0.0
    %5029 = vmatpush1.msra.mxu0 0.0
    %5030 = vmatprep.subr.mxu0 0.0
    %5031 = vmatpush1.msra.mxu0 0.0
    %5032 = vmatprep.subr.mxu0 0.0
    %5033 = vmatpush1.msra.mxu0 0.0
    %5034 = vmatprep.subr.mxu0 0.0
    %5035 = vmatpush1.msra.mxu0 0.0
    %5036 = vmatprep.subr.mxu0 0.0
    %5037 = vmatpush1.msra.mxu0 0.0
    %5038 = vmatprep.subr.mxu0 0.0
    %5039 = vmatpush1.msra.mxu0 0.0
    %5040 = vmatprep.subr.mxu0 0.0
    %5041 = vmatpush1.msra.mxu0 0.0
    %5042 = vmatprep.subr.mxu0 0.0
    %5043 = vmatpush1.msra.mxu0 0.0
    %5044 = vmatprep.subr.mxu0 0.0
    %5045 = vmatpush1.msra.mxu0 0.0
    %5046 = vmatprep.subr.mxu0 0.0
    %5047 = vmatpush1.msra.mxu0 0.0
    %5048 = vmatprep.subr.mxu0 0.0
    %5049 = vmatpush1.msra.mxu0 0.0
    %5050 = vmatprep.subr.mxu0 0.0
    %5051 = vmatpush1.msra.mxu0 0.0
    %5052 = vmatprep.mubr.f32.mxu0 0.0
    %5053 = vmatmul.mubr.f32.gmra.mrb[0].mxu0 %v4983
    %v5054 = vpop.f32.mrb[0].mxu0
    %v5055 = vadd.f32 %v4974, %v5054
    %v5056 = vpop.f32.mrb[0].mxu0
    %5057 = vmatprep.mubr.f32.mxu0 0.0
    %5058 = vmatmul.mubr.f32.gmra.mrb[0].mxu0 %v4986
    %v5059 = vpop.f32.mrb[0].mxu0
    %v5060 = vadd.f32 %v4979, %v5059
    %v5061 = vpop.f32.mrb[0].mxu0
    %5062 = vdwg.mxu0
    %v5064 = vlaneseq
    %v5065 = vshrl.u32 %v5064, 7
    %v5066 = vsub.s32 0, %v5065
    %v5067 = vrot.slane %v4521, %v5066
    %v5069 = vmul.f32 %v3514, %v5067
    %v5070 = vmul.f32 %v3515, %v5067
    %v5072 = vlaneseq
    %v5073 = vshrl.u32 %v5072, 7
    %v5074 = vsub.s32 0, %v5073
    %v5075 = vrot.slane %v4523, %v5074
    %v5077 = vadd.f32 %v5069, %v5075
    %v5078 = vadd.f32 %v5070, %v5075
    %v5080 = vsel %vm1077, %v5077, 0
    %v5083 = vsel %vm1077, %v5078, 0
    %v5086 = vsel %vm1128, %v4527, 0
    %5088 = vmatprep.subr.mxu0 0.0
    %5089 = vmatpush1.msra.mxu0 %v4525
    %5090 = vmatprep.subr.mxu0 0.0
    %5091 = vmatpush1.msra.mxu0 %v4526
    %5092 = vmatprep.subr.mxu0 0.0
    %5093 = vmatpush1.msra.mxu0 %v5086
    %5094 = vmatprep.subr.mxu0 0.0
    %5095 = vmatpush1.msra.mxu0 0.0
    %5096 = vmatprep.subr.mxu0 0.0
    %5097 = vmatpush1.msra.mxu0 0.0
    %5098 = vmatprep.subr.mxu0 0.0
    %5099 = vmatpush1.msra.mxu0 0.0
    %5100 = vmatprep.subr.mxu0 0.0
    %5101 = vmatpush1.msra.mxu0 0.0
    %5102 = vmatprep.subr.mxu0 0.0
    %5103 = vmatpush1.msra.mxu0 0.0
    %5104 = vmatprep.subr.mxu0 0.0
    %5105 = vmatpush1.msra.mxu0 0.0
    %5106 = vmatprep.subr.mxu0 0.0
    %5107 = vmatpush1.msra.mxu0 0.0
    %5108 = vmatprep.subr.mxu0 0.0
    %5109 = vmatpush1.msra.mxu0 0.0
    %5110 = vmatprep.subr.mxu0 0.0
    %5111 = vmatpush1.msra.mxu0 0.0
    %5112 = vmatprep.subr.mxu0 0.0
    %5113 = vmatpush1.msra.mxu0 0.0
    %5114 = vmatprep.subr.mxu0 0.0
    %5115 = vmatpush1.msra.mxu0 0.0
    %5116 = vmatprep.subr.mxu0 0.0
    %5117 = vmatpush1.msra.mxu0 0.0
    %5118 = vmatprep.subr.mxu0 0.0
    %5119 = vmatpush1.msra.mxu0 0.0
    %5120 = vmatprep.subr.mxu0 0.0
    %5121 = vmatpush1.msra.mxu0 0.0
    %5122 = vmatprep.subr.mxu0 0.0
    %5123 = vmatpush1.msra.mxu0 0.0
    %5124 = vmatprep.subr.mxu0 0.0
    %5125 = vmatpush1.msra.mxu0 0.0
    %5126 = vmatprep.subr.mxu0 0.0
    %5127 = vmatpush1.msra.mxu0 0.0
    %5128 = vmatprep.subr.mxu0 0.0
    %5129 = vmatpush1.msra.mxu0 0.0
    %5130 = vmatprep.subr.mxu0 0.0
    %5131 = vmatpush1.msra.mxu0 0.0
    %5132 = vmatprep.subr.mxu0 0.0
    %5133 = vmatpush1.msra.mxu0 0.0
    %5134 = vmatprep.subr.mxu0 0.0
    %5135 = vmatpush1.msra.mxu0 0.0
    %5136 = vmatprep.subr.mxu0 0.0
    %5137 = vmatpush1.msra.mxu0 0.0
    %5138 = vmatprep.subr.mxu0 0.0
    %5139 = vmatpush1.msra.mxu0 0.0
    %5140 = vmatprep.subr.mxu0 0.0
    %5141 = vmatpush1.msra.mxu0 0.0
    %5142 = vmatprep.subr.mxu0 0.0
    %5143 = vmatpush1.msra.mxu0 0.0
    %5144 = vmatprep.subr.mxu0 0.0
    %5145 = vmatpush1.msra.mxu0 0.0
    %5146 = vmatprep.subr.mxu0 0.0
    %5147 = vmatpush1.msra.mxu0 0.0
    %5148 = vmatprep.subr.mxu0 0.0
    %5149 = vmatpush1.msra.mxu0 0.0
    %5150 = vmatprep.subr.mxu0 0.0
    %5151 = vmatpush1.msra.mxu0 0.0
    %5152 = vmatprep.mubr.f32.mxu0 0.0
    %5153 = vmatmul.mubr.f32.gmra.mrb[0].mxu0 %v5080
    %v5154 = vpop.f32.mrb[0].mxu0
    %v5155 = vadd.f32 0.0, %v5154
    %v5156 = vpop.f32.mrb[0].mxu0
    %5157 = vmatprep.mubr.f32.mxu0 0.0
    %5158 = vmatmul.mubr.f32.gmra.mrb[0].mxu0 %v5083
    %v5159 = vpop.f32.mrb[0].mxu0
    %v5160 = vadd.f32 0.0, %v5159
    %v5161 = vpop.f32.mrb[0].mxu0
    %5162 = vdwg.mxu0
    %v5163 = vadd.f32 %v5055, %v5155
    %v5164 = vadd.f32 %v5060, %v5160
    %v5166 = vlaneseq
    %v5167 = vshrl.u32 %v5166, 7
    %v5168 = vsub.s32 0, %v5167
    %v5169 = vrot.slane %v4529, %v5168
    %v5171 = vadd.f32 %v5163, %v5169
    %v5172 = vadd.f32 %v5164, %v5169
    %vm5173 = vcmp.ge.f32.partialorder %v5171, 0.0
    %vm5174 = vcmp.ge.f32.partialorder %v5172, 0.0
    %v5175 = vmul.f32 %v5171, 0.1
    %v5176 = vmul.f32 %v5172, 0.1
    %v5177 = vsel %vm5173, %v5171, %v5175
    %v5178 = vsel %vm5174, %v5172, %v5176
    %v5179 = vsel %vm1223, %v5177, 0.0
    %v5180 = vsel %vm1223, %v5178, 0.0
    %v5181 = vadd.f32 %v5179, %v5180
    %v5182 = vrot.slane %v5181, 4
    %v5183 = vadd.f32 %v5181, %v5182
    %v5184 = vrot.slane %v5183, 2
    %v5185 = vadd.f32 %v5183, %v5184
    %v5186 = vrot.slane %v5185, 1
    %v5187 = vadd.f32 %v5185, %v5186
    %v5188 = vmul.f32 %v5187, %v835
    %v5189 = vsub.f32 %v5177, %v5188
    %v5190 = vsub.f32 %v5178, %v5188
    %v5191 = vmul.f32 %v5189, %v5189
    %v5192 = vmul.f32 %v5190, %v5190
    %v5193 = vsel %vm1223, %v5191, 0.0
    %v5194 = vsel %vm1223, %v5192, 0.0
    %v5195 = vadd.f32 %v5193, %v5194
    %v5196 = vrot.slane %v5195, 4
    %v5197 = vadd.f32 %v5195, %v5196
    %v5198 = vrot.slane %v5197, 2
    %v5199 = vadd.f32 %v5197, %v5198
    %v5200 = vrot.slane %v5199, 1
    %v5201 = vadd.f32 %v5199, %v5200
    %v5202 = vmul.f32 %v5201, %v835
    %v5203 = vadd.f32 %v5202, 1e-05
    %v5204 = vrsqrt.pop %v5203
    %v5205 = vmul.f32 %v5189, %v5204
    %v5206 = vmul.f32 %v5190, %v5204
    %v5208 = vlaneseq
    %v5209 = vshrl.u32 %v5208, 7
    %v5210 = vsub.s32 0, %v5209
    %v5211 = vrot.slane %v4531, %v5210
    %v5213 = vmul.f32 %v5205, %v5211
    %v5214 = vmul.f32 %v5206, %v5211
    %v5216 = vlaneseq
    %v5217 = vshrl.u32 %v5216, 7
    %v5218 = vsub.s32 0, %v5217
    %v5219 = vrot.slane %v4533, %v5218
    %v5221 = vadd.f32 %v5213, %v5219
    %v5222 = vadd.f32 %v5214, %v5219
    %v5224 = vlaneseq
    %v5225 = vshrl.u32 %v5224, 7
    %v5226 = vsub.s32 0, %v5225
    %v5227 = vrot.slane %v4544, %v5226
    %v5230 = vsel %vm1223, %v5221, 0
    %v5233 = vsel %vm1223, %v5222, 0
    %5235 = vmatprep.subr.mxu0 0.0
    %5236 = vmatpush1.msra.mxu0 %v4535
    %5237 = vmatprep.subr.mxu0 0.0
    %5238 = vmatpush1.msra.mxu0 %v4536
    %5239 = vmatprep.subr.mxu0 0.0
    %5240 = vmatpush1.msra.mxu0 %v4537
    %5241 = vmatprep.subr.mxu0 0.0
    %5242 = vmatpush1.msra.mxu0 %v4538
    %5243 = vmatprep.subr.mxu0 0.0
    %5244 = vmatpush1.msra.mxu0 %v4539
    %5245 = vmatprep.subr.mxu0 0.0
    %5246 = vmatpush1.msra.mxu0 %v4540
    %5247 = vmatprep.subr.mxu0 0.0
    %5248 = vmatpush1.msra.mxu0 %v4541
    %5249 = vmatprep.subr.mxu0 0.0
    %5250 = vmatpush1.msra.mxu0 %v4542
    %5251 = vmatprep.subr.mxu0 0.0
    %5252 = vmatpush1.msra.mxu0 0.0
    %5253 = vmatprep.subr.mxu0 0.0
    %5254 = vmatpush1.msra.mxu0 0.0
    %5255 = vmatprep.subr.mxu0 0.0
    %5256 = vmatpush1.msra.mxu0 0.0
    %5257 = vmatprep.subr.mxu0 0.0
    %5258 = vmatpush1.msra.mxu0 0.0
    %5259 = vmatprep.subr.mxu0 0.0
    %5260 = vmatpush1.msra.mxu0 0.0
    %5261 = vmatprep.subr.mxu0 0.0
    %5262 = vmatpush1.msra.mxu0 0.0
    %5263 = vmatprep.subr.mxu0 0.0
    %5264 = vmatpush1.msra.mxu0 0.0
    %5265 = vmatprep.subr.mxu0 0.0
    %5266 = vmatpush1.msra.mxu0 0.0
    %5267 = vmatprep.subr.mxu0 0.0
    %5268 = vmatpush1.msra.mxu0 0.0
    %5269 = vmatprep.subr.mxu0 0.0
    %5270 = vmatpush1.msra.mxu0 0.0
    %5271 = vmatprep.subr.mxu0 0.0
    %5272 = vmatpush1.msra.mxu0 0.0
    %5273 = vmatprep.subr.mxu0 0.0
    %5274 = vmatpush1.msra.mxu0 0.0
    %5275 = vmatprep.subr.mxu0 0.0
    %5276 = vmatpush1.msra.mxu0 0.0
    %5277 = vmatprep.subr.mxu0 0.0
    %5278 = vmatpush1.msra.mxu0 0.0
    %5279 = vmatprep.subr.mxu0 0.0
    %5280 = vmatpush1.msra.mxu0 0.0
    %5281 = vmatprep.subr.mxu0 0.0
    %5282 = vmatpush1.msra.mxu0 0.0
    %5283 = vmatprep.subr.mxu0 0.0
    %5284 = vmatpush1.msra.mxu0 0.0
    %5285 = vmatprep.subr.mxu0 0.0
    %5286 = vmatpush1.msra.mxu0 0.0
    %5287 = vmatprep.subr.mxu0 0.0
    %5288 = vmatpush1.msra.mxu0 0.0
    %5289 = vmatprep.subr.mxu0 0.0
    %5290 = vmatpush1.msra.mxu0 0.0
    %5291 = vmatprep.subr.mxu0 0.0
    %5292 = vmatpush1.msra.mxu0 0.0
    %5293 = vmatprep.subr.mxu0 0.0
    %5294 = vmatpush1.msra.mxu0 0.0
    %5295 = vmatprep.subr.mxu0 0.0
    %5296 = vmatpush1.msra.mxu0 0.0
    %5297 = vmatprep.subr.mxu0 0.0
    %5298 = vmatpush1.msra.mxu0 0.0
    %5299 = vmatprep.mubr.f32.mxu0 0.0
    %5300 = vmatmul.mubr.f32.gmra.mrb[0].mxu0 %v5230
    %v5301 = vpop.f32.mrb[0].mxu0
    %v5302 = vadd.f32 %v5227, %v5301
    %v5303 = vpop.f32.mrb[0].mxu0
    %5304 = vmatprep.mubr.f32.mxu0 0.0
    %5305 = vmatmul.mubr.f32.gmra.mrb[0].mxu0 %v5233
    %v5306 = vpop.f32.mrb[0].mxu0
    %v5307 = vadd.f32 %v5227, %v5306
    %v5308 = vpop.f32.mrb[0].mxu0
    %5309 = vdwg.mxu0
    %vm5310 = vcmp.ge.f32.partialorder %v5302, 0.0
    %vm5311 = vcmp.ge.f32.partialorder %v5307, 0.0
    %v5312 = vmul.f32 %v5302, 0.1
    %v5313 = vmul.f32 %v5307, 0.1
    %v5314 = vsel %vm5310, %v5302, %v5312
    %v5315 = vsel %vm5311, %v5307, %v5313
    %v5316 = vsel %vm1223, %v5314, 0.0
    %v5317 = vsel %vm1223, %v5315, 0.0
    %v5318 = vadd.f32 %v5316, %v5317
    %v5319 = vrot.slane %v5318, 4
    %v5320 = vadd.f32 %v5318, %v5319
    %v5321 = vrot.slane %v5320, 2
    %v5322 = vadd.f32 %v5320, %v5321
    %v5323 = vrot.slane %v5322, 1
    %v5324 = vadd.f32 %v5322, %v5323
    %v5325 = vmul.f32 %v5324, %v835
    %v5326 = vsub.f32 %v5314, %v5325
    %v5327 = vsub.f32 %v5315, %v5325
    %v5328 = vmul.f32 %v5326, %v5326
    %v5329 = vmul.f32 %v5327, %v5327
    %v5330 = vsel %vm1223, %v5328, 0.0
    %v5331 = vsel %vm1223, %v5329, 0.0
    %v5332 = vadd.f32 %v5330, %v5331
    %v5333 = vrot.slane %v5332, 4
    %v5334 = vadd.f32 %v5332, %v5333
    %v5335 = vrot.slane %v5334, 2
    %v5336 = vadd.f32 %v5334, %v5335
    %v5337 = vrot.slane %v5336, 1
    %v5338 = vadd.f32 %v5336, %v5337
    %v5339 = vmul.f32 %v5338, %v835
    %v5340 = vadd.f32 %v5339, 1e-05
    %v5341 = vrsqrt.pop %v5340
    %v5342 = vmul.f32 %v5326, %v5341
    %v5343 = vmul.f32 %v5327, %v5341
    %v5345 = vlaneseq
    %v5346 = vshrl.u32 %v5345, 7
    %v5347 = vsub.s32 0, %v5346
    %v5348 = vrot.slane %v4546, %v5347
    %v5350 = vmul.f32 %v5342, %v5348
    %v5351 = vmul.f32 %v5343, %v5348
    %v5353 = vlaneseq
    %v5354 = vshrl.u32 %v5353, 7
    %v5355 = vsub.s32 0, %v5354
    %v5356 = vrot.slane %v4548, %v5355
    %v5358 = vadd.f32 %v5350, %v5356
    %v5359 = vadd.f32 %v5351, %v5356
    %v5361 = vlaneseq
    %v5362 = vshrl.u32 %v5361, 7
    %v5363 = vsub.s32 0, %v5362
    %v5364 = vrot.slane %v4559, %v5363
    %v5367 = vsel %vm1223, %v5358, 0
    %v5370 = vsel %vm1223, %v5359, 0
    %5372 = vmatprep.subr.mxu0 0.0
    %5373 = vmatpush1.msra.mxu0 %v4550
    %5374 = vmatprep.subr.mxu0 0.0
    %5375 = vmatpush1.msra.mxu0 %v4551
    %5376 = vmatprep.subr.mxu0 0.0
    %5377 = vmatpush1.msra.mxu0 %v4552
    %5378 = vmatprep.subr.mxu0 0.0
    %5379 = vmatpush1.msra.mxu0 %v4553
    %5380 = vmatprep.subr.mxu0 0.0
    %5381 = vmatpush1.msra.mxu0 %v4554
    %5382 = vmatprep.subr.mxu0 0.0
    %5383 = vmatpush1.msra.mxu0 %v4555
    %5384 = vmatprep.subr.mxu0 0.0
    %5385 = vmatpush1.msra.mxu0 %v4556
    %5386 = vmatprep.subr.mxu0 0.0
    %5387 = vmatpush1.msra.mxu0 %v4557
    %5388 = vmatprep.subr.mxu0 0.0
    %5389 = vmatpush1.msra.mxu0 0.0
    %5390 = vmatprep.subr.mxu0 0.0
    %5391 = vmatpush1.msra.mxu0 0.0
    %5392 = vmatprep.subr.mxu0 0.0
    %5393 = vmatpush1.msra.mxu0 0.0
    %5394 = vmatprep.subr.mxu0 0.0
    %5395 = vmatpush1.msra.mxu0 0.0
    %5396 = vmatprep.subr.mxu0 0.0
    %5397 = vmatpush1.msra.mxu0 0.0
    %5398 = vmatprep.subr.mxu0 0.0
    %5399 = vmatpush1.msra.mxu0 0.0
    %5400 = vmatprep.subr.mxu0 0.0
    %5401 = vmatpush1.msra.mxu0 0.0
    %5402 = vmatprep.subr.mxu0 0.0
    %5403 = vmatpush1.msra.mxu0 0.0
    %5404 = vmatprep.subr.mxu0 0.0
    %5405 = vmatpush1.msra.mxu0 0.0
    %5406 = vmatprep.subr.mxu0 0.0
    %5407 = vmatpush1.msra.mxu0 0.0
    %5408 = vmatprep.subr.mxu0 0.0
    %5409 = vmatpush1.msra.mxu0 0.0
    %5410 = vmatprep.subr.mxu0 0.0
    %5411 = vmatpush1.msra.mxu0 0.0
    %5412 = vmatprep.subr.mxu0 0.0
    %5413 = vmatpush1.msra.mxu0 0.0
    %5414 = vmatprep.subr.mxu0 0.0
    %5415 = vmatpush1.msra.mxu0 0.0
    %5416 = vmatprep.subr.mxu0 0.0
    %5417 = vmatpush1.msra.mxu0 0.0
    %5418 = vmatprep.subr.mxu0 0.0
    %5419 = vmatpush1.msra.mxu0 0.0
    %5420 = vmatprep.subr.mxu0 0.0
    %5421 = vmatpush1.msra.mxu0 0.0
    %5422 = vmatprep.subr.mxu0 0.0
    %5423 = vmatpush1.msra.mxu0 0.0
    %5424 = vmatprep.subr.mxu0 0.0
    %5425 = vmatpush1.msra.mxu0 0.0
    %5426 = vmatprep.subr.mxu0 0.0
    %5427 = vmatpush1.msra.mxu0 0.0
    %5428 = vmatprep.subr.mxu0 0.0
    %5429 = vmatpush1.msra.mxu0 0.0
    %5430 = vmatprep.subr.mxu0 0.0
    %5431 = vmatpush1.msra.mxu0 0.0
    %5432 = vmatprep.subr.mxu0 0.0
    %5433 = vmatpush1.msra.mxu0 0.0
    %5434 = vmatprep.subr.mxu0 0.0
    %5435 = vmatpush1.msra.mxu0 0.0
    %5436 = vmatprep.mubr.f32.mxu0 0.0
    %5437 = vmatmul.mubr.f32.gmra.mrb[0].mxu0 %v5367
    %v5438 = vpop.f32.mrb[0].mxu0
    %v5439 = vadd.f32 %v5364, %v5438
    %v5440 = vpop.f32.mrb[0].mxu0
    %5441 = vmatprep.mubr.f32.mxu0 0.0
    %5442 = vmatmul.mubr.f32.gmra.mrb[0].mxu0 %v5370
    %v5443 = vpop.f32.mrb[0].mxu0
    %v5444 = vadd.f32 %v5364, %v5443
    %v5445 = vpop.f32.mrb[0].mxu0
    %5446 = vdwg.mxu0
    %v5448 = vlaneseq
    %v5449 = vshrl.u32 %v5448, 7
    %v5450 = vsub.s32 0, %v5449
    %v5451 = vrot.slane %v4561, %v5450
    %v5453 = vmul.f32 %v4839, %v5451
    %v5454 = vmul.f32 %v4840, %v5451
    %v5456 = vlaneseq
    %v5457 = vshrl.u32 %v5456, 7
    %v5458 = vsub.s32 0, %v5457
    %v5459 = vrot.slane %v4563, %v5458
    %v5461 = vadd.f32 %v5453, %v5459
    %v5462 = vadd.f32 %v5454, %v5459
    %v5463 = vsel %vm1077, %v5439, 0.0
    %v5464 = vsel %vm1077, %v5444, 0.0
    %v5465 = vadd.f32 %v5463, %v5464
    %v5466 = vrot.slane %v5465, 4
    %v5467 = vadd.f32 %v5465, %v5466
    %v5468 = vrot.slane %v5467, 2
    %v5469 = vadd.f32 %v5467, %v5468
    %v5470 = vrot.slane %v5469, 1
    %v5471 = vadd.f32 %v5469, %v5470
    %v5472 = vmul.f32 %v5471, %v835
    %v5473 = vsub.f32 %v5439, %v5472
    %v5474 = vsub.f32 %v5444, %v5472
    %v5475 = vmul.f32 %v5473, %v5473
    %v5476 = vmul.f32 %v5474, %v5474
    %v5477 = vsel %vm1077, %v5475, 0.0
    %v5478 = vsel %vm1077, %v5476, 0.0
    %v5479 = vadd.f32 %v5477, %v5478
    %v5480 = vrot.slane %v5479, 4
    %v5481 = vadd.f32 %v5479, %v5480
    %v5482 = vrot.slane %v5481, 2
    %v5483 = vadd.f32 %v5481, %v5482
    %v5484 = vrot.slane %v5483, 1
    %v5485 = vadd.f32 %v5483, %v5484
    %v5486 = vmul.f32 %v5485, %v835
    %v5487 = vadd.f32 %v5486, 1e-05
    %v5488 = vrsqrt.pop %v5487
    %v5489 = vmul.f32 %v5473, %v5488
    %v5490 = vmul.f32 %v5474, %v5488
    %v5492 = vlaneseq
    %v5493 = vshrl.u32 %v5492, 7
    %v5494 = vsub.s32 0, %v5493
    %v5495 = vrot.slane %v4568, %v5494
    %v5497 = vmul.f32 %v5489, %v5495
    %v5498 = vmul.f32 %v5490, %v5495
    %v5500 = vlaneseq
    %v5501 = vshrl.u32 %v5500, 7
    %v5502 = vsub.s32 0, %v5501
    %v5503 = vrot.slane %v4570, %v5502
    %v5505 = vadd.f32 %v5497, %v5503
    %v5506 = vadd.f32 %v5498, %v5503
    %v5508 = vsel %vm1077, %v5505, 0
    %v5511 = vsel %vm1077, %v5506, 0
    %v5514 = vsel %vm1128, %v4574, 0
    %5516 = vmatprep.subr.mxu0 0.0
    %5517 = vmatpush1.msra.mxu0 %v4572
    %5518 = vmatprep.subr.mxu0 0.0
    %5519 = vmatpush1.msra.mxu0 %v4573
    %5520 = vmatprep.subr.mxu0 0.0
    %5521 = vmatpush1.msra.mxu0 %v5514
    %5522 = vmatprep.subr.mxu0 0.0
    %5523 = vmatpush1.msra.mxu0 0.0
    %5524 = vmatprep.subr.mxu0 0.0
    %5525 = vmatpush1.msra.mxu0 0.0
    %5526 = vmatprep.subr.mxu0 0.0
    %5527 = vmatpush1.msra.mxu0 0.0
    %5528 = vmatprep.subr.mxu0 0.0
    %5529 = vmatpush1.msra.mxu0 0.0
    %5530 = vmatprep.subr.mxu0 0.0
    %5531 = vmatpush1.msra.mxu0 0.0
    %5532 = vmatprep.subr.mxu0 0.0
    %5533 = vmatpush1.msra.mxu0 0.0
    %5534 = vmatprep.subr.mxu0 0.0
    %5535 = vmatpush1.msra.mxu0 0.0
    %5536 = vmatprep.subr.mxu0 0.0
    %5537 = vmatpush1.msra.mxu0 0.0
    %5538 = vmatprep.subr.mxu0 0.0
    %5539 = vmatpush1.msra.mxu0 0.0
    %5540 = vmatprep.subr.mxu0 0.0
    %5541 = vmatpush1.msra.mxu0 0.0
    %5542 = vmatprep.subr.mxu0 0.0
    %5543 = vmatpush1.msra.mxu0 0.0
    %5544 = vmatprep.subr.mxu0 0.0
    %5545 = vmatpush1.msra.mxu0 0.0
    %5546 = vmatprep.subr.mxu0 0.0
    %5547 = vmatpush1.msra.mxu0 0.0
    %5548 = vmatprep.subr.mxu0 0.0
    %5549 = vmatpush1.msra.mxu0 0.0
    %5550 = vmatprep.subr.mxu0 0.0
    %5551 = vmatpush1.msra.mxu0 0.0
    %5552 = vmatprep.subr.mxu0 0.0
    %5553 = vmatpush1.msra.mxu0 0.0
    %5554 = vmatprep.subr.mxu0 0.0
    %5555 = vmatpush1.msra.mxu0 0.0
    %5556 = vmatprep.subr.mxu0 0.0
    %5557 = vmatpush1.msra.mxu0 0.0
    %5558 = vmatprep.subr.mxu0 0.0
    %5559 = vmatpush1.msra.mxu0 0.0
    %5560 = vmatprep.subr.mxu0 0.0
    %5561 = vmatpush1.msra.mxu0 0.0
    %5562 = vmatprep.subr.mxu0 0.0
    %5563 = vmatpush1.msra.mxu0 0.0
    %5564 = vmatprep.subr.mxu0 0.0
    %5565 = vmatpush1.msra.mxu0 0.0
    %5566 = vmatprep.subr.mxu0 0.0
    %5567 = vmatpush1.msra.mxu0 0.0
    %5568 = vmatprep.subr.mxu0 0.0
    %5569 = vmatpush1.msra.mxu0 0.0
    %5570 = vmatprep.subr.mxu0 0.0
    %5571 = vmatpush1.msra.mxu0 0.0
    %5572 = vmatprep.subr.mxu0 0.0
    %5573 = vmatpush1.msra.mxu0 0.0
    %5574 = vmatprep.subr.mxu0 0.0
    %5575 = vmatpush1.msra.mxu0 0.0
    %5576 = vmatprep.subr.mxu0 0.0
    %5577 = vmatpush1.msra.mxu0 0.0
    %5578 = vmatprep.subr.mxu0 0.0
    %5579 = vmatpush1.msra.mxu0 0.0
    %5580 = vmatprep.mubr.f32.mxu0 0.0
    %5581 = vmatmul.mubr.f32.gmra.mrb[0].mxu0 %v5508
    %v5582 = vpop.f32.mrb[0].mxu0
    %v5583 = vadd.f32 0.0, %v5582
    %v5584 = vpop.f32.mrb[0].mxu0
    %5585 = vmatprep.mubr.f32.mxu0 0.0
    %5586 = vmatmul.mubr.f32.gmra.mrb[0].mxu0 %v5511
    %v5587 = vpop.f32.mrb[0].mxu0
    %v5588 = vadd.f32 0.0, %v5587
    %v5589 = vpop.f32.mrb[0].mxu0
    %5590 = vdwg.mxu0
    %v5592 = vsel %vm825, %v5461, 0
    %v5595 = vsel %vm825, %v5462, 0
    %5597 = vmatprep.subr.mxu0 0.0
    %5598 = vmatpush1.msra.mxu0 %v4565
    %5599 = vmatprep.subr.mxu0 0.0
    %5600 = vmatpush1.msra.mxu0 %v4566
    %5601 = vmatprep.subr.mxu0 0.0
    %5602 = vmatpush1.msra.mxu0 0.0
    %5603 = vmatprep.subr.mxu0 0.0
    %5604 = vmatpush1.msra.mxu0 0.0
    %5605 = vmatprep.subr.mxu0 0.0
    %5606 = vmatpush1.msra.mxu0 0.0
    %5607 = vmatprep.subr.mxu0 0.0
    %5608 = vmatpush1.msra.mxu0 0.0
    %5609 = vmatprep.subr.mxu0 0.0
    %5610 = vmatpush1.msra.mxu0 0.0
    %5611 = vmatprep.subr.mxu0 0.0
    %5612 = vmatpush1.msra.mxu0 0.0
    %5613 = vmatprep.subr.mxu0 0.0
    %5614 = vmatpush1.msra.mxu0 0.0
    %5615 = vmatprep.subr.mxu0 0.0
    %5616 = vmatpush1.msra.mxu0 0.0
    %5617 = vmatprep.subr.mxu0 0.0
    %5618 = vmatpush1.msra.mxu0 0.0
    %5619 = vmatprep.subr.mxu0 0.0
    %5620 = vmatpush1.msra.mxu0 0.0
    %5621 = vmatprep.subr.mxu0 0.0
    %5622 = vmatpush1.msra.mxu0 0.0
    %5623 = vmatprep.subr.mxu0 0.0
    %5624 = vmatpush1.msra.mxu0 0.0
    %5625 = vmatprep.subr.mxu0 0.0
    %5626 = vmatpush1.msra.mxu0 0.0
    %5627 = vmatprep.subr.mxu0 0.0
    %5628 = vmatpush1.msra.mxu0 0.0
    %5629 = vmatprep.subr.mxu0 0.0
    %5630 = vmatpush1.msra.mxu0 0.0
    %5631 = vmatprep.subr.mxu0 0.0
    %5632 = vmatpush1.msra.mxu0 0.0
    %5633 = vmatprep.subr.mxu0 0.0
    %5634 = vmatpush1.msra.mxu0 0.0
    %5635 = vmatprep.subr.mxu0 0.0
    %5636 = vmatpush1.msra.mxu0 0.0
    %5637 = vmatprep.subr.mxu0 0.0
    %5638 = vmatpush1.msra.mxu0 0.0
    %5639 = vmatprep.subr.mxu0 0.0
    %5640 = vmatpush1.msra.mxu0 0.0
    %5641 = vmatprep.subr.mxu0 0.0
    %5642 = vmatpush1.msra.mxu0 0.0
    %5643 = vmatprep.subr.mxu0 0.0
    %5644 = vmatpush1.msra.mxu0 0.0
    %5645 = vmatprep.subr.mxu0 0.0
    %5646 = vmatpush1.msra.mxu0 0.0
    %5647 = vmatprep.subr.mxu0 0.0
    %5648 = vmatpush1.msra.mxu0 0.0
    %5649 = vmatprep.subr.mxu0 0.0
    %5650 = vmatpush1.msra.mxu0 0.0
    %5651 = vmatprep.subr.mxu0 0.0
    %5652 = vmatpush1.msra.mxu0 0.0
    %5653 = vmatprep.subr.mxu0 0.0
    %5654 = vmatpush1.msra.mxu0 0.0
    %5655 = vmatprep.subr.mxu0 0.0
    %5656 = vmatpush1.msra.mxu0 0.0
    %5657 = vmatprep.subr.mxu0 0.0
    %5658 = vmatpush1.msra.mxu0 0.0
    %5659 = vmatprep.subr.mxu0 0.0
    %5660 = vmatpush1.msra.mxu0 0.0
    %5661 = vmatprep.mubr.f32.mxu0 0.0
    %5662 = vmatmul.mubr.f32.gmra.mrb[0].mxu0 %v5592
    %v5663 = vpop.f32.mrb[0].mxu0
    %v5664 = vadd.f32 %v5583, %v5663
    %v5665 = vpop.f32.mrb[0].mxu0
    %5666 = vmatprep.mubr.f32.mxu0 0.0
    %5667 = vmatmul.mubr.f32.gmra.mrb[0].mxu0 %v5595
    %v5668 = vpop.f32.mrb[0].mxu0
    %v5669 = vadd.f32 %v5588, %v5668
    %v5670 = vpop.f32.mrb[0].mxu0
    %5671 = vdwg.mxu0
    %v5673 = vlaneseq
    %v5674 = vshrl.u32 %v5673, 7
    %v5675 = vsub.s32 0, %v5674
    %v5676 = vrot.slane %v4576, %v5675
    %v5678 = vadd.f32 %v5664, %v5676
    %v5679 = vadd.f32 %v5669, %v5676
    %vm5680 = vcmp.ge.f32.partialorder %v5678, 0.0
    %vm5681 = vcmp.ge.f32.partialorder %v5679, 0.0
    %v5682 = vmul.f32 %v5678, 0.1
    %v5683 = vmul.f32 %v5679, 0.1
    %v5684 = vsel %vm5680, %v5678, %v5682
    %v5685 = vsel %vm5681, %v5679, %v5683
    %v5686 = vsel %vm1223, %v5684, 0.0
    %v5687 = vsel %vm1223, %v5685, 0.0
    %v5688 = vadd.f32 %v5686, %v5687
    %v5689 = vrot.slane %v5688, 4
    %v5690 = vadd.f32 %v5688, %v5689
    %v5691 = vrot.slane %v5690, 2
    %v5692 = vadd.f32 %v5690, %v5691
    %v5693 = vrot.slane %v5692, 1
    %v5694 = vadd.f32 %v5692, %v5693
    %v5695 = vmul.f32 %v5694, %v835
    %v5696 = vsub.f32 %v5684, %v5695
    %v5697 = vsub.f32 %v5685, %v5695
    %v5698 = vmul.f32 %v5696, %v5696
    %v5699 = vmul.f32 %v5697, %v5697
    %v5700 = vsel %vm1223, %v5698, 0.0
    %v5701 = vsel %vm1223, %v5699, 0.0
    %v5702 = vadd.f32 %v5700, %v5701
    %v5703 = vrot.slane %v5702, 4
    %v5704 = vadd.f32 %v5702, %v5703
    %v5705 = vrot.slane %v5704, 2
    %v5706 = vadd.f32 %v5704, %v5705
    %v5707 = vrot.slane %v5706, 1
    %v5708 = vadd.f32 %v5706, %v5707
    %v5709 = vmul.f32 %v5708, %v835
    %v5710 = vadd.f32 %v5709, 1e-05
    %v5711 = vrsqrt.pop %v5710
    %v5712 = vmul.f32 %v5696, %v5711
    %v5713 = vmul.f32 %v5697, %v5711
    %v5715 = vlaneseq
    %v5716 = vshrl.u32 %v5715, 7
    %v5717 = vsub.s32 0, %v5716
    %v5718 = vrot.slane %v4578, %v5717
    %v5720 = vmul.f32 %v5712, %v5718
    %v5721 = vmul.f32 %v5713, %v5718
    %v5723 = vlaneseq
    %v5724 = vshrl.u32 %v5723, 7
    %v5725 = vsub.s32 0, %v5724
    %v5726 = vrot.slane %v4580, %v5725
    %v5728 = vadd.f32 %v5720, %v5726
    %v5729 = vadd.f32 %v5721, %v5726
    %v5731 = vlaneseq
    %v5732 = vshrl.u32 %v5731, 7
    %v5733 = vsub.s32 0, %v5732
    %v5734 = vrot.slane %v4591, %v5733
    %v5737 = vsel %vm1223, %v5728, 0
    %v5740 = vsel %vm1223, %v5729, 0
    %5742 = vmatprep.subr.mxu0 0.0
    %5743 = vmatpush1.msra.mxu0 %v4582
    %5744 = vmatprep.subr.mxu0 0.0
    %5745 = vmatpush1.msra.mxu0 %v4583
    %5746 = vmatprep.subr.mxu0 0.0
    %5747 = vmatpush1.msra.mxu0 %v4584
    %5748 = vmatprep.subr.mxu0 0.0
    %5749 = vmatpush1.msra.mxu0 %v4585
    %5750 = vmatprep.subr.mxu0 0.0
    %5751 = vmatpush1.msra.mxu0 %v4586
    %5752 = vmatprep.subr.mxu0 0.0
    %5753 = vmatpush1.msra.mxu0 %v4587
    %5754 = vmatprep.subr.mxu0 0.0
    %5755 = vmatpush1.msra.mxu0 %v4588
    %5756 = vmatprep.subr.mxu0 0.0
    %5757 = vmatpush1.msra.mxu0 %v4589
    %5758 = vmatprep.subr.mxu0 0.0
    %5759 = vmatpush1.msra.mxu0 0.0
    %5760 = vmatprep.subr.mxu0 0.0
    %5761 = vmatpush1.msra.mxu0 0.0
    %5762 = vmatprep.subr.mxu0 0.0
    %5763 = vmatpush1.msra.mxu0 0.0
    %5764 = vmatprep.subr.mxu0 0.0
    %5765 = vmatpush1.msra.mxu0 0.0
    %5766 = vmatprep.subr.mxu0 0.0
    %5767 = vmatpush1.msra.mxu0 0.0
    %5768 = vmatprep.subr.mxu0 0.0
    %5769 = vmatpush1.msra.mxu0 0.0
    %5770 = vmatprep.subr.mxu0 0.0
    %5771 = vmatpush1.msra.mxu0 0.0
    %5772 = vmatprep.subr.mxu0 0.0
    %5773 = vmatpush1.msra.mxu0 0.0
    %5774 = vmatprep.subr.mxu0 0.0
    %5775 = vmatpush1.msra.mxu0 0.0
    %5776 = vmatprep.subr.mxu0 0.0
    %5777 = vmatpush1.msra.mxu0 0.0
    %5778 = vmatprep.subr.mxu0 0.0
    %5779 = vmatpush1.msra.mxu0 0.0
    %5780 = vmatprep.subr.mxu0 0.0
    %5781 = vmatpush1.msra.mxu0 0.0
    %5782 = vmatprep.subr.mxu0 0.0
    %5783 = vmatpush1.msra.mxu0 0.0
    %5784 = vmatprep.subr.mxu0 0.0
    %5785 = vmatpush1.msra.mxu0 0.0
    %5786 = vmatprep.subr.mxu0 0.0
    %5787 = vmatpush1.msra.mxu0 0.0
    %5788 = vmatprep.subr.mxu0 0.0
    %5789 = vmatpush1.msra.mxu0 0.0
    %5790 = vmatprep.subr.mxu0 0.0
    %5791 = vmatpush1.msra.mxu0 0.0
    %5792 = vmatprep.subr.mxu0 0.0
    %5793 = vmatpush1.msra.mxu0 0.0
    %5794 = vmatprep.subr.mxu0 0.0
    %5795 = vmatpush1.msra.mxu0 0.0
    %5796 = vmatprep.subr.mxu0 0.0
    %5797 = vmatpush1.msra.mxu0 0.0
    %5798 = vmatprep.subr.mxu0 0.0
    %5799 = vmatpush1.msra.mxu0 0.0
    %5800 = vmatprep.subr.mxu0 0.0
    %5801 = vmatpush1.msra.mxu0 0.0
    %5802 = vmatprep.subr.mxu0 0.0
    %5803 = vmatpush1.msra.mxu0 0.0
    %5804 = vmatprep.subr.mxu0 0.0
    %5805 = vmatpush1.msra.mxu0 0.0
    %5806 = vmatprep.mubr.f32.mxu0 0.0
    %5807 = vmatmul.mubr.f32.gmra.mrb[0].mxu0 %v5737
    %v5808 = vpop.f32.mrb[0].mxu0
    %v5809 = vadd.f32 %v5734, %v5808
    %v5810 = vpop.f32.mrb[0].mxu0
    %5811 = vmatprep.mubr.f32.mxu0 0.0
    %5812 = vmatmul.mubr.f32.gmra.mrb[0].mxu0 %v5740
    %v5813 = vpop.f32.mrb[0].mxu0
    %v5814 = vadd.f32 %v5734, %v5813
    %v5815 = vpop.f32.mrb[0].mxu0
    %5816 = vdwg.mxu0
    %vm5817 = vcmp.ge.f32.partialorder %v5809, 0.0
    %vm5818 = vcmp.ge.f32.partialorder %v5814, 0.0
    %v5819 = vmul.f32 %v5809, 0.1
    %v5820 = vmul.f32 %v5814, 0.1
    %v5821 = vsel %vm5817, %v5809, %v5819
    %v5822 = vsel %vm5818, %v5814, %v5820
    %v5823 = vsel %vm1223, %v5821, 0.0
    %v5824 = vsel %vm1223, %v5822, 0.0
    %v5825 = vadd.f32 %v5823, %v5824
    %v5826 = vrot.slane %v5825, 4
    %v5827 = vadd.f32 %v5825, %v5826
    %v5828 = vrot.slane %v5827, 2
    %v5829 = vadd.f32 %v5827, %v5828
    %v5830 = vrot.slane %v5829, 1
    %v5831 = vadd.f32 %v5829, %v5830
    %v5832 = vmul.f32 %v5831, %v835
    %v5833 = vsub.f32 %v5821, %v5832
    %v5834 = vsub.f32 %v5822, %v5832
    %v5835 = vmul.f32 %v5833, %v5833
    %v5836 = vmul.f32 %v5834, %v5834
    %v5837 = vsel %vm1223, %v5835, 0.0
    %v5838 = vsel %vm1223, %v5836, 0.0
    %v5839 = vadd.f32 %v5837, %v5838
    %v5840 = vrot.slane %v5839, 4
    %v5841 = vadd.f32 %v5839, %v5840
    %v5842 = vrot.slane %v5841, 2
    %v5843 = vadd.f32 %v5841, %v5842
    %v5844 = vrot.slane %v5843, 1
    %v5845 = vadd.f32 %v5843, %v5844
    %v5846 = vmul.f32 %v5845, %v835
    %v5847 = vadd.f32 %v5846, 1e-05
    %v5848 = vrsqrt.pop %v5847
    %v5849 = vmul.f32 %v5833, %v5848
    %v5850 = vmul.f32 %v5834, %v5848
    %v5852 = vlaneseq
    %v5853 = vshrl.u32 %v5852, 7
    %v5854 = vsub.s32 0, %v5853
    %v5855 = vrot.slane %v4593, %v5854
    %v5857 = vmul.f32 %v5849, %v5855
    %v5858 = vmul.f32 %v5850, %v5855
    %v5860 = vlaneseq
    %v5861 = vshrl.u32 %v5860, 7
    %v5862 = vsub.s32 0, %v5861
    %v5863 = vrot.slane %v4595, %v5862
    %v5865 = vadd.f32 %v5857, %v5863
    %v5866 = vadd.f32 %v5858, %v5863
    %v5868 = vlaneseq
    %v5869 = vshrl.u32 %v5868, 7
    %v5870 = vsub.s32 0, %v5869
    %v5871 = vrot.slane %v4606, %v5870
    %v5874 = vsel %vm1223, %v5865, 0
    %v5877 = vsel %vm1223, %v5866, 0
    %5879 = vmatprep.subr.mxu0 0.0
    %5880 = vmatpush1.msra.mxu0 %v4597
    %5881 = vmatprep.subr.mxu0 0.0
    %5882 = vmatpush1.msra.mxu0 %v4598
    %5883 = vmatprep.subr.mxu0 0.0
    %5884 = vmatpush1.msra.mxu0 %v4599
    %5885 = vmatprep.subr.mxu0 0.0
    %5886 = vmatpush1.msra.mxu0 %v4600
    %5887 = vmatprep.subr.mxu0 0.0
    %5888 = vmatpush1.msra.mxu0 %v4601
    %5889 = vmatprep.subr.mxu0 0.0
    %5890 = vmatpush1.msra.mxu0 %v4602
    %5891 = vmatprep.subr.mxu0 0.0
    %5892 = vmatpush1.msra.mxu0 %v4603
    %5893 = vmatprep.subr.mxu0 0.0
    %5894 = vmatpush1.msra.mxu0 %v4604
    %5895 = vmatprep.subr.mxu0 0.0
    %5896 = vmatpush1.msra.mxu0 0.0
    %5897 = vmatprep.subr.mxu0 0.0
    %5898 = vmatpush1.msra.mxu0 0.0
    %5899 = vmatprep.subr.mxu0 0.0
    %5900 = vmatpush1.msra.mxu0 0.0
    %5901 = vmatprep.subr.mxu0 0.0
    %5902 = vmatpush1.msra.mxu0 0.0
    %5903 = vmatprep.subr.mxu0 0.0
    %5904 = vmatpush1.msra.mxu0 0.0
    %5905 = vmatprep.subr.mxu0 0.0
    %5906 = vmatpush1.msra.mxu0 0.0
    %5907 = vmatprep.subr.mxu0 0.0
    %5908 = vmatpush1.msra.mxu0 0.0
    %5909 = vmatprep.subr.mxu0 0.0
    %5910 = vmatpush1.msra.mxu0 0.0
    %5911 = vmatprep.subr.mxu0 0.0
    %5912 = vmatpush1.msra.mxu0 0.0
    %5913 = vmatprep.subr.mxu0 0.0
    %5914 = vmatpush1.msra.mxu0 0.0
    %5915 = vmatprep.subr.mxu0 0.0
    %5916 = vmatpush1.msra.mxu0 0.0
    %5917 = vmatprep.subr.mxu0 0.0
    %5918 = vmatpush1.msra.mxu0 0.0
    %5919 = vmatprep.subr.mxu0 0.0
    %5920 = vmatpush1.msra.mxu0 0.0
    %5921 = vmatprep.subr.mxu0 0.0
    %5922 = vmatpush1.msra.mxu0 0.0
    %5923 = vmatprep.subr.mxu0 0.0
    %5924 = vmatpush1.msra.mxu0 0.0
    %5925 = vmatprep.subr.mxu0 0.0
    %5926 = vmatpush1.msra.mxu0 0.0
    %5927 = vmatprep.subr.mxu0 0.0
    %5928 = vmatpush1.msra.mxu0 0.0
    %5929 = vmatprep.subr.mxu0 0.0
    %5930 = vmatpush1.msra.mxu0 0.0
    %5931 = vmatprep.subr.mxu0 0.0
    %5932 = vmatpush1.msra.mxu0 0.0
    %5933 = vmatprep.subr.mxu0 0.0
    %5934 = vmatpush1.msra.mxu0 0.0
    %5935 = vmatprep.subr.mxu0 0.0
    %5936 = vmatpush1.msra.mxu0 0.0
    %5937 = vmatprep.subr.mxu0 0.0
    %5938 = vmatpush1.msra.mxu0 0.0
    %5939 = vmatprep.subr.mxu0 0.0
    %5940 = vmatpush1.msra.mxu0 0.0
    %5941 = vmatprep.subr.mxu0 0.0
    %5942 = vmatpush1.msra.mxu0 0.0
    %5943 = vmatprep.mubr.f32.mxu0 0.0
    %5944 = vmatmul.mubr.f32.gmra.mrb[0].mxu0 %v5874
    %v5945 = vpop.f32.mrb[0].mxu0
    %v5946 = vadd.f32 %v5871, %v5945
    %v5947 = vpop.f32.mrb[0].mxu0
    %5948 = vmatprep.mubr.f32.mxu0 0.0
    %5949 = vmatmul.mubr.f32.gmra.mrb[0].mxu0 %v5877
    %v5950 = vpop.f32.mrb[0].mxu0
    %v5951 = vadd.f32 %v5871, %v5950
    %v5952 = vpop.f32.mrb[0].mxu0
    %5953 = vdwg.mxu0
    %5954 = vmatprep.subr.mxu0 0.0
    %5955 = vmatpush1.msra.mxu0 %v5946
    %5956 = vmatprep.subr.mxu0 0.0
    %5957 = vmatpush1.msra.mxu0 %v5951
    %5958 = vmatprep.subr.mxu0 0.0
    %5959 = vmatpush1.msra.mxu0 0.0
    %5960 = vmatprep.subr.mxu0 0.0
    %5961 = vmatpush1.msra.mxu0 0.0
    %5962 = vmatprep.subr.mxu0 0.0
    %5963 = vmatpush1.msra.mxu0 0.0
    %5964 = vmatprep.subr.mxu0 0.0
    %5965 = vmatpush1.msra.mxu0 0.0
    %5966 = vmatprep.subr.mxu0 0.0
    %5967 = vmatpush1.msra.mxu0 0.0
    %5968 = vmatprep.subr.mxu0 0.0
    %5969 = vmatpush1.msra.mxu0 0.0
    %5970 = vmatprep.subr.mxu0 0.0
    %5971 = vmatpush1.msra.mxu0 0.0
    %5972 = vmatprep.subr.mxu0 0.0
    %5973 = vmatpush1.msra.mxu0 0.0
    %5974 = vmatprep.subr.mxu0 0.0
    %5975 = vmatpush1.msra.mxu0 0.0
    %5976 = vmatprep.subr.mxu0 0.0
    %5977 = vmatpush1.msra.mxu0 0.0
    %5978 = vmatprep.subr.mxu0 0.0
    %5979 = vmatpush1.msra.mxu0 0.0
    %5980 = vmatprep.subr.mxu0 0.0
    %5981 = vmatpush1.msra.mxu0 0.0
    %5982 = vmatprep.subr.mxu0 0.0
    %5983 = vmatpush1.msra.mxu0 0.0
    %5984 = vmatprep.subr.mxu0 0.0
    %5985 = vmatpush1.msra.mxu0 0.0
    %5986 = vmatprep.subr.mxu0 0.0
    %5987 = vmatpush1.msra.mxu0 0.0
    %5988 = vmatprep.subr.mxu0 0.0
    %5989 = vmatpush1.msra.mxu0 0.0
    %5990 = vmatprep.subr.mxu0 0.0
    %5991 = vmatpush1.msra.mxu0 0.0
    %5992 = vmatprep.subr.mxu0 0.0
    %5993 = vmatpush1.msra.mxu0 0.0
    %5994 = vmatprep.subr.mxu0 0.0
    %5995 = vmatpush1.msra.mxu0 0.0
    %5996 = vmatprep.subr.mxu0 0.0
    %5997 = vmatpush1.msra.mxu0 0.0
    %5998 = vmatprep.subr.mxu0 0.0
    %5999 = vmatpush1.msra.mxu0 0.0
    %6000 = vmatprep.subr.mxu0 0.0
    %6001 = vmatpush1.msra.mxu0 0.0
    %6002 = vmatprep.subr.mxu0 0.0
    %6003 = vmatpush1.msra.mxu0 0.0
    %6004 = vmatprep.subr.mxu0 0.0
    %6005 = vmatpush1.msra.mxu0 0.0
    %6006 = vmatprep.subr.mxu0 0.0
    %6007 = vmatpush1.msra.mxu0 0.0
    %6008 = vmatprep.subr.mxu0 0.0
    %6009 = vmatpush1.msra.mxu0 0.0
    %6010 = vmatprep.subr.mxu0 0.0
    %6011 = vmatpush1.msra.mxu0 0.0
    %6012 = vmatprep.subr.mxu0 0.0
    %6013 = vmatpush1.msra.mxu0 0.0
    %6014 = vmatprep.subr.mxu0 0.0
    %6015 = vmatpush1.msra.mxu0 0.0
    %6016 = vmatprep.subr.mxu0 0.0
    %6017 = vmatpush1.msra.mxu0 0.0
    %6018 = vmatprep.mubr.f32.mxu0 0.0
    %6019 = vmatmul.mubr.f32.gmra.mrb[0].mxu0 %v2000
    %v6020 = vpop.f32.mrb[0].mxu0
    %v6021 = vadd.f32 0.0, %v6020
    %v6022 = vpop.f32.mrb[0].mxu0
    %6023 = vdwg.mxu0
    %v6024 = vsel %vm825, %v4503, 0.0
    %v6025 = vrot.slane %v6024, 4
    %v6026 = vadd.f32 %v6024, %v6025
    %v6027 = vrot.slane %v6026, 2
    %v6028 = vadd.f32 %v6026, %v6027
    %v6029 = vrot.slane %v6028, 1
    %v6030 = vadd.f32 %v6028, %v6029
    %v6031 = vmul.f32 %v6030, %v2079
    %v6032 = vsub.f32 %v4503, %v6031
    %v6033 = vmul.f32 %v6032, %v6032
    %v6034 = vsel %vm825, %v6033, 0.0
    %v6035 = vrot.slane %v6034, 4
    %v6036 = vadd.f32 %v6034, %v6035
    %v6037 = vrot.slane %v6036, 2
    %v6038 = vadd.f32 %v6036, %v6037
    %v6039 = vrot.slane %v6038, 1
    %v6040 = vadd.f32 %v6038, %v6039
    %v6041 = vmul.f32 %v6040, %v2079
    %v6042 = vadd.f32 %v6041, 1e-05
    %v6043 = vrsqrt.pop %v6042
    %v6044 = vmul.f32 %v6032, %v6043
    %v6046 = vlaneseq
    %v6047 = vshrl.u32 %v6046, 7
    %v6048 = vsub.s32 0, %v6047
    %v6049 = vrot.slane %v4608, %v6048
    %v6051 = vmul.f32 %v6044, %v6049
    %v6053 = vlaneseq
    %v6054 = vshrl.u32 %v6053, 7
    %v6055 = vsub.s32 0, %v6054
    %v6056 = vrot.slane %v4610, %v6055
    %v6058 = vadd.f32 %v6051, %v6056
    %v6059 = vsel %vm1223, %v6021, 0.0
    %v6060 = vrot.slane %v6059, 4
    %v6061 = vadd.f32 %v6059, %v6060
    %v6062 = vrot.slane %v6061, 2
    %v6063 = vadd.f32 %v6061, %v6062
    %v6064 = vrot.slane %v6063, 1
    %v6065 = vadd.f32 %v6063, %v6064
    %v6066 = vmul.f32 %v6065, %v2079
    %v6067 = vsub.f32 %v6021, %v6066
    %v6068 = vmul.f32 %v6067, %v6067
    %v6069 = vsel %vm1223, %v6068, 0.0
    %v6070 = vrot.slane %v6069, 4
    %v6071 = vadd.f32 %v6069, %v6070
    %v6072 = vrot.slane %v6071, 2
    %v6073 = vadd.f32 %v6071, %v6072
    %v6074 = vrot.slane %v6073, 1
    %v6075 = vadd.f32 %v6073, %v6074
    %v6076 = vmul.f32 %v6075, %v2079
    %v6077 = vadd.f32 %v6076, 1e-05
    %v6078 = vrsqrt.pop %v6077
    %v6079 = vmul.f32 %v6067, %v6078
    %v6081 = vlaneseq
    %v6082 = vshrl.u32 %v6081, 7
    %v6083 = vsub.s32 0, %v6082
    %v6084 = vrot.slane %v4615, %v6083
    %v6086 = vmul.f32 %v6079, %v6084
    %v6088 = vlaneseq
    %v6089 = vshrl.u32 %v6088, 7
    %v6090 = vsub.s32 0, %v6089
    %v6091 = vrot.slane %v4617, %v6090
    %v6093 = vadd.f32 %v6086, %v6091
    %v6095 = vsel %vm1223, %v6093, 0
    %6097 = vmatprep.subr.mxu0 0.0
    %6098 = vmatpush1.msra.mxu0 %v4619
    %6099 = vmatprep.subr.mxu0 0.0
    %6100 = vmatpush1.msra.mxu0 %v4620
    %6101 = vmatprep.subr.mxu0 0.0
    %6102 = vmatpush1.msra.mxu0 %v4621
    %6103 = vmatprep.subr.mxu0 0.0
    %6104 = vmatpush1.msra.mxu0 %v4622
    %6105 = vmatprep.subr.mxu0 0.0
    %6106 = vmatpush1.msra.mxu0 %v4623
    %6107 = vmatprep.subr.mxu0 0.0
    %6108 = vmatpush1.msra.mxu0 %v4624
    %6109 = vmatprep.subr.mxu0 0.0
    %6110 = vmatpush1.msra.mxu0 %v4625
    %6111 = vmatprep.subr.mxu0 0.0
    %6112 = vmatpush1.msra.mxu0 %v4626
    %6113 = vmatprep.subr.mxu0 0.0
    %6114 = vmatpush1.msra.mxu0 0.0
    %6115 = vmatprep.subr.mxu0 0.0
    %6116 = vmatpush1.msra.mxu0 0.0
    %6117 = vmatprep.subr.mxu0 0.0
    %6118 = vmatpush1.msra.mxu0 0.0
    %6119 = vmatprep.subr.mxu0 0.0
    %6120 = vmatpush1.msra.mxu0 0.0
    %6121 = vmatprep.subr.mxu0 0.0
    %6122 = vmatpush1.msra.mxu0 0.0
    %6123 = vmatprep.subr.mxu0 0.0
    %6124 = vmatpush1.msra.mxu0 0.0
    %6125 = vmatprep.subr.mxu0 0.0
    %6126 = vmatpush1.msra.mxu0 0.0
    %6127 = vmatprep.subr.mxu0 0.0
    %6128 = vmatpush1.msra.mxu0 0.0
    %6129 = vmatprep.subr.mxu0 0.0
    %6130 = vmatpush1.msra.mxu0 0.0
    %6131 = vmatprep.subr.mxu0 0.0
    %6132 = vmatpush1.msra.mxu0 0.0
    %6133 = vmatprep.subr.mxu0 0.0
    %6134 = vmatpush1.msra.mxu0 0.0
    %6135 = vmatprep.subr.mxu0 0.0
    %6136 = vmatpush1.msra.mxu0 0.0
    %6137 = vmatprep.subr.mxu0 0.0
    %6138 = vmatpush1.msra.mxu0 0.0
    %6139 = vmatprep.subr.mxu0 0.0
    %6140 = vmatpush1.msra.mxu0 0.0
    %6141 = vmatprep.subr.mxu0 0.0
    %6142 = vmatpush1.msra.mxu0 0.0
    %6143 = vmatprep.subr.mxu0 0.0
    %6144 = vmatpush1.msra.mxu0 0.0
    %6145 = vmatprep.subr.mxu0 0.0
    %6146 = vmatpush1.msra.mxu0 0.0
    %6147 = vmatprep.subr.mxu0 0.0
    %6148 = vmatpush1.msra.mxu0 0.0
    %6149 = vmatprep.subr.mxu0 0.0
    %6150 = vmatpush1.msra.mxu0 0.0
    %6151 = vmatprep.subr.mxu0 0.0
    %6152 = vmatpush1.msra.mxu0 0.0
    %6153 = vmatprep.subr.mxu0 0.0
    %6154 = vmatpush1.msra.mxu0 0.0
    %6155 = vmatprep.subr.mxu0 0.0
    %6156 = vmatpush1.msra.mxu0 0.0
    %6157 = vmatprep.subr.mxu0 0.0
    %6158 = vmatpush1.msra.mxu0 0.0
    %6159 = vmatprep.subr.mxu0 0.0
    %6160 = vmatpush1.msra.mxu0 0.0
    %6161 = vmatprep.mubr.f32.mxu0 0.0
    %6162 = vmatmul.mubr.f32.gmra.mrb[0].mxu0 %v6095
    %v6163 = vpop.f32.mrb[0].mxu0
    %v6164 = vadd.f32 0.0, %v6163
    %v6165 = vpop.f32.mrb[0].mxu0
    %6166 = vdwg.mxu0
    %v6168 = vsel %vm825, %v6058, 0
    %6170 = vmatprep.subr.mxu0 0.0
    %6171 = vmatpush1.msra.mxu0 %v4612
    %6172 = vmatprep.subr.mxu0 0.0
    %6173 = vmatpush1.msra.mxu0 %v4613
    %6174 = vmatprep.subr.mxu0 0.0
    %6175 = vmatpush1.msra.mxu0 0.0
    %6176 = vmatprep.subr.mxu0 0.0
    %6177 = vmatpush1.msra.mxu0 0.0
    %6178 = vmatprep.subr.mxu0 0.0
    %6179 = vmatpush1.msra.mxu0 0.0
    %6180 = vmatprep.subr.mxu0 0.0
    %6181 = vmatpush1.msra.mxu0 0.0
    %6182 = vmatprep.subr.mxu0 0.0
    %6183 = vmatpush1.msra.mxu0 0.0
    %6184 = vmatprep.subr.mxu0 0.0
    %6185 = vmatpush1.msra.mxu0 0.0
    %6186 = vmatprep.subr.mxu0 0.0
    %6187 = vmatpush1.msra.mxu0 0.0
    %6188 = vmatprep.subr.mxu0 0.0
    %6189 = vmatpush1.msra.mxu0 0.0
    %6190 = vmatprep.subr.mxu0 0.0
    %6191 = vmatpush1.msra.mxu0 0.0
    %6192 = vmatprep.subr.mxu0 0.0
    %6193 = vmatpush1.msra.mxu0 0.0
    %6194 = vmatprep.subr.mxu0 0.0
    %6195 = vmatpush1.msra.mxu0 0.0
    %6196 = vmatprep.subr.mxu0 0.0
    %6197 = vmatpush1.msra.mxu0 0.0
    %6198 = vmatprep.subr.mxu0 0.0
    %6199 = vmatpush1.msra.mxu0 0.0
    %6200 = vmatprep.subr.mxu0 0.0
    %6201 = vmatpush1.msra.mxu0 0.0
    %6202 = vmatprep.subr.mxu0 0.0
    %6203 = vmatpush1.msra.mxu0 0.0
    %6204 = vmatprep.subr.mxu0 0.0
    %6205 = vmatpush1.msra.mxu0 0.0
    %6206 = vmatprep.subr.mxu0 0.0
    %6207 = vmatpush1.msra.mxu0 0.0
    %6208 = vmatprep.subr.mxu0 0.0
    %6209 = vmatpush1.msra.mxu0 0.0
    %6210 = vmatprep.subr.mxu0 0.0
    %6211 = vmatpush1.msra.mxu0 0.0
    %6212 = vmatprep.subr.mxu0 0.0
    %6213 = vmatpush1.msra.mxu0 0.0
    %6214 = vmatprep.subr.mxu0 0.0
    %6215 = vmatpush1.msra.mxu0 0.0
    %6216 = vmatprep.subr.mxu0 0.0
    %6217 = vmatpush1.msra.mxu0 0.0
    %6218 = vmatprep.subr.mxu0 0.0
    %6219 = vmatpush1.msra.mxu0 0.0
    %6220 = vmatprep.subr.mxu0 0.0
    %6221 = vmatpush1.msra.mxu0 0.0
    %6222 = vmatprep.subr.mxu0 0.0
    %6223 = vmatpush1.msra.mxu0 0.0
    %6224 = vmatprep.subr.mxu0 0.0
    %6225 = vmatpush1.msra.mxu0 0.0
    %6226 = vmatprep.subr.mxu0 0.0
    %6227 = vmatpush1.msra.mxu0 0.0
    %6228 = vmatprep.subr.mxu0 0.0
    %6229 = vmatpush1.msra.mxu0 0.0
    %6230 = vmatprep.subr.mxu0 0.0
    %6231 = vmatpush1.msra.mxu0 0.0
    %6232 = vmatprep.subr.mxu0 0.0
    %6233 = vmatpush1.msra.mxu0 0.0
    %6234 = vmatprep.mubr.f32.mxu0 0.0
    %6235 = vmatmul.mubr.f32.gmra.mrb[0].mxu0 %v6168
    %v6236 = vpop.f32.mrb[0].mxu0
    %v6237 = vadd.f32 %v6164, %v6236
    %v6238 = vpop.f32.mrb[0].mxu0
    %6239 = vdwg.mxu0
    %v6241 = vlaneseq
    %v6242 = vshrl.u32 %v6241, 7
    %v6243 = vsub.s32 0, %v6242
    %v6244 = vrot.slane %v4628, %v6243
    %v6246 = vadd.f32 %v6237, %v6244
    %vm6247 = vcmp.ge.f32.partialorder %v6246, 0.0
    %v6248 = vmul.f32 %v6246, 0.1
    %v6249 = vsel %vm6247, %v6246, %v6248
    %v6250 = vsel %vm2299, %v6249, 0.0
    %v6251 = vrot.slane %v6250, 4
    %v6252 = vadd.f32 %v6250, %v6251
    %v6253 = vrot.slane %v6252, 2
    %v6254 = vadd.f32 %v6252, %v6253
    %v6255 = vrot.slane %v6254, 1
    %v6256 = vadd.f32 %v6254, %v6255
    %v6257 = vmul.f32 %v6256, %v2079
    %v6258 = vsub.f32 %v6249, %v6257
    %v6259 = vmul.f32 %v6258, %v6258
    %v6260 = vsel %vm2299, %v6259, 0.0
    %v6261 = vrot.slane %v6260, 4
    %v6262 = vadd.f32 %v6260, %v6261
    %v6263 = vrot.slane %v6262, 2
    %v6264 = vadd.f32 %v6262, %v6263
    %v6265 = vrot.slane %v6264, 1
    %v6266 = vadd.f32 %v6264, %v6265
    %v6267 = vmul.f32 %v6266, %v2079
    %v6268 = vadd.f32 %v6267, 1e-05
    %v6269 = vrsqrt.pop %v6268
    %v6270 = vmul.f32 %v6258, %v6269
    %v6272 = vlaneseq
    %v6273 = vshrl.u32 %v6272, 7
    %v6274 = vsub.s32 0, %v6273
    %v6275 = vrot.slane %v4630, %v6274
    %v6277 = vmul.f32 %v6270, %v6275
    %v6279 = vlaneseq
    %v6280 = vshrl.u32 %v6279, 7
    %v6281 = vsub.s32 0, %v6280
    %v6282 = vrot.slane %v4632, %v6281
    %v6284 = vadd.f32 %v6277, %v6282
    %v6286 = vlaneseq
    %v6287 = vshrl.u32 %v6286, 7
    %v6288 = vsub.s32 0, %v6287
    %v6289 = vrot.slane %v4645, %v6288
    %v6292 = vsel %vm2299, %v6284, 0
    %6294 = vmatprep.subr.mxu0 0.0
    %6295 = vmatpush1.msra.mxu0 %v4634
    %6296 = vmatprep.subr.mxu0 0.0
    %6297 = vmatpush1.msra.mxu0 %v4635
    %6298 = vmatprep.subr.mxu0 0.0
    %6299 = vmatpush1.msra.mxu0 %v4636
    %6300 = vmatprep.subr.mxu0 0.0
    %6301 = vmatpush1.msra.mxu0 %v4637
    %6302 = vmatprep.subr.mxu0 0.0
    %6303 = vmatpush1.msra.mxu0 %v4638
    %6304 = vmatprep.subr.mxu0 0.0
    %6305 = vmatpush1.msra.mxu0 %v4639
    %6306 = vmatprep.subr.mxu0 0.0
    %6307 = vmatpush1.msra.mxu0 %v4640
    %6308 = vmatprep.subr.mxu0 0.0
    %6309 = vmatpush1.msra.mxu0 %v4641
    %6310 = vmatprep.subr.mxu0 0.0
    %6311 = vmatpush1.msra.mxu0 %v4642
    %6312 = vmatprep.subr.mxu0 0.0
    %6313 = vmatpush1.msra.mxu0 %v4643
    %6314 = vmatprep.subr.mxu0 0.0
    %6315 = vmatpush1.msra.mxu0 0.0
    %6316 = vmatprep.subr.mxu0 0.0
    %6317 = vmatpush1.msra.mxu0 0.0
    %6318 = vmatprep.subr.mxu0 0.0
    %6319 = vmatpush1.msra.mxu0 0.0
    %6320 = vmatprep.subr.mxu0 0.0
    %6321 = vmatpush1.msra.mxu0 0.0
    %6322 = vmatprep.subr.mxu0 0.0
    %6323 = vmatpush1.msra.mxu0 0.0
    %6324 = vmatprep.subr.mxu0 0.0
    %6325 = vmatpush1.msra.mxu0 0.0
    %6326 = vmatprep.subr.mxu0 0.0
    %6327 = vmatpush1.msra.mxu0 0.0
    %6328 = vmatprep.subr.mxu0 0.0
    %6329 = vmatpush1.msra.mxu0 0.0
    %6330 = vmatprep.subr.mxu0 0.0
    %6331 = vmatpush1.msra.mxu0 0.0
    %6332 = vmatprep.subr.mxu0 0.0
    %6333 = vmatpush1.msra.mxu0 0.0
    %6334 = vmatprep.subr.mxu0 0.0
    %6335 = vmatpush1.msra.mxu0 0.0
    %6336 = vmatprep.subr.mxu0 0.0
    %6337 = vmatpush1.msra.mxu0 0.0
    %6338 = vmatprep.subr.mxu0 0.0
    %6339 = vmatpush1.msra.mxu0 0.0
    %6340 = vmatprep.subr.mxu0 0.0
    %6341 = vmatpush1.msra.mxu0 0.0
    %6342 = vmatprep.subr.mxu0 0.0
    %6343 = vmatpush1.msra.mxu0 0.0
    %6344 = vmatprep.subr.mxu0 0.0
    %6345 = vmatpush1.msra.mxu0 0.0
    %6346 = vmatprep.subr.mxu0 0.0
    %6347 = vmatpush1.msra.mxu0 0.0
    %6348 = vmatprep.subr.mxu0 0.0
    %6349 = vmatpush1.msra.mxu0 0.0
    %6350 = vmatprep.subr.mxu0 0.0
    %6351 = vmatpush1.msra.mxu0 0.0
    %6352 = vmatprep.subr.mxu0 0.0
    %6353 = vmatpush1.msra.mxu0 0.0
    %6354 = vmatprep.subr.mxu0 0.0
    %6355 = vmatpush1.msra.mxu0 0.0
    %6356 = vmatprep.subr.mxu0 0.0
    %6357 = vmatpush1.msra.mxu0 0.0
    %6358 = vmatprep.mubr.f32.mxu0 0.0
    %6359 = vmatmul.mubr.f32.gmra.mrb[0].mxu0 %v6292
    %v6360 = vpop.f32.mrb[0].mxu0
    %v6361 = vadd.f32 %v6289, %v6360
    %v6362 = vpop.f32.mrb[0].mxu0
    %6363 = vdwg.mxu0
    %vm6364 = vcmp.ge.f32.partialorder %v6361, 0.0
    %v6365 = vmul.f32 %v6361, 0.1
    %v6366 = vsel %vm6364, %v6361, %v6365
    %v6367 = vsel %vm2299, %v6366, 0.0
    %v6368 = vrot.slane %v6367, 4
    %v6369 = vadd.f32 %v6367, %v6368
    %v6370 = vrot.slane %v6369, 2
    %v6371 = vadd.f32 %v6369, %v6370
    %v6372 = vrot.slane %v6371, 1
    %v6373 = vadd.f32 %v6371, %v6372
    %v6374 = vmul.f32 %v6373, %v2079
    %v6375 = vsub.f32 %v6366, %v6374
    %v6376 = vmul.f32 %v6375, %v6375
    %v6377 = vsel %vm2299, %v6376, 0.0
    %v6378 = vrot.slane %v6377, 4
    %v6379 = vadd.f32 %v6377, %v6378
    %v6380 = vrot.slane %v6379, 2
    %v6381 = vadd.f32 %v6379, %v6380
    %v6382 = vrot.slane %v6381, 1
    %v6383 = vadd.f32 %v6381, %v6382
    %v6384 = vmul.f32 %v6383, %v2079
    %v6385 = vadd.f32 %v6384, 1e-05
    %v6386 = vrsqrt.pop %v6385
    %v6387 = vmul.f32 %v6375, %v6386
    %v6389 = vlaneseq
    %v6390 = vshrl.u32 %v6389, 7
    %v6391 = vsub.s32 0, %v6390
    %v6392 = vrot.slane %v4647, %v6391
    %v6394 = vmul.f32 %v6387, %v6392
    %v6396 = vlaneseq
    %v6397 = vshrl.u32 %v6396, 7
    %v6398 = vsub.s32 0, %v6397
    %v6399 = vrot.slane %v4649, %v6398
    %v6401 = vadd.f32 %v6394, %v6399
    %v6403 = vlaneseq
    %v6404 = vshrl.u32 %v6403, 7
    %v6405 = vsub.s32 0, %v6404
    %v6406 = vrot.slane %v4662, %v6405
    %v6409 = vsel %vm2299, %v6401, 0
    %6411 = vmatprep.subr.mxu0 0.0
    %6412 = vmatpush1.msra.mxu0 %v4651
    %6413 = vmatprep.subr.mxu0 0.0
    %6414 = vmatpush1.msra.mxu0 %v4652
    %6415 = vmatprep.subr.mxu0 0.0
    %6416 = vmatpush1.msra.mxu0 %v4653
    %6417 = vmatprep.subr.mxu0 0.0
    %6418 = vmatpush1.msra.mxu0 %v4654
    %6419 = vmatprep.subr.mxu0 0.0
    %6420 = vmatpush1.msra.mxu0 %v4655
    %6421 = vmatprep.subr.mxu0 0.0
    %6422 = vmatpush1.msra.mxu0 %v4656
    %6423 = vmatprep.subr.mxu0 0.0
    %6424 = vmatpush1.msra.mxu0 %v4657
    %6425 = vmatprep.subr.mxu0 0.0
    %6426 = vmatpush1.msra.mxu0 %v4658
    %6427 = vmatprep.subr.mxu0 0.0
    %6428 = vmatpush1.msra.mxu0 %v4659
    %6429 = vmatprep.subr.mxu0 0.0
    %6430 = vmatpush1.msra.mxu0 %v4660
    %6431 = vmatprep.subr.mxu0 0.0
    %6432 = vmatpush1.msra.mxu0 0.0
    %6433 = vmatprep.subr.mxu0 0.0
    %6434 = vmatpush1.msra.mxu0 0.0
    %6435 = vmatprep.subr.mxu0 0.0
    %6436 = vmatpush1.msra.mxu0 0.0
    %6437 = vmatprep.subr.mxu0 0.0
    %6438 = vmatpush1.msra.mxu0 0.0
    %6439 = vmatprep.subr.mxu0 0.0
    %6440 = vmatpush1.msra.mxu0 0.0
    %6441 = vmatprep.subr.mxu0 0.0
    %6442 = vmatpush1.msra.mxu0 0.0
    %6443 = vmatprep.subr.mxu0 0.0
    %6444 = vmatpush1.msra.mxu0 0.0
    %6445 = vmatprep.subr.mxu0 0.0
    %6446 = vmatpush1.msra.mxu0 0.0
    %6447 = vmatprep.subr.mxu0 0.0
    %6448 = vmatpush1.msra.mxu0 0.0
    %6449 = vmatprep.subr.mxu0 0.0
    %6450 = vmatpush1.msra.mxu0 0.0
    %6451 = vmatprep.subr.mxu0 0.0
    %6452 = vmatpush1.msra.mxu0 0.0
    %6453 = vmatprep.subr.mxu0 0.0
    %6454 = vmatpush1.msra.mxu0 0.0
    %6455 = vmatprep.subr.mxu0 0.0
    %6456 = vmatpush1.msra.mxu0 0.0
    %6457 = vmatprep.subr.mxu0 0.0
    %6458 = vmatpush1.msra.mxu0 0.0
    %6459 = vmatprep.subr.mxu0 0.0
    %6460 = vmatpush1.msra.mxu0 0.0
    %6461 = vmatprep.subr.mxu0 0.0
    %6462 = vmatpush1.msra.mxu0 0.0
    %6463 = vmatprep.subr.mxu0 0.0
    %6464 = vmatpush1.msra.mxu0 0.0
    %6465 = vmatprep.subr.mxu0 0.0
    %6466 = vmatpush1.msra.mxu0 0.0
    %6467 = vmatprep.subr.mxu0 0.0
    %6468 = vmatpush1.msra.mxu0 0.0
    %6469 = vmatprep.subr.mxu0 0.0
    %6470 = vmatpush1.msra.mxu0 0.0
    %6471 = vmatprep.subr.mxu0 0.0
    %6472 = vmatpush1.msra.mxu0 0.0
    %6473 = vmatprep.subr.mxu0 0.0
    %6474 = vmatpush1.msra.mxu0 0.0
    %6475 = vmatprep.mubr.f32.mxu0 0.0
    %6476 = vmatmul.mubr.f32.gmra.mrb[0].mxu0 %v6409
    %v6477 = vpop.f32.mrb[0].mxu0
    %v6478 = vadd.f32 %v6406, %v6477
    %v6479 = vpop.f32.mrb[0].mxu0
    %6480 = vdwg.mxu0
    %v6481 = vld [vmem:[#allocation8] sm:$0xff]
    %v6482 = vld [vmem:[#allocation8 + $0x8] sm:$0xff]
    %v6483 = vld [vmem:[#allocation3] sm:$0x1]
    %v6485 = vlaneseq
    %v6486 = vshrl.u32 %v6485, 7
    %v6487 = vsub.s32 0, %v6486
    %v6488 = vrot.slane %v6483, %v6487
    %v6491 = vsel %vm825, %v6478, 0
    %6493 = vmatprep.subr.mxu0 0.0
    %6494 = vmatpush1.msra.mxu0 %v6481
    %6495 = vmatprep.subr.mxu0 0.0
    %6496 = vmatpush1.msra.mxu0 %v6482
    %6497 = vmatprep.subr.mxu0 0.0
    %6498 = vmatpush1.msra.mxu0 0.0
    %6499 = vmatprep.subr.mxu0 0.0
    %6500 = vmatpush1.msra.mxu0 0.0
    %6501 = vmatprep.subr.mxu0 0.0
    %6502 = vmatpush1.msra.mxu0 0.0
    %6503 = vmatprep.subr.mxu0 0.0
    %6504 = vmatpush1.msra.mxu0 0.0
    %6505 = vmatprep.subr.mxu0 0.0
    %6506 = vmatpush1.msra.mxu0 0.0
    %6507 = vmatprep.subr.mxu0 0.0
    %6508 = vmatpush1.msra.mxu0 0.0
    %6509 = vmatprep.subr.mxu0 0.0
    %6510 = vmatpush1.msra.mxu0 0.0
    %6511 = vmatprep.subr.mxu0 0.0
    %6512 = vmatpush1.msra.mxu0 0.0
    %6513 = vmatprep.subr.mxu0 0.0
    %6514 = vmatpush1.msra.mxu0 0.0
    %6515 = vmatprep.subr.mxu0 0.0
    %6516 = vmatpush1.msra.mxu0 0.0
    %6517 = vmatprep.subr.mxu0 0.0
    %6518 = vmatpush1.msra.mxu0 0.0
    %6519 = vmatprep.subr.mxu0 0.0
    %6520 = vmatpush1.msra.mxu0 0.0
    %6521 = vmatprep.subr.mxu0 0.0
    %6522 = vmatpush1.msra.mxu0 0.0
    %6523 = vmatprep.subr.mxu0 0.0
    %6524 = vmatpush1.msra.mxu0 0.0
    %6525 = vmatprep.subr.mxu0 0.0
    %6526 = vmatpush1.msra.mxu0 0.0
    %6527 = vmatprep.subr.mxu0 0.0
    %6528 = vmatpush1.msra.mxu0 0.0
    %6529 = vmatprep.subr.mxu0 0.0
    %6530 = vmatpush1.msra.mxu0 0.0
    %6531 = vmatprep.subr.mxu0 0.0
    %6532 = vmatpush1.msra.mxu0 0.0
    %6533 = vmatprep.subr.mxu0 0.0
    %6534 = vmatpush1.msra.mxu0 0.0
    %6535 = vmatprep.subr.mxu0 0.0
    %6536 = vmatpush1.msra.mxu0 0.0
    %6537 = vmatprep.subr.mxu0 0.0
    %6538 = vmatpush1.msra.mxu0 0.0
    %6539 = vmatprep.subr.mxu0 0.0
    %6540 = vmatpush1.msra.mxu0 0.0
    %6541 = vmatprep.subr.mxu0 0.0
    %6542 = vmatpush1.msra.mxu0 0.0
    %6543 = vmatprep.subr.mxu0 0.0
    %6544 = vmatpush1.msra.mxu0 0.0
    %6545 = vmatprep.subr.mxu0 0.0
    %6546 = vmatpush1.msra.mxu0 0.0
    %6547 = vmatprep.subr.mxu0 0.0
    %6548 = vmatpush1.msra.mxu0 0.0
    %6549 = vmatprep.subr.mxu0 0.0
    %6550 = vmatpush1.msra.mxu0 0.0
    %6551 = vmatprep.subr.mxu0 0.0
    %6552 = vmatpush1.msra.mxu0 0.0
    %6553 = vmatprep.subr.mxu0 0.0
    %6554 = vmatpush1.msra.mxu0 0.0
    %6555 = vmatprep.subr.mxu0 0.0
    %6556 = vmatpush1.msra.mxu0 0.0
    %6557 = vmatprep.mubr.f32.mxu0 0.0
    %6558 = vmatmul.mubr.f32.gmra.mrb[0].mxu0 %v6491
    %v6559 = vpop.f32.mrb[0].mxu0
    %v6560 = vadd.f32 %v6488, %v6559
    %v6561 = vpop.f32.mrb[0].mxu0
    %6562 = vdwg.mxu0
    %v6563 = vld [vmem:[#allocation6] sm:$0xff]
    %v6564 = vld [vmem:[#allocation6 + $0x8] sm:$0xff]
    %v6565 = vld [vmem:[#allocation6 + $0x10] sm:$0x7]
    %v6566 = vld [vmem:[#allocation2] sm:$0x1]
    %v6568 = vlaneseq
    %v6569 = vshrl.u32 %v6568, 7
    %v6570 = vsub.s32 0, %v6569
    %v6571 = vrot.slane %v6566, %v6570
    %v6574 = vsel %vm1077, %v5439, 0
    %v6577 = vsel %vm1077, %v5444, 0
    %v6580 = vsel %vm1128, %v6565, 0
    %6582 = vmatprep.subr.mxu0 0.0
    %6583 = vmatpush1.msra.mxu0 %v6563
    %6584 = vmatprep.subr.mxu0 0.0
    %6585 = vmatpush1.msra.mxu0 %v6564
    %6586 = vmatprep.subr.mxu0 0.0
    %6587 = vmatpush1.msra.mxu0 %v6580
    %6588 = vmatprep.subr.mxu0 0.0
    %6589 = vmatpush1.msra.mxu0 0.0
    %6590 = vmatprep.subr.mxu0 0.0
    %6591 = vmatpush1.msra.mxu0 0.0
    %6592 = vmatprep.subr.mxu0 0.0
    %6593 = vmatpush1.msra.mxu0 0.0
    %6594 = vmatprep.subr.mxu0 0.0
    %6595 = vmatpush1.msra.mxu0 0.0
    %6596 = vmatprep.subr.mxu0 0.0
    %6597 = vmatpush1.msra.mxu0 0.0
    %6598 = vmatprep.subr.mxu0 0.0
    %6599 = vmatpush1.msra.mxu0 0.0
    %6600 = vmatprep.subr.mxu0 0.0
    %6601 = vmatpush1.msra.mxu0 0.0
    %6602 = vmatprep.subr.mxu0 0.0
    %6603 = vmatpush1.msra.mxu0 0.0
    %6604 = vmatprep.subr.mxu0 0.0
    %6605 = vmatpush1.msra.mxu0 0.0
    %6606 = vmatprep.subr.mxu0 0.0
    %6607 = vmatpush1.msra.mxu0 0.0
    %6608 = vmatprep.subr.mxu0 0.0
    %6609 = vmatpush1.msra.mxu0 0.0
    %6610 = vmatprep.subr.mxu0 0.0
    %6611 = vmatpush1.msra.mxu0 0.0
    %6612 = vmatprep.subr.mxu0 0.0
    %6613 = vmatpush1.msra.mxu0 0.0
    %6614 = vmatprep.subr.mxu0 0.0
    %6615 = vmatpush1.msra.mxu0 0.0
    %6616 = vmatprep.subr.mxu0 0.0
    %6617 = vmatpush1.msra.mxu0 0.0
    %6618 = vmatprep.subr.mxu0 0.0
    %6619 = vmatpush1.msra.mxu0 0.0
    %6620 = vmatprep.subr.mxu0 0.0
    %6621 = vmatpush1.msra.mxu0 0.0
    %6622 = vmatprep.subr.mxu0 0.0
    %6623 = vmatpush1.msra.mxu0 0.0
    %6624 = vmatprep.subr.mxu0 0.0
    %6625 = vmatpush1.msra.mxu0 0.0
    %6626 = vmatprep.subr.mxu0 0.0
    %6627 = vmatpush1.msra.mxu0 0.0
    %6628 = vmatprep.subr.mxu0 0.0
    %6629 = vmatpush1.msra.mxu0 0.0
    %6630 = vmatprep.subr.mxu0 0.0
    %6631 = vmatpush1.msra.mxu0 0.0
    %6632 = vmatprep.subr.mxu0 0.0
    %6633 = vmatpush1.msra.mxu0 0.0
    %6634 = vmatprep.subr.mxu0 0.0
    %6635 = vmatpush1.msra.mxu0 0.0
    %6636 = vmatprep.subr.mxu0 0.0
    %6637 = vmatpush1.msra.mxu0 0.0
    %6638 = vmatprep.subr.mxu0 0.0
    %6639 = vmatpush1.msra.mxu0 0.0
    %6640 = vmatprep.subr.mxu0 0.0
    %6641 = vmatpush1.msra.mxu0 0.0
    %6642 = vmatprep.subr.mxu0 0.0
    %6643 = vmatpush1.msra.mxu0 0.0
    %6644 = vmatprep.subr.mxu0 0.0
    %6645 = vmatpush1.msra.mxu0 0.0
    %6646 = vmatprep.mubr.f32.mxu0 0.0
    %6647 = vmatmul.mubr.f32.gmra.mrb[0].mxu0 %v6574
    %v6648 = vpop.f32.mrb[0].mxu0
    %v6649 = vadd.f32 %v6571, %v6648
    %v6650 = vpop.f32.mrb[0].mxu0
    %6651 = vmatprep.mubr.f32.mxu0 0.0
    %6652 = vmatmul.mubr.f32.gmra.mrb[0].mxu0 %v6577
    %v6653 = vpop.f32.mrb[0].mxu0
    %v6654 = vadd.f32 %v6571, %v6653
    %v6655 = vpop.f32.mrb[0].mxu0
    %6656 = vdwg.mxu0
    %v6657 = vxor.u32 %v6560, 2147483648
    %v6658 = vmul.f32 %v6657, 1.442695
    %v6659 = vpow.pop %v6658
    %v6660 = vadd.f32 %v6659, 1.0
    %v6661 = vrcp.pop %v6660
    %v6662 = vmul.f32 1.0, %v6661
    %vm6663 = vcmask 7168
    %6664 = vst.msk [vmem:[%s115] sm:$0xff] %vm6663, %v6662
    %v6665 = vxor.u32 %v6649, 2147483648
    %v6666 = vxor.u32 %v6654, 2147483648
    %v6667 = vmul.f32 %v6665, 1.442695
    %v6668 = vpow.pop %v6667
    %v6669 = vmul.f32 %v6666, 1.442695
    %v6670 = vpow.pop %v6669
    %v6671 = vadd.f32 %v6668, 1.0
    %v6672 = vadd.f32 %v6670, 1.0
    %v6673 = vrcp.pop %v6671
    %v6674 = vmul.f32 1.0, %v6673
    %v6675 = vrcp.pop %v6672
    %v6676 = vmul.f32 1.0, %v6675
    %6677 = vst.msk [vmem:[%s117] sm:$0xff] %vm6663, %v6674
    %6678 = vst.msk [vmem:[%s117 + $0x8] sm:$0xff] %vm6663, %v6676
    // Predicated region
    $region310: #{forward.1} parent=1 // pred_check
      _
    $region311: #{forward.1} parent=1 // pred_check_branch
      %6680 = sbr.rel (0) target = $region313
    $region312: #{forward.1} parent=1 // pred_region
      _
    $region313: #{forward.1} parent=1 // pred_fallthru
      _
    // Predicated region
    $region314: #{forward.1} parent=1 // pred_check
      _
    $region315: #{forward.1} parent=1 // pred_check_branch
      %6682 = sbr.rel (0) target = $region317
    $region316: #{forward.1} parent=1 // pred_region
      _
    $region317: #{forward.1} parent=1 // pred_fallthru
      _
    // Predicated region
    $region318: #{forward.1} parent=1 // pred_check
      _
    $region319: #{forward.1} parent=1 // pred_check_branch
      %6684 = sbr.rel (0) target = $region321
    $region320: #{forward.1} parent=1 // pred_region
      _
    $region321: #{forward.1} parent=1 // pred_fallthru
      _
    // Predicated region
    $region322: #{forward.1} parent=1 // pred_check
      _
    $region323: #{forward.1} parent=1 // pred_check_branch
      %6686 = sbr.rel (0) target = $region325
    $region324: #{forward.1} parent=1 // pred_region
      _
    $region325: #{forward.1} parent=1 // pred_fallthru
      _
    %6687 = vsyncpa [#allocation5], 1
    %6688 = vsyncpa [#allocation7], 1
    %6689 = vsyncpa [#allocation10], 1
    %6690 = vsyncpa [#allocation13], 1
    %6691 = vsyncpa [#allocation16], 1
    %6692 = vsyncpa [#allocation19], 1
    %6693 = vsyncpa [#allocation22], 1
    %6694 = vsyncpa [#allocation25], 1
    %6695 = vsyncpa [#allocation28], 1
    %6696 = vsyncpa [#allocation31], 1
    %6697 = vsyncpa [#allocation34], 1

</llo_original>
